<compile_context>
chip_gen: v7x
topology: tpu7x:2x2x1
jax: 0.10.0
libtpu: 0.0.40
codegen_flags: <defaults>
</compile_context>

<pallas_src>
import math
import functools

import jax
import jax.numpy as jnp
from jax import lax
from jax.experimental import pallas as pl
from jax.experimental.pallas import tpu as pltpu


# ----------------------------------------------------------------------------- kernel
def timesformer_kernel(x_ref, wqkv_ref, bqkv_ref, wo_ref, bo_ref,
                       gamma_ref, beta_ref, o_ref, *, num_heads, matmul_dtype):
    T, D, TN = x_ref.shape                      # (8, hidden, tile_n) -- lanes = tile_n
    H = num_heads
    dh = D // H
    scale = 1.0 / math.sqrt(dh)

    x = x_ref[...]                               # (T, D, tn)
    x_mm = x.astype(matmul_dtype)
    wqkv = wqkv_ref[...].astype(matmul_dtype)    # (3D, D)
    wo = wo_ref[...].astype(matmul_dtype)        # (D, D)
    bqkv = bqkv_ref[...].astype(jnp.float32)     # (3D, 1)
    bo = bo_ref[...].astype(jnp.float32)         # (D, 1)

    # Fused QKV projection: one dense (3D, D) @ (D, tn) matmul per time step (T=8, static).
    qkv_t = []
    for tt in range(T):
        qkv_t.append(jnp.dot(wqkv, x_mm[tt], preferred_element_type=jnp.float32) + bqkv)
    qkv = jnp.stack(qkv_t, axis=0)               # (T, 3D, tn), f32

    q_all = qkv[:, 0 * D:1 * D, :]               # (T, D, tn)
    k_all = qkv[:, 1 * D:2 * D, :]
    v_all = qkv[:, 2 * D:3 * D, :]

    # Temporal attention, lane-dense over n.  Per head:
    #   scores[qi, ki, n] = sum_d q[qi, d, n] * k[ki, d, n]   -> (T, T, tn)
    attn_heads = []
    for h in range(H):
        lo, hi = h * dh, (h + 1) * dh
        qh = q_all[:, lo:hi, :]                  # (T, dh, tn)
        kh = k_all[:, lo:hi, :]
        vh = v_all[:, lo:hi, :]

        s = jnp.sum(qh[:, None, :, :] * kh[None, :, :, :], axis=2) * scale   # (T, T, tn)
        s = s - jnp.max(s, axis=1, keepdims=True)
        p = jnp.exp(s)
        inv_l = pl.reciprocal(jnp.sum(p, axis=1, keepdims=True), approx=True)
        p = p * inv_l                                                        # (T, T, tn)

        # out[qi, d, n] = sum_ki p[qi, ki, n] * v[ki, d, n]
        ah = jnp.sum(p[:, :, None, :] * vh[None, :, :, :], axis=1)           # (T, dh, tn)
        attn_heads.append(ah)

    attn = jnp.concatenate(attn_heads, axis=1)   # (T, D, tn)
    attn_mm = attn.astype(matmul_dtype)

    # Fused output projection: one dense (D, D) @ (D, tn) matmul per time step.
    out_t = []
    for tt in range(T):
        out_t.append(jnp.dot(wo, attn_mm[tt], preferred_element_type=jnp.float32) + bo)
    out = jnp.stack(out_t, axis=0)               # (T, D, tn), f32

    # Residual + LayerNorm over the hidden dim (eps = 1e-5, PyTorch default).
    y = x.astype(jnp.float32) + out
    mean = jnp.mean(y, axis=1, keepdims=True)                     # (T, 1, tn)
    var = jnp.mean(jnp.square(y - mean), axis=1, keepdims=True)
    yn = (y - mean) * lax.rsqrt(var + 1e-5)
    yn = yn * gamma_ref[...][None, :, :] + beta_ref[...][None, :, :]

    o_ref[...] = yn.astype(o_ref.dtype)


# ----------------------------------------------------------------------------- wrapper
def timesformer_layer(x, params, num_heads, *, tile_n=128, matmul_dtype=jnp.float32):
    """x: (seq_len, batch, hidden) float32.  Returns same shape.

    matmul_dtype=jnp.bfloat16 is recommended on v6e/v7x for the MXU matmuls
    (softmax / LayerNorm always stay in f32).
    """
    in_w, in_b, out_w, out_b, ln_w, ln_b = params
    seq_len, b, d = x.shape
    t = 8

    # Pad the time axis to a multiple of t (matches the PyTorch module; no key mask).
    pad_t = (-seq_len) % t
    xp = jnp.pad(x, ((0, pad_t), (0, 0), (0, 0))) if pad_t else x
    s = xp.shape[0] // t
    n = s * b

    # '(t s) b d -> t (s b) d', then hidden -> sublane axis, (s b) -> lane axis.
    xr = xp.reshape(t, s, b, d).reshape(t, n, d).transpose(0, 2, 1)   # (t, d, n)

    # Pad n to a multiple of the lane tile so every kernel tile is (8,128)-aligned.
    pad_n = (-n) % tile_n
    if pad_n:
        xr = jnp.pad(xr, ((0, 0), (0, 0), (0, pad_n)))
    n_padded = n + pad_n
    grid = (n_padded // tile_n,)

    # Weights used as column-vector matmuls: q_col = W_q @ x_col + b_q, so the PyTorch
    # (3d, d) in_proj_weight and (d, d) out_proj.weight are used as-is (no transpose).
    wqkv = in_w                                   # (3d, d)
    bqkv = in_b.reshape(3 * d, 1)
    wo = out_w                                    # (d, d)
    bo = out_b.reshape(d, 1)
    gamma = ln_w.reshape(d, 1)
    beta = ln_b.reshape(d, 1)
    weight_args = (wqkv, bqkv, wo, bo, gamma, beta)

    def const_spec(shape):
        nd = len(shape)
        return pl.BlockSpec(shape, lambda i, _nd=nd: (0,) * _nd)

    flops = t * n_padded * (8 * d * d + 4 * t * d)
    transcendentals = num_heads * t * t * n_padded
    bytes_accessed = 4 * (2 * t * d * n_padded + sum(int(w.size) for w in weight_args))

    out = pl.pallas_call(
        functools.partial(timesformer_kernel, num_heads=num_heads,
                          matmul_dtype=matmul_dtype),
        out_shape=jax.ShapeDtypeStruct((t, d, n_padded), x.dtype),
        grid=grid,
        in_specs=[pl.BlockSpec((t, d, tile_n), lambda i: (0, 0, i))]
                 + [const_spec(w.shape) for w in weight_args],
        out_specs=pl.BlockSpec((t, d, tile_n), lambda i: (0, 0, i)),
        compiler_params=pltpu.CompilerParams(
            dimension_semantics=("parallel",),
            vmem_limit_bytes=32 * 1024 * 1024),
        cost_estimate=pl.CostEstimate(flops=flops,
                                      transcendentals=transcendentals,
                                      bytes_accessed=bytes_accessed),
    )(xr, *weight_args)

    # (t, d, n_padded) -> drop n padding -> 't (s b) d -> (t s) b d' -> drop t padding.
    y = out.transpose(0, 2, 1)[:, :n, :].reshape(t, s, b, d).reshape(t * s, b, d)
    return y[:seq_len]


# ----------------------------------------------------------------------------- reference
def timesformer_reference(x, params, num_heads):
    in_w, in_b, out_w, out_b, ln_w, ln_b = params
    seq_len, b, d = x.shape
    t = 8
    pad = (-seq_len) % t
    xp = jnp.pad(x, ((0, pad), (0, 0), (0, 0))) if pad else x
    s = xp.shape[0] // t
    N = s * b
    H = num_heads
    dh = d // H
    xr = xp.reshape(t, s, b, d).reshape(t, N, d)

    q = xr @ in_w[0:d].T + in_b[0:d]
    k = xr @ in_w[d:2 * d].T + in_b[d:2 * d]
    v = xr @ in_w[2 * d:3 * d].T + in_b[2 * d:3 * d]

    def heads(z):                              # (t, N, d) -> (N, H, t, dh)
        return z.reshape(t, N, H, dh).transpose(1, 2, 0, 3)

    qh, kh, vh = heads(q), heads(k), heads(v)
    scores = (qh @ kh.transpose(0, 1, 3, 2)) / math.sqrt(dh)
    p = jax.nn.softmax(scores, axis=-1)
    a = (p @ vh).transpose(2, 0, 1, 3).reshape(t, N, d)
    attn_out = a @ out_w.T + out_b

    y = xr + attn_out
    mean = y.mean(-1, keepdims=True)
    var = ((y - mean) ** 2).mean(-1, keepdims=True)
    yn = (y - mean) / jnp.sqrt(var + 1e-5) * ln_w + ln_b
    return yn.reshape(t, s, b, d).reshape(t * s, b, d)[:seq_len]


# ----------------------------------------------------------------------------- main
if __name__ == "__main__":
    hidden_dim = 32
    num_heads = 4
    seq_len = 12          # not a multiple of 8 -> exercises the time-padding path
    batch = 2

    key = jax.random.PRNGKey(0)
    k_x, k_inw, k_inb, k_ow, k_ob, k_g, k_be = jax.random.split(key, 7)

    x = jax.random.normal(k_x, (seq_len, batch, hidden_dim), dtype=jnp.float32)

    scale = 1.0 / math.sqrt(hidden_dim)
    in_proj_w = jax.random.uniform(k_inw, (3 * hidden_dim, hidden_dim),
                                   minval=-scale, maxval=scale, dtype=jnp.float32)
    in_proj_b = jax.random.uniform(k_inb, (3 * hidden_dim,),
                                   minval=-scale, maxval=scale, dtype=jnp.float32)
    out_proj_w = jax.random.uniform(k_ow, (hidden_dim, hidden_dim),
                                    minval=-scale, maxval=scale, dtype=jnp.float32)
    out_proj_b = jax.random.uniform(k_ob, (hidden_dim,),
                                    minval=-scale, maxval=scale, dtype=jnp.float32)
    ln_w = 1.0 + 0.1 * jax.random.normal(k_g, (hidden_dim,), dtype=jnp.float32)
    ln_b = 0.1 * jax.random.normal(k_be, (hidden_dim,), dtype=jnp.float32)

    params = (in_proj_w, in_proj_b, out_proj_w, out_proj_b, ln_w, ln_b)

    out = timesformer_layer(x, params, num_heads)   # f32 matmuls for the tight check
    out = jax.block_until_ready(out)

    ref = jax.block_until_ready(timesformer_reference(x, params, num_heads))
    assert out.shape == x.shape, (out.shape, x.shape)
    err = float(jnp.max(jnp.abs(out - ref)))
    assert jnp.allclose(out, ref, atol=5e-3, rtol=5e-3), err

    print("KERNEL_OK")
</pallas_src>

<mosaic_0001>
module attributes {stable_mosaic.version = 11 : i64} {
  func.func @timesformer_kernel(%arg0: i32, %arg1: memref<8x32x128xf32, #tpu.memory_space<vmem>>, %arg2: memref<96x32xf32, #tpu.memory_space<vmem>>, %arg3: memref<96x1xf32, #tpu.memory_space<vmem>>, %arg4: memref<32x32xf32, #tpu.memory_space<vmem>>, %arg5: memref<32x1xf32, #tpu.memory_space<vmem>>, %arg6: memref<32x1xf32, #tpu.memory_space<vmem>>, %arg7: memref<32x1xf32, #tpu.memory_space<vmem>>, %arg8: memref<8x32x128xf32, #tpu.memory_space<vmem>>) attributes {dimension_semantics = [#tpu.dimension_semantics<parallel>], iteration_bounds = array<i64: 1>, scalar_prefetch = 0 : i64, scratch_operands = 0 : i64, tpu.core_type = #tpu.core_type<tc>, window_params = [{transform_indices = @transform_0, window_bounds = array<i64: 8, 32, 128>}, {pipeline_mode = #tpu.pipeline_mode<synchronous>, transform_indices = @transform_1, window_bounds = array<i64: 96, 32>}, {pipeline_mode = #tpu.pipeline_mode<synchronous>, transform_indices = @transform_2, window_bounds = array<i64: 96, 1>}, {pipeline_mode = #tpu.pipeline_mode<synchronous>, transform_indices = @transform_3, window_bounds = array<i64: 32, 32>}, {pipeline_mode = #tpu.pipeline_mode<synchronous>, transform_indices = @transform_4, window_bounds = array<i64: 32, 1>}, {pipeline_mode = #tpu.pipeline_mode<synchronous>, transform_indices = @transform_5, window_bounds = array<i64: 32, 1>}, {pipeline_mode = #tpu.pipeline_mode<synchronous>, transform_indices = @transform_6, window_bounds = array<i64: 32, 1>}, {transform_indices = @transform_7, window_bounds = array<i64: 8, 32, 128>}]} {
    %c0 = arith.constant 0 : index
    %c0_0 = arith.constant 0 : index
    %c0_1 = arith.constant 0 : index
    %0 = vector.load %arg1[%c0, %c0_0, %c0_1] : memref<8x32x128xf32, #tpu.memory_space<vmem>>, vector<8x32x128xf32>
    %c0_2 = arith.constant 0 : index
    %c0_3 = arith.constant 0 : index
    %1 = vector.load %arg2[%c0_2, %c0_3] : memref<96x32xf32, #tpu.memory_space<vmem>>, vector<96x32xf32>
    %c0_4 = arith.constant 0 : index
    %c0_5 = arith.constant 0 : index
    %2 = vector.load %arg4[%c0_4, %c0_5] : memref<32x32xf32, #tpu.memory_space<vmem>>, vector<32x32xf32>
    %c0_6 = arith.constant 0 : index
    %c0_7 = arith.constant 0 : index
    %3 = vector.load %arg3[%c0_6, %c0_7] : memref<96x1xf32, #tpu.memory_space<vmem>>, vector<96x1xf32>
    %c0_8 = arith.constant 0 : index
    %c0_9 = arith.constant 0 : index
    %4 = vector.load %arg5[%c0_8, %c0_9] : memref<32x1xf32, #tpu.memory_space<vmem>>, vector<32x1xf32>
    %5 = vector.extract_strided_slice %0 {offsets = [0, 0, 0], sizes = [1, 32, 128], strides = [1, 1, 1]} : vector<8x32x128xf32> to vector<1x32x128xf32>
    %6 = vector.shape_cast %5 : vector<1x32x128xf32> to vector<32x128xf32>
    %cst = arith.constant dense<0.000000e+00> : vector<96x128xf32>
    %7 = tpu.matmul %1, %6, %cst {dimension_numbers = #tpu.dot_dimension_numbers<[1], [0], [0], [1], [0, 0, 1, 1], [], []>} : vector<96x32xf32>, vector<32x128xf32>, vector<96x128xf32> -> vector<96x128xf32>
    %8 = vector.broadcast %3 : vector<96x1xf32> to vector<96x128xf32>
    %9 = arith.addf %7, %8 : vector<96x128xf32>
    %10 = vector.extract_strided_slice %0 {offsets = [1, 0, 0], sizes = [1, 32, 128], strides = [1, 1, 1]} : vector<8x32x128xf32> to vector<1x32x128xf32>
    %11 = vector.shape_cast %10 : vector<1x32x128xf32> to vector<32x128xf32>
    %cst_10 = arith.constant dense<0.000000e+00> : vector<96x128xf32>
    %12 = tpu.matmul %1, %11, %cst_10 {dimension_numbers = #tpu.dot_dimension_numbers<[1], [0], [0], [1], [0, 0, 1, 1], [], []>} : vector<96x32xf32>, vector<32x128xf32>, vector<96x128xf32> -> vector<96x128xf32>
    %13 = vector.broadcast %3 : vector<96x1xf32> to vector<96x128xf32>
    %14 = arith.addf %12, %13 : vector<96x128xf32>
    %15 = vector.extract_strided_slice %0 {offsets = [2, 0, 0], sizes = [1, 32, 128], strides = [1, 1, 1]} : vector<8x32x128xf32> to vector<1x32x128xf32>
    %16 = vector.shape_cast %15 : vector<1x32x128xf32> to vector<32x128xf32>
    %cst_11 = arith.constant dense<0.000000e+00> : vector<96x128xf32>
    %17 = tpu.matmul %1, %16, %cst_11 {dimension_numbers = #tpu.dot_dimension_numbers<[1], [0], [0], [1], [0, 0, 1, 1], [], []>} : vector<96x32xf32>, vector<32x128xf32>, vector<96x128xf32> -> vector<96x128xf32>
    %18 = vector.broadcast %3 : vector<96x1xf32> to vector<96x128xf32>
    %19 = arith.addf %17, %18 : vector<96x128xf32>
    %20 = vector.extract_strided_slice %0 {offsets = [3, 0, 0], sizes = [1, 32, 128], strides = [1, 1, 1]} : vector<8x32x128xf32> to vector<1x32x128xf32>
    %21 = vector.shape_cast %20 : vector<1x32x128xf32> to vector<32x128xf32>
    %cst_12 = arith.constant dense<0.000000e+00> : vector<96x128xf32>
    %22 = tpu.matmul %1, %21, %cst_12 {dimension_numbers = #tpu.dot_dimension_numbers<[1], [0], [0], [1], [0, 0, 1, 1], [], []>} : vector<96x32xf32>, vector<32x128xf32>, vector<96x128xf32> -> vector<96x128xf32>
    %23 = vector.broadcast %3 : vector<96x1xf32> to vector<96x128xf32>
    %24 = arith.addf %22, %23 : vector<96x128xf32>
    %25 = vector.extract_strided_slice %0 {offsets = [4, 0, 0], sizes = [1, 32, 128], strides = [1, 1, 1]} : vector<8x32x128xf32> to vector<1x32x128xf32>
    %26 = vector.shape_cast %25 : vector<1x32x128xf32> to vector<32x128xf32>
    %cst_13 = arith.constant dense<0.000000e+00> : vector<96x128xf32>
    %27 = tpu.matmul %1, %26, %cst_13 {dimension_numbers = #tpu.dot_dimension_numbers<[1], [0], [0], [1], [0, 0, 1, 1], [], []>} : vector<96x32xf32>, vector<32x128xf32>, vector<96x128xf32> -> vector<96x128xf32>
    %28 = vector.broadcast %3 : vector<96x1xf32> to vector<96x128xf32>
    %29 = arith.addf %27, %28 : vector<96x128xf32>
    %30 = vector.extract_strided_slice %0 {offsets = [5, 0, 0], sizes = [1, 32, 128], strides = [1, 1, 1]} : vector<8x32x128xf32> to vector<1x32x128xf32>
    %31 = vector.shape_cast %30 : vector<1x32x128xf32> to vector<32x128xf32>
    %cst_14 = arith.constant dense<0.000000e+00> : vector<96x128xf32>
    %32 = tpu.matmul %1, %31, %cst_14 {dimension_numbers = #tpu.dot_dimension_numbers<[1], [0], [0], [1], [0, 0, 1, 1], [], []>} : vector<96x32xf32>, vector<32x128xf32>, vector<96x128xf32> -> vector<96x128xf32>
    %33 = vector.broadcast %3 : vector<96x1xf32> to vector<96x128xf32>
    %34 = arith.addf %32, %33 : vector<96x128xf32>
    %35 = vector.extract_strided_slice %0 {offsets = [6, 0, 0], sizes = [1, 32, 128], strides = [1, 1, 1]} : vector<8x32x128xf32> to vector<1x32x128xf32>
    %36 = vector.shape_cast %35 : vector<1x32x128xf32> to vector<32x128xf32>
    %cst_15 = arith.constant dense<0.000000e+00> : vector<96x128xf32>
    %37 = tpu.matmul %1, %36, %cst_15 {dimension_numbers = #tpu.dot_dimension_numbers<[1], [0], [0], [1], [0, 0, 1, 1], [], []>} : vector<96x32xf32>, vector<32x128xf32>, vector<96x128xf32> -> vector<96x128xf32>
    %38 = vector.broadcast %3 : vector<96x1xf32> to vector<96x128xf32>
    %39 = arith.addf %37, %38 : vector<96x128xf32>
    %40 = vector.extract_strided_slice %0 {offsets = [7, 0, 0], sizes = [1, 32, 128], strides = [1, 1, 1]} : vector<8x32x128xf32> to vector<1x32x128xf32>
    %41 = vector.shape_cast %40 : vector<1x32x128xf32> to vector<32x128xf32>
    %cst_16 = arith.constant dense<0.000000e+00> : vector<96x128xf32>
    %42 = tpu.matmul %1, %41, %cst_16 {dimension_numbers = #tpu.dot_dimension_numbers<[1], [0], [0], [1], [0, 0, 1, 1], [], []>} : vector<96x32xf32>, vector<32x128xf32>, vector<96x128xf32> -> vector<96x128xf32>
    %43 = vector.broadcast %3 : vector<96x1xf32> to vector<96x128xf32>
    %44 = arith.addf %42, %43 : vector<96x128xf32>
    %45 = vector.shape_cast %9 : vector<96x128xf32> to vector<1x96x128xf32>
    %46 = vector.shape_cast %14 : vector<96x128xf32> to vector<1x96x128xf32>
    %47 = vector.shape_cast %19 : vector<96x128xf32> to vector<1x96x128xf32>
    %48 = vector.shape_cast %24 : vector<96x128xf32> to vector<1x96x128xf32>
    %49 = vector.shape_cast %29 : vector<96x128xf32> to vector<1x96x128xf32>
    %50 = vector.shape_cast %34 : vector<96x128xf32> to vector<1x96x128xf32>
    %51 = vector.shape_cast %39 : vector<96x128xf32> to vector<1x96x128xf32>
    %52 = vector.shape_cast %44 : vector<96x128xf32> to vector<1x96x128xf32>
    %53 = tpu.concatenate %45, %46, %47, %48, %49, %50, %51, %52 in 0 : vector<1x96x128xf32>, vector<1x96x128xf32>, vector<1x96x128xf32>, vector<1x96x128xf32>, vector<1x96x128xf32>, vector<1x96x128xf32>, vector<1x96x128xf32>, vector<1x96x128xf32> -> vector<8x96x128xf32>
    %54 = vector.extract_strided_slice %53 {offsets = [0, 0, 0], sizes = [8, 32, 128], strides = [1, 1, 1]} : vector<8x96x128xf32> to vector<8x32x128xf32>
    %55 = vector.extract_strided_slice %53 {offsets = [0, 32, 0], sizes = [8, 32, 128], strides = [1, 1, 1]} : vector<8x96x128xf32> to vector<8x32x128xf32>
    %56 = vector.extract_strided_slice %53 {offsets = [0, 64, 0], sizes = [8, 32, 128], strides = [1, 1, 1]} : vector<8x96x128xf32> to vector<8x32x128xf32>
    %57 = vector.extract_strided_slice %54 {offsets = [0, 0, 0], sizes = [8, 8, 128], strides = [1, 1, 1]} : vector<8x32x128xf32> to vector<8x8x128xf32>
    %58 = vector.extract_strided_slice %55 {offsets = [0, 0, 0], sizes = [8, 8, 128], strides = [1, 1, 1]} : vector<8x32x128xf32> to vector<8x8x128xf32>
    %59 = vector.extract_strided_slice %56 {offsets = [0, 0, 0], sizes = [8, 8, 128], strides = [1, 1, 1]} : vector<8x32x128xf32> to vector<8x8x128xf32>
    %60 = vector.shape_cast %57 : vector<8x8x128xf32> to vector<8x1x8x128xf32>
    %61 = vector.shape_cast %58 : vector<8x8x128xf32> to vector<1x8x8x128xf32>
    %62 = vector.broadcast %60 : vector<8x1x8x128xf32> to vector<8x8x8x128xf32>
    %63 = vector.broadcast %61 : vector<1x8x8x128xf32> to vector<8x8x8x128xf32>
    %64 = arith.mulf %62, %63 : vector<8x8x8x128xf32>
    %cst_17 = arith.constant dense<0.000000e+00> : vector<8x8x128xf32>
    %65 = vector.multi_reduction <add>, %64, %cst_17 [2] : vector<8x8x8x128xf32> to vector<8x8x128xf32>
    %cst_18 = arith.constant 0.353553385 : f32
    %66 = vector.broadcast %cst_18 : f32 to vector<8x8x128xf32>
    %67 = arith.mulf %65, %66 : vector<8x8x128xf32>
    %cst_19 = arith.constant dense<0xFF800000> : vector<8x128xf32>
    %68 = vector.multi_reduction <maximumf>, %67, %cst_19 [1] : vector<8x8x128xf32> to vector<8x128xf32>
    %69 = vector.shape_cast %68 : vector<8x128xf32> to vector<8x1x128xf32>
    %70 = vector.broadcast %69 : vector<8x1x128xf32> to vector<8x8x128xf32>
    %71 = arith.subf %67, %70 : vector<8x8x128xf32>
    %72 = math.exp %71 : vector<8x8x128xf32>
    %cst_20 = arith.constant dense<0.000000e+00> : vector<8x128xf32>
    %73 = vector.multi_reduction <add>, %72, %cst_20 [1] : vector<8x8x128xf32> to vector<8x128xf32>
    %74 = vector.shape_cast %73 : vector<8x128xf32> to vector<8x1x128xf32>
    %75 = tpu.reciprocal %74 {approx = true} : vector<8x1x128xf32> -> vector<8x1x128xf32>
    %76 = vector.broadcast %75 : vector<8x1x128xf32> to vector<8x8x128xf32>
    %77 = arith.mulf %72, %76 : vector<8x8x128xf32>
    %78 = vector.shape_cast %77 : vector<8x8x128xf32> to vector<8x8x1x128xf32>
    %79 = vector.shape_cast %59 : vector<8x8x128xf32> to vector<1x8x8x128xf32>
    %80 = vector.broadcast %78 : vector<8x8x1x128xf32> to vector<8x8x8x128xf32>
    %81 = vector.broadcast %79 : vector<1x8x8x128xf32> to vector<8x8x8x128xf32>
    %82 = arith.mulf %80, %81 : vector<8x8x8x128xf32>
    %cst_21 = arith.constant dense<0.000000e+00> : vector<8x8x128xf32>
    %83 = vector.multi_reduction <add>, %82, %cst_21 [1] : vector<8x8x8x128xf32> to vector<8x8x128xf32>
    %84 = vector.extract_strided_slice %54 {offsets = [0, 8, 0], sizes = [8, 8, 128], strides = [1, 1, 1]} : vector<8x32x128xf32> to vector<8x8x128xf32>
    %85 = vector.extract_strided_slice %55 {offsets = [0, 8, 0], sizes = [8, 8, 128], strides = [1, 1, 1]} : vector<8x32x128xf32> to vector<8x8x128xf32>
    %86 = vector.extract_strided_slice %56 {offsets = [0, 8, 0], sizes = [8, 8, 128], strides = [1, 1, 1]} : vector<8x32x128xf32> to vector<8x8x128xf32>
    %87 = vector.shape_cast %84 : vector<8x8x128xf32> to vector<8x1x8x128xf32>
    %88 = vector.shape_cast %85 : vector<8x8x128xf32> to vector<1x8x8x128xf32>
    %89 = vector.broadcast %87 : vector<8x1x8x128xf32> to vector<8x8x8x128xf32>
    %90 = vector.broadcast %88 : vector<1x8x8x128xf32> to vector<8x8x8x128xf32>
    %91 = arith.mulf %89, %90 : vector<8x8x8x128xf32>
    %cst_22 = arith.constant dense<0.000000e+00> : vector<8x8x128xf32>
    %92 = vector.multi_reduction <add>, %91, %cst_22 [2] : vector<8x8x8x128xf32> to vector<8x8x128xf32>
    %cst_23 = arith.constant 0.353553385 : f32
    %93 = vector.broadcast %cst_23 : f32 to vector<8x8x128xf32>
    %94 = arith.mulf %92, %93 : vector<8x8x128xf32>
    %cst_24 = arith.constant dense<0xFF800000> : vector<8x128xf32>
    %95 = vector.multi_reduction <maximumf>, %94, %cst_24 [1] : vector<8x8x128xf32> to vector<8x128xf32>
    %96 = vector.shape_cast %95 : vector<8x128xf32> to vector<8x1x128xf32>
    %97 = vector.broadcast %96 : vector<8x1x128xf32> to vector<8x8x128xf32>
    %98 = arith.subf %94, %97 : vector<8x8x128xf32>
    %99 = math.exp %98 : vector<8x8x128xf32>
    %cst_25 = arith.constant dense<0.000000e+00> : vector<8x128xf32>
    %100 = vector.multi_reduction <add>, %99, %cst_25 [1] : vector<8x8x128xf32> to vector<8x128xf32>
    %101 = vector.shape_cast %100 : vector<8x128xf32> to vector<8x1x128xf32>
    %102 = tpu.reciprocal %101 {approx = true} : vector<8x1x128xf32> -> vector<8x1x128xf32>
    %103 = vector.broadcast %102 : vector<8x1x128xf32> to vector<8x8x128xf32>
    %104 = arith.mulf %99, %103 : vector<8x8x128xf32>
    %105 = vector.shape_cast %104 : vector<8x8x128xf32> to vector<8x8x1x128xf32>
    %106 = vector.shape_cast %86 : vector<8x8x128xf32> to vector<1x8x8x128xf32>
    %107 = vector.broadcast %105 : vector<8x8x1x128xf32> to vector<8x8x8x128xf32>
    %108 = vector.broadcast %106 : vector<1x8x8x128xf32> to vector<8x8x8x128xf32>
    %109 = arith.mulf %107, %108 : vector<8x8x8x128xf32>
    %cst_26 = arith.constant dense<0.000000e+00> : vector<8x8x128xf32>
    %110 = vector.multi_reduction <add>, %109, %cst_26 [1] : vector<8x8x8x128xf32> to vector<8x8x128xf32>
    %111 = vector.extract_strided_slice %54 {offsets = [0, 16, 0], sizes = [8, 8, 128], strides = [1, 1, 1]} : vector<8x32x128xf32> to vector<8x8x128xf32>
    %112 = vector.extract_strided_slice %55 {offsets = [0, 16, 0], sizes = [8, 8, 128], strides = [1, 1, 1]} : vector<8x32x128xf32> to vector<8x8x128xf32>
    %113 = vector.extract_strided_slice %56 {offsets = [0, 16, 0], sizes = [8, 8, 128], strides = [1, 1, 1]} : vector<8x32x128xf32> to vector<8x8x128xf32>
    %114 = vector.shape_cast %111 : vector<8x8x128xf32> to vector<8x1x8x128xf32>
    %115 = vector.shape_cast %112 : vector<8x8x128xf32> to vector<1x8x8x128xf32>
    %116 = vector.broadcast %114 : vector<8x1x8x128xf32> to vector<8x8x8x128xf32>
    %117 = vector.broadcast %115 : vector<1x8x8x128xf32> to vector<8x8x8x128xf32>
    %118 = arith.mulf %116, %117 : vector<8x8x8x128xf32>
    %cst_27 = arith.constant dense<0.000000e+00> : vector<8x8x128xf32>
    %119 = vector.multi_reduction <add>, %118, %cst_27 [2] : vector<8x8x8x128xf32> to vector<8x8x128xf32>
    %cst_28 = arith.constant 0.353553385 : f32
    %120 = vector.broadcast %cst_28 : f32 to vector<8x8x128xf32>
    %121 = arith.mulf %119, %120 : vector<8x8x128xf32>
    %cst_29 = arith.constant dense<0xFF800000> : vector<8x128xf32>
    %122 = vector.multi_reduction <maximumf>, %121, %cst_29 [1] : vector<8x8x128xf32> to vector<8x128xf32>
    %123 = vector.shape_cast %122 : vector<8x128xf32> to vector<8x1x128xf32>
    %124 = vector.broadcast %123 : vector<8x1x128xf32> to vector<8x8x128xf32>
    %125 = arith.subf %121, %124 : vector<8x8x128xf32>
    %126 = math.exp %125 : vector<8x8x128xf32>
    %cst_30 = arith.constant dense<0.000000e+00> : vector<8x128xf32>
    %127 = vector.multi_reduction <add>, %126, %cst_30 [1] : vector<8x8x128xf32> to vector<8x128xf32>
    %128 = vector.shape_cast %127 : vector<8x128xf32> to vector<8x1x128xf32>
    %129 = tpu.reciprocal %128 {approx = true} : vector<8x1x128xf32> -> vector<8x1x128xf32>
    %130 = vector.broadcast %129 : vector<8x1x128xf32> to vector<8x8x128xf32>
    %131 = arith.mulf %126, %130 : vector<8x8x128xf32>
    %132 = vector.shape_cast %131 : vector<8x8x128xf32> to vector<8x8x1x128xf32>
    %133 = vector.shape_cast %113 : vector<8x8x128xf32> to vector<1x8x8x128xf32>
    %134 = vector.broadcast %132 : vector<8x8x1x128xf32> to vector<8x8x8x128xf32>
    %135 = vector.broadcast %133 : vector<1x8x8x128xf32> to vector<8x8x8x128xf32>
    %136 = arith.mulf %134, %135 : vector<8x8x8x128xf32>
    %cst_31 = arith.constant dense<0.000000e+00> : vector<8x8x128xf32>
    %137 = vector.multi_reduction <add>, %136, %cst_31 [1] : vector<8x8x8x128xf32> to vector<8x8x128xf32>
    %138 = vector.extract_strided_slice %54 {offsets = [0, 24, 0], sizes = [8, 8, 128], strides = [1, 1, 1]} : vector<8x32x128xf32> to vector<8x8x128xf32>
    %139 = vector.extract_strided_slice %55 {offsets = [0, 24, 0], sizes = [8, 8, 128], strides = [1, 1, 1]} : vector<8x32x128xf32> to vector<8x8x128xf32>
    %140 = vector.extract_strided_slice %56 {offsets = [0, 24, 0], sizes = [8, 8, 128], strides = [1, 1, 1]} : vector<8x32x128xf32> to vector<8x8x128xf32>
    %141 = vector.shape_cast %138 : vector<8x8x128xf32> to vector<8x1x8x128xf32>
    %142 = vector.shape_cast %139 : vector<8x8x128xf32> to vector<1x8x8x128xf32>
    %143 = vector.broadcast %141 : vector<8x1x8x128xf32> to vector<8x8x8x128xf32>
    %144 = vector.broadcast %142 : vector<1x8x8x128xf32> to vector<8x8x8x128xf32>
    %145 = arith.mulf %143, %144 : vector<8x8x8x128xf32>
    %cst_32 = arith.constant dense<0.000000e+00> : vector<8x8x128xf32>
    %146 = vector.multi_reduction <add>, %145, %cst_32 [2] : vector<8x8x8x128xf32> to vector<8x8x128xf32>
    %cst_33 = arith.constant 0.353553385 : f32
    %147 = vector.broadcast %cst_33 : f32 to vector<8x8x128xf32>
    %148 = arith.mulf %146, %147 : vector<8x8x128xf32>
    %cst_34 = arith.constant dense<0xFF800000> : vector<8x128xf32>
    %149 = vector.multi_reduction <maximumf>, %148, %cst_34 [1] : vector<8x8x128xf32> to vector<8x128xf32>
    %150 = vector.shape_cast %149 : vector<8x128xf32> to vector<8x1x128xf32>
    %151 = vector.broadcast %150 : vector<8x1x128xf32> to vector<8x8x128xf32>
    %152 = arith.subf %148, %151 : vector<8x8x128xf32>
    %153 = math.exp %152 : vector<8x8x128xf32>
    %cst_35 = arith.constant dense<0.000000e+00> : vector<8x128xf32>
    %154 = vector.multi_reduction <add>, %153, %cst_35 [1] : vector<8x8x128xf32> to vector<8x128xf32>
    %155 = vector.shape_cast %154 : vector<8x128xf32> to vector<8x1x128xf32>
    %156 = tpu.reciprocal %155 {approx = true} : vector<8x1x128xf32> -> vector<8x1x128xf32>
    %157 = vector.broadcast %156 : vector<8x1x128xf32> to vector<8x8x128xf32>
    %158 = arith.mulf %153, %157 : vector<8x8x128xf32>
    %159 = vector.shape_cast %158 : vector<8x8x128xf32> to vector<8x8x1x128xf32>
    %160 = vector.shape_cast %140 : vector<8x8x128xf32> to vector<1x8x8x128xf32>
    %161 = vector.broadcast %159 : vector<8x8x1x128xf32> to vector<8x8x8x128xf32>
    %162 = vector.broadcast %160 : vector<1x8x8x128xf32> to vector<8x8x8x128xf32>
    %163 = arith.mulf %161, %162 : vector<8x8x8x128xf32>
    %cst_36 = arith.constant dense<0.000000e+00> : vector<8x8x128xf32>
    %164 = vector.multi_reduction <add>, %163, %cst_36 [1] : vector<8x8x8x128xf32> to vector<8x8x128xf32>
    %165 = tpu.concatenate %83, %110, %137, %164 in 1 : vector<8x8x128xf32>, vector<8x8x128xf32>, vector<8x8x128xf32>, vector<8x8x128xf32> -> vector<8x32x128xf32>
    %166 = vector.extract_strided_slice %165 {offsets = [0, 0, 0], sizes = [1, 32, 128], strides = [1, 1, 1]} : vector<8x32x128xf32> to vector<1x32x128xf32>
    %167 = vector.shape_cast %166 : vector<1x32x128xf32> to vector<32x128xf32>
    %cst_37 = arith.constant dense<0.000000e+00> : vector<32x128xf32>
    %168 = tpu.matmul %2, %167, %cst_37 {dimension_numbers = #tpu.dot_dimension_numbers<[1], [0], [0], [1], [0, 0, 1, 1], [], []>} : vector<32x32xf32>, vector<32x128xf32>, vector<32x128xf32> -> vector<32x128xf32>
    %169 = vector.broadcast %4 : vector<32x1xf32> to vector<32x128xf32>
    %170 = arith.addf %168, %169 : vector<32x128xf32>
    %171 = vector.extract_strided_slice %165 {offsets = [1, 0, 0], sizes = [1, 32, 128], strides = [1, 1, 1]} : vector<8x32x128xf32> to vector<1x32x128xf32>
    %172 = vector.shape_cast %171 : vector<1x32x128xf32> to vector<32x128xf32>
    %cst_38 = arith.constant dense<0.000000e+00> : vector<32x128xf32>
    %173 = tpu.matmul %2, %172, %cst_38 {dimension_numbers = #tpu.dot_dimension_numbers<[1], [0], [0], [1], [0, 0, 1, 1], [], []>} : vector<32x32xf32>, vector<32x128xf32>, vector<32x128xf32> -> vector<32x128xf32>
    %174 = vector.broadcast %4 : vector<32x1xf32> to vector<32x128xf32>
    %175 = arith.addf %173, %174 : vector<32x128xf32>
    %176 = vector.extract_strided_slice %165 {offsets = [2, 0, 0], sizes = [1, 32, 128], strides = [1, 1, 1]} : vector<8x32x128xf32> to vector<1x32x128xf32>
    %177 = vector.shape_cast %176 : vector<1x32x128xf32> to vector<32x128xf32>
    %cst_39 = arith.constant dense<0.000000e+00> : vector<32x128xf32>
    %178 = tpu.matmul %2, %177, %cst_39 {dimension_numbers = #tpu.dot_dimension_numbers<[1], [0], [0], [1], [0, 0, 1, 1], [], []>} : vector<32x32xf32>, vector<32x128xf32>, vector<32x128xf32> -> vector<32x128xf32>
    %179 = vector.broadcast %4 : vector<32x1xf32> to vector<32x128xf32>
    %180 = arith.addf %178, %179 : vector<32x128xf32>
    %181 = vector.extract_strided_slice %165 {offsets = [3, 0, 0], sizes = [1, 32, 128], strides = [1, 1, 1]} : vector<8x32x128xf32> to vector<1x32x128xf32>
    %182 = vector.shape_cast %181 : vector<1x32x128xf32> to vector<32x128xf32>
    %cst_40 = arith.constant dense<0.000000e+00> : vector<32x128xf32>
    %183 = tpu.matmul %2, %182, %cst_40 {dimension_numbers = #tpu.dot_dimension_numbers<[1], [0], [0], [1], [0, 0, 1, 1], [], []>} : vector<32x32xf32>, vector<32x128xf32>, vector<32x128xf32> -> vector<32x128xf32>
    %184 = vector.broadcast %4 : vector<32x1xf32> to vector<32x128xf32>
    %185 = arith.addf %183, %184 : vector<32x128xf32>
    %186 = vector.extract_strided_slice %165 {offsets = [4, 0, 0], sizes = [1, 32, 128], strides = [1, 1, 1]} : vector<8x32x128xf32> to vector<1x32x128xf32>
    %187 = vector.shape_cast %186 : vector<1x32x128xf32> to vector<32x128xf32>
    %cst_41 = arith.constant dense<0.000000e+00> : vector<32x128xf32>
    %188 = tpu.matmul %2, %187, %cst_41 {dimension_numbers = #tpu.dot_dimension_numbers<[1], [0], [0], [1], [0, 0, 1, 1], [], []>} : vector<32x32xf32>, vector<32x128xf32>, vector<32x128xf32> -> vector<32x128xf32>
    %189 = vector.broadcast %4 : vector<32x1xf32> to vector<32x128xf32>
    %190 = arith.addf %188, %189 : vector<32x128xf32>
    %191 = vector.extract_strided_slice %165 {offsets = [5, 0, 0], sizes = [1, 32, 128], strides = [1, 1, 1]} : vector<8x32x128xf32> to vector<1x32x128xf32>
    %192 = vector.shape_cast %191 : vector<1x32x128xf32> to vector<32x128xf32>
    %cst_42 = arith.constant dense<0.000000e+00> : vector<32x128xf32>
    %193 = tpu.matmul %2, %192, %cst_42 {dimension_numbers = #tpu.dot_dimension_numbers<[1], [0], [0], [1], [0, 0, 1, 1], [], []>} : vector<32x32xf32>, vector<32x128xf32>, vector<32x128xf32> -> vector<32x128xf32>
    %194 = vector.broadcast %4 : vector<32x1xf32> to vector<32x128xf32>
    %195 = arith.addf %193, %194 : vector<32x128xf32>
    %196 = vector.extract_strided_slice %165 {offsets = [6, 0, 0], sizes = [1, 32, 128], strides = [1, 1, 1]} : vector<8x32x128xf32> to vector<1x32x128xf32>
    %197 = vector.shape_cast %196 : vector<1x32x128xf32> to vector<32x128xf32>
    %cst_43 = arith.constant dense<0.000000e+00> : vector<32x128xf32>
    %198 = tpu.matmul %2, %197, %cst_43 {dimension_numbers = #tpu.dot_dimension_numbers<[1], [0], [0], [1], [0, 0, 1, 1], [], []>} : vector<32x32xf32>, vector<32x128xf32>, vector<32x128xf32> -> vector<32x128xf32>
    %199 = vector.broadcast %4 : vector<32x1xf32> to vector<32x128xf32>
    %200 = arith.addf %198, %199 : vector<32x128xf32>
    %201 = vector.extract_strided_slice %165 {offsets = [7, 0, 0], sizes = [1, 32, 128], strides = [1, 1, 1]} : vector<8x32x128xf32> to vector<1x32x128xf32>
    %202 = vector.shape_cast %201 : vector<1x32x128xf32> to vector<32x128xf32>
    %cst_44 = arith.constant dense<0.000000e+00> : vector<32x128xf32>
    %203 = tpu.matmul %2, %202, %cst_44 {dimension_numbers = #tpu.dot_dimension_numbers<[1], [0], [0], [1], [0, 0, 1, 1], [], []>} : vector<32x32xf32>, vector<32x128xf32>, vector<32x128xf32> -> vector<32x128xf32>
    %204 = vector.broadcast %4 : vector<32x1xf32> to vector<32x128xf32>
    %205 = arith.addf %203, %204 : vector<32x128xf32>
    %206 = vector.shape_cast %170 : vector<32x128xf32> to vector<1x32x128xf32>
    %207 = vector.shape_cast %175 : vector<32x128xf32> to vector<1x32x128xf32>
    %208 = vector.shape_cast %180 : vector<32x128xf32> to vector<1x32x128xf32>
    %209 = vector.shape_cast %185 : vector<32x128xf32> to vector<1x32x128xf32>
    %210 = vector.shape_cast %190 : vector<32x128xf32> to vector<1x32x128xf32>
    %211 = vector.shape_cast %195 : vector<32x128xf32> to vector<1x32x128xf32>
    %212 = vector.shape_cast %200 : vector<32x128xf32> to vector<1x32x128xf32>
    %213 = vector.shape_cast %205 : vector<32x128xf32> to vector<1x32x128xf32>
    %214 = tpu.concatenate %206, %207, %208, %209, %210, %211, %212, %213 in 0 : vector<1x32x128xf32>, vector<1x32x128xf32>, vector<1x32x128xf32>, vector<1x32x128xf32>, vector<1x32x128xf32>, vector<1x32x128xf32>, vector<1x32x128xf32>, vector<1x32x128xf32> -> vector<8x32x128xf32>
    %215 = arith.addf %0, %214 : vector<8x32x128xf32>
    %cst_45 = arith.constant dense<0.000000e+00> : vector<8x128xf32>
    %216 = vector.multi_reduction <add>, %215, %cst_45 [1] : vector<8x32x128xf32> to vector<8x128xf32>
    %217 = vector.shape_cast %216 : vector<8x128xf32> to vector<8x1x128xf32>
    %cst_46 = arith.constant 3.200000e+01 : f32
    %218 = vector.broadcast %cst_46 : f32 to vector<8x1x128xf32>
    %219 = arith.divf %217, %218 : vector<8x1x128xf32>
    %220 = vector.broadcast %219 : vector<8x1x128xf32> to vector<8x32x128xf32>
    %221 = arith.subf %215, %220 : vector<8x32x128xf32>
    %222 = arith.mulf %221, %221 : vector<8x32x128xf32>
    %cst_47 = arith.constant dense<0.000000e+00> : vector<8x128xf32>
    %223 = vector.multi_reduction <add>, %222, %cst_47 [1] : vector<8x32x128xf32> to vector<8x128xf32>
    %224 = vector.shape_cast %223 : vector<8x128xf32> to vector<8x1x128xf32>
    %cst_48 = arith.constant 3.200000e+01 : f32
    %225 = vector.broadcast %cst_48 : f32 to vector<8x1x128xf32>
    %226 = arith.divf %224, %225 : vector<8x1x128xf32>
    %227 = vector.broadcast %219 : vector<8x1x128xf32> to vector<8x32x128xf32>
    %228 = arith.subf %215, %227 : vector<8x32x128xf32>
    %cst_49 = arith.constant 9.99999974E-6 : f32
    %229 = vector.broadcast %cst_49 : f32 to vector<8x1x128xf32>
    %230 = arith.addf %226, %229 : vector<8x1x128xf32>
    %231 = math.rsqrt %230 : vector<8x1x128xf32>
    %232 = vector.broadcast %231 : vector<8x1x128xf32> to vector<8x32x128xf32>
    %233 = arith.mulf %228, %232 : vector<8x32x128xf32>
    %c0_50 = arith.constant 0 : index
    %c0_51 = arith.constant 0 : index
    %234 = vector.load %arg6[%c0_50, %c0_51] : memref<32x1xf32, #tpu.memory_space<vmem>>, vector<32x1xf32>
    %235 = vector.shape_cast %234 : vector<32x1xf32> to vector<1x32x1xf32>
    %236 = vector.broadcast %235 : vector<1x32x1xf32> to vector<8x32x128xf32>
    %237 = arith.mulf %233, %236 : vector<8x32x128xf32>
    %c0_52 = arith.constant 0 : index
    %c0_53 = arith.constant 0 : index
    %238 = vector.load %arg7[%c0_52, %c0_53] : memref<32x1xf32, #tpu.memory_space<vmem>>, vector<32x1xf32>
    %239 = vector.shape_cast %238 : vector<32x1xf32> to vector<1x32x1xf32>
    %240 = vector.broadcast %239 : vector<1x32x1xf32> to vector<8x32x128xf32>
    %241 = arith.addf %237, %240 : vector<8x32x128xf32>
    %c0_54 = arith.constant 0 : index
    %c0_55 = arith.constant 0 : index
    %c0_56 = arith.constant 0 : index
    %242 = vector.load %arg8[%c0_54, %c0_55, %c0_56] : memref<8x32x128xf32, #tpu.memory_space<vmem>>, vector<8x32x128xf32>
    tpu.vector_store %arg8[%c0_54, %c0_55, %c0_56], %241 {strides = array<i32>} : memref<8x32x128xf32, #tpu.memory_space<vmem>>, vector<8x32x128xf32>,
    return
  }
  func.func @transform_0(%arg0: i32) -> (i32, i32, i32) {
    %c0_i32 = arith.constant 0 : i32
    %c0_i32_0 = arith.constant 0 : i32
    %c0_i32_1 = arith.constant 0 : i32
    return %c0_i32, %c0_i32_0, %arg0 : i32, i32, i32
  }
  func.func @transform_1(%arg0: i32) -> (i32, i32) {
    %c0_i32 = arith.constant 0 : i32
    %c0_i32_0 = arith.constant 0 : i32
    %c0_i32_1 = arith.constant 0 : i32
    return %c0_i32, %c0_i32_0 : i32, i32
  }
  func.func @transform_2(%arg0: i32) -> (i32, i32) {
    %c0_i32 = arith.constant 0 : i32
    %c0_i32_0 = arith.constant 0 : i32
    %c0_i32_1 = arith.constant 0 : i32
    return %c0_i32, %c0_i32_0 : i32, i32
  }
  func.func @transform_3(%arg0: i32) -> (i32, i32) {
    %c0_i32 = arith.constant 0 : i32
    %c0_i32_0 = arith.constant 0 : i32
    %c0_i32_1 = arith.constant 0 : i32
    return %c0_i32, %c0_i32_0 : i32, i32
  }
  func.func @transform_4(%arg0: i32) -> (i32, i32) {
    %c0_i32 = arith.constant 0 : i32
    %c0_i32_0 = arith.constant 0 : i32
    %c0_i32_1 = arith.constant 0 : i32
    return %c0_i32, %c0_i32_0 : i32, i32
  }
  func.func @transform_5(%arg0: i32) -> (i32, i32) {
    %c0_i32 = arith.constant 0 : i32
    %c0_i32_0 = arith.constant 0 : i32
    %c0_i32_1 = arith.constant 0 : i32
    return %c0_i32, %c0_i32_0 : i32, i32
  }
  func.func @transform_6(%arg0: i32) -> (i32, i32) {
    %c0_i32 = arith.constant 0 : i32
    %c0_i32_0 = arith.constant 0 : i32
    %c0_i32_1 = arith.constant 0 : i32
    return %c0_i32, %c0_i32_0 : i32, i32
  }
  func.func @transform_7(%arg0: i32) -> (i32, i32, i32) {
    %c0_i32 = arith.constant 0 : i32
    %c0_i32_0 = arith.constant 0 : i32
    %c0_i32_1 = arith.constant 0 : i32
    return %c0_i32, %c0_i32_0, %arg0 : i32, i32, i32
  }
}

</mosaic_0001>

<llo_original>
// kernel: tpu_custom_call.1
$region0: #{tpu_custom_call.1}
  #allocation0 [shape = 'u32[]', space=smem, size = 0x4, offset = 0x4, fixed_abs, tag = 'smem constant byte address 0x4 - core index']
  #allocation1 [shape = 'u32[144,128]{1,0:T(1,128)}', space=vmem, size = 0x12000, scoped, tag = 'internal scratch']
  %s0 = inlined_call_operand.vmem [shape: f32[8,32,128], index: 0, kind: input, shape index: {}]
  %s1 = inlined_call_operand.vmem [shape: f32[96,32], index: 1, kind: input, shape index: {}]
  %s2 = inlined_call_operand.vmem [shape: f32[96,1], index: 2, kind: input, shape index: {}]
  %s3 = inlined_call_operand.vmem [shape: f32[32,32], index: 3, kind: input, shape index: {}]
  %s4 = inlined_call_operand.vmem [shape: f32[32,1], index: 4, kind: input, shape index: {}]
  %s5 = inlined_call_operand.vmem [shape: f32[32,1], index: 5, kind: input, shape index: {}]
  %s6 = inlined_call_operand.vmem [shape: f32[32,1], index: 6, kind: input, shape index: {}]
  %s7 = inlined_call_operand.hbm [shape: f32[8,32,128], index: 7, kind: output, shape index: {}]
  %s8 = sld [smem:[#allocation0]]
  $region38: #{tpu_custom_call.1} parent=0
    _
  %s10 = ssub.s32 1, %s8
  %s11 = scalar_select 0, %s10, %s8
  $region1: #{tpu_custom_call.1} parent=0
    #allocation2 [shape = 'u8[131072]{0}', space=vmem, size = 0x20000, scoped, tag = 'output window, operand 0, single buffered']
    #allocation3 [shape = 's32[1]{0}', space=sflag, size = 0x4, scoped, tag = 'scoped memory for tpu_custom_call.1']
    %12 = vsyncpa [#allocation3], 0
    // Predicated region
    $region2: #{tpu_custom_call.1} parent=1 // pred_check
      _
    $region3: #{tpu_custom_call.1} parent=1 // pred_check_branch
      %14 = sbr.rel (0) target = $region5
    $region4: #{tpu_custom_call.1} parent=1 // pred_region
      _
    $region5: #{tpu_custom_call.1} parent=1 // pred_fallthru
      _
    // Predicated region
    $region6: #{tpu_custom_call.1} parent=1 // pred_check
      _
    $region7: #{tpu_custom_call.1} parent=1 // pred_check_branch
      %16 = sbr.rel (0) target = $region9
    $region8: #{tpu_custom_call.1} parent=1 // pred_region
      _
    $region9: #{tpu_custom_call.1} parent=1 // pred_fallthru
      _
    // Predicated region
    $region10: #{tpu_custom_call.1} parent=1 // pred_check
      _
    $region11: #{tpu_custom_call.1} parent=1 // pred_check_branch
      %18 = sbr.rel (0) target = $region13
    $region12: #{tpu_custom_call.1} parent=1 // pred_region
      _
    $region13: #{tpu_custom_call.1} parent=1 // pred_fallthru
      _
    // Predicated region
    $region14: #{tpu_custom_call.1} parent=1 // pred_check
      _
    $region15: #{tpu_custom_call.1} parent=1 // pred_check_branch
      %20 = sbr.rel (0) target = $region17
    $region16: #{tpu_custom_call.1} parent=1 // pred_region
      _
    $region17: #{tpu_custom_call.1} parent=1 // pred_fallthru
      _
    // Predicated region
    $region18: #{tpu_custom_call.1} parent=1 // pred_check
      _
    $region19: #{tpu_custom_call.1} parent=1 // pred_check_branch
      %22 = sbr.rel (0) target = $region21
    $region20: #{tpu_custom_call.1} parent=1 // pred_region
      _
    $region21: #{tpu_custom_call.1} parent=1 // pred_fallthru
      _
    // Predicated region
    $region22: #{tpu_custom_call.1} parent=1 // pred_check
      _
    $region23: #{tpu_custom_call.1} parent=1 // pred_check_branch
      %24 = sbr.rel (0) target = $region25
    $region24: #{tpu_custom_call.1} parent=1 // pred_region
      _
    $region25: #{tpu_custom_call.1} parent=1 // pred_fallthru
      _
    // Predicated region
    $region26: #{tpu_custom_call.1} parent=1 // pred_check
      _
    $region27: #{tpu_custom_call.1} parent=1 // pred_check_branch
      %26 = sbr.rel (0) target = $region29
    $region28: #{tpu_custom_call.1} parent=1 // pred_region
      _
    $region29: #{tpu_custom_call.1} parent=1 // pred_fallthru
      _
    %v27 = vld [vmem:[%s0] sm:$0xff]
    %v28 = vld [vmem:[%s0 + $0x8] sm:$0xff]
    %v29 = vld [vmem:[%s0 + $0x10] sm:$0xff]
    %v30 = vld [vmem:[%s0 + $0x18] sm:$0xff]
    %v31 = vld [vmem:[%s0 + $0x20] sm:$0xff]
    %v32 = vld [vmem:[%s0 + $0x28] sm:$0xff]
    %v33 = vld [vmem:[%s0 + $0x30] sm:$0xff]
    %v34 = vld [vmem:[%s0 + $0x38] sm:$0xff]
    %v35 = vld [vmem:[%s0 + $0x40] sm:$0xff]
    %v36 = vld [vmem:[%s0 + $0x48] sm:$0xff]
    %v37 = vld [vmem:[%s0 + $0x50] sm:$0xff]
    %v38 = vld [vmem:[%s0 + $0x58] sm:$0xff]
    %v39 = vld [vmem:[%s0 + $0x60] sm:$0xff]
    %v40 = vld [vmem:[%s0 + $0x68] sm:$0xff]
    %v41 = vld [vmem:[%s0 + $0x70] sm:$0xff]
    %v42 = vld [vmem:[%s0 + $0x78] sm:$0xff]
    %v43 = vld [vmem:[%s0 + $0x80] sm:$0xff]
    %v44 = vld [vmem:[%s0 + $0x88] sm:$0xff]
    %v45 = vld [vmem:[%s0 + $0x90] sm:$0xff]
    %v46 = vld [vmem:[%s0 + $0x98] sm:$0xff]
    %v47 = vld [vmem:[%s0 + $0xa0] sm:$0xff]
    %v48 = vld [vmem:[%s0 + $0xa8] sm:$0xff]
    %v49 = vld [vmem:[%s0 + $0xb0] sm:$0xff]
    %v50 = vld [vmem:[%s0 + $0xb8] sm:$0xff]
    %v51 = vld [vmem:[%s0 + $0xc0] sm:$0xff]
    %v52 = vld [vmem:[%s0 + $0xc8] sm:$0xff]
    %v53 = vld [vmem:[%s0 + $0xd0] sm:$0xff]
    %v54 = vld [vmem:[%s0 + $0xd8] sm:$0xff]
    %v55 = vld [vmem:[%s0 + $0xe0] sm:$0xff]
    %v56 = vld [vmem:[%s0 + $0xe8] sm:$0xff]
    %v57 = vld [vmem:[%s0 + $0xf0] sm:$0xff]
    %v58 = vld [vmem:[%s0 + $0xf8] sm:$0xff]
    %v59 = vld [vmem:[%s1] sm:$0xff]
    %v60 = vld [vmem:[%s1 + $0x8] sm:$0xff]
    %v61 = vld [vmem:[%s1 + $0x10] sm:$0xff]
    %v62 = vld [vmem:[%s1 + $0x18] sm:$0xff]
    %v63 = vld [vmem:[%s1 + $0x20] sm:$0xff]
    %v64 = vld [vmem:[%s1 + $0x28] sm:$0xff]
    %v65 = vld [vmem:[%s1 + $0x30] sm:$0xff]
    %v66 = vld [vmem:[%s1 + $0x38] sm:$0xff]
    %v67 = vld [vmem:[%s1 + $0x40] sm:$0xff]
    %v68 = vld [vmem:[%s1 + $0x48] sm:$0xff]
    %v69 = vld [vmem:[%s1 + $0x50] sm:$0xff]
    %v70 = vld [vmem:[%s1 + $0x58] sm:$0xff]
    %v71 = vld [vmem:[%s3] sm:$0xff]
    %v72 = vld [vmem:[%s3 + $0x8] sm:$0xff]
    %v73 = vld [vmem:[%s3 + $0x10] sm:$0xff]
    %v74 = vld [vmem:[%s3 + $0x18] sm:$0xff]
    %v75 = vld [vmem:[%s2] sm:$0xff]
    %v76 = vld [vmem:[%s2 + $0x8] sm:$0xff]
    %v77 = vld [vmem:[%s2 + $0x10] sm:$0xff]
    %v78 = vld [vmem:[%s2 + $0x18] sm:$0xff]
    %v79 = vld [vmem:[%s2 + $0x20] sm:$0xff]
    %v80 = vld [vmem:[%s2 + $0x28] sm:$0xff]
    %v81 = vld [vmem:[%s2 + $0x30] sm:$0xff]
    %v82 = vld [vmem:[%s2 + $0x38] sm:$0xff]
    %v83 = vld [vmem:[%s2 + $0x40] sm:$0xff]
    %v84 = vld [vmem:[%s2 + $0x48] sm:$0xff]
    %v85 = vld [vmem:[%s2 + $0x50] sm:$0xff]
    %v86 = vld [vmem:[%s2 + $0x58] sm:$0xff]
    %v87 = vld [vmem:[%s4] sm:$0xff]
    %v88 = vld [vmem:[%s4 + $0x8] sm:$0xff]
    %v89 = vld [vmem:[%s4 + $0x10] sm:$0xff]
    %v90 = vld [vmem:[%s4 + $0x18] sm:$0xff]
    %92 = vset.pattern.permute.xlu0 0
    %93 = vperm.xlu0 %92, %v75
    %v94 = vpop.permute.xlu0 %93
    %97 = vset.pattern.permute.xlu0 0
    %98 = vperm.xlu0 %97, %v76
    %v99 = vpop.permute.xlu0 %98
    %102 = vset.pattern.permute.xlu0 0
    %103 = vperm.xlu0 %102, %v77
    %v104 = vpop.permute.xlu0 %103
    %107 = vset.pattern.permute.xlu0 0
    %108 = vperm.xlu0 %107, %v78
    %v109 = vpop.permute.xlu0 %108
    %112 = vset.pattern.permute.xlu0 0
    %113 = vperm.xlu0 %112, %v79
    %v114 = vpop.permute.xlu0 %113
    %117 = vset.pattern.permute.xlu0 0
    %118 = vperm.xlu0 %117, %v80
    %v119 = vpop.permute.xlu0 %118
    %122 = vset.pattern.permute.xlu0 0
    %123 = vperm.xlu0 %122, %v81
    %v124 = vpop.permute.xlu0 %123
    %127 = vset.pattern.permute.xlu0 0
    %128 = vperm.xlu0 %127, %v82
    %v129 = vpop.permute.xlu0 %128
    %132 = vset.pattern.permute.xlu0 0
    %133 = vperm.xlu0 %132, %v83
    %v134 = vpop.permute.xlu0 %133
    %137 = vset.pattern.permute.xlu0 0
    %138 = vperm.xlu0 %137, %v84
    %v139 = vpop.permute.xlu0 %138
    %142 = vset.pattern.permute.xlu0 0
    %143 = vperm.xlu0 %142, %v85
    %v144 = vpop.permute.xlu0 %143
    %147 = vset.pattern.permute.xlu0 0
    %148 = vperm.xlu0 %147, %v86
    %v149 = vpop.permute.xlu0 %148
    %vm151 = vcmask 261120
    %v153 = vsel %vm151, %v59, 0
    %v156 = vsel %vm151, %v60, 0
    %v159 = vsel %vm151, %v61, 0
    %v162 = vsel %vm151, %v62, 0
    %v165 = vsel %vm151, %v63, 0
    %v168 = vsel %vm151, %v64, 0
    %v171 = vsel %vm151, %v65, 0
    %v174 = vsel %vm151, %v66, 0
    %v177 = vsel %vm151, %v67, 0
    %v180 = vsel %vm151, %v68, 0
    %v183 = vsel %vm151, %v69, 0
    %v186 = vsel %vm151, %v70, 0
    %188 = vmatprep.subr.mxu0 0.0
    %189 = vmatpush1.msra.mxu0 %v27
    %190 = vmatprep.subr.mxu0 0.0
    %191 = vmatpush1.msra.mxu0 %v28
    %192 = vmatprep.subr.mxu0 0.0
    %193 = vmatpush1.msra.mxu0 %v29
    %194 = vmatprep.subr.mxu0 0.0
    %195 = vmatpush1.msra.mxu0 %v30
    %196 = vmatprep.subr.mxu0 0.0
    %197 = vmatpush1.msra.mxu0 0.0
    %198 = vmatprep.subr.mxu0 0.0
    %199 = vmatpush1.msra.mxu0 0.0
    %200 = vmatprep.subr.mxu0 0.0
    %201 = vmatpush1.msra.mxu0 0.0
    %202 = vmatprep.subr.mxu0 0.0
    %203 = vmatpush1.msra.mxu0 0.0
    %204 = vmatprep.subr.mxu0 0.0
    %205 = vmatpush1.msra.mxu0 0.0
    %206 = vmatprep.subr.mxu0 0.0
    %207 = vmatpush1.msra.mxu0 0.0
    %208 = vmatprep.subr.mxu0 0.0
    %209 = vmatpush1.msra.mxu0 0.0
    %210 = vmatprep.subr.mxu0 0.0
    %211 = vmatpush1.msra.mxu0 0.0
    %212 = vmatprep.subr.mxu0 0.0
    %213 = vmatpush1.msra.mxu0 0.0
    %214 = vmatprep.subr.mxu0 0.0
    %215 = vmatpush1.msra.mxu0 0.0
    %216 = vmatprep.subr.mxu0 0.0
    %217 = vmatpush1.msra.mxu0 0.0
    %218 = vmatprep.subr.mxu0 0.0
    %219 = vmatpush1.msra.mxu0 0.0
    %220 = vmatprep.subr.mxu0 0.0
    %221 = vmatpush1.msra.mxu0 0.0
    %222 = vmatprep.subr.mxu0 0.0
    %223 = vmatpush1.msra.mxu0 0.0
    %224 = vmatprep.subr.mxu0 0.0
    %225 = vmatpush1.msra.mxu0 0.0
    %226 = vmatprep.subr.mxu0 0.0
    %227 = vmatpush1.msra.mxu0 0.0
    %228 = vmatprep.subr.mxu0 0.0
    %229 = vmatpush1.msra.mxu0 0.0
    %230 = vmatprep.subr.mxu0 0.0
    %231 = vmatpush1.msra.mxu0 0.0
    %232 = vmatprep.subr.mxu0 0.0
    %233 = vmatpush1.msra.mxu0 0.0
    %234 = vmatprep.subr.mxu0 0.0
    %235 = vmatpush1.msra.mxu0 0.0
    %236 = vmatprep.subr.mxu0 0.0
    %237 = vmatpush1.msra.mxu0 0.0
    %238 = vmatprep.subr.mxu0 0.0
    %239 = vmatpush1.msra.mxu0 0.0
    %240 = vmatprep.subr.mxu0 0.0
    %241 = vmatpush1.msra.mxu0 0.0
    %242 = vmatprep.subr.mxu0 0.0
    %243 = vmatpush1.msra.mxu0 0.0
    %244 = vmatprep.subr.mxu0 0.0
    %245 = vmatpush1.msra.mxu0 0.0
    %246 = vmatprep.subr.mxu0 0.0
    %247 = vmatpush1.msra.mxu0 0.0
    %248 = vmatprep.subr.mxu0 0.0
    %249 = vmatpush1.msra.mxu0 0.0
    %250 = vmatprep.subr.mxu0 0.0
    %251 = vmatpush1.msra.mxu0 0.0
    %252 = vmatprep.mubr.f32.mxu0 0.0
    %253 = vmatmul.mubr.f32.gmra.mrb[0].mxu0 %v153
    %v254 = vpop.f32.mrb[0].mxu0
    %v255 = vadd.f32 %v94, %v254
    %v256 = vpop.f32.mrb[0].mxu0
    %257 = vmatprep.mubr.f32.mxu0 0.0
    %258 = vmatmul.mubr.f32.gmra.mrb[0].mxu0 %v156
    %v259 = vpop.f32.mrb[0].mxu0
    %v260 = vadd.f32 %v99, %v259
    %v261 = vpop.f32.mrb[0].mxu0
    %262 = vmatprep.mubr.f32.mxu0 0.0
    %263 = vmatmul.mubr.f32.gmra.mrb[0].mxu0 %v159
    %v264 = vpop.f32.mrb[0].mxu0
    %v265 = vadd.f32 %v104, %v264
    %v266 = vpop.f32.mrb[0].mxu0
    %267 = vmatprep.mubr.f32.mxu0 0.0
    %268 = vmatmul.mubr.f32.gmra.mrb[0].mxu0 %v162
    %v269 = vpop.f32.mrb[0].mxu0
    %v270 = vadd.f32 %v109, %v269
    %v271 = vpop.f32.mrb[0].mxu0
    %272 = vmatprep.mubr.f32.mxu0 0.0
    %273 = vmatmul.mubr.f32.gmra.mrb[0].mxu0 %v165
    %v274 = vpop.f32.mrb[0].mxu0
    %v275 = vadd.f32 %v114, %v274
    %v276 = vpop.f32.mrb[0].mxu0
    %277 = vmatprep.mubr.f32.mxu0 0.0
    %278 = vmatmul.mubr.f32.gmra.mrb[0].mxu0 %v168
    %v279 = vpop.f32.mrb[0].mxu0
    %v280 = vadd.f32 %v119, %v279
    %v281 = vpop.f32.mrb[0].mxu0
    %282 = vmatprep.mubr.f32.mxu0 0.0
    %283 = vmatmul.mubr.f32.gmra.mrb[0].mxu0 %v171
    %v284 = vpop.f32.mrb[0].mxu0
    %v285 = vadd.f32 %v124, %v284
    %v286 = vpop.f32.mrb[0].mxu0
    %287 = vmatprep.mubr.f32.mxu0 0.0
    %288 = vmatmul.mubr.f32.gmra.mrb[0].mxu0 %v174
    %v289 = vpop.f32.mrb[0].mxu0
    %v290 = vadd.f32 %v129, %v289
    %v291 = vpop.f32.mrb[0].mxu0
    %292 = vmatprep.mubr.f32.mxu0 0.0
    %293 = vmatmul.mubr.f32.gmra.mrb[0].mxu0 %v177
    %v294 = vpop.f32.mrb[0].mxu0
    %v295 = vadd.f32 %v134, %v294
    %v296 = vpop.f32.mrb[0].mxu0
    %297 = vmatprep.mubr.f32.mxu0 0.0
    %298 = vmatmul.mubr.f32.gmra.mrb[0].mxu0 %v180
    %v299 = vpop.f32.mrb[0].mxu0
    %v300 = vadd.f32 %v139, %v299
    %v301 = vpop.f32.mrb[0].mxu0
    %302 = vmatprep.mubr.f32.mxu0 0.0
    %303 = vmatmul.mubr.f32.gmra.mrb[0].mxu0 %v183
    %v304 = vpop.f32.mrb[0].mxu0
    %v305 = vadd.f32 %v144, %v304
    %v306 = vpop.f32.mrb[0].mxu0
    %307 = vmatprep.mubr.f32.mxu0 0.0
    %308 = vmatmul.mubr.f32.gmra.mrb[0].mxu0 %v186
    %v309 = vpop.f32.mrb[0].mxu0
    %v310 = vadd.f32 %v149, %v309
    %v311 = vpop.f32.mrb[0].mxu0
    %312 = vdwg.mxu0
    %313 = vmatprep.subr.mxu0 0.0
    %314 = vmatpush1.msra.mxu0 %v31
    %315 = vmatprep.subr.mxu0 0.0
    %316 = vmatpush1.msra.mxu0 %v32
    %317 = vmatprep.subr.mxu0 0.0
    %318 = vmatpush1.msra.mxu0 %v33
    %319 = vmatprep.subr.mxu0 0.0
    %320 = vmatpush1.msra.mxu0 %v34
    %321 = vmatprep.subr.mxu0 0.0
    %322 = vmatpush1.msra.mxu0 0.0
    %323 = vmatprep.subr.mxu0 0.0
    %324 = vmatpush1.msra.mxu0 0.0
    %325 = vmatprep.subr.mxu0 0.0
    %326 = vmatpush1.msra.mxu0 0.0
    %327 = vmatprep.subr.mxu0 0.0
    %328 = vmatpush1.msra.mxu0 0.0
    %329 = vmatprep.subr.mxu0 0.0
    %330 = vmatpush1.msra.mxu0 0.0
    %331 = vmatprep.subr.mxu0 0.0
    %332 = vmatpush1.msra.mxu0 0.0
    %333 = vmatprep.subr.mxu0 0.0
    %334 = vmatpush1.msra.mxu0 0.0
    %335 = vmatprep.subr.mxu0 0.0
    %336 = vmatpush1.msra.mxu0 0.0
    %337 = vmatprep.subr.mxu0 0.0
    %338 = vmatpush1.msra.mxu0 0.0
    %339 = vmatprep.subr.mxu0 0.0
    %340 = vmatpush1.msra.mxu0 0.0
    %341 = vmatprep.subr.mxu0 0.0
    %342 = vmatpush1.msra.mxu0 0.0
    %343 = vmatprep.subr.mxu0 0.0
    %344 = vmatpush1.msra.mxu0 0.0
    %345 = vmatprep.subr.mxu0 0.0
    %346 = vmatpush1.msra.mxu0 0.0
    %347 = vmatprep.subr.mxu0 0.0
    %348 = vmatpush1.msra.mxu0 0.0
    %349 = vmatprep.subr.mxu0 0.0
    %350 = vmatpush1.msra.mxu0 0.0
    %351 = vmatprep.subr.mxu0 0.0
    %352 = vmatpush1.msra.mxu0 0.0
    %353 = vmatprep.subr.mxu0 0.0
    %354 = vmatpush1.msra.mxu0 0.0
    %355 = vmatprep.subr.mxu0 0.0
    %356 = vmatpush1.msra.mxu0 0.0
    %357 = vmatprep.subr.mxu0 0.0
    %358 = vmatpush1.msra.mxu0 0.0
    %359 = vmatprep.subr.mxu0 0.0
    %360 = vmatpush1.msra.mxu0 0.0
    %361 = vmatprep.subr.mxu0 0.0
    %362 = vmatpush1.msra.mxu0 0.0
    %363 = vmatprep.subr.mxu0 0.0
    %364 = vmatpush1.msra.mxu0 0.0
    %365 = vmatprep.subr.mxu0 0.0
    %366 = vmatpush1.msra.mxu0 0.0
    %367 = vmatprep.subr.mxu0 0.0
    %368 = vmatpush1.msra.mxu0 0.0
    %369 = vmatprep.subr.mxu0 0.0
    %370 = vmatpush1.msra.mxu0 0.0
    %371 = vmatprep.subr.mxu0 0.0
    %372 = vmatpush1.msra.mxu0 0.0
    %373 = vmatprep.subr.mxu0 0.0
    %374 = vmatpush1.msra.mxu0 0.0
    %375 = vmatprep.subr.mxu0 0.0
    %376 = vmatpush1.msra.mxu0 0.0
    %377 = vmatprep.mubr.f32.mxu0 0.0
    %378 = vmatmul.mubr.f32.gmra.mrb[0].mxu0 %v153
    %v379 = vpop.f32.mrb[0].mxu0
    %v380 = vadd.f32 %v94, %v379
    %v381 = vpop.f32.mrb[0].mxu0
    %382 = vmatprep.mubr.f32.mxu0 0.0
    %383 = vmatmul.mubr.f32.gmra.mrb[0].mxu0 %v156
    %v384 = vpop.f32.mrb[0].mxu0
    %v385 = vadd.f32 %v99, %v384
    %v386 = vpop.f32.mrb[0].mxu0
    %387 = vmatprep.mubr.f32.mxu0 0.0
    %388 = vmatmul.mubr.f32.gmra.mrb[0].mxu0 %v159
    %v389 = vpop.f32.mrb[0].mxu0
    %v390 = vadd.f32 %v104, %v389
    %v391 = vpop.f32.mrb[0].mxu0
    %392 = vmatprep.mubr.f32.mxu0 0.0
    %393 = vmatmul.mubr.f32.gmra.mrb[0].mxu0 %v162
    %v394 = vpop.f32.mrb[0].mxu0
    %v395 = vadd.f32 %v109, %v394
    %v396 = vpop.f32.mrb[0].mxu0
    %397 = vmatprep.mubr.f32.mxu0 0.0
    %398 = vmatmul.mubr.f32.gmra.mrb[0].mxu0 %v165
    %v399 = vpop.f32.mrb[0].mxu0
    %v400 = vadd.f32 %v114, %v399
    %v401 = vpop.f32.mrb[0].mxu0
    %402 = vmatprep.mubr.f32.mxu0 0.0
    %403 = vmatmul.mubr.f32.gmra.mrb[0].mxu0 %v168
    %v404 = vpop.f32.mrb[0].mxu0
    %v405 = vadd.f32 %v119, %v404
    %v406 = vpop.f32.mrb[0].mxu0
    %407 = vmatprep.mubr.f32.mxu0 0.0
    %408 = vmatmul.mubr.f32.gmra.mrb[0].mxu0 %v171
    %v409 = vpop.f32.mrb[0].mxu0
    %v410 = vadd.f32 %v124, %v409
    %v411 = vpop.f32.mrb[0].mxu0
    %412 = vmatprep.mubr.f32.mxu0 0.0
    %413 = vmatmul.mubr.f32.gmra.mrb[0].mxu0 %v174
    %v414 = vpop.f32.mrb[0].mxu0
    %v415 = vadd.f32 %v129, %v414
    %v416 = vpop.f32.mrb[0].mxu0
    %417 = vmatprep.mubr.f32.mxu0 0.0
    %418 = vmatmul.mubr.f32.gmra.mrb[0].mxu0 %v177
    %v419 = vpop.f32.mrb[0].mxu0
    %v420 = vadd.f32 %v134, %v419
    %v421 = vpop.f32.mrb[0].mxu0
    %422 = vmatprep.mubr.f32.mxu0 0.0
    %423 = vmatmul.mubr.f32.gmra.mrb[0].mxu0 %v180
    %v424 = vpop.f32.mrb[0].mxu0
    %v425 = vadd.f32 %v139, %v424
    %v426 = vpop.f32.mrb[0].mxu0
    %427 = vmatprep.mubr.f32.mxu0 0.0
    %428 = vmatmul.mubr.f32.gmra.mrb[0].mxu0 %v183
    %v429 = vpop.f32.mrb[0].mxu0
    %v430 = vadd.f32 %v144, %v429
    %v431 = vpop.f32.mrb[0].mxu0
    %432 = vmatprep.mubr.f32.mxu0 0.0
    %433 = vmatmul.mubr.f32.gmra.mrb[0].mxu0 %v186
    %v434 = vpop.f32.mrb[0].mxu0
    %v435 = vadd.f32 %v149, %v434
    %v436 = vpop.f32.mrb[0].mxu0
    %437 = vdwg.mxu0
    %438 = vmatprep.subr.mxu0 0.0
    %439 = vmatpush1.msra.mxu0 %v35
    %440 = vmatprep.subr.mxu0 0.0
    %441 = vmatpush1.msra.mxu0 %v36
    %442 = vmatprep.subr.mxu0 0.0
    %443 = vmatpush1.msra.mxu0 %v37
    %444 = vmatprep.subr.mxu0 0.0
    %445 = vmatpush1.msra.mxu0 %v38
    %446 = vmatprep.subr.mxu0 0.0
    %447 = vmatpush1.msra.mxu0 0.0
    %448 = vmatprep.subr.mxu0 0.0
    %449 = vmatpush1.msra.mxu0 0.0
    %450 = vmatprep.subr.mxu0 0.0
    %451 = vmatpush1.msra.mxu0 0.0
    %452 = vmatprep.subr.mxu0 0.0
    %453 = vmatpush1.msra.mxu0 0.0
    %454 = vmatprep.subr.mxu0 0.0
    %455 = vmatpush1.msra.mxu0 0.0
    %456 = vmatprep.subr.mxu0 0.0
    %457 = vmatpush1.msra.mxu0 0.0
    %458 = vmatprep.subr.mxu0 0.0
    %459 = vmatpush1.msra.mxu0 0.0
    %460 = vmatprep.subr.mxu0 0.0
    %461 = vmatpush1.msra.mxu0 0.0
    %462 = vmatprep.subr.mxu0 0.0
    %463 = vmatpush1.msra.mxu0 0.0
    %464 = vmatprep.subr.mxu0 0.0
    %465 = vmatpush1.msra.mxu0 0.0
    %466 = vmatprep.subr.mxu0 0.0
    %467 = vmatpush1.msra.mxu0 0.0
    %468 = vmatprep.subr.mxu0 0.0
    %469 = vmatpush1.msra.mxu0 0.0
    %470 = vmatprep.subr.mxu0 0.0
    %471 = vmatpush1.msra.mxu0 0.0
    %472 = vmatprep.subr.mxu0 0.0
    %473 = vmatpush1.msra.mxu0 0.0
    %474 = vmatprep.subr.mxu0 0.0
    %475 = vmatpush1.msra.mxu0 0.0
    %476 = vmatprep.subr.mxu0 0.0
    %477 = vmatpush1.msra.mxu0 0.0
    %478 = vmatprep.subr.mxu0 0.0
    %479 = vmatpush1.msra.mxu0 0.0
    %480 = vmatprep.subr.mxu0 0.0
    %481 = vmatpush1.msra.mxu0 0.0
    %482 = vmatprep.subr.mxu0 0.0
    %483 = vmatpush1.msra.mxu0 0.0
    %484 = vmatprep.subr.mxu0 0.0
    %485 = vmatpush1.msra.mxu0 0.0
    %486 = vmatprep.subr.mxu0 0.0
    %487 = vmatpush1.msra.mxu0 0.0
    %488 = vmatprep.subr.mxu0 0.0
    %489 = vmatpush1.msra.mxu0 0.0
    %490 = vmatprep.subr.mxu0 0.0
    %491 = vmatpush1.msra.mxu0 0.0
    %492 = vmatprep.subr.mxu0 0.0
    %493 = vmatpush1.msra.mxu0 0.0
    %494 = vmatprep.subr.mxu0 0.0
    %495 = vmatpush1.msra.mxu0 0.0
    %496 = vmatprep.subr.mxu0 0.0
    %497 = vmatpush1.msra.mxu0 0.0
    %498 = vmatprep.subr.mxu0 0.0
    %499 = vmatpush1.msra.mxu0 0.0
    %500 = vmatprep.subr.mxu0 0.0
    %501 = vmatpush1.msra.mxu0 0.0
    %502 = vmatprep.mubr.f32.mxu0 0.0
    %503 = vmatmul.mubr.f32.gmra.mrb[0].mxu0 %v153
    %v504 = vpop.f32.mrb[0].mxu0
    %v505 = vadd.f32 %v94, %v504
    %v506 = vpop.f32.mrb[0].mxu0
    %507 = vmatprep.mubr.f32.mxu0 0.0
    %508 = vmatmul.mubr.f32.gmra.mrb[0].mxu0 %v156
    %v509 = vpop.f32.mrb[0].mxu0
    %v510 = vadd.f32 %v99, %v509
    %v511 = vpop.f32.mrb[0].mxu0
    %512 = vmatprep.mubr.f32.mxu0 0.0
    %513 = vmatmul.mubr.f32.gmra.mrb[0].mxu0 %v159
    %v514 = vpop.f32.mrb[0].mxu0
    %v515 = vadd.f32 %v104, %v514
    %v516 = vpop.f32.mrb[0].mxu0
    %517 = vmatprep.mubr.f32.mxu0 0.0
    %518 = vmatmul.mubr.f32.gmra.mrb[0].mxu0 %v162
    %v519 = vpop.f32.mrb[0].mxu0
    %v520 = vadd.f32 %v109, %v519
    %v521 = vpop.f32.mrb[0].mxu0
    %522 = vmatprep.mubr.f32.mxu0 0.0
    %523 = vmatmul.mubr.f32.gmra.mrb[0].mxu0 %v165
    %v524 = vpop.f32.mrb[0].mxu0
    %v525 = vadd.f32 %v114, %v524
    %v526 = vpop.f32.mrb[0].mxu0
    %527 = vmatprep.mubr.f32.mxu0 0.0
    %528 = vmatmul.mubr.f32.gmra.mrb[0].mxu0 %v168
    %v529 = vpop.f32.mrb[0].mxu0
    %v530 = vadd.f32 %v119, %v529
    %v531 = vpop.f32.mrb[0].mxu0
    %532 = vmatprep.mubr.f32.mxu0 0.0
    %533 = vmatmul.mubr.f32.gmra.mrb[0].mxu0 %v171
    %v534 = vpop.f32.mrb[0].mxu0
    %v535 = vadd.f32 %v124, %v534
    %v536 = vpop.f32.mrb[0].mxu0
    %537 = vmatprep.mubr.f32.mxu0 0.0
    %538 = vmatmul.mubr.f32.gmra.mrb[0].mxu0 %v174
    %v539 = vpop.f32.mrb[0].mxu0
    %v540 = vadd.f32 %v129, %v539
    %v541 = vpop.f32.mrb[0].mxu0
    %542 = vmatprep.mubr.f32.mxu0 0.0
    %543 = vmatmul.mubr.f32.gmra.mrb[0].mxu0 %v177
    %v544 = vpop.f32.mrb[0].mxu0
    %v545 = vadd.f32 %v134, %v544
    %v546 = vpop.f32.mrb[0].mxu0
    %547 = vmatprep.mubr.f32.mxu0 0.0
    %548 = vmatmul.mubr.f32.gmra.mrb[0].mxu0 %v180
    %v549 = vpop.f32.mrb[0].mxu0
    %v550 = vadd.f32 %v139, %v549
    %v551 = vpop.f32.mrb[0].mxu0
    %552 = vmatprep.mubr.f32.mxu0 0.0
    %553 = vmatmul.mubr.f32.gmra.mrb[0].mxu0 %v183
    %v554 = vpop.f32.mrb[0].mxu0
    %v555 = vadd.f32 %v144, %v554
    %v556 = vpop.f32.mrb[0].mxu0
    %557 = vmatprep.mubr.f32.mxu0 0.0
    %558 = vmatmul.mubr.f32.gmra.mrb[0].mxu0 %v186
    %v559 = vpop.f32.mrb[0].mxu0
    %v560 = vadd.f32 %v149, %v559
    %v561 = vpop.f32.mrb[0].mxu0
    %562 = vdwg.mxu0
    %563 = vmatprep.subr.mxu0 0.0
    %564 = vmatpush1.msra.mxu0 %v39
    %565 = vmatprep.subr.mxu0 0.0
    %566 = vmatpush1.msra.mxu0 %v40
    %567 = vmatprep.subr.mxu0 0.0
    %568 = vmatpush1.msra.mxu0 %v41
    %569 = vmatprep.subr.mxu0 0.0
    %570 = vmatpush1.msra.mxu0 %v42
    %571 = vmatprep.subr.mxu0 0.0
    %572 = vmatpush1.msra.mxu0 0.0
    %573 = vmatprep.subr.mxu0 0.0
    %574 = vmatpush1.msra.mxu0 0.0
    %575 = vmatprep.subr.mxu0 0.0
    %576 = vmatpush1.msra.mxu0 0.0
    %577 = vmatprep.subr.mxu0 0.0
    %578 = vmatpush1.msra.mxu0 0.0
    %579 = vmatprep.subr.mxu0 0.0
    %580 = vmatpush1.msra.mxu0 0.0
    %581 = vmatprep.subr.mxu0 0.0
    %582 = vmatpush1.msra.mxu0 0.0
    %583 = vmatprep.subr.mxu0 0.0
    %584 = vmatpush1.msra.mxu0 0.0
    %585 = vmatprep.subr.mxu0 0.0
    %586 = vmatpush1.msra.mxu0 0.0
    %587 = vmatprep.subr.mxu0 0.0
    %588 = vmatpush1.msra.mxu0 0.0
    %589 = vmatprep.subr.mxu0 0.0
    %590 = vmatpush1.msra.mxu0 0.0
    %591 = vmatprep.subr.mxu0 0.0
    %592 = vmatpush1.msra.mxu0 0.0
    %593 = vmatprep.subr.mxu0 0.0
    %594 = vmatpush1.msra.mxu0 0.0
    %595 = vmatprep.subr.mxu0 0.0
    %596 = vmatpush1.msra.mxu0 0.0
    %597 = vmatprep.subr.mxu0 0.0
    %598 = vmatpush1.msra.mxu0 0.0
    %599 = vmatprep.subr.mxu0 0.0
    %600 = vmatpush1.msra.mxu0 0.0
    %601 = vmatprep.subr.mxu0 0.0
    %602 = vmatpush1.msra.mxu0 0.0
    %603 = vmatprep.subr.mxu0 0.0
    %604 = vmatpush1.msra.mxu0 0.0
    %605 = vmatprep.subr.mxu0 0.0
    %606 = vmatpush1.msra.mxu0 0.0
    %607 = vmatprep.subr.mxu0 0.0
    %608 = vmatpush1.msra.mxu0 0.0
    %609 = vmatprep.subr.mxu0 0.0
    %610 = vmatpush1.msra.mxu0 0.0
    %611 = vmatprep.subr.mxu0 0.0
    %612 = vmatpush1.msra.mxu0 0.0
    %613 = vmatprep.subr.mxu0 0.0
    %614 = vmatpush1.msra.mxu0 0.0
    %615 = vmatprep.subr.mxu0 0.0
    %616 = vmatpush1.msra.mxu0 0.0
    %617 = vmatprep.subr.mxu0 0.0
    %618 = vmatpush1.msra.mxu0 0.0
    %619 = vmatprep.subr.mxu0 0.0
    %620 = vmatpush1.msra.mxu0 0.0
    %621 = vmatprep.subr.mxu0 0.0
    %622 = vmatpush1.msra.mxu0 0.0
    %623 = vmatprep.subr.mxu0 0.0
    %624 = vmatpush1.msra.mxu0 0.0
    %625 = vmatprep.subr.mxu0 0.0
    %626 = vmatpush1.msra.mxu0 0.0
    %627 = vmatprep.mubr.f32.mxu0 0.0
    %628 = vmatmul.mubr.f32.gmra.mrb[0].mxu0 %v153
    %v629 = vpop.f32.mrb[0].mxu0
    %v630 = vadd.f32 %v94, %v629
    %v631 = vpop.f32.mrb[0].mxu0
    %632 = vmatprep.mubr.f32.mxu0 0.0
    %633 = vmatmul.mubr.f32.gmra.mrb[0].mxu0 %v156
    %v634 = vpop.f32.mrb[0].mxu0
    %v635 = vadd.f32 %v99, %v634
    %v636 = vpop.f32.mrb[0].mxu0
    %637 = vmatprep.mubr.f32.mxu0 0.0
    %638 = vmatmul.mubr.f32.gmra.mrb[0].mxu0 %v159
    %v639 = vpop.f32.mrb[0].mxu0
    %v640 = vadd.f32 %v104, %v639
    %v641 = vpop.f32.mrb[0].mxu0
    %642 = vmatprep.mubr.f32.mxu0 0.0
    %643 = vmatmul.mubr.f32.gmra.mrb[0].mxu0 %v162
    %v644 = vpop.f32.mrb[0].mxu0
    %v645 = vadd.f32 %v109, %v644
    %v646 = vpop.f32.mrb[0].mxu0
    %647 = vmatprep.mubr.f32.mxu0 0.0
    %648 = vmatmul.mubr.f32.gmra.mrb[0].mxu0 %v165
    %v649 = vpop.f32.mrb[0].mxu0
    %v650 = vadd.f32 %v114, %v649
    %v651 = vpop.f32.mrb[0].mxu0
    %652 = vmatprep.mubr.f32.mxu0 0.0
    %653 = vmatmul.mubr.f32.gmra.mrb[0].mxu0 %v168
    %v654 = vpop.f32.mrb[0].mxu0
    %v655 = vadd.f32 %v119, %v654
    %v656 = vpop.f32.mrb[0].mxu0
    %657 = vmatprep.mubr.f32.mxu0 0.0
    %658 = vmatmul.mubr.f32.gmra.mrb[0].mxu0 %v171
    %v659 = vpop.f32.mrb[0].mxu0
    %v660 = vadd.f32 %v124, %v659
    %v661 = vpop.f32.mrb[0].mxu0
    %662 = vmatprep.mubr.f32.mxu0 0.0
    %663 = vmatmul.mubr.f32.gmra.mrb[0].mxu0 %v174
    %v664 = vpop.f32.mrb[0].mxu0
    %v665 = vadd.f32 %v129, %v664
    %v666 = vpop.f32.mrb[0].mxu0
    %667 = vmatprep.mubr.f32.mxu0 0.0
    %668 = vmatmul.mubr.f32.gmra.mrb[0].mxu0 %v177
    %v669 = vpop.f32.mrb[0].mxu0
    %v670 = vadd.f32 %v134, %v669
    %v671 = vpop.f32.mrb[0].mxu0
    %672 = vmatprep.mubr.f32.mxu0 0.0
    %673 = vmatmul.mubr.f32.gmra.mrb[0].mxu0 %v180
    %v674 = vpop.f32.mrb[0].mxu0
    %v675 = vadd.f32 %v139, %v674
    %v676 = vpop.f32.mrb[0].mxu0
    %677 = vmatprep.mubr.f32.mxu0 0.0
    %678 = vmatmul.mubr.f32.gmra.mrb[0].mxu0 %v183
    %v679 = vpop.f32.mrb[0].mxu0
    %v680 = vadd.f32 %v144, %v679
    %v681 = vpop.f32.mrb[0].mxu0
    %682 = vmatprep.mubr.f32.mxu0 0.0
    %683 = vmatmul.mubr.f32.gmra.mrb[0].mxu0 %v186
    %v684 = vpop.f32.mrb[0].mxu0
    %v685 = vadd.f32 %v149, %v684
    %v686 = vpop.f32.mrb[0].mxu0
    %687 = vdwg.mxu0
    %688 = vmatprep.subr.mxu0 0.0
    %689 = vmatpush1.msra.mxu0 %v43
    %690 = vmatprep.subr.mxu0 0.0
    %691 = vmatpush1.msra.mxu0 %v44
    %692 = vmatprep.subr.mxu0 0.0
    %693 = vmatpush1.msra.mxu0 %v45
    %694 = vmatprep.subr.mxu0 0.0
    %695 = vmatpush1.msra.mxu0 %v46
    %696 = vmatprep.subr.mxu0 0.0
    %697 = vmatpush1.msra.mxu0 0.0
    %698 = vmatprep.subr.mxu0 0.0
    %699 = vmatpush1.msra.mxu0 0.0
    %700 = vmatprep.subr.mxu0 0.0
    %701 = vmatpush1.msra.mxu0 0.0
    %702 = vmatprep.subr.mxu0 0.0
    %703 = vmatpush1.msra.mxu0 0.0
    %704 = vmatprep.subr.mxu0 0.0
    %705 = vmatpush1.msra.mxu0 0.0
    %706 = vmatprep.subr.mxu0 0.0
    %707 = vmatpush1.msra.mxu0 0.0
    %708 = vmatprep.subr.mxu0 0.0
    %709 = vmatpush1.msra.mxu0 0.0
    %710 = vmatprep.subr.mxu0 0.0
    %711 = vmatpush1.msra.mxu0 0.0
    %712 = vmatprep.subr.mxu0 0.0
    %713 = vmatpush1.msra.mxu0 0.0
    %714 = vmatprep.subr.mxu0 0.0
    %715 = vmatpush1.msra.mxu0 0.0
    %716 = vmatprep.subr.mxu0 0.0
    %717 = vmatpush1.msra.mxu0 0.0
    %718 = vmatprep.subr.mxu0 0.0
    %719 = vmatpush1.msra.mxu0 0.0
    %720 = vmatprep.subr.mxu0 0.0
    %721 = vmatpush1.msra.mxu0 0.0
    %722 = vmatprep.subr.mxu0 0.0
    %723 = vmatpush1.msra.mxu0 0.0
    %724 = vmatprep.subr.mxu0 0.0
    %725 = vmatpush1.msra.mxu0 0.0
    %726 = vmatprep.subr.mxu0 0.0
    %727 = vmatpush1.msra.mxu0 0.0
    %728 = vmatprep.subr.mxu0 0.0
    %729 = vmatpush1.msra.mxu0 0.0
    %730 = vmatprep.subr.mxu0 0.0
    %731 = vmatpush1.msra.mxu0 0.0
    %732 = vmatprep.subr.mxu0 0.0
    %733 = vmatpush1.msra.mxu0 0.0
    %734 = vmatprep.subr.mxu0 0.0
    %735 = vmatpush1.msra.mxu0 0.0
    %736 = vmatprep.subr.mxu0 0.0
    %737 = vmatpush1.msra.mxu0 0.0
    %738 = vmatprep.subr.mxu0 0.0
    %739 = vmatpush1.msra.mxu0 0.0
    %740 = vmatprep.subr.mxu0 0.0
    %741 = vmatpush1.msra.mxu0 0.0
    %742 = vmatprep.subr.mxu0 0.0
    %743 = vmatpush1.msra.mxu0 0.0
    %744 = vmatprep.subr.mxu0 0.0
    %745 = vmatpush1.msra.mxu0 0.0
    %746 = vmatprep.subr.mxu0 0.0
    %747 = vmatpush1.msra.mxu0 0.0
    %748 = vmatprep.subr.mxu0 0.0
    %749 = vmatpush1.msra.mxu0 0.0
    %750 = vmatprep.subr.mxu0 0.0
    %751 = vmatpush1.msra.mxu0 0.0
    %752 = vmatprep.mubr.f32.mxu0 0.0
    %753 = vmatmul.mubr.f32.gmra.mrb[0].mxu0 %v153
    %v754 = vpop.f32.mrb[0].mxu0
    %v755 = vadd.f32 %v94, %v754
    %v756 = vpop.f32.mrb[0].mxu0
    %757 = vmatprep.mubr.f32.mxu0 0.0
    %758 = vmatmul.mubr.f32.gmra.mrb[0].mxu0 %v156
    %v759 = vpop.f32.mrb[0].mxu0
    %v760 = vadd.f32 %v99, %v759
    %v761 = vpop.f32.mrb[0].mxu0
    %762 = vmatprep.mubr.f32.mxu0 0.0
    %763 = vmatmul.mubr.f32.gmra.mrb[0].mxu0 %v159
    %v764 = vpop.f32.mrb[0].mxu0
    %v765 = vadd.f32 %v104, %v764
    %v766 = vpop.f32.mrb[0].mxu0
    %767 = vmatprep.mubr.f32.mxu0 0.0
    %768 = vmatmul.mubr.f32.gmra.mrb[0].mxu0 %v162
    %v769 = vpop.f32.mrb[0].mxu0
    %v770 = vadd.f32 %v109, %v769
    %v771 = vpop.f32.mrb[0].mxu0
    %772 = vmatprep.mubr.f32.mxu0 0.0
    %773 = vmatmul.mubr.f32.gmra.mrb[0].mxu0 %v165
    %v774 = vpop.f32.mrb[0].mxu0
    %v775 = vadd.f32 %v114, %v774
    %v776 = vpop.f32.mrb[0].mxu0
    %777 = vmatprep.mubr.f32.mxu0 0.0
    %778 = vmatmul.mubr.f32.gmra.mrb[0].mxu0 %v168
    %v779 = vpop.f32.mrb[0].mxu0
    %v780 = vadd.f32 %v119, %v779
    %v781 = vpop.f32.mrb[0].mxu0
    %782 = vmatprep.mubr.f32.mxu0 0.0
    %783 = vmatmul.mubr.f32.gmra.mrb[0].mxu0 %v171
    %v784 = vpop.f32.mrb[0].mxu0
    %v785 = vadd.f32 %v124, %v784
    %v786 = vpop.f32.mrb[0].mxu0
    %787 = vmatprep.mubr.f32.mxu0 0.0
    %788 = vmatmul.mubr.f32.gmra.mrb[0].mxu0 %v174
    %v789 = vpop.f32.mrb[0].mxu0
    %v790 = vadd.f32 %v129, %v789
    %v791 = vpop.f32.mrb[0].mxu0
    %792 = vmatprep.mubr.f32.mxu0 0.0
    %793 = vmatmul.mubr.f32.gmra.mrb[0].mxu0 %v177
    %v794 = vpop.f32.mrb[0].mxu0
    %v795 = vadd.f32 %v134, %v794
    %v796 = vpop.f32.mrb[0].mxu0
    %797 = vmatprep.mubr.f32.mxu0 0.0
    %798 = vmatmul.mubr.f32.gmra.mrb[0].mxu0 %v180
    %v799 = vpop.f32.mrb[0].mxu0
    %v800 = vadd.f32 %v139, %v799
    %v801 = vpop.f32.mrb[0].mxu0
    %802 = vmatprep.mubr.f32.mxu0 0.0
    %803 = vmatmul.mubr.f32.gmra.mrb[0].mxu0 %v183
    %v804 = vpop.f32.mrb[0].mxu0
    %v805 = vadd.f32 %v144, %v804
    %v806 = vpop.f32.mrb[0].mxu0
    %807 = vmatprep.mubr.f32.mxu0 0.0
    %808 = vmatmul.mubr.f32.gmra.mrb[0].mxu0 %v186
    %v809 = vpop.f32.mrb[0].mxu0
    %v810 = vadd.f32 %v149, %v809
    %v811 = vpop.f32.mrb[0].mxu0
    %812 = vdwg.mxu0
    %813 = vmatprep.subr.mxu0 0.0
    %814 = vmatpush1.msra.mxu0 %v47
    %815 = vmatprep.subr.mxu0 0.0
    %816 = vmatpush1.msra.mxu0 %v48
    %817 = vmatprep.subr.mxu0 0.0
    %818 = vmatpush1.msra.mxu0 %v49
    %819 = vmatprep.subr.mxu0 0.0
    %820 = vmatpush1.msra.mxu0 %v50
    %821 = vmatprep.subr.mxu0 0.0
    %822 = vmatpush1.msra.mxu0 0.0
    %823 = vmatprep.subr.mxu0 0.0
    %824 = vmatpush1.msra.mxu0 0.0
    %825 = vmatprep.subr.mxu0 0.0
    %826 = vmatpush1.msra.mxu0 0.0
    %827 = vmatprep.subr.mxu0 0.0
    %828 = vmatpush1.msra.mxu0 0.0
    %829 = vmatprep.subr.mxu0 0.0
    %830 = vmatpush1.msra.mxu0 0.0
    %831 = vmatprep.subr.mxu0 0.0
    %832 = vmatpush1.msra.mxu0 0.0
    %833 = vmatprep.subr.mxu0 0.0
    %834 = vmatpush1.msra.mxu0 0.0
    %835 = vmatprep.subr.mxu0 0.0
    %836 = vmatpush1.msra.mxu0 0.0
    %837 = vmatprep.subr.mxu0 0.0
    %838 = vmatpush1.msra.mxu0 0.0
    %839 = vmatprep.subr.mxu0 0.0
    %840 = vmatpush1.msra.mxu0 0.0
    %841 = vmatprep.subr.mxu0 0.0
    %842 = vmatpush1.msra.mxu0 0.0
    %843 = vmatprep.subr.mxu0 0.0
    %844 = vmatpush1.msra.mxu0 0.0
    %845 = vmatprep.subr.mxu0 0.0
    %846 = vmatpush1.msra.mxu0 0.0
    %847 = vmatprep.subr.mxu0 0.0
    %848 = vmatpush1.msra.mxu0 0.0
    %849 = vmatprep.subr.mxu0 0.0
    %850 = vmatpush1.msra.mxu0 0.0
    %851 = vmatprep.subr.mxu0 0.0
    %852 = vmatpush1.msra.mxu0 0.0
    %853 = vmatprep.subr.mxu0 0.0
    %854 = vmatpush1.msra.mxu0 0.0
    %855 = vmatprep.subr.mxu0 0.0
    %856 = vmatpush1.msra.mxu0 0.0
    %857 = vmatprep.subr.mxu0 0.0
    %858 = vmatpush1.msra.mxu0 0.0
    %859 = vmatprep.subr.mxu0 0.0
    %860 = vmatpush1.msra.mxu0 0.0
    %861 = vmatprep.subr.mxu0 0.0
    %862 = vmatpush1.msra.mxu0 0.0
    %863 = vmatprep.subr.mxu0 0.0
    %864 = vmatpush1.msra.mxu0 0.0
    %865 = vmatprep.subr.mxu0 0.0
    %866 = vmatpush1.msra.mxu0 0.0
    %867 = vmatprep.subr.mxu0 0.0
    %868 = vmatpush1.msra.mxu0 0.0
    %869 = vmatprep.subr.mxu0 0.0
    %870 = vmatpush1.msra.mxu0 0.0
    %871 = vmatprep.subr.mxu0 0.0
    %872 = vmatpush1.msra.mxu0 0.0
    %873 = vmatprep.subr.mxu0 0.0
    %874 = vmatpush1.msra.mxu0 0.0
    %875 = vmatprep.subr.mxu0 0.0
    %876 = vmatpush1.msra.mxu0 0.0
    %877 = vmatprep.mubr.f32.mxu0 0.0
    %878 = vmatmul.mubr.f32.gmra.mrb[0].mxu0 %v153
    %v879 = vpop.f32.mrb[0].mxu0
    %v880 = vadd.f32 %v94, %v879
    %v881 = vpop.f32.mrb[0].mxu0
    %882 = vmatprep.mubr.f32.mxu0 0.0
    %883 = vmatmul.mubr.f32.gmra.mrb[0].mxu0 %v156
    %v884 = vpop.f32.mrb[0].mxu0
    %v885 = vadd.f32 %v99, %v884
    %v886 = vpop.f32.mrb[0].mxu0
    %887 = vmatprep.mubr.f32.mxu0 0.0
    %888 = vmatmul.mubr.f32.gmra.mrb[0].mxu0 %v159
    %v889 = vpop.f32.mrb[0].mxu0
    %v890 = vadd.f32 %v104, %v889
    %v891 = vpop.f32.mrb[0].mxu0
    %892 = vmatprep.mubr.f32.mxu0 0.0
    %893 = vmatmul.mubr.f32.gmra.mrb[0].mxu0 %v162
    %v894 = vpop.f32.mrb[0].mxu0
    %v895 = vadd.f32 %v109, %v894
    %v896 = vpop.f32.mrb[0].mxu0
    %897 = vmatprep.mubr.f32.mxu0 0.0
    %898 = vmatmul.mubr.f32.gmra.mrb[0].mxu0 %v165
    %v899 = vpop.f32.mrb[0].mxu0
    %v900 = vadd.f32 %v114, %v899
    %v901 = vpop.f32.mrb[0].mxu0
    %902 = vmatprep.mubr.f32.mxu0 0.0
    %903 = vmatmul.mubr.f32.gmra.mrb[0].mxu0 %v168
    %v904 = vpop.f32.mrb[0].mxu0
    %v905 = vadd.f32 %v119, %v904
    %v906 = vpop.f32.mrb[0].mxu0
    %907 = vmatprep.mubr.f32.mxu0 0.0
    %908 = vmatmul.mubr.f32.gmra.mrb[0].mxu0 %v171
    %v909 = vpop.f32.mrb[0].mxu0
    %v910 = vadd.f32 %v124, %v909
    %v911 = vpop.f32.mrb[0].mxu0
    %912 = vmatprep.mubr.f32.mxu0 0.0
    %913 = vmatmul.mubr.f32.gmra.mrb[0].mxu0 %v174
    %v914 = vpop.f32.mrb[0].mxu0
    %v915 = vadd.f32 %v129, %v914
    %v916 = vpop.f32.mrb[0].mxu0
    %917 = vmatprep.mubr.f32.mxu0 0.0
    %918 = vmatmul.mubr.f32.gmra.mrb[0].mxu0 %v177
    %v919 = vpop.f32.mrb[0].mxu0
    %v920 = vadd.f32 %v134, %v919
    %v921 = vpop.f32.mrb[0].mxu0
    %922 = vmatprep.mubr.f32.mxu0 0.0
    %923 = vmatmul.mubr.f32.gmra.mrb[0].mxu0 %v180
    %v924 = vpop.f32.mrb[0].mxu0
    %v925 = vadd.f32 %v139, %v924
    %v926 = vpop.f32.mrb[0].mxu0
    %927 = vmatprep.mubr.f32.mxu0 0.0
    %928 = vmatmul.mubr.f32.gmra.mrb[0].mxu0 %v183
    %v929 = vpop.f32.mrb[0].mxu0
    %v930 = vadd.f32 %v144, %v929
    %v931 = vpop.f32.mrb[0].mxu0
    %932 = vmatprep.mubr.f32.mxu0 0.0
    %933 = vmatmul.mubr.f32.gmra.mrb[0].mxu0 %v186
    %v934 = vpop.f32.mrb[0].mxu0
    %v935 = vadd.f32 %v149, %v934
    %v936 = vpop.f32.mrb[0].mxu0
    %937 = vdwg.mxu0
    %938 = vmatprep.subr.mxu0 0.0
    %939 = vmatpush1.msra.mxu0 %v51
    %940 = vmatprep.subr.mxu0 0.0
    %941 = vmatpush1.msra.mxu0 %v52
    %942 = vmatprep.subr.mxu0 0.0
    %943 = vmatpush1.msra.mxu0 %v53
    %944 = vmatprep.subr.mxu0 0.0
    %945 = vmatpush1.msra.mxu0 %v54
    %946 = vmatprep.subr.mxu0 0.0
    %947 = vmatpush1.msra.mxu0 0.0
    %948 = vmatprep.subr.mxu0 0.0
    %949 = vmatpush1.msra.mxu0 0.0
    %950 = vmatprep.subr.mxu0 0.0
    %951 = vmatpush1.msra.mxu0 0.0
    %952 = vmatprep.subr.mxu0 0.0
    %953 = vmatpush1.msra.mxu0 0.0
    %954 = vmatprep.subr.mxu0 0.0
    %955 = vmatpush1.msra.mxu0 0.0
    %956 = vmatprep.subr.mxu0 0.0
    %957 = vmatpush1.msra.mxu0 0.0
    %958 = vmatprep.subr.mxu0 0.0
    %959 = vmatpush1.msra.mxu0 0.0
    %960 = vmatprep.subr.mxu0 0.0
    %961 = vmatpush1.msra.mxu0 0.0
    %962 = vmatprep.subr.mxu0 0.0
    %963 = vmatpush1.msra.mxu0 0.0
    %964 = vmatprep.subr.mxu0 0.0
    %965 = vmatpush1.msra.mxu0 0.0
    %966 = vmatprep.subr.mxu0 0.0
    %967 = vmatpush1.msra.mxu0 0.0
    %968 = vmatprep.subr.mxu0 0.0
    %969 = vmatpush1.msra.mxu0 0.0
    %970 = vmatprep.subr.mxu0 0.0
    %971 = vmatpush1.msra.mxu0 0.0
    %972 = vmatprep.subr.mxu0 0.0
    %973 = vmatpush1.msra.mxu0 0.0
    %974 = vmatprep.subr.mxu0 0.0
    %975 = vmatpush1.msra.mxu0 0.0
    %976 = vmatprep.subr.mxu0 0.0
    %977 = vmatpush1.msra.mxu0 0.0
    %978 = vmatprep.subr.mxu0 0.0
    %979 = vmatpush1.msra.mxu0 0.0
    %980 = vmatprep.subr.mxu0 0.0
    %981 = vmatpush1.msra.mxu0 0.0
    %982 = vmatprep.subr.mxu0 0.0
    %983 = vmatpush1.msra.mxu0 0.0
    %984 = vmatprep.subr.mxu0 0.0
    %985 = vmatpush1.msra.mxu0 0.0
    %986 = vmatprep.subr.mxu0 0.0
    %987 = vmatpush1.msra.mxu0 0.0
    %988 = vmatprep.subr.mxu0 0.0
    %989 = vmatpush1.msra.mxu0 0.0
    %990 = vmatprep.subr.mxu0 0.0
    %991 = vmatpush1.msra.mxu0 0.0
    %992 = vmatprep.subr.mxu0 0.0
    %993 = vmatpush1.msra.mxu0 0.0
    %994 = vmatprep.subr.mxu0 0.0
    %995 = vmatpush1.msra.mxu0 0.0
    %996 = vmatprep.subr.mxu0 0.0
    %997 = vmatpush1.msra.mxu0 0.0
    %998 = vmatprep.subr.mxu0 0.0
    %999 = vmatpush1.msra.mxu0 0.0
    %1000 = vmatprep.subr.mxu0 0.0
    %1001 = vmatpush1.msra.mxu0 0.0
    %1002 = vmatprep.mubr.f32.mxu0 0.0
    %1003 = vmatmul.mubr.f32.gmra.mrb[0].mxu0 %v153
    %v1004 = vpop.f32.mrb[0].mxu0
    %v1005 = vadd.f32 %v94, %v1004
    %v1006 = vpop.f32.mrb[0].mxu0
    %1007 = vmatprep.mubr.f32.mxu0 0.0
    %1008 = vmatmul.mubr.f32.gmra.mrb[0].mxu0 %v156
    %v1009 = vpop.f32.mrb[0].mxu0
    %v1010 = vadd.f32 %v99, %v1009
    %v1011 = vpop.f32.mrb[0].mxu0
    %1012 = vmatprep.mubr.f32.mxu0 0.0
    %1013 = vmatmul.mubr.f32.gmra.mrb[0].mxu0 %v159
    %v1014 = vpop.f32.mrb[0].mxu0
    %v1015 = vadd.f32 %v104, %v1014
    %v1016 = vpop.f32.mrb[0].mxu0
    %1017 = vmatprep.mubr.f32.mxu0 0.0
    %1018 = vmatmul.mubr.f32.gmra.mrb[0].mxu0 %v162
    %v1019 = vpop.f32.mrb[0].mxu0
    %v1020 = vadd.f32 %v109, %v1019
    %v1021 = vpop.f32.mrb[0].mxu0
    %1022 = vmatprep.mubr.f32.mxu0 0.0
    %1023 = vmatmul.mubr.f32.gmra.mrb[0].mxu0 %v165
    %v1024 = vpop.f32.mrb[0].mxu0
    %v1025 = vadd.f32 %v114, %v1024
    %v1026 = vpop.f32.mrb[0].mxu0
    %1027 = vmatprep.mubr.f32.mxu0 0.0
    %1028 = vmatmul.mubr.f32.gmra.mrb[0].mxu0 %v168
    %v1029 = vpop.f32.mrb[0].mxu0
    %v1030 = vadd.f32 %v119, %v1029
    %v1031 = vpop.f32.mrb[0].mxu0
    %1032 = vmatprep.mubr.f32.mxu0 0.0
    %1033 = vmatmul.mubr.f32.gmra.mrb[0].mxu0 %v171
    %v1034 = vpop.f32.mrb[0].mxu0
    %v1035 = vadd.f32 %v124, %v1034
    %v1036 = vpop.f32.mrb[0].mxu0
    %1037 = vmatprep.mubr.f32.mxu0 0.0
    %1038 = vmatmul.mubr.f32.gmra.mrb[0].mxu0 %v174
    %v1039 = vpop.f32.mrb[0].mxu0
    %v1040 = vadd.f32 %v129, %v1039
    %v1041 = vpop.f32.mrb[0].mxu0
    %1042 = vmatprep.mubr.f32.mxu0 0.0
    %1043 = vmatmul.mubr.f32.gmra.mrb[0].mxu0 %v177
    %v1044 = vpop.f32.mrb[0].mxu0
    %v1045 = vadd.f32 %v134, %v1044
    %v1046 = vpop.f32.mrb[0].mxu0
    %1047 = vmatprep.mubr.f32.mxu0 0.0
    %1048 = vmatmul.mubr.f32.gmra.mrb[0].mxu0 %v180
    %v1049 = vpop.f32.mrb[0].mxu0
    %v1050 = vadd.f32 %v139, %v1049
    %v1051 = vpop.f32.mrb[0].mxu0
    %1052 = vmatprep.mubr.f32.mxu0 0.0
    %1053 = vmatmul.mubr.f32.gmra.mrb[0].mxu0 %v183
    %v1054 = vpop.f32.mrb[0].mxu0
    %v1055 = vadd.f32 %v144, %v1054
    %v1056 = vpop.f32.mrb[0].mxu0
    %1057 = vmatprep.mubr.f32.mxu0 0.0
    %1058 = vmatmul.mubr.f32.gmra.mrb[0].mxu0 %v186
    %v1059 = vpop.f32.mrb[0].mxu0
    %v1060 = vadd.f32 %v149, %v1059
    %v1061 = vpop.f32.mrb[0].mxu0
    %1062 = vdwg.mxu0
    %1063 = vmatprep.subr.mxu0 0.0
    %1064 = vmatpush1.msra.mxu0 %v55
    %1065 = vmatprep.subr.mxu0 0.0
    %1066 = vmatpush1.msra.mxu0 %v56
    %1067 = vmatprep.subr.mxu0 0.0
    %1068 = vmatpush1.msra.mxu0 %v57
    %1069 = vmatprep.subr.mxu0 0.0
    %1070 = vmatpush1.msra.mxu0 %v58
    %1071 = vmatprep.subr.mxu0 0.0
    %1072 = vmatpush1.msra.mxu0 0.0
    %1073 = vmatprep.subr.mxu0 0.0
    %1074 = vmatpush1.msra.mxu0 0.0
    %1075 = vmatprep.subr.mxu0 0.0
    %1076 = vmatpush1.msra.mxu0 0.0
    %1077 = vmatprep.subr.mxu0 0.0
    %1078 = vmatpush1.msra.mxu0 0.0
    %1079 = vmatprep.subr.mxu0 0.0
    %1080 = vmatpush1.msra.mxu0 0.0
    %1081 = vmatprep.subr.mxu0 0.0
    %1082 = vmatpush1.msra.mxu0 0.0
    %1083 = vmatprep.subr.mxu0 0.0
    %1084 = vmatpush1.msra.mxu0 0.0
    %1085 = vmatprep.subr.mxu0 0.0
    %1086 = vmatpush1.msra.mxu0 0.0
    %1087 = vmatprep.subr.mxu0 0.0
    %1088 = vmatpush1.msra.mxu0 0.0
    %1089 = vmatprep.subr.mxu0 0.0
    %1090 = vmatpush1.msra.mxu0 0.0
    %1091 = vmatprep.subr.mxu0 0.0
    %1092 = vmatpush1.msra.mxu0 0.0
    %1093 = vmatprep.subr.mxu0 0.0
    %1094 = vmatpush1.msra.mxu0 0.0
    %1095 = vmatprep.subr.mxu0 0.0
    %1096 = vmatpush1.msra.mxu0 0.0
    %1097 = vmatprep.subr.mxu0 0.0
    %1098 = vmatpush1.msra.mxu0 0.0
    %1099 = vmatprep.subr.mxu0 0.0
    %1100 = vmatpush1.msra.mxu0 0.0
    %1101 = vmatprep.subr.mxu0 0.0
    %1102 = vmatpush1.msra.mxu0 0.0
    %1103 = vmatprep.subr.mxu0 0.0
    %1104 = vmatpush1.msra.mxu0 0.0
    %1105 = vmatprep.subr.mxu0 0.0
    %1106 = vmatpush1.msra.mxu0 0.0
    %1107 = vmatprep.subr.mxu0 0.0
    %1108 = vmatpush1.msra.mxu0 0.0
    %1109 = vmatprep.subr.mxu0 0.0
    %1110 = vmatpush1.msra.mxu0 0.0
    %1111 = vmatprep.subr.mxu0 0.0
    %1112 = vmatpush1.msra.mxu0 0.0
    %1113 = vmatprep.subr.mxu0 0.0
    %1114 = vmatpush1.msra.mxu0 0.0
    %1115 = vmatprep.subr.mxu0 0.0
    %1116 = vmatpush1.msra.mxu0 0.0
    %1117 = vmatprep.subr.mxu0 0.0
    %1118 = vmatpush1.msra.mxu0 0.0
    %1119 = vmatprep.subr.mxu0 0.0
    %1120 = vmatpush1.msra.mxu0 0.0
    %1121 = vmatprep.subr.mxu0 0.0
    %1122 = vmatpush1.msra.mxu0 0.0
    %1123 = vmatprep.subr.mxu0 0.0
    %1124 = vmatpush1.msra.mxu0 0.0
    %1125 = vmatprep.subr.mxu0 0.0
    %1126 = vmatpush1.msra.mxu0 0.0
    %1127 = vmatprep.mubr.f32.mxu0 0.0
    %1128 = vmatmul.mubr.f32.gmra.mrb[0].mxu0 %v153
    %v1129 = vpop.f32.mrb[0].mxu0
    %v1130 = vadd.f32 %v94, %v1129
    %v1131 = vpop.f32.mrb[0].mxu0
    %1132 = vmatprep.mubr.f32.mxu0 0.0
    %1133 = vmatmul.mubr.f32.gmra.mrb[0].mxu0 %v156
    %v1134 = vpop.f32.mrb[0].mxu0
    %v1135 = vadd.f32 %v99, %v1134
    %v1136 = vpop.f32.mrb[0].mxu0
    %1137 = vmatprep.mubr.f32.mxu0 0.0
    %1138 = vmatmul.mubr.f32.gmra.mrb[0].mxu0 %v159
    %v1139 = vpop.f32.mrb[0].mxu0
    %v1140 = vadd.f32 %v104, %v1139
    %v1141 = vpop.f32.mrb[0].mxu0
    %1142 = vmatprep.mubr.f32.mxu0 0.0
    %1143 = vmatmul.mubr.f32.gmra.mrb[0].mxu0 %v162
    %v1144 = vpop.f32.mrb[0].mxu0
    %v1145 = vadd.f32 %v109, %v1144
    %v1146 = vpop.f32.mrb[0].mxu0
    %1147 = vmatprep.mubr.f32.mxu0 0.0
    %1148 = vmatmul.mubr.f32.gmra.mrb[0].mxu0 %v165
    %v1149 = vpop.f32.mrb[0].mxu0
    %v1150 = vadd.f32 %v114, %v1149
    %v1151 = vpop.f32.mrb[0].mxu0
    %1152 = vmatprep.mubr.f32.mxu0 0.0
    %1153 = vmatmul.mubr.f32.gmra.mrb[0].mxu0 %v168
    %v1154 = vpop.f32.mrb[0].mxu0
    %v1155 = vadd.f32 %v119, %v1154
    %v1156 = vpop.f32.mrb[0].mxu0
    %1157 = vmatprep.mubr.f32.mxu0 0.0
    %1158 = vmatmul.mubr.f32.gmra.mrb[0].mxu0 %v171
    %v1159 = vpop.f32.mrb[0].mxu0
    %v1160 = vadd.f32 %v124, %v1159
    %v1161 = vpop.f32.mrb[0].mxu0
    %1162 = vmatprep.mubr.f32.mxu0 0.0
    %1163 = vmatmul.mubr.f32.gmra.mrb[0].mxu0 %v174
    %v1164 = vpop.f32.mrb[0].mxu0
    %v1165 = vadd.f32 %v129, %v1164
    %v1166 = vpop.f32.mrb[0].mxu0
    %1167 = vmatprep.mubr.f32.mxu0 0.0
    %1168 = vmatmul.mubr.f32.gmra.mrb[0].mxu0 %v177
    %v1169 = vpop.f32.mrb[0].mxu0
    %v1170 = vadd.f32 %v134, %v1169
    %v1171 = vpop.f32.mrb[0].mxu0
    %1172 = vmatprep.mubr.f32.mxu0 0.0
    %1173 = vmatmul.mubr.f32.gmra.mrb[0].mxu0 %v180
    %v1174 = vpop.f32.mrb[0].mxu0
    %v1175 = vadd.f32 %v139, %v1174
    %v1176 = vpop.f32.mrb[0].mxu0
    %1177 = vmatprep.mubr.f32.mxu0 0.0
    %1178 = vmatmul.mubr.f32.gmra.mrb[0].mxu0 %v183
    %v1179 = vpop.f32.mrb[0].mxu0
    %v1180 = vadd.f32 %v144, %v1179
    %v1181 = vpop.f32.mrb[0].mxu0
    %1182 = vmatprep.mubr.f32.mxu0 0.0
    %1183 = vmatmul.mubr.f32.gmra.mrb[0].mxu0 %v186
    %v1184 = vpop.f32.mrb[0].mxu0
    %v1185 = vadd.f32 %v149, %v1184
    %v1186 = vpop.f32.mrb[0].mxu0
    %1187 = vdwg.mxu0
    %v1188 = vmul.f32 %v255, %v275
    %v1189 = vmul.f32 %v255, %v400
    %v1190 = vmul.f32 %v255, %v525
    %v1191 = vmul.f32 %v255, %v650
    %v1192 = vmul.f32 %v255, %v775
    %v1193 = vmul.f32 %v255, %v900
    %v1194 = vmul.f32 %v255, %v1025
    %v1195 = vmul.f32 %v255, %v1150
    %v1196 = vmul.f32 %v380, %v275
    %v1197 = vmul.f32 %v380, %v400
    %v1198 = vmul.f32 %v380, %v525
    %v1199 = vmul.f32 %v380, %v650
    %v1200 = vmul.f32 %v380, %v775
    %v1201 = vmul.f32 %v380, %v900
    %v1202 = vmul.f32 %v380, %v1025
    %v1203 = vmul.f32 %v380, %v1150
    %v1204 = vmul.f32 %v505, %v275
    %v1205 = vmul.f32 %v505, %v400
    %v1206 = vmul.f32 %v505, %v525
    %v1207 = vmul.f32 %v505, %v650
    %v1208 = vmul.f32 %v505, %v775
    %v1209 = vmul.f32 %v505, %v900
    %v1210 = vmul.f32 %v505, %v1025
    %v1211 = vmul.f32 %v505, %v1150
    %v1212 = vmul.f32 %v630, %v275
    %v1213 = vmul.f32 %v630, %v400
    %v1214 = vmul.f32 %v630, %v525
    %v1215 = vmul.f32 %v630, %v650
    %v1216 = vmul.f32 %v630, %v775
    %v1217 = vmul.f32 %v630, %v900
    %v1218 = vmul.f32 %v630, %v1025
    %v1219 = vmul.f32 %v630, %v1150
    %v1220 = vmul.f32 %v755, %v275
    %v1221 = vmul.f32 %v755, %v400
    %v1222 = vmul.f32 %v755, %v525
    %v1223 = vmul.f32 %v755, %v650
    %v1224 = vmul.f32 %v755, %v775
    %v1225 = vmul.f32 %v755, %v900
    %v1226 = vmul.f32 %v755, %v1025
    %v1227 = vmul.f32 %v755, %v1150
    %v1228 = vmul.f32 %v880, %v275
    %v1229 = vmul.f32 %v880, %v400
    %v1230 = vmul.f32 %v880, %v525
    %v1231 = vmul.f32 %v880, %v650
    %v1232 = vmul.f32 %v880, %v775
    %v1233 = vmul.f32 %v880, %v900
    %v1234 = vmul.f32 %v880, %v1025
    %v1235 = vmul.f32 %v880, %v1150
    %v1236 = vmul.f32 %v1005, %v275
    %v1237 = vmul.f32 %v1005, %v400
    %v1238 = vmul.f32 %v1005, %v525
    %v1239 = vmul.f32 %v1005, %v650
    %v1240 = vmul.f32 %v1005, %v775
    %v1241 = vmul.f32 %v1005, %v900
    %v1242 = vmul.f32 %v1005, %v1025
    %v1243 = vmul.f32 %v1005, %v1150
    %v1244 = vmul.f32 %v1130, %v275
    %v1245 = vmul.f32 %v1130, %v400
    %v1246 = vmul.f32 %v1130, %v525
    %v1247 = vmul.f32 %v1130, %v650
    %v1248 = vmul.f32 %v1130, %v775
    %v1249 = vmul.f32 %v1130, %v900
    %v1250 = vmul.f32 %v1130, %v1025
    %v1251 = vmul.f32 %v1130, %v1150
    %v1252 = vrot.slane %v1188, 4
    %v1253 = vadd.f32 %v1188, %v1252
    %v1254 = vrot.slane %v1253, 2
    %v1255 = vadd.f32 %v1253, %v1254
    %v1256 = vrot.slane %v1255, 1
    %v1257 = vadd.f32 %v1255, %v1256
    %v1258 = vrot.slane %v1189, 4
    %v1259 = vadd.f32 %v1189, %v1258
    %v1260 = vrot.slane %v1259, 2
    %v1261 = vadd.f32 %v1259, %v1260
    %v1262 = vrot.slane %v1261, 1
    %v1263 = vadd.f32 %v1261, %v1262
    %v1264 = vrot.slane %v1190, 4
    %v1265 = vadd.f32 %v1190, %v1264
    %v1266 = vrot.slane %v1265, 2
    %v1267 = vadd.f32 %v1265, %v1266
    %v1268 = vrot.slane %v1267, 1
    %v1269 = vadd.f32 %v1267, %v1268
    %v1270 = vrot.slane %v1191, 4
    %v1271 = vadd.f32 %v1191, %v1270
    %v1272 = vrot.slane %v1271, 2
    %v1273 = vadd.f32 %v1271, %v1272
    %v1274 = vrot.slane %v1273, 1
    %v1275 = vadd.f32 %v1273, %v1274
    %v1276 = vrot.slane %v1192, 4
    %v1277 = vadd.f32 %v1192, %v1276
    %v1278 = vrot.slane %v1277, 2
    %v1279 = vadd.f32 %v1277, %v1278
    %v1280 = vrot.slane %v1279, 1
    %v1281 = vadd.f32 %v1279, %v1280
    %v1282 = vrot.slane %v1193, 4
    %v1283 = vadd.f32 %v1193, %v1282
    %v1284 = vrot.slane %v1283, 2
    %v1285 = vadd.f32 %v1283, %v1284
    %v1286 = vrot.slane %v1285, 1
    %v1287 = vadd.f32 %v1285, %v1286
    %v1288 = vrot.slane %v1194, 4
    %v1289 = vadd.f32 %v1194, %v1288
    %v1290 = vrot.slane %v1289, 2
    %v1291 = vadd.f32 %v1289, %v1290
    %v1292 = vrot.slane %v1291, 1
    %v1293 = vadd.f32 %v1291, %v1292
    %v1294 = vrot.slane %v1195, 4
    %v1295 = vadd.f32 %v1195, %v1294
    %v1296 = vrot.slane %v1295, 2
    %v1297 = vadd.f32 %v1295, %v1296
    %v1298 = vrot.slane %v1297, 1
    %v1299 = vadd.f32 %v1297, %v1298
    %v1300 = vrot.slane %v1196, 4
    %v1301 = vadd.f32 %v1196, %v1300
    %v1302 = vrot.slane %v1301, 2
    %v1303 = vadd.f32 %v1301, %v1302
    %v1304 = vrot.slane %v1303, 1
    %v1305 = vadd.f32 %v1303, %v1304
    %v1306 = vrot.slane %v1197, 4
    %v1307 = vadd.f32 %v1197, %v1306
    %v1308 = vrot.slane %v1307, 2
    %v1309 = vadd.f32 %v1307, %v1308
    %v1310 = vrot.slane %v1309, 1
    %v1311 = vadd.f32 %v1309, %v1310
    %v1312 = vrot.slane %v1198, 4
    %v1313 = vadd.f32 %v1198, %v1312
    %v1314 = vrot.slane %v1313, 2
    %v1315 = vadd.f32 %v1313, %v1314
    %v1316 = vrot.slane %v1315, 1
    %v1317 = vadd.f32 %v1315, %v1316
    %v1318 = vrot.slane %v1199, 4
    %v1319 = vadd.f32 %v1199, %v1318
    %v1320 = vrot.slane %v1319, 2
    %v1321 = vadd.f32 %v1319, %v1320
    %v1322 = vrot.slane %v1321, 1
    %v1323 = vadd.f32 %v1321, %v1322
    %v1324 = vrot.slane %v1200, 4
    %v1325 = vadd.f32 %v1200, %v1324
    %v1326 = vrot.slane %v1325, 2
    %v1327 = vadd.f32 %v1325, %v1326
    %v1328 = vrot.slane %v1327, 1
    %v1329 = vadd.f32 %v1327, %v1328
    %v1330 = vrot.slane %v1201, 4
    %v1331 = vadd.f32 %v1201, %v1330
    %v1332 = vrot.slane %v1331, 2
    %v1333 = vadd.f32 %v1331, %v1332
    %v1334 = vrot.slane %v1333, 1
    %v1335 = vadd.f32 %v1333, %v1334
    %v1336 = vrot.slane %v1202, 4
    %v1337 = vadd.f32 %v1202, %v1336
    %v1338 = vrot.slane %v1337, 2
    %v1339 = vadd.f32 %v1337, %v1338
    %v1340 = vrot.slane %v1339, 1
    %v1341 = vadd.f32 %v1339, %v1340
    %v1342 = vrot.slane %v1203, 4
    %v1343 = vadd.f32 %v1203, %v1342
    %v1344 = vrot.slane %v1343, 2
    %v1345 = vadd.f32 %v1343, %v1344
    %v1346 = vrot.slane %v1345, 1
    %v1347 = vadd.f32 %v1345, %v1346
    %v1348 = vrot.slane %v1204, 4
    %v1349 = vadd.f32 %v1204, %v1348
    %v1350 = vrot.slane %v1349, 2
    %v1351 = vadd.f32 %v1349, %v1350
    %v1352 = vrot.slane %v1351, 1
    %v1353 = vadd.f32 %v1351, %v1352
    %v1354 = vrot.slane %v1205, 4
    %v1355 = vadd.f32 %v1205, %v1354
    %v1356 = vrot.slane %v1355, 2
    %v1357 = vadd.f32 %v1355, %v1356
    %v1358 = vrot.slane %v1357, 1
    %v1359 = vadd.f32 %v1357, %v1358
    %v1360 = vrot.slane %v1206, 4
    %v1361 = vadd.f32 %v1206, %v1360
    %v1362 = vrot.slane %v1361, 2
    %v1363 = vadd.f32 %v1361, %v1362
    %v1364 = vrot.slane %v1363, 1
    %v1365 = vadd.f32 %v1363, %v1364
    %v1366 = vrot.slane %v1207, 4
    %v1367 = vadd.f32 %v1207, %v1366
    %v1368 = vrot.slane %v1367, 2
    %v1369 = vadd.f32 %v1367, %v1368
    %v1370 = vrot.slane %v1369, 1
    %v1371 = vadd.f32 %v1369, %v1370
    %v1372 = vrot.slane %v1208, 4
    %v1373 = vadd.f32 %v1208, %v1372
    %v1374 = vrot.slane %v1373, 2
    %v1375 = vadd.f32 %v1373, %v1374
    %v1376 = vrot.slane %v1375, 1
    %v1377 = vadd.f32 %v1375, %v1376
    %v1378 = vrot.slane %v1209, 4
    %v1379 = vadd.f32 %v1209, %v1378
    %v1380 = vrot.slane %v1379, 2
    %v1381 = vadd.f32 %v1379, %v1380
    %v1382 = vrot.slane %v1381, 1
    %v1383 = vadd.f32 %v1381, %v1382
    %v1384 = vrot.slane %v1210, 4
    %v1385 = vadd.f32 %v1210, %v1384
    %v1386 = vrot.slane %v1385, 2
    %v1387 = vadd.f32 %v1385, %v1386
    %v1388 = vrot.slane %v1387, 1
    %v1389 = vadd.f32 %v1387, %v1388
    %v1390 = vrot.slane %v1211, 4
    %v1391 = vadd.f32 %v1211, %v1390
    %v1392 = vrot.slane %v1391, 2
    %v1393 = vadd.f32 %v1391, %v1392
    %v1394 = vrot.slane %v1393, 1
    %v1395 = vadd.f32 %v1393, %v1394
    %v1396 = vrot.slane %v1212, 4
    %v1397 = vadd.f32 %v1212, %v1396
    %v1398 = vrot.slane %v1397, 2
    %v1399 = vadd.f32 %v1397, %v1398
    %v1400 = vrot.slane %v1399, 1
    %v1401 = vadd.f32 %v1399, %v1400
    %v1402 = vrot.slane %v1213, 4
    %v1403 = vadd.f32 %v1213, %v1402
    %v1404 = vrot.slane %v1403, 2
    %v1405 = vadd.f32 %v1403, %v1404
    %v1406 = vrot.slane %v1405, 1
    %v1407 = vadd.f32 %v1405, %v1406
    %v1408 = vrot.slane %v1214, 4
    %v1409 = vadd.f32 %v1214, %v1408
    %v1410 = vrot.slane %v1409, 2
    %v1411 = vadd.f32 %v1409, %v1410
    %v1412 = vrot.slane %v1411, 1
    %v1413 = vadd.f32 %v1411, %v1412
    %v1414 = vrot.slane %v1215, 4
    %v1415 = vadd.f32 %v1215, %v1414
    %v1416 = vrot.slane %v1415, 2
    %v1417 = vadd.f32 %v1415, %v1416
    %v1418 = vrot.slane %v1417, 1
    %v1419 = vadd.f32 %v1417, %v1418
    %v1420 = vrot.slane %v1216, 4
    %v1421 = vadd.f32 %v1216, %v1420
    %v1422 = vrot.slane %v1421, 2
    %v1423 = vadd.f32 %v1421, %v1422
    %v1424 = vrot.slane %v1423, 1
    %v1425 = vadd.f32 %v1423, %v1424
    %v1426 = vrot.slane %v1217, 4
    %v1427 = vadd.f32 %v1217, %v1426
    %v1428 = vrot.slane %v1427, 2
    %v1429 = vadd.f32 %v1427, %v1428
    %v1430 = vrot.slane %v1429, 1
    %v1431 = vadd.f32 %v1429, %v1430
    %v1432 = vrot.slane %v1218, 4
    %v1433 = vadd.f32 %v1218, %v1432
    %v1434 = vrot.slane %v1433, 2
    %v1435 = vadd.f32 %v1433, %v1434
    %v1436 = vrot.slane %v1435, 1
    %v1437 = vadd.f32 %v1435, %v1436
    %v1438 = vrot.slane %v1219, 4
    %v1439 = vadd.f32 %v1219, %v1438
    %v1440 = vrot.slane %v1439, 2
    %v1441 = vadd.f32 %v1439, %v1440
    %v1442 = vrot.slane %v1441, 1
    %v1443 = vadd.f32 %v1441, %v1442
    %v1444 = vrot.slane %v1220, 4
    %v1445 = vadd.f32 %v1220, %v1444
    %v1446 = vrot.slane %v1445, 2
    %v1447 = vadd.f32 %v1445, %v1446
    %v1448 = vrot.slane %v1447, 1
    %v1449 = vadd.f32 %v1447, %v1448
    %v1450 = vrot.slane %v1221, 4
    %v1451 = vadd.f32 %v1221, %v1450
    %v1452 = vrot.slane %v1451, 2
    %v1453 = vadd.f32 %v1451, %v1452
    %v1454 = vrot.slane %v1453, 1
    %v1455 = vadd.f32 %v1453, %v1454
    %v1456 = vrot.slane %v1222, 4
    %v1457 = vadd.f32 %v1222, %v1456
    %v1458 = vrot.slane %v1457, 2
    %v1459 = vadd.f32 %v1457, %v1458
    %v1460 = vrot.slane %v1459, 1
    %v1461 = vadd.f32 %v1459, %v1460
    %v1462 = vrot.slane %v1223, 4
    %v1463 = vadd.f32 %v1223, %v1462
    %v1464 = vrot.slane %v1463, 2
    %v1465 = vadd.f32 %v1463, %v1464
    %v1466 = vrot.slane %v1465, 1
    %v1467 = vadd.f32 %v1465, %v1466
    %v1468 = vrot.slane %v1224, 4
    %v1469 = vadd.f32 %v1224, %v1468
    %v1470 = vrot.slane %v1469, 2
    %v1471 = vadd.f32 %v1469, %v1470
    %v1472 = vrot.slane %v1471, 1
    %v1473 = vadd.f32 %v1471, %v1472
    %v1474 = vrot.slane %v1225, 4
    %v1475 = vadd.f32 %v1225, %v1474
    %v1476 = vrot.slane %v1475, 2
    %v1477 = vadd.f32 %v1475, %v1476
    %v1478 = vrot.slane %v1477, 1
    %v1479 = vadd.f32 %v1477, %v1478
    %v1480 = vrot.slane %v1226, 4
    %v1481 = vadd.f32 %v1226, %v1480
    %v1482 = vrot.slane %v1481, 2
    %v1483 = vadd.f32 %v1481, %v1482
    %v1484 = vrot.slane %v1483, 1
    %v1485 = vadd.f32 %v1483, %v1484
    %v1486 = vrot.slane %v1227, 4
    %v1487 = vadd.f32 %v1227, %v1486
    %v1488 = vrot.slane %v1487, 2
    %v1489 = vadd.f32 %v1487, %v1488
    %v1490 = vrot.slane %v1489, 1
    %v1491 = vadd.f32 %v1489, %v1490
    %v1492 = vrot.slane %v1228, 4
    %v1493 = vadd.f32 %v1228, %v1492
    %v1494 = vrot.slane %v1493, 2
    %v1495 = vadd.f32 %v1493, %v1494
    %v1496 = vrot.slane %v1495, 1
    %v1497 = vadd.f32 %v1495, %v1496
    %v1498 = vrot.slane %v1229, 4
    %v1499 = vadd.f32 %v1229, %v1498
    %v1500 = vrot.slane %v1499, 2
    %v1501 = vadd.f32 %v1499, %v1500
    %v1502 = vrot.slane %v1501, 1
    %v1503 = vadd.f32 %v1501, %v1502
    %v1504 = vrot.slane %v1230, 4
    %v1505 = vadd.f32 %v1230, %v1504
    %v1506 = vrot.slane %v1505, 2
    %v1507 = vadd.f32 %v1505, %v1506
    %v1508 = vrot.slane %v1507, 1
    %v1509 = vadd.f32 %v1507, %v1508
    %v1510 = vrot.slane %v1231, 4
    %v1511 = vadd.f32 %v1231, %v1510
    %v1512 = vrot.slane %v1511, 2
    %v1513 = vadd.f32 %v1511, %v1512
    %v1514 = vrot.slane %v1513, 1
    %v1515 = vadd.f32 %v1513, %v1514
    %v1516 = vrot.slane %v1232, 4
    %v1517 = vadd.f32 %v1232, %v1516
    %v1518 = vrot.slane %v1517, 2
    %v1519 = vadd.f32 %v1517, %v1518
    %v1520 = vrot.slane %v1519, 1
    %v1521 = vadd.f32 %v1519, %v1520
    %v1522 = vrot.slane %v1233, 4
    %v1523 = vadd.f32 %v1233, %v1522
    %v1524 = vrot.slane %v1523, 2
    %v1525 = vadd.f32 %v1523, %v1524
    %v1526 = vrot.slane %v1525, 1
    %v1527 = vadd.f32 %v1525, %v1526
    %v1528 = vrot.slane %v1234, 4
    %v1529 = vadd.f32 %v1234, %v1528
    %v1530 = vrot.slane %v1529, 2
    %v1531 = vadd.f32 %v1529, %v1530
    %v1532 = vrot.slane %v1531, 1
    %v1533 = vadd.f32 %v1531, %v1532
    %v1534 = vrot.slane %v1235, 4
    %v1535 = vadd.f32 %v1235, %v1534
    %v1536 = vrot.slane %v1535, 2
    %v1537 = vadd.f32 %v1535, %v1536
    %v1538 = vrot.slane %v1537, 1
    %v1539 = vadd.f32 %v1537, %v1538
    %v1540 = vrot.slane %v1236, 4
    %v1541 = vadd.f32 %v1236, %v1540
    %v1542 = vrot.slane %v1541, 2
    %v1543 = vadd.f32 %v1541, %v1542
    %v1544 = vrot.slane %v1543, 1
    %v1545 = vadd.f32 %v1543, %v1544
    %v1546 = vrot.slane %v1237, 4
    %v1547 = vadd.f32 %v1237, %v1546
    %v1548 = vrot.slane %v1547, 2
    %v1549 = vadd.f32 %v1547, %v1548
    %v1550 = vrot.slane %v1549, 1
    %v1551 = vadd.f32 %v1549, %v1550
    %v1552 = vrot.slane %v1238, 4
    %v1553 = vadd.f32 %v1238, %v1552
    %v1554 = vrot.slane %v1553, 2
    %v1555 = vadd.f32 %v1553, %v1554
    %v1556 = vrot.slane %v1555, 1
    %v1557 = vadd.f32 %v1555, %v1556
    %v1558 = vrot.slane %v1239, 4
    %v1559 = vadd.f32 %v1239, %v1558
    %v1560 = vrot.slane %v1559, 2
    %v1561 = vadd.f32 %v1559, %v1560
    %v1562 = vrot.slane %v1561, 1
    %v1563 = vadd.f32 %v1561, %v1562
    %v1564 = vrot.slane %v1240, 4
    %v1565 = vadd.f32 %v1240, %v1564
    %v1566 = vrot.slane %v1565, 2
    %v1567 = vadd.f32 %v1565, %v1566
    %v1568 = vrot.slane %v1567, 1
    %v1569 = vadd.f32 %v1567, %v1568
    %v1570 = vrot.slane %v1241, 4
    %v1571 = vadd.f32 %v1241, %v1570
    %v1572 = vrot.slane %v1571, 2
    %v1573 = vadd.f32 %v1571, %v1572
    %v1574 = vrot.slane %v1573, 1
    %v1575 = vadd.f32 %v1573, %v1574
    %v1576 = vrot.slane %v1242, 4
    %v1577 = vadd.f32 %v1242, %v1576
    %v1578 = vrot.slane %v1577, 2
    %v1579 = vadd.f32 %v1577, %v1578
    %v1580 = vrot.slane %v1579, 1
    %v1581 = vadd.f32 %v1579, %v1580
    %v1582 = vrot.slane %v1243, 4
    %v1583 = vadd.f32 %v1243, %v1582
    %v1584 = vrot.slane %v1583, 2
    %v1585 = vadd.f32 %v1583, %v1584
    %v1586 = vrot.slane %v1585, 1
    %v1587 = vadd.f32 %v1585, %v1586
    %v1588 = vrot.slane %v1244, 4
    %v1589 = vadd.f32 %v1244, %v1588
    %v1590 = vrot.slane %v1589, 2
    %v1591 = vadd.f32 %v1589, %v1590
    %v1592 = vrot.slane %v1591, 1
    %v1593 = vadd.f32 %v1591, %v1592
    %v1594 = vrot.slane %v1245, 4
    %v1595 = vadd.f32 %v1245, %v1594
    %v1596 = vrot.slane %v1595, 2
    %v1597 = vadd.f32 %v1595, %v1596
    %v1598 = vrot.slane %v1597, 1
    %v1599 = vadd.f32 %v1597, %v1598
    %v1600 = vrot.slane %v1246, 4
    %v1601 = vadd.f32 %v1246, %v1600
    %v1602 = vrot.slane %v1601, 2
    %v1603 = vadd.f32 %v1601, %v1602
    %v1604 = vrot.slane %v1603, 1
    %v1605 = vadd.f32 %v1603, %v1604
    %v1606 = vrot.slane %v1247, 4
    %v1607 = vadd.f32 %v1247, %v1606
    %v1608 = vrot.slane %v1607, 2
    %v1609 = vadd.f32 %v1607, %v1608
    %v1610 = vrot.slane %v1609, 1
    %v1611 = vadd.f32 %v1609, %v1610
    %v1612 = vrot.slane %v1248, 4
    %v1613 = vadd.f32 %v1248, %v1612
    %v1614 = vrot.slane %v1613, 2
    %v1615 = vadd.f32 %v1613, %v1614
    %v1616 = vrot.slane %v1615, 1
    %v1617 = vadd.f32 %v1615, %v1616
    %v1618 = vrot.slane %v1249, 4
    %v1619 = vadd.f32 %v1249, %v1618
    %v1620 = vrot.slane %v1619, 2
    %v1621 = vadd.f32 %v1619, %v1620
    %v1622 = vrot.slane %v1621, 1
    %v1623 = vadd.f32 %v1621, %v1622
    %v1624 = vrot.slane %v1250, 4
    %v1625 = vadd.f32 %v1250, %v1624
    %v1626 = vrot.slane %v1625, 2
    %v1627 = vadd.f32 %v1625, %v1626
    %v1628 = vrot.slane %v1627, 1
    %v1629 = vadd.f32 %v1627, %v1628
    %v1630 = vrot.slane %v1251, 4
    %v1631 = vadd.f32 %v1251, %v1630
    %v1632 = vrot.slane %v1631, 2
    %v1633 = vadd.f32 %v1631, %v1632
    %v1634 = vrot.slane %v1633, 1
    %v1635 = vadd.f32 %v1633, %v1634
    %v1636 = vmul.f32 %v1257, 0.35355338
    %v1637 = vmul.f32 %v1263, 0.35355338
    %v1638 = vmul.f32 %v1269, 0.35355338
    %v1639 = vmul.f32 %v1275, 0.35355338
    %v1640 = vmul.f32 %v1281, 0.35355338
    %v1641 = vmul.f32 %v1287, 0.35355338
    %v1642 = vmul.f32 %v1293, 0.35355338
    %v1643 = vmul.f32 %v1299, 0.35355338
    %v1644 = vmul.f32 %v1305, 0.35355338
    %v1645 = vmul.f32 %v1311, 0.35355338
    %v1646 = vmul.f32 %v1317, 0.35355338
    %v1647 = vmul.f32 %v1323, 0.35355338
    %v1648 = vmul.f32 %v1329, 0.35355338
    %v1649 = vmul.f32 %v1335, 0.35355338
    %v1650 = vmul.f32 %v1341, 0.35355338
    %v1651 = vmul.f32 %v1347, 0.35355338
    %v1652 = vmul.f32 %v1353, 0.35355338
    %v1653 = vmul.f32 %v1359, 0.35355338
    %v1654 = vmul.f32 %v1365, 0.35355338
    %v1655 = vmul.f32 %v1371, 0.35355338
    %v1656 = vmul.f32 %v1377, 0.35355338
    %v1657 = vmul.f32 %v1383, 0.35355338
    %v1658 = vmul.f32 %v1389, 0.35355338
    %v1659 = vmul.f32 %v1395, 0.35355338
    %v1660 = vmul.f32 %v1401, 0.35355338
    %v1661 = vmul.f32 %v1407, 0.35355338
    %v1662 = vmul.f32 %v1413, 0.35355338
    %v1663 = vmul.f32 %v1419, 0.35355338
    %v1664 = vmul.f32 %v1425, 0.35355338
    %v1665 = vmul.f32 %v1431, 0.35355338
    %v1666 = vmul.f32 %v1437, 0.35355338
    %v1667 = vmul.f32 %v1443, 0.35355338
    %v1668 = vmul.f32 %v1449, 0.35355338
    %v1669 = vmul.f32 %v1455, 0.35355338
    %v1670 = vmul.f32 %v1461, 0.35355338
    %v1671 = vmul.f32 %v1467, 0.35355338
    %v1672 = vmul.f32 %v1473, 0.35355338
    %v1673 = vmul.f32 %v1479, 0.35355338
    %v1674 = vmul.f32 %v1485, 0.35355338
    %v1675 = vmul.f32 %v1491, 0.35355338
    %v1676 = vmul.f32 %v1497, 0.35355338
    %v1677 = vmul.f32 %v1503, 0.35355338
    %v1678 = vmul.f32 %v1509, 0.35355338
    %v1679 = vmul.f32 %v1515, 0.35355338
    %v1680 = vmul.f32 %v1521, 0.35355338
    %v1681 = vmul.f32 %v1527, 0.35355338
    %v1682 = vmul.f32 %v1533, 0.35355338
    %v1683 = vmul.f32 %v1539, 0.35355338
    %v1684 = vmul.f32 %v1545, 0.35355338
    %v1685 = vmul.f32 %v1551, 0.35355338
    %v1686 = vmul.f32 %v1557, 0.35355338
    %v1687 = vmul.f32 %v1563, 0.35355338
    %v1688 = vmul.f32 %v1569, 0.35355338
    %v1689 = vmul.f32 %v1575, 0.35355338
    %v1690 = vmul.f32 %v1581, 0.35355338
    %v1691 = vmul.f32 %v1587, 0.35355338
    %v1692 = vmul.f32 %v1593, 0.35355338
    %v1693 = vmul.f32 %v1599, 0.35355338
    %v1694 = vmul.f32 %v1605, 0.35355338
    %v1695 = vmul.f32 %v1611, 0.35355338
    %v1696 = vmul.f32 %v1617, 0.35355338
    %v1697 = vmul.f32 %v1623, 0.35355338
    %v1698 = vmul.f32 %v1629, 0.35355338
    %v1699 = vmul.f32 %v1635, 0.35355338
    %v1700 = vmax.f32 %v1636, %v1637
    %v1701 = vmax.f32 %v1700, %v1638
    %v1702 = vmax.f32 %v1701, %v1639
    %v1703 = vmax.f32 %v1702, %v1640
    %v1704 = vmax.f32 %v1703, %v1641
    %v1705 = vmax.f32 %v1704, %v1642
    %v1706 = vmax.f32 %v1705, %v1643
    %v1707 = vmax.f32 %v1644, %v1645
    %v1708 = vmax.f32 %v1707, %v1646
    %v1709 = vmax.f32 %v1708, %v1647
    %v1710 = vmax.f32 %v1709, %v1648
    %v1711 = vmax.f32 %v1710, %v1649
    %v1712 = vmax.f32 %v1711, %v1650
    %v1713 = vmax.f32 %v1712, %v1651
    %v1714 = vmax.f32 %v1652, %v1653
    %v1715 = vmax.f32 %v1714, %v1654
    %v1716 = vmax.f32 %v1715, %v1655
    %v1717 = vmax.f32 %v1716, %v1656
    %v1718 = vmax.f32 %v1717, %v1657
    %v1719 = vmax.f32 %v1718, %v1658
    %v1720 = vmax.f32 %v1719, %v1659
    %v1721 = vmax.f32 %v1660, %v1661
    %v1722 = vmax.f32 %v1721, %v1662
    %v1723 = vmax.f32 %v1722, %v1663
    %v1724 = vmax.f32 %v1723, %v1664
    %v1725 = vmax.f32 %v1724, %v1665
    %v1726 = vmax.f32 %v1725, %v1666
    %v1727 = vmax.f32 %v1726, %v1667
    %v1728 = vmax.f32 %v1668, %v1669
    %v1729 = vmax.f32 %v1728, %v1670
    %v1730 = vmax.f32 %v1729, %v1671
    %v1731 = vmax.f32 %v1730, %v1672
    %v1732 = vmax.f32 %v1731, %v1673
    %v1733 = vmax.f32 %v1732, %v1674
    %v1734 = vmax.f32 %v1733, %v1675
    %v1735 = vmax.f32 %v1676, %v1677
    %v1736 = vmax.f32 %v1735, %v1678
    %v1737 = vmax.f32 %v1736, %v1679
    %v1738 = vmax.f32 %v1737, %v1680
    %v1739 = vmax.f32 %v1738, %v1681
    %v1740 = vmax.f32 %v1739, %v1682
    %v1741 = vmax.f32 %v1740, %v1683
    %v1742 = vmax.f32 %v1684, %v1685
    %v1743 = vmax.f32 %v1742, %v1686
    %v1744 = vmax.f32 %v1743, %v1687
    %v1745 = vmax.f32 %v1744, %v1688
    %v1746 = vmax.f32 %v1745, %v1689
    %v1747 = vmax.f32 %v1746, %v1690
    %v1748 = vmax.f32 %v1747, %v1691
    %v1749 = vmax.f32 %v1692, %v1693
    %v1750 = vmax.f32 %v1749, %v1694
    %v1751 = vmax.f32 %v1750, %v1695
    %v1752 = vmax.f32 %v1751, %v1696
    %v1753 = vmax.f32 %v1752, %v1697
    %v1754 = vmax.f32 %v1753, %v1698
    %v1755 = vmax.f32 %v1754, %v1699
    %v1756 = vsub.f32 %v1636, %v1706
    %v1757 = vsub.f32 %v1637, %v1706
    %v1758 = vsub.f32 %v1638, %v1706
    %v1759 = vsub.f32 %v1639, %v1706
    %v1760 = vsub.f32 %v1640, %v1706
    %v1761 = vsub.f32 %v1641, %v1706
    %v1762 = vsub.f32 %v1642, %v1706
    %v1763 = vsub.f32 %v1643, %v1706
    %v1764 = vsub.f32 %v1644, %v1713
    %v1765 = vsub.f32 %v1645, %v1713
    %v1766 = vsub.f32 %v1646, %v1713
    %v1767 = vsub.f32 %v1647, %v1713
    %v1768 = vsub.f32 %v1648, %v1713
    %v1769 = vsub.f32 %v1649, %v1713
    %v1770 = vsub.f32 %v1650, %v1713
    %v1771 = vsub.f32 %v1651, %v1713
    %v1772 = vsub.f32 %v1652, %v1720
    %v1773 = vsub.f32 %v1653, %v1720
    %v1774 = vsub.f32 %v1654, %v1720
    %v1775 = vsub.f32 %v1655, %v1720
    %v1776 = vsub.f32 %v1656, %v1720
    %v1777 = vsub.f32 %v1657, %v1720
    %v1778 = vsub.f32 %v1658, %v1720
    %v1779 = vsub.f32 %v1659, %v1720
    %v1780 = vsub.f32 %v1660, %v1727
    %v1781 = vsub.f32 %v1661, %v1727
    %v1782 = vsub.f32 %v1662, %v1727
    %v1783 = vsub.f32 %v1663, %v1727
    %v1784 = vsub.f32 %v1664, %v1727
    %v1785 = vsub.f32 %v1665, %v1727
    %v1786 = vsub.f32 %v1666, %v1727
    %v1787 = vsub.f32 %v1667, %v1727
    %v1788 = vsub.f32 %v1668, %v1734
    %v1789 = vsub.f32 %v1669, %v1734
    %v1790 = vsub.f32 %v1670, %v1734
    %v1791 = vsub.f32 %v1671, %v1734
    %v1792 = vsub.f32 %v1672, %v1734
    %v1793 = vsub.f32 %v1673, %v1734
    %v1794 = vsub.f32 %v1674, %v1734
    %v1795 = vsub.f32 %v1675, %v1734
    %v1796 = vsub.f32 %v1676, %v1741
    %v1797 = vsub.f32 %v1677, %v1741
    %v1798 = vsub.f32 %v1678, %v1741
    %v1799 = vsub.f32 %v1679, %v1741
    %v1800 = vsub.f32 %v1680, %v1741
    %v1801 = vsub.f32 %v1681, %v1741
    %v1802 = vsub.f32 %v1682, %v1741
    %v1803 = vsub.f32 %v1683, %v1741
    %v1804 = vsub.f32 %v1684, %v1748
    %v1805 = vsub.f32 %v1685, %v1748
    %v1806 = vsub.f32 %v1686, %v1748
    %v1807 = vsub.f32 %v1687, %v1748
    %v1808 = vsub.f32 %v1688, %v1748
    %v1809 = vsub.f32 %v1689, %v1748
    %v1810 = vsub.f32 %v1690, %v1748
    %v1811 = vsub.f32 %v1691, %v1748
    %v1812 = vsub.f32 %v1692, %v1755
    %v1813 = vsub.f32 %v1693, %v1755
    %v1814 = vsub.f32 %v1694, %v1755
    %v1815 = vsub.f32 %v1695, %v1755
    %v1816 = vsub.f32 %v1696, %v1755
    %v1817 = vsub.f32 %v1697, %v1755
    %v1818 = vsub.f32 %v1698, %v1755
    %v1819 = vsub.f32 %v1699, %v1755
    %v1820 = vmul.f32 %v1756, 1.442695
    %v1821 = vpow.pop %v1820
    %v1822 = vmul.f32 %v1757, 1.442695
    %v1823 = vpow.pop %v1822
    %v1824 = vmul.f32 %v1758, 1.442695
    %v1825 = vpow.pop %v1824
    %v1826 = vmul.f32 %v1759, 1.442695
    %v1827 = vpow.pop %v1826
    %v1828 = vmul.f32 %v1760, 1.442695
    %v1829 = vpow.pop %v1828
    %v1830 = vmul.f32 %v1761, 1.442695
    %v1831 = vpow.pop %v1830
    %v1832 = vmul.f32 %v1762, 1.442695
    %v1833 = vpow.pop %v1832
    %v1834 = vmul.f32 %v1763, 1.442695
    %v1835 = vpow.pop %v1834
    %v1836 = vmul.f32 %v1764, 1.442695
    %v1837 = vpow.pop %v1836
    %v1838 = vmul.f32 %v1765, 1.442695
    %v1839 = vpow.pop %v1838
    %v1840 = vmul.f32 %v1766, 1.442695
    %v1841 = vpow.pop %v1840
    %v1842 = vmul.f32 %v1767, 1.442695
    %v1843 = vpow.pop %v1842
    %v1844 = vmul.f32 %v1768, 1.442695
    %v1845 = vpow.pop %v1844
    %v1846 = vmul.f32 %v1769, 1.442695
    %v1847 = vpow.pop %v1846
    %v1848 = vmul.f32 %v1770, 1.442695
    %v1849 = vpow.pop %v1848
    %v1850 = vmul.f32 %v1771, 1.442695
    %v1851 = vpow.pop %v1850
    %v1852 = vmul.f32 %v1772, 1.442695
    %v1853 = vpow.pop %v1852
    %v1854 = vmul.f32 %v1773, 1.442695
    %v1855 = vpow.pop %v1854
    %v1856 = vmul.f32 %v1774, 1.442695
    %v1857 = vpow.pop %v1856
    %v1858 = vmul.f32 %v1775, 1.442695
    %v1859 = vpow.pop %v1858
    %v1860 = vmul.f32 %v1776, 1.442695
    %v1861 = vpow.pop %v1860
    %v1862 = vmul.f32 %v1777, 1.442695
    %v1863 = vpow.pop %v1862
    %v1864 = vmul.f32 %v1778, 1.442695
    %v1865 = vpow.pop %v1864
    %v1866 = vmul.f32 %v1779, 1.442695
    %v1867 = vpow.pop %v1866
    %v1868 = vmul.f32 %v1780, 1.442695
    %v1869 = vpow.pop %v1868
    %v1870 = vmul.f32 %v1781, 1.442695
    %v1871 = vpow.pop %v1870
    %v1872 = vmul.f32 %v1782, 1.442695
    %v1873 = vpow.pop %v1872
    %v1874 = vmul.f32 %v1783, 1.442695
    %v1875 = vpow.pop %v1874
    %v1876 = vmul.f32 %v1784, 1.442695
    %v1877 = vpow.pop %v1876
    %v1878 = vmul.f32 %v1785, 1.442695
    %v1879 = vpow.pop %v1878
    %v1880 = vmul.f32 %v1786, 1.442695
    %v1881 = vpow.pop %v1880
    %v1882 = vmul.f32 %v1787, 1.442695
    %v1883 = vpow.pop %v1882
    %v1884 = vmul.f32 %v1788, 1.442695
    %v1885 = vpow.pop %v1884
    %v1886 = vmul.f32 %v1789, 1.442695
    %v1887 = vpow.pop %v1886
    %v1888 = vmul.f32 %v1790, 1.442695
    %v1889 = vpow.pop %v1888
    %v1890 = vmul.f32 %v1791, 1.442695
    %v1891 = vpow.pop %v1890
    %v1892 = vmul.f32 %v1792, 1.442695
    %v1893 = vpow.pop %v1892
    %v1894 = vmul.f32 %v1793, 1.442695
    %v1895 = vpow.pop %v1894
    %v1896 = vmul.f32 %v1794, 1.442695
    %v1897 = vpow.pop %v1896
    %v1898 = vmul.f32 %v1795, 1.442695
    %v1899 = vpow.pop %v1898
    %v1900 = vmul.f32 %v1796, 1.442695
    %v1901 = vpow.pop %v1900
    %v1902 = vmul.f32 %v1797, 1.442695
    %v1903 = vpow.pop %v1902
    %v1904 = vmul.f32 %v1798, 1.442695
    %v1905 = vpow.pop %v1904
    %v1906 = vmul.f32 %v1799, 1.442695
    %v1907 = vpow.pop %v1906
    %v1908 = vmul.f32 %v1800, 1.442695
    %v1909 = vpow.pop %v1908
    %v1910 = vmul.f32 %v1801, 1.442695
    %v1911 = vpow.pop %v1910
    %v1912 = vmul.f32 %v1802, 1.442695
    %v1913 = vpow.pop %v1912
    %v1914 = vmul.f32 %v1803, 1.442695
    %v1915 = vpow.pop %v1914
    %v1916 = vmul.f32 %v1804, 1.442695
    %v1917 = vpow.pop %v1916
    %v1918 = vmul.f32 %v1805, 1.442695
    %v1919 = vpow.pop %v1918
    %v1920 = vmul.f32 %v1806, 1.442695
    %v1921 = vpow.pop %v1920
    %v1922 = vmul.f32 %v1807, 1.442695
    %v1923 = vpow.pop %v1922
    %v1924 = vmul.f32 %v1808, 1.442695
    %v1925 = vpow.pop %v1924
    %v1926 = vmul.f32 %v1809, 1.442695
    %v1927 = vpow.pop %v1926
    %v1928 = vmul.f32 %v1810, 1.442695
    %v1929 = vpow.pop %v1928
    %v1930 = vmul.f32 %v1811, 1.442695
    %v1931 = vpow.pop %v1930
    %v1932 = vmul.f32 %v1812, 1.442695
    %v1933 = vpow.pop %v1932
    %v1934 = vmul.f32 %v1813, 1.442695
    %v1935 = vpow.pop %v1934
    %v1936 = vmul.f32 %v1814, 1.442695
    %v1937 = vpow.pop %v1936
    %v1938 = vmul.f32 %v1815, 1.442695
    %v1939 = vpow.pop %v1938
    %v1940 = vmul.f32 %v1816, 1.442695
    %v1941 = vpow.pop %v1940
    %v1942 = vmul.f32 %v1817, 1.442695
    %v1943 = vpow.pop %v1942
    %v1944 = vmul.f32 %v1818, 1.442695
    %v1945 = vpow.pop %v1944
    %v1946 = vmul.f32 %v1819, 1.442695
    %v1947 = vpow.pop %v1946
    %v2012 = vrot.slane %v1823, 7
    %vm2013 = vcmask 1041409
    %v2014 = vsel %vm2013, %v2012, %v1821
    %v2015 = vrot.slane %v1825, 6
    %vm2016 = vcmask 1042434
    %v2017 = vsel %vm2016, %v2015, %v2014
    %v2018 = vrot.slane %v1827, 5
    %vm2019 = vcmask 1043459
    %v2020 = vsel %vm2019, %v2018, %v2017
    %v2021 = vrot.slane %v1829, 4
    %vm2022 = vcmask 1044484
    %v2023 = vsel %vm2022, %v2021, %v2020
    %v2024 = vrot.slane %v1831, 3
    %vm2025 = vcmask 1045509
    %v2026 = vsel %vm2025, %v2024, %v2023
    %v2027 = vrot.slane %v1833, 2
    %vm2028 = vcmask 1046534
    %v2029 = vsel %vm2028, %v2027, %v2026
    %v2030 = vrot.slane %v1835, 1
    %vm2031 = vcmask 1047559
    %v2032 = vsel %vm2031, %v2030, %v2029
    %v2033 = vrot.slane %v1839, 7
    %v2034 = vsel %vm2013, %v2033, %v1837
    %v2035 = vrot.slane %v1841, 6
    %v2036 = vsel %vm2016, %v2035, %v2034
    %v2037 = vrot.slane %v1843, 5
    %v2038 = vsel %vm2019, %v2037, %v2036
    %v2039 = vrot.slane %v1845, 4
    %v2040 = vsel %vm2022, %v2039, %v2038
    %v2041 = vrot.slane %v1847, 3
    %v2042 = vsel %vm2025, %v2041, %v2040
    %v2043 = vrot.slane %v1849, 2
    %v2044 = vsel %vm2028, %v2043, %v2042
    %v2045 = vrot.slane %v1851, 1
    %v2046 = vsel %vm2031, %v2045, %v2044
    %v2047 = vrot.slane %v1855, 7
    %v2048 = vsel %vm2013, %v2047, %v1853
    %v2049 = vrot.slane %v1857, 6
    %v2050 = vsel %vm2016, %v2049, %v2048
    %v2051 = vrot.slane %v1859, 5
    %v2052 = vsel %vm2019, %v2051, %v2050
    %v2053 = vrot.slane %v1861, 4
    %v2054 = vsel %vm2022, %v2053, %v2052
    %v2055 = vrot.slane %v1863, 3
    %v2056 = vsel %vm2025, %v2055, %v2054
    %v2057 = vrot.slane %v1865, 2
    %v2058 = vsel %vm2028, %v2057, %v2056
    %v2059 = vrot.slane %v1867, 1
    %v2060 = vsel %vm2031, %v2059, %v2058
    %v2061 = vrot.slane %v1871, 7
    %v2062 = vsel %vm2013, %v2061, %v1869
    %v2063 = vrot.slane %v1873, 6
    %v2064 = vsel %vm2016, %v2063, %v2062
    %v2065 = vrot.slane %v1875, 5
    %v2066 = vsel %vm2019, %v2065, %v2064
    %v2067 = vrot.slane %v1877, 4
    %v2068 = vsel %vm2022, %v2067, %v2066
    %v2069 = vrot.slane %v1879, 3
    %v2070 = vsel %vm2025, %v2069, %v2068
    %v2071 = vrot.slane %v1881, 2
    %v2072 = vsel %vm2028, %v2071, %v2070
    %v2073 = vrot.slane %v1883, 1
    %v2074 = vsel %vm2031, %v2073, %v2072
    %v2075 = vrot.slane %v1887, 7
    %v2076 = vsel %vm2013, %v2075, %v1885
    %v2077 = vrot.slane %v1889, 6
    %v2078 = vsel %vm2016, %v2077, %v2076
    %v2079 = vrot.slane %v1891, 5
    %v2080 = vsel %vm2019, %v2079, %v2078
    %v2081 = vrot.slane %v1893, 4
    %v2082 = vsel %vm2022, %v2081, %v2080
    %v2083 = vrot.slane %v1895, 3
    %v2084 = vsel %vm2025, %v2083, %v2082
    %v2085 = vrot.slane %v1897, 2
    %v2086 = vsel %vm2028, %v2085, %v2084
    %v2087 = vrot.slane %v1899, 1
    %v2088 = vsel %vm2031, %v2087, %v2086
    %v2089 = vrot.slane %v1903, 7
    %v2090 = vsel %vm2013, %v2089, %v1901
    %v2091 = vrot.slane %v1905, 6
    %v2092 = vsel %vm2016, %v2091, %v2090
    %v2093 = vrot.slane %v1907, 5
    %v2094 = vsel %vm2019, %v2093, %v2092
    %v2095 = vrot.slane %v1909, 4
    %v2096 = vsel %vm2022, %v2095, %v2094
    %v2097 = vrot.slane %v1911, 3
    %v2098 = vsel %vm2025, %v2097, %v2096
    %v2099 = vrot.slane %v1913, 2
    %v2100 = vsel %vm2028, %v2099, %v2098
    %v2101 = vrot.slane %v1915, 1
    %v2102 = vsel %vm2031, %v2101, %v2100
    %v2103 = vrot.slane %v1919, 7
    %v2104 = vsel %vm2013, %v2103, %v1917
    %v2105 = vrot.slane %v1921, 6
    %v2106 = vsel %vm2016, %v2105, %v2104
    %v2107 = vrot.slane %v1923, 5
    %v2108 = vsel %vm2019, %v2107, %v2106
    %v2109 = vrot.slane %v1925, 4
    %v2110 = vsel %vm2022, %v2109, %v2108
    %v2111 = vrot.slane %v1927, 3
    %v2112 = vsel %vm2025, %v2111, %v2110
    %v2113 = vrot.slane %v1929, 2
    %v2114 = vsel %vm2028, %v2113, %v2112
    %v2115 = vrot.slane %v1931, 1
    %v2116 = vsel %vm2031, %v2115, %v2114
    %v2117 = vrot.slane %v1935, 7
    %v2118 = vsel %vm2013, %v2117, %v1933
    %v2119 = vrot.slane %v1937, 6
    %v2120 = vsel %vm2016, %v2119, %v2118
    %v2121 = vrot.slane %v1939, 5
    %v2122 = vsel %vm2019, %v2121, %v2120
    %v2123 = vrot.slane %v1941, 4
    %v2124 = vsel %vm2022, %v2123, %v2122
    %v2125 = vrot.slane %v1943, 3
    %v2126 = vsel %vm2025, %v2125, %v2124
    %v2127 = vrot.slane %v1945, 2
    %v2128 = vsel %vm2028, %v2127, %v2126
    %v2129 = vrot.slane %v1947, 1
    %v2130 = vsel %vm2031, %v2129, %v2128
    %v2139 = vrot.slane %v2032, 4
    %v2140 = vadd.f32 %v2032, %v2139
    %v2141 = vrot.slane %v2140, 2
    %v2142 = vadd.f32 %v2140, %v2141
    %v2143 = vrot.slane %v2142, 1
    %v2144 = vadd.f32 %v2142, %v2143
    %v2145 = vrot.slane %v2046, 4
    %v2146 = vadd.f32 %v2046, %v2145
    %v2147 = vrot.slane %v2146, 2
    %v2148 = vadd.f32 %v2146, %v2147
    %v2149 = vrot.slane %v2148, 1
    %v2150 = vadd.f32 %v2148, %v2149
    %v2151 = vrot.slane %v2060, 4
    %v2152 = vadd.f32 %v2060, %v2151
    %v2153 = vrot.slane %v2152, 2
    %v2154 = vadd.f32 %v2152, %v2153
    %v2155 = vrot.slane %v2154, 1
    %v2156 = vadd.f32 %v2154, %v2155
    %v2157 = vrot.slane %v2074, 4
    %v2158 = vadd.f32 %v2074, %v2157
    %v2159 = vrot.slane %v2158, 2
    %v2160 = vadd.f32 %v2158, %v2159
    %v2161 = vrot.slane %v2160, 1
    %v2162 = vadd.f32 %v2160, %v2161
    %v2163 = vrot.slane %v2088, 4
    %v2164 = vadd.f32 %v2088, %v2163
    %v2165 = vrot.slane %v2164, 2
    %v2166 = vadd.f32 %v2164, %v2165
    %v2167 = vrot.slane %v2166, 1
    %v2168 = vadd.f32 %v2166, %v2167
    %v2169 = vrot.slane %v2102, 4
    %v2170 = vadd.f32 %v2102, %v2169
    %v2171 = vrot.slane %v2170, 2
    %v2172 = vadd.f32 %v2170, %v2171
    %v2173 = vrot.slane %v2172, 1
    %v2174 = vadd.f32 %v2172, %v2173
    %v2175 = vrot.slane %v2116, 4
    %v2176 = vadd.f32 %v2116, %v2175
    %v2177 = vrot.slane %v2176, 2
    %v2178 = vadd.f32 %v2176, %v2177
    %v2179 = vrot.slane %v2178, 1
    %v2180 = vadd.f32 %v2178, %v2179
    %v2181 = vrot.slane %v2130, 4
    %v2182 = vadd.f32 %v2130, %v2181
    %v2183 = vrot.slane %v2182, 2
    %v2184 = vadd.f32 %v2182, %v2183
    %v2185 = vrot.slane %v2184, 1
    %v2186 = vadd.f32 %v2184, %v2185
    %v2187 = vrcp.pop %v2144
    %v2188 = vrcp.pop %v2150
    %v2189 = vrcp.pop %v2156
    %v2190 = vrcp.pop %v2162
    %v2191 = vrcp.pop %v2168
    %v2192 = vrcp.pop %v2174
    %v2193 = vrcp.pop %v2180
    %v2194 = vrcp.pop %v2186
    %v2195 = vlaneseq
    %v2196 = vshrl.u32 %v2195, 7
    %v2197 = vsub.s32 0, %v2196
    %v2198 = vrot.slane %v2187, %v2197
    %v2199 = vlaneseq
    %v2200 = vshrl.u32 %v2199, 7
    %v2201 = vsub.s32 0, %v2200
    %v2202 = vrot.slane %v2188, %v2201
    %v2203 = vlaneseq
    %v2204 = vshrl.u32 %v2203, 7
    %v2205 = vsub.s32 0, %v2204
    %v2206 = vrot.slane %v2189, %v2205
    %v2207 = vlaneseq
    %v2208 = vshrl.u32 %v2207, 7
    %v2209 = vsub.s32 0, %v2208
    %v2210 = vrot.slane %v2190, %v2209
    %v2211 = vlaneseq
    %v2212 = vshrl.u32 %v2211, 7
    %v2213 = vsub.s32 0, %v2212
    %v2214 = vrot.slane %v2191, %v2213
    %v2215 = vlaneseq
    %v2216 = vshrl.u32 %v2215, 7
    %v2217 = vsub.s32 0, %v2216
    %v2218 = vrot.slane %v2192, %v2217
    %v2219 = vlaneseq
    %v2220 = vshrl.u32 %v2219, 7
    %v2221 = vsub.s32 0, %v2220
    %v2222 = vrot.slane %v2193, %v2221
    %v2223 = vlaneseq
    %v2224 = vshrl.u32 %v2223, 7
    %v2225 = vsub.s32 0, %v2224
    %v2226 = vrot.slane %v2194, %v2225
    %v2227 = vmul.f32 %v1821, %v2198
    %v2228 = vmul.f32 %v1823, %v2198
    %v2229 = vmul.f32 %v1825, %v2198
    %v2230 = vmul.f32 %v1827, %v2198
    %v2231 = vmul.f32 %v1829, %v2198
    %v2232 = vmul.f32 %v1831, %v2198
    %v2233 = vmul.f32 %v1833, %v2198
    %v2234 = vmul.f32 %v1835, %v2198
    %v2235 = vmul.f32 %v1837, %v2202
    %v2236 = vmul.f32 %v1839, %v2202
    %v2237 = vmul.f32 %v1841, %v2202
    %v2238 = vmul.f32 %v1843, %v2202
    %v2239 = vmul.f32 %v1845, %v2202
    %v2240 = vmul.f32 %v1847, %v2202
    %v2241 = vmul.f32 %v1849, %v2202
    %v2242 = vmul.f32 %v1851, %v2202
    %v2243 = vmul.f32 %v1853, %v2206
    %v2244 = vmul.f32 %v1855, %v2206
    %v2245 = vmul.f32 %v1857, %v2206
    %v2246 = vmul.f32 %v1859, %v2206
    %v2247 = vmul.f32 %v1861, %v2206
    %v2248 = vmul.f32 %v1863, %v2206
    %v2249 = vmul.f32 %v1865, %v2206
    %v2250 = vmul.f32 %v1867, %v2206
    %v2251 = vmul.f32 %v1869, %v2210
    %v2252 = vmul.f32 %v1871, %v2210
    %v2253 = vmul.f32 %v1873, %v2210
    %v2254 = vmul.f32 %v1875, %v2210
    %v2255 = vmul.f32 %v1877, %v2210
    %v2256 = vmul.f32 %v1879, %v2210
    %v2257 = vmul.f32 %v1881, %v2210
    %v2258 = vmul.f32 %v1883, %v2210
    %v2259 = vmul.f32 %v1885, %v2214
    %v2260 = vmul.f32 %v1887, %v2214
    %v2261 = vmul.f32 %v1889, %v2214
    %v2262 = vmul.f32 %v1891, %v2214
    %v2263 = vmul.f32 %v1893, %v2214
    %v2264 = vmul.f32 %v1895, %v2214
    %v2265 = vmul.f32 %v1897, %v2214
    %v2266 = vmul.f32 %v1899, %v2214
    %v2267 = vmul.f32 %v1901, %v2218
    %v2268 = vmul.f32 %v1903, %v2218
    %v2269 = vmul.f32 %v1905, %v2218
    %v2270 = vmul.f32 %v1907, %v2218
    %v2271 = vmul.f32 %v1909, %v2218
    %v2272 = vmul.f32 %v1911, %v2218
    %v2273 = vmul.f32 %v1913, %v2218
    %v2274 = vmul.f32 %v1915, %v2218
    %v2275 = vmul.f32 %v1917, %v2222
    %v2276 = vmul.f32 %v1919, %v2222
    %v2277 = vmul.f32 %v1921, %v2222
    %v2278 = vmul.f32 %v1923, %v2222
    %v2279 = vmul.f32 %v1925, %v2222
    %v2280 = vmul.f32 %v1927, %v2222
    %v2281 = vmul.f32 %v1929, %v2222
    %v2282 = vmul.f32 %v1931, %v2222
    %v2283 = vmul.f32 %v1933, %v2226
    %v2284 = vmul.f32 %v1935, %v2226
    %v2285 = vmul.f32 %v1937, %v2226
    %v2286 = vmul.f32 %v1939, %v2226
    %v2287 = vmul.f32 %v1941, %v2226
    %v2288 = vmul.f32 %v1943, %v2226
    %v2289 = vmul.f32 %v1945, %v2226
    %v2290 = vmul.f32 %v1947, %v2226
    %v2291 = vlaneseq
    %v2292 = vshrl.u32 %v2291, 7
    %v2293 = vsub.s32 0, %v2292
    %v2294 = vrot.slane %v2227, %v2293
    %v2295 = vlaneseq
    %v2296 = vshrl.u32 %v2295, 7
    %v2297 = vsub.s32 0, %v2296
    %v2298 = vrot.slane %v2228, %v2297
    %v2299 = vlaneseq
    %v2300 = vshrl.u32 %v2299, 7
    %v2301 = vsub.s32 0, %v2300
    %v2302 = vrot.slane %v2229, %v2301
    %v2303 = vlaneseq
    %v2304 = vshrl.u32 %v2303, 7
    %v2305 = vsub.s32 0, %v2304
    %v2306 = vrot.slane %v2230, %v2305
    %v2307 = vlaneseq
    %v2308 = vshrl.u32 %v2307, 7
    %v2309 = vsub.s32 0, %v2308
    %v2310 = vrot.slane %v2231, %v2309
    %v2311 = vlaneseq
    %v2312 = vshrl.u32 %v2311, 7
    %v2313 = vsub.s32 0, %v2312
    %v2314 = vrot.slane %v2232, %v2313
    %v2315 = vlaneseq
    %v2316 = vshrl.u32 %v2315, 7
    %v2317 = vsub.s32 0, %v2316
    %v2318 = vrot.slane %v2233, %v2317
    %v2319 = vlaneseq
    %v2320 = vshrl.u32 %v2319, 7
    %v2321 = vsub.s32 0, %v2320
    %v2322 = vrot.slane %v2234, %v2321
    %v2323 = vlaneseq
    %v2324 = vshrl.u32 %v2323, 7
    %v2325 = vsub.s32 0, %v2324
    %v2326 = vrot.slane %v2235, %v2325
    %v2327 = vlaneseq
    %v2328 = vshrl.u32 %v2327, 7
    %v2329 = vsub.s32 0, %v2328
    %v2330 = vrot.slane %v2236, %v2329
    %v2331 = vlaneseq
    %v2332 = vshrl.u32 %v2331, 7
    %v2333 = vsub.s32 0, %v2332
    %v2334 = vrot.slane %v2237, %v2333
    %v2335 = vlaneseq
    %v2336 = vshrl.u32 %v2335, 7
    %v2337 = vsub.s32 0, %v2336
    %v2338 = vrot.slane %v2238, %v2337
    %v2339 = vlaneseq
    %v2340 = vshrl.u32 %v2339, 7
    %v2341 = vsub.s32 0, %v2340
    %v2342 = vrot.slane %v2239, %v2341
    %v2343 = vlaneseq
    %v2344 = vshrl.u32 %v2343, 7
    %v2345 = vsub.s32 0, %v2344
    %v2346 = vrot.slane %v2240, %v2345
    %v2347 = vlaneseq
    %v2348 = vshrl.u32 %v2347, 7
    %v2349 = vsub.s32 0, %v2348
    %v2350 = vrot.slane %v2241, %v2349
    %v2351 = vlaneseq
    %v2352 = vshrl.u32 %v2351, 7
    %v2353 = vsub.s32 0, %v2352
    %v2354 = vrot.slane %v2242, %v2353
    %v2355 = vlaneseq
    %v2356 = vshrl.u32 %v2355, 7
    %v2357 = vsub.s32 0, %v2356
    %v2358 = vrot.slane %v2243, %v2357
    %v2359 = vlaneseq
    %v2360 = vshrl.u32 %v2359, 7
    %v2361 = vsub.s32 0, %v2360
    %v2362 = vrot.slane %v2244, %v2361
    %v2363 = vlaneseq
    %v2364 = vshrl.u32 %v2363, 7
    %v2365 = vsub.s32 0, %v2364
    %v2366 = vrot.slane %v2245, %v2365
    %v2367 = vlaneseq
    %v2368 = vshrl.u32 %v2367, 7
    %v2369 = vsub.s32 0, %v2368
    %v2370 = vrot.slane %v2246, %v2369
    %v2371 = vlaneseq
    %v2372 = vshrl.u32 %v2371, 7
    %v2373 = vsub.s32 0, %v2372
    %v2374 = vrot.slane %v2247, %v2373
    %v2375 = vlaneseq
    %v2376 = vshrl.u32 %v2375, 7
    %v2377 = vsub.s32 0, %v2376
    %v2378 = vrot.slane %v2248, %v2377
    %v2379 = vlaneseq
    %v2380 = vshrl.u32 %v2379, 7
    %v2381 = vsub.s32 0, %v2380
    %v2382 = vrot.slane %v2249, %v2381
    %v2383 = vlaneseq
    %v2384 = vshrl.u32 %v2383, 7
    %v2385 = vsub.s32 0, %v2384
    %v2386 = vrot.slane %v2250, %v2385
    %v2387 = vlaneseq
    %v2388 = vshrl.u32 %v2387, 7
    %v2389 = vsub.s32 0, %v2388
    %v2390 = vrot.slane %v2251, %v2389
    %v2391 = vlaneseq
    %v2392 = vshrl.u32 %v2391, 7
    %v2393 = vsub.s32 0, %v2392
    %v2394 = vrot.slane %v2252, %v2393
    %v2395 = vlaneseq
    %v2396 = vshrl.u32 %v2395, 7
    %v2397 = vsub.s32 0, %v2396
    %v2398 = vrot.slane %v2253, %v2397
    %v2399 = vlaneseq
    %v2400 = vshrl.u32 %v2399, 7
    %v2401 = vsub.s32 0, %v2400
    %v2402 = vrot.slane %v2254, %v2401
    %v2403 = vlaneseq
    %v2404 = vshrl.u32 %v2403, 7
    %v2405 = vsub.s32 0, %v2404
    %v2406 = vrot.slane %v2255, %v2405
    %v2407 = vlaneseq
    %v2408 = vshrl.u32 %v2407, 7
    %v2409 = vsub.s32 0, %v2408
    %v2410 = vrot.slane %v2256, %v2409
    %v2411 = vlaneseq
    %v2412 = vshrl.u32 %v2411, 7
    %v2413 = vsub.s32 0, %v2412
    %v2414 = vrot.slane %v2257, %v2413
    %v2415 = vlaneseq
    %v2416 = vshrl.u32 %v2415, 7
    %v2417 = vsub.s32 0, %v2416
    %v2418 = vrot.slane %v2258, %v2417
    %v2419 = vlaneseq
    %v2420 = vshrl.u32 %v2419, 7
    %v2421 = vsub.s32 0, %v2420
    %v2422 = vrot.slane %v2259, %v2421
    %v2423 = vlaneseq
    %v2424 = vshrl.u32 %v2423, 7
    %v2425 = vsub.s32 0, %v2424
    %v2426 = vrot.slane %v2260, %v2425
    %v2427 = vlaneseq
    %v2428 = vshrl.u32 %v2427, 7
    %v2429 = vsub.s32 0, %v2428
    %v2430 = vrot.slane %v2261, %v2429
    %v2431 = vlaneseq
    %v2432 = vshrl.u32 %v2431, 7
    %v2433 = vsub.s32 0, %v2432
    %v2434 = vrot.slane %v2262, %v2433
    %v2435 = vlaneseq
    %v2436 = vshrl.u32 %v2435, 7
    %v2437 = vsub.s32 0, %v2436
    %v2438 = vrot.slane %v2263, %v2437
    %v2439 = vlaneseq
    %v2440 = vshrl.u32 %v2439, 7
    %v2441 = vsub.s32 0, %v2440
    %v2442 = vrot.slane %v2264, %v2441
    %v2443 = vlaneseq
    %v2444 = vshrl.u32 %v2443, 7
    %v2445 = vsub.s32 0, %v2444
    %v2446 = vrot.slane %v2265, %v2445
    %v2447 = vlaneseq
    %v2448 = vshrl.u32 %v2447, 7
    %v2449 = vsub.s32 0, %v2448
    %v2450 = vrot.slane %v2266, %v2449
    %v2451 = vlaneseq
    %v2452 = vshrl.u32 %v2451, 7
    %v2453 = vsub.s32 0, %v2452
    %v2454 = vrot.slane %v2267, %v2453
    %v2455 = vlaneseq
    %v2456 = vshrl.u32 %v2455, 7
    %v2457 = vsub.s32 0, %v2456
    %v2458 = vrot.slane %v2268, %v2457
    %v2459 = vlaneseq
    %v2460 = vshrl.u32 %v2459, 7
    %v2461 = vsub.s32 0, %v2460
    %v2462 = vrot.slane %v2269, %v2461
    %v2463 = vlaneseq
    %v2464 = vshrl.u32 %v2463, 7
    %v2465 = vsub.s32 0, %v2464
    %v2466 = vrot.slane %v2270, %v2465
    %v2467 = vlaneseq
    %v2468 = vshrl.u32 %v2467, 7
    %v2469 = vsub.s32 0, %v2468
    %v2470 = vrot.slane %v2271, %v2469
    %v2471 = vlaneseq
    %v2472 = vshrl.u32 %v2471, 7
    %v2473 = vsub.s32 0, %v2472
    %v2474 = vrot.slane %v2272, %v2473
    %v2475 = vlaneseq
    %v2476 = vshrl.u32 %v2475, 7
    %v2477 = vsub.s32 0, %v2476
    %v2478 = vrot.slane %v2273, %v2477
    %v2479 = vlaneseq
    %v2480 = vshrl.u32 %v2479, 7
    %v2481 = vsub.s32 0, %v2480
    %v2482 = vrot.slane %v2274, %v2481
    %v2483 = vlaneseq
    %v2484 = vshrl.u32 %v2483, 7
    %v2485 = vsub.s32 0, %v2484
    %v2486 = vrot.slane %v2275, %v2485
    %v2487 = vlaneseq
    %v2488 = vshrl.u32 %v2487, 7
    %v2489 = vsub.s32 0, %v2488
    %v2490 = vrot.slane %v2276, %v2489
    %v2491 = vlaneseq
    %v2492 = vshrl.u32 %v2491, 7
    %v2493 = vsub.s32 0, %v2492
    %v2494 = vrot.slane %v2277, %v2493
    %v2495 = vlaneseq
    %v2496 = vshrl.u32 %v2495, 7
    %v2497 = vsub.s32 0, %v2496
    %v2498 = vrot.slane %v2278, %v2497
    %v2499 = vlaneseq
    %v2500 = vshrl.u32 %v2499, 7
    %v2501 = vsub.s32 0, %v2500
    %v2502 = vrot.slane %v2279, %v2501
    %v2503 = vlaneseq
    %v2504 = vshrl.u32 %v2503, 7
    %v2505 = vsub.s32 0, %v2504
    %v2506 = vrot.slane %v2280, %v2505
    %v2507 = vlaneseq
    %v2508 = vshrl.u32 %v2507, 7
    %v2509 = vsub.s32 0, %v2508
    %v2510 = vrot.slane %v2281, %v2509
    %v2511 = vlaneseq
    %v2512 = vshrl.u32 %v2511, 7
    %v2513 = vsub.s32 0, %v2512
    %v2514 = vrot.slane %v2282, %v2513
    %v2515 = vlaneseq
    %v2516 = vshrl.u32 %v2515, 7
    %v2517 = vsub.s32 0, %v2516
    %v2518 = vrot.slane %v2283, %v2517
    %v2519 = vlaneseq
    %v2520 = vshrl.u32 %v2519, 7
    %v2521 = vsub.s32 0, %v2520
    %v2522 = vrot.slane %v2284, %v2521
    %v2523 = vlaneseq
    %v2524 = vshrl.u32 %v2523, 7
    %v2525 = vsub.s32 0, %v2524
    %v2526 = vrot.slane %v2285, %v2525
    %v2527 = vlaneseq
    %v2528 = vshrl.u32 %v2527, 7
    %v2529 = vsub.s32 0, %v2528
    %v2530 = vrot.slane %v2286, %v2529
    %v2531 = vlaneseq
    %v2532 = vshrl.u32 %v2531, 7
    %v2533 = vsub.s32 0, %v2532
    %v2534 = vrot.slane %v2287, %v2533
    %v2535 = vlaneseq
    %v2536 = vshrl.u32 %v2535, 7
    %v2537 = vsub.s32 0, %v2536
    %v2538 = vrot.slane %v2288, %v2537
    %v2539 = vlaneseq
    %v2540 = vshrl.u32 %v2539, 7
    %v2541 = vsub.s32 0, %v2540
    %v2542 = vrot.slane %v2289, %v2541
    %v2543 = vlaneseq
    %v2544 = vshrl.u32 %v2543, 7
    %v2545 = vsub.s32 0, %v2544
    %v2546 = vrot.slane %v2290, %v2545
    %v2547 = vmul.f32 %v2294, %v295
    %v2548 = vmul.f32 %v2298, %v420
    %v2549 = vmul.f32 %v2302, %v545
    %v2550 = vmul.f32 %v2306, %v670
    %v2551 = vmul.f32 %v2310, %v795
    %v2552 = vmul.f32 %v2314, %v920
    %v2553 = vmul.f32 %v2318, %v1045
    %v2554 = vmul.f32 %v2322, %v1170
    %v2555 = vmul.f32 %v2326, %v295
    %v2556 = vmul.f32 %v2330, %v420
    %v2557 = vmul.f32 %v2334, %v545
    %v2558 = vmul.f32 %v2338, %v670
    %v2559 = vmul.f32 %v2342, %v795
    %v2560 = vmul.f32 %v2346, %v920
    %v2561 = vmul.f32 %v2350, %v1045
    %v2562 = vmul.f32 %v2354, %v1170
    %v2563 = vmul.f32 %v2358, %v295
    %v2564 = vmul.f32 %v2362, %v420
    %v2565 = vmul.f32 %v2366, %v545
    %v2566 = vmul.f32 %v2370, %v670
    %v2567 = vmul.f32 %v2374, %v795
    %v2568 = vmul.f32 %v2378, %v920
    %v2569 = vmul.f32 %v2382, %v1045
    %v2570 = vmul.f32 %v2386, %v1170
    %v2571 = vmul.f32 %v2390, %v295
    %v2572 = vmul.f32 %v2394, %v420
    %v2573 = vmul.f32 %v2398, %v545
    %v2574 = vmul.f32 %v2402, %v670
    %v2575 = vmul.f32 %v2406, %v795
    %v2576 = vmul.f32 %v2410, %v920
    %v2577 = vmul.f32 %v2414, %v1045
    %v2578 = vmul.f32 %v2418, %v1170
    %v2579 = vmul.f32 %v2422, %v295
    %v2580 = vmul.f32 %v2426, %v420
    %v2581 = vmul.f32 %v2430, %v545
    %v2582 = vmul.f32 %v2434, %v670
    %v2583 = vmul.f32 %v2438, %v795
    %v2584 = vmul.f32 %v2442, %v920
    %v2585 = vmul.f32 %v2446, %v1045
    %v2586 = vmul.f32 %v2450, %v1170
    %v2587 = vmul.f32 %v2454, %v295
    %v2588 = vmul.f32 %v2458, %v420
    %v2589 = vmul.f32 %v2462, %v545
    %v2590 = vmul.f32 %v2466, %v670
    %v2591 = vmul.f32 %v2470, %v795
    %v2592 = vmul.f32 %v2474, %v920
    %v2593 = vmul.f32 %v2478, %v1045
    %v2594 = vmul.f32 %v2482, %v1170
    %v2595 = vmul.f32 %v2486, %v295
    %v2596 = vmul.f32 %v2490, %v420
    %v2597 = vmul.f32 %v2494, %v545
    %v2598 = vmul.f32 %v2498, %v670
    %v2599 = vmul.f32 %v2502, %v795
    %v2600 = vmul.f32 %v2506, %v920
    %v2601 = vmul.f32 %v2510, %v1045
    %v2602 = vmul.f32 %v2514, %v1170
    %v2603 = vmul.f32 %v2518, %v295
    %v2604 = vmul.f32 %v2522, %v420
    %v2605 = vmul.f32 %v2526, %v545
    %v2606 = vmul.f32 %v2530, %v670
    %v2607 = vmul.f32 %v2534, %v795
    %v2608 = vmul.f32 %v2538, %v920
    %v2609 = vmul.f32 %v2542, %v1045
    %v2610 = vmul.f32 %v2546, %v1170
    %v2611 = vadd.f32 %v2547, %v2548
    %v2612 = vadd.f32 %v2611, %v2549
    %v2613 = vadd.f32 %v2612, %v2550
    %v2614 = vadd.f32 %v2613, %v2551
    %v2615 = vadd.f32 %v2614, %v2552
    %v2616 = vadd.f32 %v2615, %v2553
    %v2617 = vadd.f32 %v2616, %v2554
    %v2618 = vadd.f32 %v2555, %v2556
    %v2619 = vadd.f32 %v2618, %v2557
    %v2620 = vadd.f32 %v2619, %v2558
    %v2621 = vadd.f32 %v2620, %v2559
    %v2622 = vadd.f32 %v2621, %v2560
    %v2623 = vadd.f32 %v2622, %v2561
    %v2624 = vadd.f32 %v2623, %v2562
    %v2625 = vadd.f32 %v2563, %v2564
    %v2626 = vadd.f32 %v2625, %v2565
    %v2627 = vadd.f32 %v2626, %v2566
    %v2628 = vadd.f32 %v2627, %v2567
    %v2629 = vadd.f32 %v2628, %v2568
    %v2630 = vadd.f32 %v2629, %v2569
    %v2631 = vadd.f32 %v2630, %v2570
    %v2632 = vadd.f32 %v2571, %v2572
    %v2633 = vadd.f32 %v2632, %v2573
    %v2634 = vadd.f32 %v2633, %v2574
    %v2635 = vadd.f32 %v2634, %v2575
    %v2636 = vadd.f32 %v2635, %v2576
    %v2637 = vadd.f32 %v2636, %v2577
    %v2638 = vadd.f32 %v2637, %v2578
    %v2639 = vadd.f32 %v2579, %v2580
    %v2640 = vadd.f32 %v2639, %v2581
    %v2641 = vadd.f32 %v2640, %v2582
    %v2642 = vadd.f32 %v2641, %v2583
    %v2643 = vadd.f32 %v2642, %v2584
    %v2644 = vadd.f32 %v2643, %v2585
    %v2645 = vadd.f32 %v2644, %v2586
    %v2646 = vadd.f32 %v2587, %v2588
    %v2647 = vadd.f32 %v2646, %v2589
    %v2648 = vadd.f32 %v2647, %v2590
    %v2649 = vadd.f32 %v2648, %v2591
    %v2650 = vadd.f32 %v2649, %v2592
    %v2651 = vadd.f32 %v2650, %v2593
    %v2652 = vadd.f32 %v2651, %v2594
    %v2653 = vadd.f32 %v2595, %v2596
    %v2654 = vadd.f32 %v2653, %v2597
    %v2655 = vadd.f32 %v2654, %v2598
    %v2656 = vadd.f32 %v2655, %v2599
    %v2657 = vadd.f32 %v2656, %v2600
    %v2658 = vadd.f32 %v2657, %v2601
    %v2659 = vadd.f32 %v2658, %v2602
    %v2660 = vadd.f32 %v2603, %v2604
    %v2661 = vadd.f32 %v2660, %v2605
    %v2662 = vadd.f32 %v2661, %v2606
    %v2663 = vadd.f32 %v2662, %v2607
    %v2664 = vadd.f32 %v2663, %v2608
    %v2665 = vadd.f32 %v2664, %v2609
    %v2666 = vadd.f32 %v2665, %v2610
    %v2667 = vmul.f32 %v260, %v280
    %v2668 = vmul.f32 %v260, %v405
    %v2669 = vmul.f32 %v260, %v530
    %v2670 = vmul.f32 %v260, %v655
    %v2671 = vmul.f32 %v260, %v780
    %v2672 = vmul.f32 %v260, %v905
    %v2673 = vmul.f32 %v260, %v1030
    %v2674 = vmul.f32 %v260, %v1155
    %v2675 = vmul.f32 %v385, %v280
    %v2676 = vmul.f32 %v385, %v405
    %v2677 = vmul.f32 %v385, %v530
    %v2678 = vmul.f32 %v385, %v655
    %v2679 = vmul.f32 %v385, %v780
    %v2680 = vmul.f32 %v385, %v905
    %v2681 = vmul.f32 %v385, %v1030
    %v2682 = vmul.f32 %v385, %v1155
    %v2683 = vmul.f32 %v510, %v280
    %v2684 = vmul.f32 %v510, %v405
    %v2685 = vmul.f32 %v510, %v530
    %v2686 = vmul.f32 %v510, %v655
    %v2687 = vmul.f32 %v510, %v780
    %v2688 = vmul.f32 %v510, %v905
    %v2689 = vmul.f32 %v510, %v1030
    %v2690 = vmul.f32 %v510, %v1155
    %v2691 = vmul.f32 %v635, %v280
    %v2692 = vmul.f32 %v635, %v405
    %v2693 = vmul.f32 %v635, %v530
    %v2694 = vmul.f32 %v635, %v655
    %v2695 = vmul.f32 %v635, %v780
    %v2696 = vmul.f32 %v635, %v905
    %v2697 = vmul.f32 %v635, %v1030
    %v2698 = vmul.f32 %v635, %v1155
    %v2699 = vmul.f32 %v760, %v280
    %v2700 = vmul.f32 %v760, %v405
    %v2701 = vmul.f32 %v760, %v530
    %v2702 = vmul.f32 %v760, %v655
    %v2703 = vmul.f32 %v760, %v780
    %v2704 = vmul.f32 %v760, %v905
    %v2705 = vmul.f32 %v760, %v1030
    %v2706 = vmul.f32 %v760, %v1155
    %v2707 = vmul.f32 %v885, %v280
    %v2708 = vmul.f32 %v885, %v405
    %v2709 = vmul.f32 %v885, %v530
    %v2710 = vmul.f32 %v885, %v655
    %v2711 = vmul.f32 %v885, %v780
    %v2712 = vmul.f32 %v885, %v905
    %v2713 = vmul.f32 %v885, %v1030
    %v2714 = vmul.f32 %v885, %v1155
    %v2715 = vmul.f32 %v1010, %v280
    %v2716 = vmul.f32 %v1010, %v405
    %v2717 = vmul.f32 %v1010, %v530
    %v2718 = vmul.f32 %v1010, %v655
    %v2719 = vmul.f32 %v1010, %v780
    %v2720 = vmul.f32 %v1010, %v905
    %v2721 = vmul.f32 %v1010, %v1030
    %v2722 = vmul.f32 %v1010, %v1155
    %v2723 = vmul.f32 %v1135, %v280
    %v2724 = vmul.f32 %v1135, %v405
    %v2725 = vmul.f32 %v1135, %v530
    %v2726 = vmul.f32 %v1135, %v655
    %v2727 = vmul.f32 %v1135, %v780
    %v2728 = vmul.f32 %v1135, %v905
    %v2729 = vmul.f32 %v1135, %v1030
    %v2730 = vmul.f32 %v1135, %v1155
    %v2731 = vrot.slane %v2667, 4
    %v2732 = vadd.f32 %v2667, %v2731
    %v2733 = vrot.slane %v2732, 2
    %v2734 = vadd.f32 %v2732, %v2733
    %v2735 = vrot.slane %v2734, 1
    %v2736 = vadd.f32 %v2734, %v2735
    %v2737 = vrot.slane %v2668, 4
    %v2738 = vadd.f32 %v2668, %v2737
    %v2739 = vrot.slane %v2738, 2
    %v2740 = vadd.f32 %v2738, %v2739
    %v2741 = vrot.slane %v2740, 1
    %v2742 = vadd.f32 %v2740, %v2741
    %v2743 = vrot.slane %v2669, 4
    %v2744 = vadd.f32 %v2669, %v2743
    %v2745 = vrot.slane %v2744, 2
    %v2746 = vadd.f32 %v2744, %v2745
    %v2747 = vrot.slane %v2746, 1
    %v2748 = vadd.f32 %v2746, %v2747
    %v2749 = vrot.slane %v2670, 4
    %v2750 = vadd.f32 %v2670, %v2749
    %v2751 = vrot.slane %v2750, 2
    %v2752 = vadd.f32 %v2750, %v2751
    %v2753 = vrot.slane %v2752, 1
    %v2754 = vadd.f32 %v2752, %v2753
    %v2755 = vrot.slane %v2671, 4
    %v2756 = vadd.f32 %v2671, %v2755
    %v2757 = vrot.slane %v2756, 2
    %v2758 = vadd.f32 %v2756, %v2757
    %v2759 = vrot.slane %v2758, 1
    %v2760 = vadd.f32 %v2758, %v2759
    %v2761 = vrot.slane %v2672, 4
    %v2762 = vadd.f32 %v2672, %v2761
    %v2763 = vrot.slane %v2762, 2
    %v2764 = vadd.f32 %v2762, %v2763
    %v2765 = vrot.slane %v2764, 1
    %v2766 = vadd.f32 %v2764, %v2765
    %v2767 = vrot.slane %v2673, 4
    %v2768 = vadd.f32 %v2673, %v2767
    %v2769 = vrot.slane %v2768, 2
    %v2770 = vadd.f32 %v2768, %v2769
    %v2771 = vrot.slane %v2770, 1
    %v2772 = vadd.f32 %v2770, %v2771
    %v2773 = vrot.slane %v2674, 4
    %v2774 = vadd.f32 %v2674, %v2773
    %v2775 = vrot.slane %v2774, 2
    %v2776 = vadd.f32 %v2774, %v2775
    %v2777 = vrot.slane %v2776, 1
    %v2778 = vadd.f32 %v2776, %v2777
    %v2779 = vrot.slane %v2675, 4
    %v2780 = vadd.f32 %v2675, %v2779
    %v2781 = vrot.slane %v2780, 2
    %v2782 = vadd.f32 %v2780, %v2781
    %v2783 = vrot.slane %v2782, 1
    %v2784 = vadd.f32 %v2782, %v2783
    %v2785 = vrot.slane %v2676, 4
    %v2786 = vadd.f32 %v2676, %v2785
    %v2787 = vrot.slane %v2786, 2
    %v2788 = vadd.f32 %v2786, %v2787
    %v2789 = vrot.slane %v2788, 1
    %v2790 = vadd.f32 %v2788, %v2789
    %v2791 = vrot.slane %v2677, 4
    %v2792 = vadd.f32 %v2677, %v2791
    %v2793 = vrot.slane %v2792, 2
    %v2794 = vadd.f32 %v2792, %v2793
    %v2795 = vrot.slane %v2794, 1
    %v2796 = vadd.f32 %v2794, %v2795
    %v2797 = vrot.slane %v2678, 4
    %v2798 = vadd.f32 %v2678, %v2797
    %v2799 = vrot.slane %v2798, 2
    %v2800 = vadd.f32 %v2798, %v2799
    %v2801 = vrot.slane %v2800, 1
    %v2802 = vadd.f32 %v2800, %v2801
    %v2803 = vrot.slane %v2679, 4
    %v2804 = vadd.f32 %v2679, %v2803
    %v2805 = vrot.slane %v2804, 2
    %v2806 = vadd.f32 %v2804, %v2805
    %v2807 = vrot.slane %v2806, 1
    %v2808 = vadd.f32 %v2806, %v2807
    %v2809 = vrot.slane %v2680, 4
    %v2810 = vadd.f32 %v2680, %v2809
    %v2811 = vrot.slane %v2810, 2
    %v2812 = vadd.f32 %v2810, %v2811
    %v2813 = vrot.slane %v2812, 1
    %v2814 = vadd.f32 %v2812, %v2813
    %v2815 = vrot.slane %v2681, 4
    %v2816 = vadd.f32 %v2681, %v2815
    %v2817 = vrot.slane %v2816, 2
    %v2818 = vadd.f32 %v2816, %v2817
    %v2819 = vrot.slane %v2818, 1
    %v2820 = vadd.f32 %v2818, %v2819
    %v2821 = vrot.slane %v2682, 4
    %v2822 = vadd.f32 %v2682, %v2821
    %v2823 = vrot.slane %v2822, 2
    %v2824 = vadd.f32 %v2822, %v2823
    %v2825 = vrot.slane %v2824, 1
    %v2826 = vadd.f32 %v2824, %v2825
    %v2827 = vrot.slane %v2683, 4
    %v2828 = vadd.f32 %v2683, %v2827
    %v2829 = vrot.slane %v2828, 2
    %v2830 = vadd.f32 %v2828, %v2829
    %v2831 = vrot.slane %v2830, 1
    %v2832 = vadd.f32 %v2830, %v2831
    %v2833 = vrot.slane %v2684, 4
    %v2834 = vadd.f32 %v2684, %v2833
    %v2835 = vrot.slane %v2834, 2
    %v2836 = vadd.f32 %v2834, %v2835
    %v2837 = vrot.slane %v2836, 1
    %v2838 = vadd.f32 %v2836, %v2837
    %v2839 = vrot.slane %v2685, 4
    %v2840 = vadd.f32 %v2685, %v2839
    %v2841 = vrot.slane %v2840, 2
    %v2842 = vadd.f32 %v2840, %v2841
    %v2843 = vrot.slane %v2842, 1
    %v2844 = vadd.f32 %v2842, %v2843
    %v2845 = vrot.slane %v2686, 4
    %v2846 = vadd.f32 %v2686, %v2845
    %v2847 = vrot.slane %v2846, 2
    %v2848 = vadd.f32 %v2846, %v2847
    %v2849 = vrot.slane %v2848, 1
    %v2850 = vadd.f32 %v2848, %v2849
    %v2851 = vrot.slane %v2687, 4
    %v2852 = vadd.f32 %v2687, %v2851
    %v2853 = vrot.slane %v2852, 2
    %v2854 = vadd.f32 %v2852, %v2853
    %v2855 = vrot.slane %v2854, 1
    %v2856 = vadd.f32 %v2854, %v2855
    %v2857 = vrot.slane %v2688, 4
    %v2858 = vadd.f32 %v2688, %v2857
    %v2859 = vrot.slane %v2858, 2
    %v2860 = vadd.f32 %v2858, %v2859
    %v2861 = vrot.slane %v2860, 1
    %v2862 = vadd.f32 %v2860, %v2861
    %v2863 = vrot.slane %v2689, 4
    %v2864 = vadd.f32 %v2689, %v2863
    %v2865 = vrot.slane %v2864, 2
    %v2866 = vadd.f32 %v2864, %v2865
    %v2867 = vrot.slane %v2866, 1
    %v2868 = vadd.f32 %v2866, %v2867
    %v2869 = vrot.slane %v2690, 4
    %v2870 = vadd.f32 %v2690, %v2869
    %v2871 = vrot.slane %v2870, 2
    %v2872 = vadd.f32 %v2870, %v2871
    %v2873 = vrot.slane %v2872, 1
    %v2874 = vadd.f32 %v2872, %v2873
    %v2875 = vrot.slane %v2691, 4
    %v2876 = vadd.f32 %v2691, %v2875
    %v2877 = vrot.slane %v2876, 2
    %v2878 = vadd.f32 %v2876, %v2877
    %v2879 = vrot.slane %v2878, 1
    %v2880 = vadd.f32 %v2878, %v2879
    %v2881 = vrot.slane %v2692, 4
    %v2882 = vadd.f32 %v2692, %v2881
    %v2883 = vrot.slane %v2882, 2
    %v2884 = vadd.f32 %v2882, %v2883
    %v2885 = vrot.slane %v2884, 1
    %v2886 = vadd.f32 %v2884, %v2885
    %v2887 = vrot.slane %v2693, 4
    %v2888 = vadd.f32 %v2693, %v2887
    %v2889 = vrot.slane %v2888, 2
    %v2890 = vadd.f32 %v2888, %v2889
    %v2891 = vrot.slane %v2890, 1
    %v2892 = vadd.f32 %v2890, %v2891
    %v2893 = vrot.slane %v2694, 4
    %v2894 = vadd.f32 %v2694, %v2893
    %v2895 = vrot.slane %v2894, 2
    %v2896 = vadd.f32 %v2894, %v2895
    %v2897 = vrot.slane %v2896, 1
    %v2898 = vadd.f32 %v2896, %v2897
    %v2899 = vrot.slane %v2695, 4
    %v2900 = vadd.f32 %v2695, %v2899
    %v2901 = vrot.slane %v2900, 2
    %v2902 = vadd.f32 %v2900, %v2901
    %v2903 = vrot.slane %v2902, 1
    %v2904 = vadd.f32 %v2902, %v2903
    %v2905 = vrot.slane %v2696, 4
    %v2906 = vadd.f32 %v2696, %v2905
    %v2907 = vrot.slane %v2906, 2
    %v2908 = vadd.f32 %v2906, %v2907
    %v2909 = vrot.slane %v2908, 1
    %v2910 = vadd.f32 %v2908, %v2909
    %v2911 = vrot.slane %v2697, 4
    %v2912 = vadd.f32 %v2697, %v2911
    %v2913 = vrot.slane %v2912, 2
    %v2914 = vadd.f32 %v2912, %v2913
    %v2915 = vrot.slane %v2914, 1
    %v2916 = vadd.f32 %v2914, %v2915
    %v2917 = vrot.slane %v2698, 4
    %v2918 = vadd.f32 %v2698, %v2917
    %v2919 = vrot.slane %v2918, 2
    %v2920 = vadd.f32 %v2918, %v2919
    %v2921 = vrot.slane %v2920, 1
    %v2922 = vadd.f32 %v2920, %v2921
    %v2923 = vrot.slane %v2699, 4
    %v2924 = vadd.f32 %v2699, %v2923
    %v2925 = vrot.slane %v2924, 2
    %v2926 = vadd.f32 %v2924, %v2925
    %v2927 = vrot.slane %v2926, 1
    %v2928 = vadd.f32 %v2926, %v2927
    %v2929 = vrot.slane %v2700, 4
    %v2930 = vadd.f32 %v2700, %v2929
    %v2931 = vrot.slane %v2930, 2
    %v2932 = vadd.f32 %v2930, %v2931
    %v2933 = vrot.slane %v2932, 1
    %v2934 = vadd.f32 %v2932, %v2933
    %v2935 = vrot.slane %v2701, 4
    %v2936 = vadd.f32 %v2701, %v2935
    %v2937 = vrot.slane %v2936, 2
    %v2938 = vadd.f32 %v2936, %v2937
    %v2939 = vrot.slane %v2938, 1
    %v2940 = vadd.f32 %v2938, %v2939
    %v2941 = vrot.slane %v2702, 4
    %v2942 = vadd.f32 %v2702, %v2941
    %v2943 = vrot.slane %v2942, 2
    %v2944 = vadd.f32 %v2942, %v2943
    %v2945 = vrot.slane %v2944, 1
    %v2946 = vadd.f32 %v2944, %v2945
    %v2947 = vrot.slane %v2703, 4
    %v2948 = vadd.f32 %v2703, %v2947
    %v2949 = vrot.slane %v2948, 2
    %v2950 = vadd.f32 %v2948, %v2949
    %v2951 = vrot.slane %v2950, 1
    %v2952 = vadd.f32 %v2950, %v2951
    %v2953 = vrot.slane %v2704, 4
    %v2954 = vadd.f32 %v2704, %v2953
    %v2955 = vrot.slane %v2954, 2
    %v2956 = vadd.f32 %v2954, %v2955
    %v2957 = vrot.slane %v2956, 1
    %v2958 = vadd.f32 %v2956, %v2957
    %v2959 = vrot.slane %v2705, 4
    %v2960 = vadd.f32 %v2705, %v2959
    %v2961 = vrot.slane %v2960, 2
    %v2962 = vadd.f32 %v2960, %v2961
    %v2963 = vrot.slane %v2962, 1
    %v2964 = vadd.f32 %v2962, %v2963
    %v2965 = vrot.slane %v2706, 4
    %v2966 = vadd.f32 %v2706, %v2965
    %v2967 = vrot.slane %v2966, 2
    %v2968 = vadd.f32 %v2966, %v2967
    %v2969 = vrot.slane %v2968, 1
    %v2970 = vadd.f32 %v2968, %v2969
    %v2971 = vrot.slane %v2707, 4
    %v2972 = vadd.f32 %v2707, %v2971
    %v2973 = vrot.slane %v2972, 2
    %v2974 = vadd.f32 %v2972, %v2973
    %v2975 = vrot.slane %v2974, 1
    %v2976 = vadd.f32 %v2974, %v2975
    %v2977 = vrot.slane %v2708, 4
    %v2978 = vadd.f32 %v2708, %v2977
    %v2979 = vrot.slane %v2978, 2
    %v2980 = vadd.f32 %v2978, %v2979
    %v2981 = vrot.slane %v2980, 1
    %v2982 = vadd.f32 %v2980, %v2981
    %v2983 = vrot.slane %v2709, 4
    %v2984 = vadd.f32 %v2709, %v2983
    %v2985 = vrot.slane %v2984, 2
    %v2986 = vadd.f32 %v2984, %v2985
    %v2987 = vrot.slane %v2986, 1
    %v2988 = vadd.f32 %v2986, %v2987
    %v2989 = vrot.slane %v2710, 4
    %v2990 = vadd.f32 %v2710, %v2989
    %v2991 = vrot.slane %v2990, 2
    %v2992 = vadd.f32 %v2990, %v2991
    %v2993 = vrot.slane %v2992, 1
    %v2994 = vadd.f32 %v2992, %v2993
    %v2995 = vrot.slane %v2711, 4
    %v2996 = vadd.f32 %v2711, %v2995
    %v2997 = vrot.slane %v2996, 2
    %v2998 = vadd.f32 %v2996, %v2997
    %v2999 = vrot.slane %v2998, 1
    %v3000 = vadd.f32 %v2998, %v2999
    %v3001 = vrot.slane %v2712, 4
    %v3002 = vadd.f32 %v2712, %v3001
    %v3003 = vrot.slane %v3002, 2
    %v3004 = vadd.f32 %v3002, %v3003
    %v3005 = vrot.slane %v3004, 1
    %v3006 = vadd.f32 %v3004, %v3005
    %v3007 = vrot.slane %v2713, 4
    %v3008 = vadd.f32 %v2713, %v3007
    %v3009 = vrot.slane %v3008, 2
    %v3010 = vadd.f32 %v3008, %v3009
    %v3011 = vrot.slane %v3010, 1
    %v3012 = vadd.f32 %v3010, %v3011
    %v3013 = vrot.slane %v2714, 4
    %v3014 = vadd.f32 %v2714, %v3013
    %v3015 = vrot.slane %v3014, 2
    %v3016 = vadd.f32 %v3014, %v3015
    %v3017 = vrot.slane %v3016, 1
    %v3018 = vadd.f32 %v3016, %v3017
    %v3019 = vrot.slane %v2715, 4
    %v3020 = vadd.f32 %v2715, %v3019
    %v3021 = vrot.slane %v3020, 2
    %v3022 = vadd.f32 %v3020, %v3021
    %v3023 = vrot.slane %v3022, 1
    %v3024 = vadd.f32 %v3022, %v3023
    %v3025 = vrot.slane %v2716, 4
    %v3026 = vadd.f32 %v2716, %v3025
    %v3027 = vrot.slane %v3026, 2
    %v3028 = vadd.f32 %v3026, %v3027
    %v3029 = vrot.slane %v3028, 1
    %v3030 = vadd.f32 %v3028, %v3029
    %v3031 = vrot.slane %v2717, 4
    %v3032 = vadd.f32 %v2717, %v3031
    %v3033 = vrot.slane %v3032, 2
    %v3034 = vadd.f32 %v3032, %v3033
    %v3035 = vrot.slane %v3034, 1
    %v3036 = vadd.f32 %v3034, %v3035
    %v3037 = vrot.slane %v2718, 4
    %v3038 = vadd.f32 %v2718, %v3037
    %v3039 = vrot.slane %v3038, 2
    %v3040 = vadd.f32 %v3038, %v3039
    %v3041 = vrot.slane %v3040, 1
    %v3042 = vadd.f32 %v3040, %v3041
    %v3043 = vrot.slane %v2719, 4
    %v3044 = vadd.f32 %v2719, %v3043
    %v3045 = vrot.slane %v3044, 2
    %v3046 = vadd.f32 %v3044, %v3045
    %v3047 = vrot.slane %v3046, 1
    %v3048 = vadd.f32 %v3046, %v3047
    %v3049 = vrot.slane %v2720, 4
    %v3050 = vadd.f32 %v2720, %v3049
    %v3051 = vrot.slane %v3050, 2
    %v3052 = vadd.f32 %v3050, %v3051
    %v3053 = vrot.slane %v3052, 1
    %v3054 = vadd.f32 %v3052, %v3053
    %v3055 = vrot.slane %v2721, 4
    %v3056 = vadd.f32 %v2721, %v3055
    %v3057 = vrot.slane %v3056, 2
    %v3058 = vadd.f32 %v3056, %v3057
    %v3059 = vrot.slane %v3058, 1
    %v3060 = vadd.f32 %v3058, %v3059
    %v3061 = vrot.slane %v2722, 4
    %v3062 = vadd.f32 %v2722, %v3061
    %v3063 = vrot.slane %v3062, 2
    %v3064 = vadd.f32 %v3062, %v3063
    %v3065 = vrot.slane %v3064, 1
    %v3066 = vadd.f32 %v3064, %v3065
    %v3067 = vrot.slane %v2723, 4
    %v3068 = vadd.f32 %v2723, %v3067
    %v3069 = vrot.slane %v3068, 2
    %v3070 = vadd.f32 %v3068, %v3069
    %v3071 = vrot.slane %v3070, 1
    %v3072 = vadd.f32 %v3070, %v3071
    %v3073 = vrot.slane %v2724, 4
    %v3074 = vadd.f32 %v2724, %v3073
    %v3075 = vrot.slane %v3074, 2
    %v3076 = vadd.f32 %v3074, %v3075
    %v3077 = vrot.slane %v3076, 1
    %v3078 = vadd.f32 %v3076, %v3077
    %v3079 = vrot.slane %v2725, 4
    %v3080 = vadd.f32 %v2725, %v3079
    %v3081 = vrot.slane %v3080, 2
    %v3082 = vadd.f32 %v3080, %v3081
    %v3083 = vrot.slane %v3082, 1
    %v3084 = vadd.f32 %v3082, %v3083
    %v3085 = vrot.slane %v2726, 4
    %v3086 = vadd.f32 %v2726, %v3085
    %v3087 = vrot.slane %v3086, 2
    %v3088 = vadd.f32 %v3086, %v3087
    %v3089 = vrot.slane %v3088, 1
    %v3090 = vadd.f32 %v3088, %v3089
    %v3091 = vrot.slane %v2727, 4
    %v3092 = vadd.f32 %v2727, %v3091
    %v3093 = vrot.slane %v3092, 2
    %v3094 = vadd.f32 %v3092, %v3093
    %v3095 = vrot.slane %v3094, 1
    %v3096 = vadd.f32 %v3094, %v3095
    %v3097 = vrot.slane %v2728, 4
    %v3098 = vadd.f32 %v2728, %v3097
    %v3099 = vrot.slane %v3098, 2
    %v3100 = vadd.f32 %v3098, %v3099
    %v3101 = vrot.slane %v3100, 1
    %v3102 = vadd.f32 %v3100, %v3101
    %v3103 = vrot.slane %v2729, 4
    %v3104 = vadd.f32 %v2729, %v3103
    %v3105 = vrot.slane %v3104, 2
    %v3106 = vadd.f32 %v3104, %v3105
    %v3107 = vrot.slane %v3106, 1
    %v3108 = vadd.f32 %v3106, %v3107
    %v3109 = vrot.slane %v2730, 4
    %v3110 = vadd.f32 %v2730, %v3109
    %v3111 = vrot.slane %v3110, 2
    %v3112 = vadd.f32 %v3110, %v3111
    %v3113 = vrot.slane %v3112, 1
    %v3114 = vadd.f32 %v3112, %v3113
    %v3115 = vmul.f32 %v2736, 0.35355338
    %v3116 = vmul.f32 %v2742, 0.35355338
    %v3117 = vmul.f32 %v2748, 0.35355338
    %v3118 = vmul.f32 %v2754, 0.35355338
    %v3119 = vmul.f32 %v2760, 0.35355338
    %v3120 = vmul.f32 %v2766, 0.35355338
    %v3121 = vmul.f32 %v2772, 0.35355338
    %v3122 = vmul.f32 %v2778, 0.35355338
    %v3123 = vmul.f32 %v2784, 0.35355338
    %v3124 = vmul.f32 %v2790, 0.35355338
    %v3125 = vmul.f32 %v2796, 0.35355338
    %v3126 = vmul.f32 %v2802, 0.35355338
    %v3127 = vmul.f32 %v2808, 0.35355338
    %v3128 = vmul.f32 %v2814, 0.35355338
    %v3129 = vmul.f32 %v2820, 0.35355338
    %v3130 = vmul.f32 %v2826, 0.35355338
    %v3131 = vmul.f32 %v2832, 0.35355338
    %v3132 = vmul.f32 %v2838, 0.35355338
    %v3133 = vmul.f32 %v2844, 0.35355338
    %v3134 = vmul.f32 %v2850, 0.35355338
    %v3135 = vmul.f32 %v2856, 0.35355338
    %v3136 = vmul.f32 %v2862, 0.35355338
    %v3137 = vmul.f32 %v2868, 0.35355338
    %v3138 = vmul.f32 %v2874, 0.35355338
    %v3139 = vmul.f32 %v2880, 0.35355338
    %v3140 = vmul.f32 %v2886, 0.35355338
    %v3141 = vmul.f32 %v2892, 0.35355338
    %v3142 = vmul.f32 %v2898, 0.35355338
    %v3143 = vmul.f32 %v2904, 0.35355338
    %v3144 = vmul.f32 %v2910, 0.35355338
    %v3145 = vmul.f32 %v2916, 0.35355338
    %v3146 = vmul.f32 %v2922, 0.35355338
    %v3147 = vmul.f32 %v2928, 0.35355338
    %v3148 = vmul.f32 %v2934, 0.35355338
    %v3149 = vmul.f32 %v2940, 0.35355338
    %v3150 = vmul.f32 %v2946, 0.35355338
    %v3151 = vmul.f32 %v2952, 0.35355338
    %v3152 = vmul.f32 %v2958, 0.35355338
    %v3153 = vmul.f32 %v2964, 0.35355338
    %v3154 = vmul.f32 %v2970, 0.35355338
    %v3155 = vmul.f32 %v2976, 0.35355338
    %v3156 = vmul.f32 %v2982, 0.35355338
    %v3157 = vmul.f32 %v2988, 0.35355338
    %v3158 = vmul.f32 %v2994, 0.35355338
    %v3159 = vmul.f32 %v3000, 0.35355338
    %v3160 = vmul.f32 %v3006, 0.35355338
    %v3161 = vmul.f32 %v3012, 0.35355338
    %v3162 = vmul.f32 %v3018, 0.35355338
    %v3163 = vmul.f32 %v3024, 0.35355338
    %v3164 = vmul.f32 %v3030, 0.35355338
    %v3165 = vmul.f32 %v3036, 0.35355338
    %v3166 = vmul.f32 %v3042, 0.35355338
    %v3167 = vmul.f32 %v3048, 0.35355338
    %v3168 = vmul.f32 %v3054, 0.35355338
    %v3169 = vmul.f32 %v3060, 0.35355338
    %v3170 = vmul.f32 %v3066, 0.35355338
    %v3171 = vmul.f32 %v3072, 0.35355338
    %v3172 = vmul.f32 %v3078, 0.35355338
    %v3173 = vmul.f32 %v3084, 0.35355338
    %v3174 = vmul.f32 %v3090, 0.35355338
    %v3175 = vmul.f32 %v3096, 0.35355338
    %v3176 = vmul.f32 %v3102, 0.35355338
    %v3177 = vmul.f32 %v3108, 0.35355338
    %v3178 = vmul.f32 %v3114, 0.35355338
    %v3179 = vmax.f32 %v3115, %v3116
    %v3180 = vmax.f32 %v3179, %v3117
    %v3181 = vmax.f32 %v3180, %v3118
    %v3182 = vmax.f32 %v3181, %v3119
    %v3183 = vmax.f32 %v3182, %v3120
    %v3184 = vmax.f32 %v3183, %v3121
    %v3185 = vmax.f32 %v3184, %v3122
    %v3186 = vmax.f32 %v3123, %v3124
    %v3187 = vmax.f32 %v3186, %v3125
    %v3188 = vmax.f32 %v3187, %v3126
    %v3189 = vmax.f32 %v3188, %v3127
    %v3190 = vmax.f32 %v3189, %v3128
    %v3191 = vmax.f32 %v3190, %v3129
    %v3192 = vmax.f32 %v3191, %v3130
    %v3193 = vmax.f32 %v3131, %v3132
    %v3194 = vmax.f32 %v3193, %v3133
    %v3195 = vmax.f32 %v3194, %v3134
    %v3196 = vmax.f32 %v3195, %v3135
    %v3197 = vmax.f32 %v3196, %v3136
    %v3198 = vmax.f32 %v3197, %v3137
    %v3199 = vmax.f32 %v3198, %v3138
    %v3200 = vmax.f32 %v3139, %v3140
    %v3201 = vmax.f32 %v3200, %v3141
    %v3202 = vmax.f32 %v3201, %v3142
    %v3203 = vmax.f32 %v3202, %v3143
    %v3204 = vmax.f32 %v3203, %v3144
    %v3205 = vmax.f32 %v3204, %v3145
    %v3206 = vmax.f32 %v3205, %v3146
    %v3207 = vmax.f32 %v3147, %v3148
    %v3208 = vmax.f32 %v3207, %v3149
    %v3209 = vmax.f32 %v3208, %v3150
    %v3210 = vmax.f32 %v3209, %v3151
    %v3211 = vmax.f32 %v3210, %v3152
    %v3212 = vmax.f32 %v3211, %v3153
    %v3213 = vmax.f32 %v3212, %v3154
    %v3214 = vmax.f32 %v3155, %v3156
    %v3215 = vmax.f32 %v3214, %v3157
    %v3216 = vmax.f32 %v3215, %v3158
    %v3217 = vmax.f32 %v3216, %v3159
    %v3218 = vmax.f32 %v3217, %v3160
    %v3219 = vmax.f32 %v3218, %v3161
    %v3220 = vmax.f32 %v3219, %v3162
    %v3221 = vmax.f32 %v3163, %v3164
    %v3222 = vmax.f32 %v3221, %v3165
    %v3223 = vmax.f32 %v3222, %v3166
    %v3224 = vmax.f32 %v3223, %v3167
    %v3225 = vmax.f32 %v3224, %v3168
    %v3226 = vmax.f32 %v3225, %v3169
    %v3227 = vmax.f32 %v3226, %v3170
    %v3228 = vmax.f32 %v3171, %v3172
    %v3229 = vmax.f32 %v3228, %v3173
    %v3230 = vmax.f32 %v3229, %v3174
    %v3231 = vmax.f32 %v3230, %v3175
    %v3232 = vmax.f32 %v3231, %v3176
    %v3233 = vmax.f32 %v3232, %v3177
    %v3234 = vmax.f32 %v3233, %v3178
    %v3235 = vsub.f32 %v3115, %v3185
    %v3236 = vsub.f32 %v3116, %v3185
    %v3237 = vsub.f32 %v3117, %v3185
    %v3238 = vsub.f32 %v3118, %v3185
    %v3239 = vsub.f32 %v3119, %v3185
    %v3240 = vsub.f32 %v3120, %v3185
    %v3241 = vsub.f32 %v3121, %v3185
    %v3242 = vsub.f32 %v3122, %v3185
    %v3243 = vsub.f32 %v3123, %v3192
    %v3244 = vsub.f32 %v3124, %v3192
    %v3245 = vsub.f32 %v3125, %v3192
    %v3246 = vsub.f32 %v3126, %v3192
    %v3247 = vsub.f32 %v3127, %v3192
    %v3248 = vsub.f32 %v3128, %v3192
    %v3249 = vsub.f32 %v3129, %v3192
    %v3250 = vsub.f32 %v3130, %v3192
    %v3251 = vsub.f32 %v3131, %v3199
    %v3252 = vsub.f32 %v3132, %v3199
    %v3253 = vsub.f32 %v3133, %v3199
    %v3254 = vsub.f32 %v3134, %v3199
    %v3255 = vsub.f32 %v3135, %v3199
    %v3256 = vsub.f32 %v3136, %v3199
    %v3257 = vsub.f32 %v3137, %v3199
    %v3258 = vsub.f32 %v3138, %v3199
    %v3259 = vsub.f32 %v3139, %v3206
    %v3260 = vsub.f32 %v3140, %v3206
    %v3261 = vsub.f32 %v3141, %v3206
    %v3262 = vsub.f32 %v3142, %v3206
    %v3263 = vsub.f32 %v3143, %v3206
    %v3264 = vsub.f32 %v3144, %v3206
    %v3265 = vsub.f32 %v3145, %v3206
    %v3266 = vsub.f32 %v3146, %v3206
    %v3267 = vsub.f32 %v3147, %v3213
    %v3268 = vsub.f32 %v3148, %v3213
    %v3269 = vsub.f32 %v3149, %v3213
    %v3270 = vsub.f32 %v3150, %v3213
    %v3271 = vsub.f32 %v3151, %v3213
    %v3272 = vsub.f32 %v3152, %v3213
    %v3273 = vsub.f32 %v3153, %v3213
    %v3274 = vsub.f32 %v3154, %v3213
    %v3275 = vsub.f32 %v3155, %v3220
    %v3276 = vsub.f32 %v3156, %v3220
    %v3277 = vsub.f32 %v3157, %v3220
    %v3278 = vsub.f32 %v3158, %v3220
    %v3279 = vsub.f32 %v3159, %v3220
    %v3280 = vsub.f32 %v3160, %v3220
    %v3281 = vsub.f32 %v3161, %v3220
    %v3282 = vsub.f32 %v3162, %v3220
    %v3283 = vsub.f32 %v3163, %v3227
    %v3284 = vsub.f32 %v3164, %v3227
    %v3285 = vsub.f32 %v3165, %v3227
    %v3286 = vsub.f32 %v3166, %v3227
    %v3287 = vsub.f32 %v3167, %v3227
    %v3288 = vsub.f32 %v3168, %v3227
    %v3289 = vsub.f32 %v3169, %v3227
    %v3290 = vsub.f32 %v3170, %v3227
    %v3291 = vsub.f32 %v3171, %v3234
    %v3292 = vsub.f32 %v3172, %v3234
    %v3293 = vsub.f32 %v3173, %v3234
    %v3294 = vsub.f32 %v3174, %v3234
    %v3295 = vsub.f32 %v3175, %v3234
    %v3296 = vsub.f32 %v3176, %v3234
    %v3297 = vsub.f32 %v3177, %v3234
    %v3298 = vsub.f32 %v3178, %v3234
    %v3299 = vmul.f32 %v3235, 1.442695
    %v3300 = vpow.pop %v3299
    %v3301 = vmul.f32 %v3236, 1.442695
    %v3302 = vpow.pop %v3301
    %v3303 = vmul.f32 %v3237, 1.442695
    %v3304 = vpow.pop %v3303
    %v3305 = vmul.f32 %v3238, 1.442695
    %v3306 = vpow.pop %v3305
    %v3307 = vmul.f32 %v3239, 1.442695
    %v3308 = vpow.pop %v3307
    %v3309 = vmul.f32 %v3240, 1.442695
    %v3310 = vpow.pop %v3309
    %v3311 = vmul.f32 %v3241, 1.442695
    %v3312 = vpow.pop %v3311
    %v3313 = vmul.f32 %v3242, 1.442695
    %v3314 = vpow.pop %v3313
    %v3315 = vmul.f32 %v3243, 1.442695
    %v3316 = vpow.pop %v3315
    %v3317 = vmul.f32 %v3244, 1.442695
    %v3318 = vpow.pop %v3317
    %v3319 = vmul.f32 %v3245, 1.442695
    %v3320 = vpow.pop %v3319
    %v3321 = vmul.f32 %v3246, 1.442695
    %v3322 = vpow.pop %v3321
    %v3323 = vmul.f32 %v3247, 1.442695
    %v3324 = vpow.pop %v3323
    %v3325 = vmul.f32 %v3248, 1.442695
    %v3326 = vpow.pop %v3325
    %v3327 = vmul.f32 %v3249, 1.442695
    %v3328 = vpow.pop %v3327
    %v3329 = vmul.f32 %v3250, 1.442695
    %v3330 = vpow.pop %v3329
    %v3331 = vmul.f32 %v3251, 1.442695
    %v3332 = vpow.pop %v3331
    %v3333 = vmul.f32 %v3252, 1.442695
    %v3334 = vpow.pop %v3333
    %v3335 = vmul.f32 %v3253, 1.442695
    %v3336 = vpow.pop %v3335
    %v3337 = vmul.f32 %v3254, 1.442695
    %v3338 = vpow.pop %v3337
    %v3339 = vmul.f32 %v3255, 1.442695
    %v3340 = vpow.pop %v3339
    %v3341 = vmul.f32 %v3256, 1.442695
    %v3342 = vpow.pop %v3341
    %v3343 = vmul.f32 %v3257, 1.442695
    %v3344 = vpow.pop %v3343
    %v3345 = vmul.f32 %v3258, 1.442695
    %v3346 = vpow.pop %v3345
    %v3347 = vmul.f32 %v3259, 1.442695
    %v3348 = vpow.pop %v3347
    %v3349 = vmul.f32 %v3260, 1.442695
    %v3350 = vpow.pop %v3349
    %v3351 = vmul.f32 %v3261, 1.442695
    %v3352 = vpow.pop %v3351
    %v3353 = vmul.f32 %v3262, 1.442695
    %v3354 = vpow.pop %v3353
    %v3355 = vmul.f32 %v3263, 1.442695
    %v3356 = vpow.pop %v3355
    %v3357 = vmul.f32 %v3264, 1.442695
    %v3358 = vpow.pop %v3357
    %v3359 = vmul.f32 %v3265, 1.442695
    %v3360 = vpow.pop %v3359
    %v3361 = vmul.f32 %v3266, 1.442695
    %v3362 = vpow.pop %v3361
    %v3363 = vmul.f32 %v3267, 1.442695
    %v3364 = vpow.pop %v3363
    %v3365 = vmul.f32 %v3268, 1.442695
    %v3366 = vpow.pop %v3365
    %v3367 = vmul.f32 %v3269, 1.442695
    %v3368 = vpow.pop %v3367
    %v3369 = vmul.f32 %v3270, 1.442695
    %v3370 = vpow.pop %v3369
    %v3371 = vmul.f32 %v3271, 1.442695
    %v3372 = vpow.pop %v3371
    %v3373 = vmul.f32 %v3272, 1.442695
    %v3374 = vpow.pop %v3373
    %v3375 = vmul.f32 %v3273, 1.442695
    %v3376 = vpow.pop %v3375
    %v3377 = vmul.f32 %v3274, 1.442695
    %v3378 = vpow.pop %v3377
    %v3379 = vmul.f32 %v3275, 1.442695
    %v3380 = vpow.pop %v3379
    %v3381 = vmul.f32 %v3276, 1.442695
    %v3382 = vpow.pop %v3381
    %v3383 = vmul.f32 %v3277, 1.442695
    %v3384 = vpow.pop %v3383
    %v3385 = vmul.f32 %v3278, 1.442695
    %v3386 = vpow.pop %v3385
    %v3387 = vmul.f32 %v3279, 1.442695
    %v3388 = vpow.pop %v3387
    %v3389 = vmul.f32 %v3280, 1.442695
    %v3390 = vpow.pop %v3389
    %v3391 = vmul.f32 %v3281, 1.442695
    %v3392 = vpow.pop %v3391
    %v3393 = vmul.f32 %v3282, 1.442695
    %v3394 = vpow.pop %v3393
    %v3395 = vmul.f32 %v3283, 1.442695
    %v3396 = vpow.pop %v3395
    %v3397 = vmul.f32 %v3284, 1.442695
    %v3398 = vpow.pop %v3397
    %v3399 = vmul.f32 %v3285, 1.442695
    %v3400 = vpow.pop %v3399
    %v3401 = vmul.f32 %v3286, 1.442695
    %v3402 = vpow.pop %v3401
    %v3403 = vmul.f32 %v3287, 1.442695
    %v3404 = vpow.pop %v3403
    %v3405 = vmul.f32 %v3288, 1.442695
    %v3406 = vpow.pop %v3405
    %v3407 = vmul.f32 %v3289, 1.442695
    %v3408 = vpow.pop %v3407
    %v3409 = vmul.f32 %v3290, 1.442695
    %v3410 = vpow.pop %v3409
    %v3411 = vmul.f32 %v3291, 1.442695
    %v3412 = vpow.pop %v3411
    %v3413 = vmul.f32 %v3292, 1.442695
    %v3414 = vpow.pop %v3413
    %v3415 = vmul.f32 %v3293, 1.442695
    %v3416 = vpow.pop %v3415
    %v3417 = vmul.f32 %v3294, 1.442695
    %v3418 = vpow.pop %v3417
    %v3419 = vmul.f32 %v3295, 1.442695
    %v3420 = vpow.pop %v3419
    %v3421 = vmul.f32 %v3296, 1.442695
    %v3422 = vpow.pop %v3421
    %v3423 = vmul.f32 %v3297, 1.442695
    %v3424 = vpow.pop %v3423
    %v3425 = vmul.f32 %v3298, 1.442695
    %v3426 = vpow.pop %v3425
    %v3491 = vrot.slane %v3302, 7
    %v3492 = vsel %vm2013, %v3491, %v3300
    %v3493 = vrot.slane %v3304, 6
    %v3494 = vsel %vm2016, %v3493, %v3492
    %v3495 = vrot.slane %v3306, 5
    %v3496 = vsel %vm2019, %v3495, %v3494
    %v3497 = vrot.slane %v3308, 4
    %v3498 = vsel %vm2022, %v3497, %v3496
    %v3499 = vrot.slane %v3310, 3
    %v3500 = vsel %vm2025, %v3499, %v3498
    %v3501 = vrot.slane %v3312, 2
    %v3502 = vsel %vm2028, %v3501, %v3500
    %v3503 = vrot.slane %v3314, 1
    %v3504 = vsel %vm2031, %v3503, %v3502
    %v3505 = vrot.slane %v3318, 7
    %v3506 = vsel %vm2013, %v3505, %v3316
    %v3507 = vrot.slane %v3320, 6
    %v3508 = vsel %vm2016, %v3507, %v3506
    %v3509 = vrot.slane %v3322, 5
    %v3510 = vsel %vm2019, %v3509, %v3508
    %v3511 = vrot.slane %v3324, 4
    %v3512 = vsel %vm2022, %v3511, %v3510
    %v3513 = vrot.slane %v3326, 3
    %v3514 = vsel %vm2025, %v3513, %v3512
    %v3515 = vrot.slane %v3328, 2
    %v3516 = vsel %vm2028, %v3515, %v3514
    %v3517 = vrot.slane %v3330, 1
    %v3518 = vsel %vm2031, %v3517, %v3516
    %v3519 = vrot.slane %v3334, 7
    %v3520 = vsel %vm2013, %v3519, %v3332
    %v3521 = vrot.slane %v3336, 6
    %v3522 = vsel %vm2016, %v3521, %v3520
    %v3523 = vrot.slane %v3338, 5
    %v3524 = vsel %vm2019, %v3523, %v3522
    %v3525 = vrot.slane %v3340, 4
    %v3526 = vsel %vm2022, %v3525, %v3524
    %v3527 = vrot.slane %v3342, 3
    %v3528 = vsel %vm2025, %v3527, %v3526
    %v3529 = vrot.slane %v3344, 2
    %v3530 = vsel %vm2028, %v3529, %v3528
    %v3531 = vrot.slane %v3346, 1
    %v3532 = vsel %vm2031, %v3531, %v3530
    %v3533 = vrot.slane %v3350, 7
    %v3534 = vsel %vm2013, %v3533, %v3348
    %v3535 = vrot.slane %v3352, 6
    %v3536 = vsel %vm2016, %v3535, %v3534
    %v3537 = vrot.slane %v3354, 5
    %v3538 = vsel %vm2019, %v3537, %v3536
    %v3539 = vrot.slane %v3356, 4
    %v3540 = vsel %vm2022, %v3539, %v3538
    %v3541 = vrot.slane %v3358, 3
    %v3542 = vsel %vm2025, %v3541, %v3540
    %v3543 = vrot.slane %v3360, 2
    %v3544 = vsel %vm2028, %v3543, %v3542
    %v3545 = vrot.slane %v3362, 1
    %v3546 = vsel %vm2031, %v3545, %v3544
    %v3547 = vrot.slane %v3366, 7
    %v3548 = vsel %vm2013, %v3547, %v3364
    %v3549 = vrot.slane %v3368, 6
    %v3550 = vsel %vm2016, %v3549, %v3548
    %v3551 = vrot.slane %v3370, 5
    %v3552 = vsel %vm2019, %v3551, %v3550
    %v3553 = vrot.slane %v3372, 4
    %v3554 = vsel %vm2022, %v3553, %v3552
    %v3555 = vrot.slane %v3374, 3
    %v3556 = vsel %vm2025, %v3555, %v3554
    %v3557 = vrot.slane %v3376, 2
    %v3558 = vsel %vm2028, %v3557, %v3556
    %v3559 = vrot.slane %v3378, 1
    %v3560 = vsel %vm2031, %v3559, %v3558
    %v3561 = vrot.slane %v3382, 7
    %v3562 = vsel %vm2013, %v3561, %v3380
    %v3563 = vrot.slane %v3384, 6
    %v3564 = vsel %vm2016, %v3563, %v3562
    %v3565 = vrot.slane %v3386, 5
    %v3566 = vsel %vm2019, %v3565, %v3564
    %v3567 = vrot.slane %v3388, 4
    %v3568 = vsel %vm2022, %v3567, %v3566
    %v3569 = vrot.slane %v3390, 3
    %v3570 = vsel %vm2025, %v3569, %v3568
    %v3571 = vrot.slane %v3392, 2
    %v3572 = vsel %vm2028, %v3571, %v3570
    %v3573 = vrot.slane %v3394, 1
    %v3574 = vsel %vm2031, %v3573, %v3572
    %v3575 = vrot.slane %v3398, 7
    %v3576 = vsel %vm2013, %v3575, %v3396
    %v3577 = vrot.slane %v3400, 6
    %v3578 = vsel %vm2016, %v3577, %v3576
    %v3579 = vrot.slane %v3402, 5
    %v3580 = vsel %vm2019, %v3579, %v3578
    %v3581 = vrot.slane %v3404, 4
    %v3582 = vsel %vm2022, %v3581, %v3580
    %v3583 = vrot.slane %v3406, 3
    %v3584 = vsel %vm2025, %v3583, %v3582
    %v3585 = vrot.slane %v3408, 2
    %v3586 = vsel %vm2028, %v3585, %v3584
    %v3587 = vrot.slane %v3410, 1
    %v3588 = vsel %vm2031, %v3587, %v3586
    %v3589 = vrot.slane %v3414, 7
    %v3590 = vsel %vm2013, %v3589, %v3412
    %v3591 = vrot.slane %v3416, 6
    %v3592 = vsel %vm2016, %v3591, %v3590
    %v3593 = vrot.slane %v3418, 5
    %v3594 = vsel %vm2019, %v3593, %v3592
    %v3595 = vrot.slane %v3420, 4
    %v3596 = vsel %vm2022, %v3595, %v3594
    %v3597 = vrot.slane %v3422, 3
    %v3598 = vsel %vm2025, %v3597, %v3596
    %v3599 = vrot.slane %v3424, 2
    %v3600 = vsel %vm2028, %v3599, %v3598
    %v3601 = vrot.slane %v3426, 1
    %v3602 = vsel %vm2031, %v3601, %v3600
    %v3611 = vrot.slane %v3504, 4
    %v3612 = vadd.f32 %v3504, %v3611
    %v3613 = vrot.slane %v3612, 2
    %v3614 = vadd.f32 %v3612, %v3613
    %v3615 = vrot.slane %v3614, 1
    %v3616 = vadd.f32 %v3614, %v3615
    %v3617 = vrot.slane %v3518, 4
    %v3618 = vadd.f32 %v3518, %v3617
    %v3619 = vrot.slane %v3618, 2
    %v3620 = vadd.f32 %v3618, %v3619
    %v3621 = vrot.slane %v3620, 1
    %v3622 = vadd.f32 %v3620, %v3621
    %v3623 = vrot.slane %v3532, 4
    %v3624 = vadd.f32 %v3532, %v3623
    %v3625 = vrot.slane %v3624, 2
    %v3626 = vadd.f32 %v3624, %v3625
    %v3627 = vrot.slane %v3626, 1
    %v3628 = vadd.f32 %v3626, %v3627
    %v3629 = vrot.slane %v3546, 4
    %v3630 = vadd.f32 %v3546, %v3629
    %v3631 = vrot.slane %v3630, 2
    %v3632 = vadd.f32 %v3630, %v3631
    %v3633 = vrot.slane %v3632, 1
    %v3634 = vadd.f32 %v3632, %v3633
    %v3635 = vrot.slane %v3560, 4
    %v3636 = vadd.f32 %v3560, %v3635
    %v3637 = vrot.slane %v3636, 2
    %v3638 = vadd.f32 %v3636, %v3637
    %v3639 = vrot.slane %v3638, 1
    %v3640 = vadd.f32 %v3638, %v3639
    %v3641 = vrot.slane %v3574, 4
    %v3642 = vadd.f32 %v3574, %v3641
    %v3643 = vrot.slane %v3642, 2
    %v3644 = vadd.f32 %v3642, %v3643
    %v3645 = vrot.slane %v3644, 1
    %v3646 = vadd.f32 %v3644, %v3645
    %v3647 = vrot.slane %v3588, 4
    %v3648 = vadd.f32 %v3588, %v3647
    %v3649 = vrot.slane %v3648, 2
    %v3650 = vadd.f32 %v3648, %v3649
    %v3651 = vrot.slane %v3650, 1
    %v3652 = vadd.f32 %v3650, %v3651
    %v3653 = vrot.slane %v3602, 4
    %v3654 = vadd.f32 %v3602, %v3653
    %v3655 = vrot.slane %v3654, 2
    %v3656 = vadd.f32 %v3654, %v3655
    %v3657 = vrot.slane %v3656, 1
    %v3658 = vadd.f32 %v3656, %v3657
    %v3659 = vrcp.pop %v3616
    %v3660 = vrcp.pop %v3622
    %v3661 = vrcp.pop %v3628
    %v3662 = vrcp.pop %v3634
    %v3663 = vrcp.pop %v3640
    %v3664 = vrcp.pop %v3646
    %v3665 = vrcp.pop %v3652
    %v3666 = vrcp.pop %v3658
    %v3667 = vlaneseq
    %v3668 = vshrl.u32 %v3667, 7
    %v3669 = vsub.s32 0, %v3668
    %v3670 = vrot.slane %v3659, %v3669
    %v3671 = vlaneseq
    %v3672 = vshrl.u32 %v3671, 7
    %v3673 = vsub.s32 0, %v3672
    %v3674 = vrot.slane %v3660, %v3673
    %v3675 = vlaneseq
    %v3676 = vshrl.u32 %v3675, 7
    %v3677 = vsub.s32 0, %v3676
    %v3678 = vrot.slane %v3661, %v3677
    %v3679 = vlaneseq
    %v3680 = vshrl.u32 %v3679, 7
    %v3681 = vsub.s32 0, %v3680
    %v3682 = vrot.slane %v3662, %v3681
    %v3683 = vlaneseq
    %v3684 = vshrl.u32 %v3683, 7
    %v3685 = vsub.s32 0, %v3684
    %v3686 = vrot.slane %v3663, %v3685
    %v3687 = vlaneseq
    %v3688 = vshrl.u32 %v3687, 7
    %v3689 = vsub.s32 0, %v3688
    %v3690 = vrot.slane %v3664, %v3689
    %v3691 = vlaneseq
    %v3692 = vshrl.u32 %v3691, 7
    %v3693 = vsub.s32 0, %v3692
    %v3694 = vrot.slane %v3665, %v3693
    %v3695 = vlaneseq
    %v3696 = vshrl.u32 %v3695, 7
    %v3697 = vsub.s32 0, %v3696
    %v3698 = vrot.slane %v3666, %v3697
    %v3699 = vmul.f32 %v3300, %v3670
    %v3700 = vmul.f32 %v3302, %v3670
    %v3701 = vmul.f32 %v3304, %v3670
    %v3702 = vmul.f32 %v3306, %v3670
    %v3703 = vmul.f32 %v3308, %v3670
    %v3704 = vmul.f32 %v3310, %v3670
    %v3705 = vmul.f32 %v3312, %v3670
    %v3706 = vmul.f32 %v3314, %v3670
    %v3707 = vmul.f32 %v3316, %v3674
    %v3708 = vmul.f32 %v3318, %v3674
    %v3709 = vmul.f32 %v3320, %v3674
    %v3710 = vmul.f32 %v3322, %v3674
    %v3711 = vmul.f32 %v3324, %v3674
    %v3712 = vmul.f32 %v3326, %v3674
    %v3713 = vmul.f32 %v3328, %v3674
    %v3714 = vmul.f32 %v3330, %v3674
    %v3715 = vmul.f32 %v3332, %v3678
    %v3716 = vmul.f32 %v3334, %v3678
    %v3717 = vmul.f32 %v3336, %v3678
    %v3718 = vmul.f32 %v3338, %v3678
    %v3719 = vmul.f32 %v3340, %v3678
    %v3720 = vmul.f32 %v3342, %v3678
    %v3721 = vmul.f32 %v3344, %v3678
    %v3722 = vmul.f32 %v3346, %v3678
    %v3723 = vmul.f32 %v3348, %v3682
    %v3724 = vmul.f32 %v3350, %v3682
    %v3725 = vmul.f32 %v3352, %v3682
    %v3726 = vmul.f32 %v3354, %v3682
    %v3727 = vmul.f32 %v3356, %v3682
    %v3728 = vmul.f32 %v3358, %v3682
    %v3729 = vmul.f32 %v3360, %v3682
    %v3730 = vmul.f32 %v3362, %v3682
    %v3731 = vmul.f32 %v3364, %v3686
    %v3732 = vmul.f32 %v3366, %v3686
    %v3733 = vmul.f32 %v3368, %v3686
    %v3734 = vmul.f32 %v3370, %v3686
    %v3735 = vmul.f32 %v3372, %v3686
    %v3736 = vmul.f32 %v3374, %v3686
    %v3737 = vmul.f32 %v3376, %v3686
    %v3738 = vmul.f32 %v3378, %v3686
    %v3739 = vmul.f32 %v3380, %v3690
    %v3740 = vmul.f32 %v3382, %v3690
    %v3741 = vmul.f32 %v3384, %v3690
    %v3742 = vmul.f32 %v3386, %v3690
    %v3743 = vmul.f32 %v3388, %v3690
    %v3744 = vmul.f32 %v3390, %v3690
    %v3745 = vmul.f32 %v3392, %v3690
    %v3746 = vmul.f32 %v3394, %v3690
    %v3747 = vmul.f32 %v3396, %v3694
    %v3748 = vmul.f32 %v3398, %v3694
    %v3749 = vmul.f32 %v3400, %v3694
    %v3750 = vmul.f32 %v3402, %v3694
    %v3751 = vmul.f32 %v3404, %v3694
    %v3752 = vmul.f32 %v3406, %v3694
    %v3753 = vmul.f32 %v3408, %v3694
    %v3754 = vmul.f32 %v3410, %v3694
    %v3755 = vmul.f32 %v3412, %v3698
    %v3756 = vmul.f32 %v3414, %v3698
    %v3757 = vmul.f32 %v3416, %v3698
    %v3758 = vmul.f32 %v3418, %v3698
    %v3759 = vmul.f32 %v3420, %v3698
    %v3760 = vmul.f32 %v3422, %v3698
    %v3761 = vmul.f32 %v3424, %v3698
    %v3762 = vmul.f32 %v3426, %v3698
    %v3763 = vlaneseq
    %v3764 = vshrl.u32 %v3763, 7
    %v3765 = vsub.s32 0, %v3764
    %v3766 = vrot.slane %v3699, %v3765
    %v3767 = vlaneseq
    %v3768 = vshrl.u32 %v3767, 7
    %v3769 = vsub.s32 0, %v3768
    %v3770 = vrot.slane %v3700, %v3769
    %v3771 = vlaneseq
    %v3772 = vshrl.u32 %v3771, 7
    %v3773 = vsub.s32 0, %v3772
    %v3774 = vrot.slane %v3701, %v3773
    %v3775 = vlaneseq
    %v3776 = vshrl.u32 %v3775, 7
    %v3777 = vsub.s32 0, %v3776
    %v3778 = vrot.slane %v3702, %v3777
    %v3779 = vlaneseq
    %v3780 = vshrl.u32 %v3779, 7
    %v3781 = vsub.s32 0, %v3780
    %v3782 = vrot.slane %v3703, %v3781
    %v3783 = vlaneseq
    %v3784 = vshrl.u32 %v3783, 7
    %v3785 = vsub.s32 0, %v3784
    %v3786 = vrot.slane %v3704, %v3785
    %v3787 = vlaneseq
    %v3788 = vshrl.u32 %v3787, 7
    %v3789 = vsub.s32 0, %v3788
    %v3790 = vrot.slane %v3705, %v3789
    %v3791 = vlaneseq
    %v3792 = vshrl.u32 %v3791, 7
    %v3793 = vsub.s32 0, %v3792
    %v3794 = vrot.slane %v3706, %v3793
    %v3795 = vlaneseq
    %v3796 = vshrl.u32 %v3795, 7
    %v3797 = vsub.s32 0, %v3796
    %v3798 = vrot.slane %v3707, %v3797
    %v3799 = vlaneseq
    %v3800 = vshrl.u32 %v3799, 7
    %v3801 = vsub.s32 0, %v3800
    %v3802 = vrot.slane %v3708, %v3801
    %v3803 = vlaneseq
    %v3804 = vshrl.u32 %v3803, 7
    %v3805 = vsub.s32 0, %v3804
    %v3806 = vrot.slane %v3709, %v3805
    %v3807 = vlaneseq
    %v3808 = vshrl.u32 %v3807, 7
    %v3809 = vsub.s32 0, %v3808
    %v3810 = vrot.slane %v3710, %v3809
    %v3811 = vlaneseq
    %v3812 = vshrl.u32 %v3811, 7
    %v3813 = vsub.s32 0, %v3812
    %v3814 = vrot.slane %v3711, %v3813
    %v3815 = vlaneseq
    %v3816 = vshrl.u32 %v3815, 7
    %v3817 = vsub.s32 0, %v3816
    %v3818 = vrot.slane %v3712, %v3817
    %v3819 = vlaneseq
    %v3820 = vshrl.u32 %v3819, 7
    %v3821 = vsub.s32 0, %v3820
    %v3822 = vrot.slane %v3713, %v3821
    %v3823 = vlaneseq
    %v3824 = vshrl.u32 %v3823, 7
    %v3825 = vsub.s32 0, %v3824
    %v3826 = vrot.slane %v3714, %v3825
    %v3827 = vlaneseq
    %v3828 = vshrl.u32 %v3827, 7
    %v3829 = vsub.s32 0, %v3828
    %v3830 = vrot.slane %v3715, %v3829
    %v3831 = vlaneseq
    %v3832 = vshrl.u32 %v3831, 7
    %v3833 = vsub.s32 0, %v3832
    %v3834 = vrot.slane %v3716, %v3833
    %v3835 = vlaneseq
    %v3836 = vshrl.u32 %v3835, 7
    %v3837 = vsub.s32 0, %v3836
    %v3838 = vrot.slane %v3717, %v3837
    %v3839 = vlaneseq
    %v3840 = vshrl.u32 %v3839, 7
    %v3841 = vsub.s32 0, %v3840
    %v3842 = vrot.slane %v3718, %v3841
    %v3843 = vlaneseq
    %v3844 = vshrl.u32 %v3843, 7
    %v3845 = vsub.s32 0, %v3844
    %v3846 = vrot.slane %v3719, %v3845
    %v3847 = vlaneseq
    %v3848 = vshrl.u32 %v3847, 7
    %v3849 = vsub.s32 0, %v3848
    %v3850 = vrot.slane %v3720, %v3849
    %v3851 = vlaneseq
    %v3852 = vshrl.u32 %v3851, 7
    %v3853 = vsub.s32 0, %v3852
    %v3854 = vrot.slane %v3721, %v3853
    %v3855 = vlaneseq
    %v3856 = vshrl.u32 %v3855, 7
    %v3857 = vsub.s32 0, %v3856
    %v3858 = vrot.slane %v3722, %v3857
    %v3859 = vlaneseq
    %v3860 = vshrl.u32 %v3859, 7
    %v3861 = vsub.s32 0, %v3860
    %v3862 = vrot.slane %v3723, %v3861
    %v3863 = vlaneseq
    %v3864 = vshrl.u32 %v3863, 7
    %v3865 = vsub.s32 0, %v3864
    %v3866 = vrot.slane %v3724, %v3865
    %v3867 = vlaneseq
    %v3868 = vshrl.u32 %v3867, 7
    %v3869 = vsub.s32 0, %v3868
    %v3870 = vrot.slane %v3725, %v3869
    %v3871 = vlaneseq
    %v3872 = vshrl.u32 %v3871, 7
    %v3873 = vsub.s32 0, %v3872
    %v3874 = vrot.slane %v3726, %v3873
    %v3875 = vlaneseq
    %v3876 = vshrl.u32 %v3875, 7
    %v3877 = vsub.s32 0, %v3876
    %v3878 = vrot.slane %v3727, %v3877
    %v3879 = vlaneseq
    %v3880 = vshrl.u32 %v3879, 7
    %v3881 = vsub.s32 0, %v3880
    %v3882 = vrot.slane %v3728, %v3881
    %v3883 = vlaneseq
    %v3884 = vshrl.u32 %v3883, 7
    %v3885 = vsub.s32 0, %v3884
    %v3886 = vrot.slane %v3729, %v3885
    %v3887 = vlaneseq
    %v3888 = vshrl.u32 %v3887, 7
    %v3889 = vsub.s32 0, %v3888
    %v3890 = vrot.slane %v3730, %v3889
    %v3891 = vlaneseq
    %v3892 = vshrl.u32 %v3891, 7
    %v3893 = vsub.s32 0, %v3892
    %v3894 = vrot.slane %v3731, %v3893
    %v3895 = vlaneseq
    %v3896 = vshrl.u32 %v3895, 7
    %v3897 = vsub.s32 0, %v3896
    %v3898 = vrot.slane %v3732, %v3897
    %v3899 = vlaneseq
    %v3900 = vshrl.u32 %v3899, 7
    %v3901 = vsub.s32 0, %v3900
    %v3902 = vrot.slane %v3733, %v3901
    %v3903 = vlaneseq
    %v3904 = vshrl.u32 %v3903, 7
    %v3905 = vsub.s32 0, %v3904
    %v3906 = vrot.slane %v3734, %v3905
    %v3907 = vlaneseq
    %v3908 = vshrl.u32 %v3907, 7
    %v3909 = vsub.s32 0, %v3908
    %v3910 = vrot.slane %v3735, %v3909
    %v3911 = vlaneseq
    %v3912 = vshrl.u32 %v3911, 7
    %v3913 = vsub.s32 0, %v3912
    %v3914 = vrot.slane %v3736, %v3913
    %v3915 = vlaneseq
    %v3916 = vshrl.u32 %v3915, 7
    %v3917 = vsub.s32 0, %v3916
    %v3918 = vrot.slane %v3737, %v3917
    %v3919 = vlaneseq
    %v3920 = vshrl.u32 %v3919, 7
    %v3921 = vsub.s32 0, %v3920
    %v3922 = vrot.slane %v3738, %v3921
    %v3923 = vlaneseq
    %v3924 = vshrl.u32 %v3923, 7
    %v3925 = vsub.s32 0, %v3924
    %v3926 = vrot.slane %v3739, %v3925
    %v3927 = vlaneseq
    %v3928 = vshrl.u32 %v3927, 7
    %v3929 = vsub.s32 0, %v3928
    %v3930 = vrot.slane %v3740, %v3929
    %v3931 = vlaneseq
    %v3932 = vshrl.u32 %v3931, 7
    %v3933 = vsub.s32 0, %v3932
    %v3934 = vrot.slane %v3741, %v3933
    %v3935 = vlaneseq
    %v3936 = vshrl.u32 %v3935, 7
    %v3937 = vsub.s32 0, %v3936
    %v3938 = vrot.slane %v3742, %v3937
    %v3939 = vlaneseq
    %v3940 = vshrl.u32 %v3939, 7
    %v3941 = vsub.s32 0, %v3940
    %v3942 = vrot.slane %v3743, %v3941
    %v3943 = vlaneseq
    %v3944 = vshrl.u32 %v3943, 7
    %v3945 = vsub.s32 0, %v3944
    %v3946 = vrot.slane %v3744, %v3945
    %v3947 = vlaneseq
    %v3948 = vshrl.u32 %v3947, 7
    %v3949 = vsub.s32 0, %v3948
    %v3950 = vrot.slane %v3745, %v3949
    %v3951 = vlaneseq
    %v3952 = vshrl.u32 %v3951, 7
    %v3953 = vsub.s32 0, %v3952
    %v3954 = vrot.slane %v3746, %v3953
    %v3955 = vlaneseq
    %v3956 = vshrl.u32 %v3955, 7
    %v3957 = vsub.s32 0, %v3956
    %v3958 = vrot.slane %v3747, %v3957
    %v3959 = vlaneseq
    %v3960 = vshrl.u32 %v3959, 7
    %v3961 = vsub.s32 0, %v3960
    %v3962 = vrot.slane %v3748, %v3961
    %v3963 = vlaneseq
    %v3964 = vshrl.u32 %v3963, 7
    %v3965 = vsub.s32 0, %v3964
    %v3966 = vrot.slane %v3749, %v3965
    %v3967 = vlaneseq
    %v3968 = vshrl.u32 %v3967, 7
    %v3969 = vsub.s32 0, %v3968
    %v3970 = vrot.slane %v3750, %v3969
    %v3971 = vlaneseq
    %v3972 = vshrl.u32 %v3971, 7
    %v3973 = vsub.s32 0, %v3972
    %v3974 = vrot.slane %v3751, %v3973
    %v3975 = vlaneseq
    %v3976 = vshrl.u32 %v3975, 7
    %v3977 = vsub.s32 0, %v3976
    %v3978 = vrot.slane %v3752, %v3977
    %v3979 = vlaneseq
    %v3980 = vshrl.u32 %v3979, 7
    %v3981 = vsub.s32 0, %v3980
    %v3982 = vrot.slane %v3753, %v3981
    %v3983 = vlaneseq
    %v3984 = vshrl.u32 %v3983, 7
    %v3985 = vsub.s32 0, %v3984
    %v3986 = vrot.slane %v3754, %v3985
    %v3987 = vlaneseq
    %v3988 = vshrl.u32 %v3987, 7
    %v3989 = vsub.s32 0, %v3988
    %v3990 = vrot.slane %v3755, %v3989
    %v3991 = vlaneseq
    %v3992 = vshrl.u32 %v3991, 7
    %v3993 = vsub.s32 0, %v3992
    %v3994 = vrot.slane %v3756, %v3993
    %v3995 = vlaneseq
    %v3996 = vshrl.u32 %v3995, 7
    %v3997 = vsub.s32 0, %v3996
    %v3998 = vrot.slane %v3757, %v3997
    %v3999 = vlaneseq
    %v4000 = vshrl.u32 %v3999, 7
    %v4001 = vsub.s32 0, %v4000
    %v4002 = vrot.slane %v3758, %v4001
    %v4003 = vlaneseq
    %v4004 = vshrl.u32 %v4003, 7
    %v4005 = vsub.s32 0, %v4004
    %v4006 = vrot.slane %v3759, %v4005
    %v4007 = vlaneseq
    %v4008 = vshrl.u32 %v4007, 7
    %v4009 = vsub.s32 0, %v4008
    %v4010 = vrot.slane %v3760, %v4009
    %v4011 = vlaneseq
    %v4012 = vshrl.u32 %v4011, 7
    %v4013 = vsub.s32 0, %v4012
    %v4014 = vrot.slane %v3761, %v4013
    %v4015 = vlaneseq
    %v4016 = vshrl.u32 %v4015, 7
    %v4017 = vsub.s32 0, %v4016
    %v4018 = vrot.slane %v3762, %v4017
    %v4019 = vmul.f32 %v3766, %v300
    %v4020 = vmul.f32 %v3770, %v425
    %v4021 = vmul.f32 %v3774, %v550
    %v4022 = vmul.f32 %v3778, %v675
    %v4023 = vmul.f32 %v3782, %v800
    %v4024 = vmul.f32 %v3786, %v925
    %v4025 = vmul.f32 %v3790, %v1050
    %v4026 = vmul.f32 %v3794, %v1175
    %v4027 = vmul.f32 %v3798, %v300
    %v4028 = vmul.f32 %v3802, %v425
    %v4029 = vmul.f32 %v3806, %v550
    %v4030 = vmul.f32 %v3810, %v675
    %v4031 = vmul.f32 %v3814, %v800
    %v4032 = vmul.f32 %v3818, %v925
    %v4033 = vmul.f32 %v3822, %v1050
    %v4034 = vmul.f32 %v3826, %v1175
    %v4035 = vmul.f32 %v3830, %v300
    %v4036 = vmul.f32 %v3834, %v425
    %v4037 = vmul.f32 %v3838, %v550
    %v4038 = vmul.f32 %v3842, %v675
    %v4039 = vmul.f32 %v3846, %v800
    %v4040 = vmul.f32 %v3850, %v925
    %v4041 = vmul.f32 %v3854, %v1050
    %v4042 = vmul.f32 %v3858, %v1175
    %v4043 = vmul.f32 %v3862, %v300
    %v4044 = vmul.f32 %v3866, %v425
    %v4045 = vmul.f32 %v3870, %v550
    %v4046 = vmul.f32 %v3874, %v675
    %v4047 = vmul.f32 %v3878, %v800
    %v4048 = vmul.f32 %v3882, %v925
    %v4049 = vmul.f32 %v3886, %v1050
    %v4050 = vmul.f32 %v3890, %v1175
    %v4051 = vmul.f32 %v3894, %v300
    %v4052 = vmul.f32 %v3898, %v425
    %v4053 = vmul.f32 %v3902, %v550
    %v4054 = vmul.f32 %v3906, %v675
    %v4055 = vmul.f32 %v3910, %v800
    %v4056 = vmul.f32 %v3914, %v925
    %v4057 = vmul.f32 %v3918, %v1050
    %v4058 = vmul.f32 %v3922, %v1175
    %v4059 = vmul.f32 %v3926, %v300
    %v4060 = vmul.f32 %v3930, %v425
    %v4061 = vmul.f32 %v3934, %v550
    %v4062 = vmul.f32 %v3938, %v675
    %v4063 = vmul.f32 %v3942, %v800
    %v4064 = vmul.f32 %v3946, %v925
    %v4065 = vmul.f32 %v3950, %v1050
    %v4066 = vmul.f32 %v3954, %v1175
    %v4067 = vmul.f32 %v3958, %v300
    %v4068 = vmul.f32 %v3962, %v425
    %v4069 = vmul.f32 %v3966, %v550
    %v4070 = vmul.f32 %v3970, %v675
    %v4071 = vmul.f32 %v3974, %v800
    %v4072 = vmul.f32 %v3978, %v925
    %v4073 = vmul.f32 %v3982, %v1050
    %v4074 = vmul.f32 %v3986, %v1175
    %v4075 = vmul.f32 %v3990, %v300
    %v4076 = vmul.f32 %v3994, %v425
    %v4077 = vmul.f32 %v3998, %v550
    %v4078 = vmul.f32 %v4002, %v675
    %v4079 = vmul.f32 %v4006, %v800
    %v4080 = vmul.f32 %v4010, %v925
    %v4081 = vmul.f32 %v4014, %v1050
    %v4082 = vmul.f32 %v4018, %v1175
    %v4083 = vadd.f32 %v4019, %v4020
    %v4084 = vadd.f32 %v4083, %v4021
    %v4085 = vadd.f32 %v4084, %v4022
    %v4086 = vadd.f32 %v4085, %v4023
    %v4087 = vadd.f32 %v4086, %v4024
    %v4088 = vadd.f32 %v4087, %v4025
    %v4089 = vadd.f32 %v4088, %v4026
    %v4090 = vadd.f32 %v4027, %v4028
    %v4091 = vadd.f32 %v4090, %v4029
    %v4092 = vadd.f32 %v4091, %v4030
    %v4093 = vadd.f32 %v4092, %v4031
    %v4094 = vadd.f32 %v4093, %v4032
    %v4095 = vadd.f32 %v4094, %v4033
    %v4096 = vadd.f32 %v4095, %v4034
    %v4097 = vadd.f32 %v4035, %v4036
    %v4098 = vadd.f32 %v4097, %v4037
    %v4099 = vadd.f32 %v4098, %v4038
    %v4100 = vadd.f32 %v4099, %v4039
    %v4101 = vadd.f32 %v4100, %v4040
    %v4102 = vadd.f32 %v4101, %v4041
    %v4103 = vadd.f32 %v4102, %v4042
    %v4104 = vadd.f32 %v4043, %v4044
    %v4105 = vadd.f32 %v4104, %v4045
    %v4106 = vadd.f32 %v4105, %v4046
    %v4107 = vadd.f32 %v4106, %v4047
    %v4108 = vadd.f32 %v4107, %v4048
    %v4109 = vadd.f32 %v4108, %v4049
    %v4110 = vadd.f32 %v4109, %v4050
    %v4111 = vadd.f32 %v4051, %v4052
    %v4112 = vadd.f32 %v4111, %v4053
    %v4113 = vadd.f32 %v4112, %v4054
    %v4114 = vadd.f32 %v4113, %v4055
    %v4115 = vadd.f32 %v4114, %v4056
    %v4116 = vadd.f32 %v4115, %v4057
    %v4117 = vadd.f32 %v4116, %v4058
    %v4118 = vadd.f32 %v4059, %v4060
    %v4119 = vadd.f32 %v4118, %v4061
    %v4120 = vadd.f32 %v4119, %v4062
    %v4121 = vadd.f32 %v4120, %v4063
    %v4122 = vadd.f32 %v4121, %v4064
    %v4123 = vadd.f32 %v4122, %v4065
    %v4124 = vadd.f32 %v4123, %v4066
    %v4125 = vadd.f32 %v4067, %v4068
    %v4126 = vadd.f32 %v4125, %v4069
    %v4127 = vadd.f32 %v4126, %v4070
    %v4128 = vadd.f32 %v4127, %v4071
    %v4129 = vadd.f32 %v4128, %v4072
    %v4130 = vadd.f32 %v4129, %v4073
    %v4131 = vadd.f32 %v4130, %v4074
    %v4132 = vadd.f32 %v4075, %v4076
    %v4133 = vadd.f32 %v4132, %v4077
    %v4134 = vadd.f32 %v4133, %v4078
    %v4135 = vadd.f32 %v4134, %v4079
    %v4136 = vadd.f32 %v4135, %v4080
    %v4137 = vadd.f32 %v4136, %v4081
    %v4138 = vadd.f32 %v4137, %v4082
    %v4139 = vmul.f32 %v265, %v285
    %v4140 = vmul.f32 %v265, %v410
    %v4141 = vmul.f32 %v265, %v535
    %v4142 = vmul.f32 %v265, %v660
    %v4143 = vmul.f32 %v265, %v785
    %v4144 = vmul.f32 %v265, %v910
    %v4145 = vmul.f32 %v265, %v1035
    %v4146 = vmul.f32 %v265, %v1160
    %v4147 = vmul.f32 %v390, %v285
    %v4148 = vmul.f32 %v390, %v410
    %v4149 = vmul.f32 %v390, %v535
    %v4150 = vmul.f32 %v390, %v660
    %v4151 = vmul.f32 %v390, %v785
    %v4152 = vmul.f32 %v390, %v910
    %v4153 = vmul.f32 %v390, %v1035
    %v4154 = vmul.f32 %v390, %v1160
    %v4155 = vmul.f32 %v515, %v285
    %v4156 = vmul.f32 %v515, %v410
    %v4157 = vmul.f32 %v515, %v535
    %v4158 = vmul.f32 %v515, %v660
    %v4159 = vmul.f32 %v515, %v785
    %v4160 = vmul.f32 %v515, %v910
    %v4161 = vmul.f32 %v515, %v1035
    %v4162 = vmul.f32 %v515, %v1160
    %v4163 = vmul.f32 %v640, %v285
    %v4164 = vmul.f32 %v640, %v410
    %v4165 = vmul.f32 %v640, %v535
    %v4166 = vmul.f32 %v640, %v660
    %v4167 = vmul.f32 %v640, %v785
    %v4168 = vmul.f32 %v640, %v910
    %v4169 = vmul.f32 %v640, %v1035
    %v4170 = vmul.f32 %v640, %v1160
    %v4171 = vmul.f32 %v765, %v285
    %v4172 = vmul.f32 %v765, %v410
    %v4173 = vmul.f32 %v765, %v535
    %v4174 = vmul.f32 %v765, %v660
    %v4175 = vmul.f32 %v765, %v785
    %v4176 = vmul.f32 %v765, %v910
    %v4177 = vmul.f32 %v765, %v1035
    %v4178 = vmul.f32 %v765, %v1160
    %v4179 = vmul.f32 %v890, %v285
    %v4180 = vmul.f32 %v890, %v410
    %v4181 = vmul.f32 %v890, %v535
    %v4182 = vmul.f32 %v890, %v660
    %v4183 = vmul.f32 %v890, %v785
    %v4184 = vmul.f32 %v890, %v910
    %v4185 = vmul.f32 %v890, %v1035
    %v4186 = vmul.f32 %v890, %v1160
    %v4187 = vmul.f32 %v1015, %v285
    %v4188 = vmul.f32 %v1015, %v410
    %v4189 = vmul.f32 %v1015, %v535
    %v4190 = vmul.f32 %v1015, %v660
    %v4191 = vmul.f32 %v1015, %v785
    %v4192 = vmul.f32 %v1015, %v910
    %v4193 = vmul.f32 %v1015, %v1035
    %v4194 = vmul.f32 %v1015, %v1160
    %v4195 = vmul.f32 %v1140, %v285
    %v4196 = vmul.f32 %v1140, %v410
    %v4197 = vmul.f32 %v1140, %v535
    %v4198 = vmul.f32 %v1140, %v660
    %v4199 = vmul.f32 %v1140, %v785
    %v4200 = vmul.f32 %v1140, %v910
    %v4201 = vmul.f32 %v1140, %v1035
    %v4202 = vmul.f32 %v1140, %v1160
    %v4203 = vrot.slane %v4139, 4
    %v4204 = vadd.f32 %v4139, %v4203
    %v4205 = vrot.slane %v4204, 2
    %v4206 = vadd.f32 %v4204, %v4205
    %v4207 = vrot.slane %v4206, 1
    %v4208 = vadd.f32 %v4206, %v4207
    %v4209 = vrot.slane %v4140, 4
    %v4210 = vadd.f32 %v4140, %v4209
    %v4211 = vrot.slane %v4210, 2
    %v4212 = vadd.f32 %v4210, %v4211
    %v4213 = vrot.slane %v4212, 1
    %v4214 = vadd.f32 %v4212, %v4213
    %v4215 = vrot.slane %v4141, 4
    %v4216 = vadd.f32 %v4141, %v4215
    %v4217 = vrot.slane %v4216, 2
    %v4218 = vadd.f32 %v4216, %v4217
    %v4219 = vrot.slane %v4218, 1
    %v4220 = vadd.f32 %v4218, %v4219
    %v4221 = vrot.slane %v4142, 4
    %v4222 = vadd.f32 %v4142, %v4221
    %v4223 = vrot.slane %v4222, 2
    %v4224 = vadd.f32 %v4222, %v4223
    %v4225 = vrot.slane %v4224, 1
    %v4226 = vadd.f32 %v4224, %v4225
    %v4227 = vrot.slane %v4143, 4
    %v4228 = vadd.f32 %v4143, %v4227
    %v4229 = vrot.slane %v4228, 2
    %v4230 = vadd.f32 %v4228, %v4229
    %v4231 = vrot.slane %v4230, 1
    %v4232 = vadd.f32 %v4230, %v4231
    %v4233 = vrot.slane %v4144, 4
    %v4234 = vadd.f32 %v4144, %v4233
    %v4235 = vrot.slane %v4234, 2
    %v4236 = vadd.f32 %v4234, %v4235
    %v4237 = vrot.slane %v4236, 1
    %v4238 = vadd.f32 %v4236, %v4237
    %v4239 = vrot.slane %v4145, 4
    %v4240 = vadd.f32 %v4145, %v4239
    %v4241 = vrot.slane %v4240, 2
    %v4242 = vadd.f32 %v4240, %v4241
    %v4243 = vrot.slane %v4242, 1
    %v4244 = vadd.f32 %v4242, %v4243
    %v4245 = vrot.slane %v4146, 4
    %v4246 = vadd.f32 %v4146, %v4245
    %v4247 = vrot.slane %v4246, 2
    %v4248 = vadd.f32 %v4246, %v4247
    %v4249 = vrot.slane %v4248, 1
    %v4250 = vadd.f32 %v4248, %v4249
    %v4251 = vrot.slane %v4147, 4
    %v4252 = vadd.f32 %v4147, %v4251
    %v4253 = vrot.slane %v4252, 2
    %v4254 = vadd.f32 %v4252, %v4253
    %v4255 = vrot.slane %v4254, 1
    %v4256 = vadd.f32 %v4254, %v4255
    %v4257 = vrot.slane %v4148, 4
    %v4258 = vadd.f32 %v4148, %v4257
    %v4259 = vrot.slane %v4258, 2
    %v4260 = vadd.f32 %v4258, %v4259
    %v4261 = vrot.slane %v4260, 1
    %v4262 = vadd.f32 %v4260, %v4261
    %v4263 = vrot.slane %v4149, 4
    %v4264 = vadd.f32 %v4149, %v4263
    %v4265 = vrot.slane %v4264, 2
    %v4266 = vadd.f32 %v4264, %v4265
    %v4267 = vrot.slane %v4266, 1
    %v4268 = vadd.f32 %v4266, %v4267
    %v4269 = vrot.slane %v4150, 4
    %v4270 = vadd.f32 %v4150, %v4269
    %v4271 = vrot.slane %v4270, 2
    %v4272 = vadd.f32 %v4270, %v4271
    %v4273 = vrot.slane %v4272, 1
    %v4274 = vadd.f32 %v4272, %v4273
    %v4275 = vrot.slane %v4151, 4
    %v4276 = vadd.f32 %v4151, %v4275
    %v4277 = vrot.slane %v4276, 2
    %v4278 = vadd.f32 %v4276, %v4277
    %v4279 = vrot.slane %v4278, 1
    %v4280 = vadd.f32 %v4278, %v4279
    %v4281 = vrot.slane %v4152, 4
    %v4282 = vadd.f32 %v4152, %v4281
    %v4283 = vrot.slane %v4282, 2
    %v4284 = vadd.f32 %v4282, %v4283
    %v4285 = vrot.slane %v4284, 1
    %v4286 = vadd.f32 %v4284, %v4285
    %v4287 = vrot.slane %v4153, 4
    %v4288 = vadd.f32 %v4153, %v4287
    %v4289 = vrot.slane %v4288, 2
    %v4290 = vadd.f32 %v4288, %v4289
    %v4291 = vrot.slane %v4290, 1
    %v4292 = vadd.f32 %v4290, %v4291
    %v4293 = vrot.slane %v4154, 4
    %v4294 = vadd.f32 %v4154, %v4293
    %v4295 = vrot.slane %v4294, 2
    %v4296 = vadd.f32 %v4294, %v4295
    %v4297 = vrot.slane %v4296, 1
    %v4298 = vadd.f32 %v4296, %v4297
    %v4299 = vrot.slane %v4155, 4
    %v4300 = vadd.f32 %v4155, %v4299
    %v4301 = vrot.slane %v4300, 2
    %v4302 = vadd.f32 %v4300, %v4301
    %v4303 = vrot.slane %v4302, 1
    %v4304 = vadd.f32 %v4302, %v4303
    %v4305 = vrot.slane %v4156, 4
    %v4306 = vadd.f32 %v4156, %v4305
    %v4307 = vrot.slane %v4306, 2
    %v4308 = vadd.f32 %v4306, %v4307
    %v4309 = vrot.slane %v4308, 1
    %v4310 = vadd.f32 %v4308, %v4309
    %v4311 = vrot.slane %v4157, 4
    %v4312 = vadd.f32 %v4157, %v4311
    %v4313 = vrot.slane %v4312, 2
    %v4314 = vadd.f32 %v4312, %v4313
    %v4315 = vrot.slane %v4314, 1
    %v4316 = vadd.f32 %v4314, %v4315
    %v4317 = vrot.slane %v4158, 4
    %v4318 = vadd.f32 %v4158, %v4317
    %v4319 = vrot.slane %v4318, 2
    %v4320 = vadd.f32 %v4318, %v4319
    %v4321 = vrot.slane %v4320, 1
    %v4322 = vadd.f32 %v4320, %v4321
    %v4323 = vrot.slane %v4159, 4
    %v4324 = vadd.f32 %v4159, %v4323
    %v4325 = vrot.slane %v4324, 2
    %v4326 = vadd.f32 %v4324, %v4325
    %v4327 = vrot.slane %v4326, 1
    %v4328 = vadd.f32 %v4326, %v4327
    %v4329 = vrot.slane %v4160, 4
    %v4330 = vadd.f32 %v4160, %v4329
    %v4331 = vrot.slane %v4330, 2
    %v4332 = vadd.f32 %v4330, %v4331
    %v4333 = vrot.slane %v4332, 1
    %v4334 = vadd.f32 %v4332, %v4333
    %v4335 = vrot.slane %v4161, 4
    %v4336 = vadd.f32 %v4161, %v4335
    %v4337 = vrot.slane %v4336, 2
    %v4338 = vadd.f32 %v4336, %v4337
    %v4339 = vrot.slane %v4338, 1
    %v4340 = vadd.f32 %v4338, %v4339
    %v4341 = vrot.slane %v4162, 4
    %v4342 = vadd.f32 %v4162, %v4341
    %v4343 = vrot.slane %v4342, 2
    %v4344 = vadd.f32 %v4342, %v4343
    %v4345 = vrot.slane %v4344, 1
    %v4346 = vadd.f32 %v4344, %v4345
    %v4347 = vrot.slane %v4163, 4
    %v4348 = vadd.f32 %v4163, %v4347
    %v4349 = vrot.slane %v4348, 2
    %v4350 = vadd.f32 %v4348, %v4349
    %v4351 = vrot.slane %v4350, 1
    %v4352 = vadd.f32 %v4350, %v4351
    %v4353 = vrot.slane %v4164, 4
    %v4354 = vadd.f32 %v4164, %v4353
    %v4355 = vrot.slane %v4354, 2
    %v4356 = vadd.f32 %v4354, %v4355
    %v4357 = vrot.slane %v4356, 1
    %v4358 = vadd.f32 %v4356, %v4357
    %v4359 = vrot.slane %v4165, 4
    %v4360 = vadd.f32 %v4165, %v4359
    %v4361 = vrot.slane %v4360, 2
    %v4362 = vadd.f32 %v4360, %v4361
    %v4363 = vrot.slane %v4362, 1
    %v4364 = vadd.f32 %v4362, %v4363
    %v4365 = vrot.slane %v4166, 4
    %v4366 = vadd.f32 %v4166, %v4365
    %v4367 = vrot.slane %v4366, 2
    %v4368 = vadd.f32 %v4366, %v4367
    %v4369 = vrot.slane %v4368, 1
    %v4370 = vadd.f32 %v4368, %v4369
    %v4371 = vrot.slane %v4167, 4
    %v4372 = vadd.f32 %v4167, %v4371
    %v4373 = vrot.slane %v4372, 2
    %v4374 = vadd.f32 %v4372, %v4373
    %v4375 = vrot.slane %v4374, 1
    %v4376 = vadd.f32 %v4374, %v4375
    %v4377 = vrot.slane %v4168, 4
    %v4378 = vadd.f32 %v4168, %v4377
    %v4379 = vrot.slane %v4378, 2
    %v4380 = vadd.f32 %v4378, %v4379
    %v4381 = vrot.slane %v4380, 1
    %v4382 = vadd.f32 %v4380, %v4381
    %v4383 = vrot.slane %v4169, 4
    %v4384 = vadd.f32 %v4169, %v4383
    %v4385 = vrot.slane %v4384, 2
    %v4386 = vadd.f32 %v4384, %v4385
    %v4387 = vrot.slane %v4386, 1
    %v4388 = vadd.f32 %v4386, %v4387
    %v4389 = vrot.slane %v4170, 4
    %v4390 = vadd.f32 %v4170, %v4389
    %v4391 = vrot.slane %v4390, 2
    %v4392 = vadd.f32 %v4390, %v4391
    %v4393 = vrot.slane %v4392, 1
    %v4394 = vadd.f32 %v4392, %v4393
    %v4395 = vrot.slane %v4171, 4
    %v4396 = vadd.f32 %v4171, %v4395
    %v4397 = vrot.slane %v4396, 2
    %v4398 = vadd.f32 %v4396, %v4397
    %v4399 = vrot.slane %v4398, 1
    %v4400 = vadd.f32 %v4398, %v4399
    %v4401 = vrot.slane %v4172, 4
    %v4402 = vadd.f32 %v4172, %v4401
    %v4403 = vrot.slane %v4402, 2
    %v4404 = vadd.f32 %v4402, %v4403
    %v4405 = vrot.slane %v4404, 1
    %v4406 = vadd.f32 %v4404, %v4405
    %v4407 = vrot.slane %v4173, 4
    %v4408 = vadd.f32 %v4173, %v4407
    %v4409 = vrot.slane %v4408, 2
    %v4410 = vadd.f32 %v4408, %v4409
    %v4411 = vrot.slane %v4410, 1
    %v4412 = vadd.f32 %v4410, %v4411
    %v4413 = vrot.slane %v4174, 4
    %v4414 = vadd.f32 %v4174, %v4413
    %v4415 = vrot.slane %v4414, 2
    %v4416 = vadd.f32 %v4414, %v4415
    %v4417 = vrot.slane %v4416, 1
    %v4418 = vadd.f32 %v4416, %v4417
    %v4419 = vrot.slane %v4175, 4
    %v4420 = vadd.f32 %v4175, %v4419
    %v4421 = vrot.slane %v4420, 2
    %v4422 = vadd.f32 %v4420, %v4421
    %v4423 = vrot.slane %v4422, 1
    %v4424 = vadd.f32 %v4422, %v4423
    %v4425 = vrot.slane %v4176, 4
    %v4426 = vadd.f32 %v4176, %v4425
    %v4427 = vrot.slane %v4426, 2
    %v4428 = vadd.f32 %v4426, %v4427
    %v4429 = vrot.slane %v4428, 1
    %v4430 = vadd.f32 %v4428, %v4429
    %v4431 = vrot.slane %v4177, 4
    %v4432 = vadd.f32 %v4177, %v4431
    %v4433 = vrot.slane %v4432, 2
    %v4434 = vadd.f32 %v4432, %v4433
    %v4435 = vrot.slane %v4434, 1
    %v4436 = vadd.f32 %v4434, %v4435
    %v4437 = vrot.slane %v4178, 4
    %v4438 = vadd.f32 %v4178, %v4437
    %v4439 = vrot.slane %v4438, 2
    %v4440 = vadd.f32 %v4438, %v4439
    %v4441 = vrot.slane %v4440, 1
    %v4442 = vadd.f32 %v4440, %v4441
    %v4443 = vrot.slane %v4179, 4
    %v4444 = vadd.f32 %v4179, %v4443
    %v4445 = vrot.slane %v4444, 2
    %v4446 = vadd.f32 %v4444, %v4445
    %v4447 = vrot.slane %v4446, 1
    %v4448 = vadd.f32 %v4446, %v4447
    %v4449 = vrot.slane %v4180, 4
    %v4450 = vadd.f32 %v4180, %v4449
    %v4451 = vrot.slane %v4450, 2
    %v4452 = vadd.f32 %v4450, %v4451
    %v4453 = vrot.slane %v4452, 1
    %v4454 = vadd.f32 %v4452, %v4453
    %v4455 = vrot.slane %v4181, 4
    %v4456 = vadd.f32 %v4181, %v4455
    %v4457 = vrot.slane %v4456, 2
    %v4458 = vadd.f32 %v4456, %v4457
    %v4459 = vrot.slane %v4458, 1
    %v4460 = vadd.f32 %v4458, %v4459
    %v4461 = vrot.slane %v4182, 4
    %v4462 = vadd.f32 %v4182, %v4461
    %v4463 = vrot.slane %v4462, 2
    %v4464 = vadd.f32 %v4462, %v4463
    %v4465 = vrot.slane %v4464, 1
    %v4466 = vadd.f32 %v4464, %v4465
    %v4467 = vrot.slane %v4183, 4
    %v4468 = vadd.f32 %v4183, %v4467
    %v4469 = vrot.slane %v4468, 2
    %v4470 = vadd.f32 %v4468, %v4469
    %v4471 = vrot.slane %v4470, 1
    %v4472 = vadd.f32 %v4470, %v4471
    %v4473 = vrot.slane %v4184, 4
    %v4474 = vadd.f32 %v4184, %v4473
    %v4475 = vrot.slane %v4474, 2
    %v4476 = vadd.f32 %v4474, %v4475
    %v4477 = vrot.slane %v4476, 1
    %v4478 = vadd.f32 %v4476, %v4477
    %v4479 = vrot.slane %v4185, 4
    %v4480 = vadd.f32 %v4185, %v4479
    %v4481 = vrot.slane %v4480, 2
    %v4482 = vadd.f32 %v4480, %v4481
    %v4483 = vrot.slane %v4482, 1
    %v4484 = vadd.f32 %v4482, %v4483
    %v4485 = vrot.slane %v4186, 4
    %v4486 = vadd.f32 %v4186, %v4485
    %v4487 = vrot.slane %v4486, 2
    %v4488 = vadd.f32 %v4486, %v4487
    %v4489 = vrot.slane %v4488, 1
    %v4490 = vadd.f32 %v4488, %v4489
    %v4491 = vrot.slane %v4187, 4
    %v4492 = vadd.f32 %v4187, %v4491
    %v4493 = vrot.slane %v4492, 2
    %v4494 = vadd.f32 %v4492, %v4493
    %v4495 = vrot.slane %v4494, 1
    %v4496 = vadd.f32 %v4494, %v4495
    %v4497 = vrot.slane %v4188, 4
    %v4498 = vadd.f32 %v4188, %v4497
    %v4499 = vrot.slane %v4498, 2
    %v4500 = vadd.f32 %v4498, %v4499
    %v4501 = vrot.slane %v4500, 1
    %v4502 = vadd.f32 %v4500, %v4501
    %v4503 = vrot.slane %v4189, 4
    %v4504 = vadd.f32 %v4189, %v4503
    %v4505 = vrot.slane %v4504, 2
    %v4506 = vadd.f32 %v4504, %v4505
    %v4507 = vrot.slane %v4506, 1
    %v4508 = vadd.f32 %v4506, %v4507
    %v4509 = vrot.slane %v4190, 4
    %v4510 = vadd.f32 %v4190, %v4509
    %v4511 = vrot.slane %v4510, 2
    %v4512 = vadd.f32 %v4510, %v4511
    %v4513 = vrot.slane %v4512, 1
    %v4514 = vadd.f32 %v4512, %v4513
    %v4515 = vrot.slane %v4191, 4
    %v4516 = vadd.f32 %v4191, %v4515
    %v4517 = vrot.slane %v4516, 2
    %v4518 = vadd.f32 %v4516, %v4517
    %v4519 = vrot.slane %v4518, 1
    %v4520 = vadd.f32 %v4518, %v4519
    %v4521 = vrot.slane %v4192, 4
    %v4522 = vadd.f32 %v4192, %v4521
    %v4523 = vrot.slane %v4522, 2
    %v4524 = vadd.f32 %v4522, %v4523
    %v4525 = vrot.slane %v4524, 1
    %v4526 = vadd.f32 %v4524, %v4525
    %v4527 = vrot.slane %v4193, 4
    %v4528 = vadd.f32 %v4193, %v4527
    %v4529 = vrot.slane %v4528, 2
    %v4530 = vadd.f32 %v4528, %v4529
    %v4531 = vrot.slane %v4530, 1
    %v4532 = vadd.f32 %v4530, %v4531
    %v4533 = vrot.slane %v4194, 4
    %v4534 = vadd.f32 %v4194, %v4533
    %v4535 = vrot.slane %v4534, 2
    %v4536 = vadd.f32 %v4534, %v4535
    %v4537 = vrot.slane %v4536, 1
    %v4538 = vadd.f32 %v4536, %v4537
    %v4539 = vrot.slane %v4195, 4
    %v4540 = vadd.f32 %v4195, %v4539
    %v4541 = vrot.slane %v4540, 2
    %v4542 = vadd.f32 %v4540, %v4541
    %v4543 = vrot.slane %v4542, 1
    %v4544 = vadd.f32 %v4542, %v4543
    %v4545 = vrot.slane %v4196, 4
    %v4546 = vadd.f32 %v4196, %v4545
    %v4547 = vrot.slane %v4546, 2
    %v4548 = vadd.f32 %v4546, %v4547
    %v4549 = vrot.slane %v4548, 1
    %v4550 = vadd.f32 %v4548, %v4549
    %v4551 = vrot.slane %v4197, 4
    %v4552 = vadd.f32 %v4197, %v4551
    %v4553 = vrot.slane %v4552, 2
    %v4554 = vadd.f32 %v4552, %v4553
    %v4555 = vrot.slane %v4554, 1
    %v4556 = vadd.f32 %v4554, %v4555
    %v4557 = vrot.slane %v4198, 4
    %v4558 = vadd.f32 %v4198, %v4557
    %v4559 = vrot.slane %v4558, 2
    %v4560 = vadd.f32 %v4558, %v4559
    %v4561 = vrot.slane %v4560, 1
    %v4562 = vadd.f32 %v4560, %v4561
    %v4563 = vrot.slane %v4199, 4
    %v4564 = vadd.f32 %v4199, %v4563
    %v4565 = vrot.slane %v4564, 2
    %v4566 = vadd.f32 %v4564, %v4565
    %v4567 = vrot.slane %v4566, 1
    %v4568 = vadd.f32 %v4566, %v4567
    %v4569 = vrot.slane %v4200, 4
    %v4570 = vadd.f32 %v4200, %v4569
    %v4571 = vrot.slane %v4570, 2
    %v4572 = vadd.f32 %v4570, %v4571
    %v4573 = vrot.slane %v4572, 1
    %v4574 = vadd.f32 %v4572, %v4573
    %v4575 = vrot.slane %v4201, 4
    %v4576 = vadd.f32 %v4201, %v4575
    %v4577 = vrot.slane %v4576, 2
    %v4578 = vadd.f32 %v4576, %v4577
    %v4579 = vrot.slane %v4578, 1
    %v4580 = vadd.f32 %v4578, %v4579
    %v4581 = vrot.slane %v4202, 4
    %v4582 = vadd.f32 %v4202, %v4581
    %v4583 = vrot.slane %v4582, 2
    %v4584 = vadd.f32 %v4582, %v4583
    %v4585 = vrot.slane %v4584, 1
    %v4586 = vadd.f32 %v4584, %v4585
    %v4587 = vmul.f32 %v4208, 0.35355338
    %v4588 = vmul.f32 %v4214, 0.35355338
    %v4589 = vmul.f32 %v4220, 0.35355338
    %v4590 = vmul.f32 %v4226, 0.35355338
    %v4591 = vmul.f32 %v4232, 0.35355338
    %v4592 = vmul.f32 %v4238, 0.35355338
    %v4593 = vmul.f32 %v4244, 0.35355338
    %v4594 = vmul.f32 %v4250, 0.35355338
    %v4595 = vmul.f32 %v4256, 0.35355338
    %v4596 = vmul.f32 %v4262, 0.35355338
    %v4597 = vmul.f32 %v4268, 0.35355338
    %v4598 = vmul.f32 %v4274, 0.35355338
    %v4599 = vmul.f32 %v4280, 0.35355338
    %v4600 = vmul.f32 %v4286, 0.35355338
    %v4601 = vmul.f32 %v4292, 0.35355338
    %v4602 = vmul.f32 %v4298, 0.35355338
    %v4603 = vmul.f32 %v4304, 0.35355338
    %v4604 = vmul.f32 %v4310, 0.35355338
    %v4605 = vmul.f32 %v4316, 0.35355338
    %v4606 = vmul.f32 %v4322, 0.35355338
    %v4607 = vmul.f32 %v4328, 0.35355338
    %v4608 = vmul.f32 %v4334, 0.35355338
    %v4609 = vmul.f32 %v4340, 0.35355338
    %v4610 = vmul.f32 %v4346, 0.35355338
    %v4611 = vmul.f32 %v4352, 0.35355338
    %v4612 = vmul.f32 %v4358, 0.35355338
    %v4613 = vmul.f32 %v4364, 0.35355338
    %v4614 = vmul.f32 %v4370, 0.35355338
    %v4615 = vmul.f32 %v4376, 0.35355338
    %v4616 = vmul.f32 %v4382, 0.35355338
    %v4617 = vmul.f32 %v4388, 0.35355338
    %v4618 = vmul.f32 %v4394, 0.35355338
    %v4619 = vmul.f32 %v4400, 0.35355338
    %v4620 = vmul.f32 %v4406, 0.35355338
    %v4621 = vmul.f32 %v4412, 0.35355338
    %v4622 = vmul.f32 %v4418, 0.35355338
    %v4623 = vmul.f32 %v4424, 0.35355338
    %v4624 = vmul.f32 %v4430, 0.35355338
    %v4625 = vmul.f32 %v4436, 0.35355338
    %v4626 = vmul.f32 %v4442, 0.35355338
    %v4627 = vmul.f32 %v4448, 0.35355338
    %v4628 = vmul.f32 %v4454, 0.35355338
    %v4629 = vmul.f32 %v4460, 0.35355338
    %v4630 = vmul.f32 %v4466, 0.35355338
    %v4631 = vmul.f32 %v4472, 0.35355338
    %v4632 = vmul.f32 %v4478, 0.35355338
    %v4633 = vmul.f32 %v4484, 0.35355338
    %v4634 = vmul.f32 %v4490, 0.35355338
    %v4635 = vmul.f32 %v4496, 0.35355338
    %v4636 = vmul.f32 %v4502, 0.35355338
    %v4637 = vmul.f32 %v4508, 0.35355338
    %v4638 = vmul.f32 %v4514, 0.35355338
    %v4639 = vmul.f32 %v4520, 0.35355338
    %v4640 = vmul.f32 %v4526, 0.35355338
    %v4641 = vmul.f32 %v4532, 0.35355338
    %v4642 = vmul.f32 %v4538, 0.35355338
    %v4643 = vmul.f32 %v4544, 0.35355338
    %v4644 = vmul.f32 %v4550, 0.35355338
    %v4645 = vmul.f32 %v4556, 0.35355338
    %v4646 = vmul.f32 %v4562, 0.35355338
    %v4647 = vmul.f32 %v4568, 0.35355338
    %v4648 = vmul.f32 %v4574, 0.35355338
    %v4649 = vmul.f32 %v4580, 0.35355338
    %v4650 = vmul.f32 %v4586, 0.35355338
    %v4651 = vmax.f32 %v4587, %v4588
    %v4652 = vmax.f32 %v4651, %v4589
    %v4653 = vmax.f32 %v4652, %v4590
    %v4654 = vmax.f32 %v4653, %v4591
    %v4655 = vmax.f32 %v4654, %v4592
    %v4656 = vmax.f32 %v4655, %v4593
    %v4657 = vmax.f32 %v4656, %v4594
    %v4658 = vmax.f32 %v4595, %v4596
    %v4659 = vmax.f32 %v4658, %v4597
    %v4660 = vmax.f32 %v4659, %v4598
    %v4661 = vmax.f32 %v4660, %v4599
    %v4662 = vmax.f32 %v4661, %v4600
    %v4663 = vmax.f32 %v4662, %v4601
    %v4664 = vmax.f32 %v4663, %v4602
    %v4665 = vmax.f32 %v4603, %v4604
    %v4666 = vmax.f32 %v4665, %v4605
    %v4667 = vmax.f32 %v4666, %v4606
    %v4668 = vmax.f32 %v4667, %v4607
    %v4669 = vmax.f32 %v4668, %v4608
    %v4670 = vmax.f32 %v4669, %v4609
    %v4671 = vmax.f32 %v4670, %v4610
    %v4672 = vmax.f32 %v4611, %v4612
    %v4673 = vmax.f32 %v4672, %v4613
    %v4674 = vmax.f32 %v4673, %v4614
    %v4675 = vmax.f32 %v4674, %v4615
    %v4676 = vmax.f32 %v4675, %v4616
    %v4677 = vmax.f32 %v4676, %v4617
    %v4678 = vmax.f32 %v4677, %v4618
    %v4679 = vmax.f32 %v4619, %v4620
    %v4680 = vmax.f32 %v4679, %v4621
    %v4681 = vmax.f32 %v4680, %v4622
    %v4682 = vmax.f32 %v4681, %v4623
    %v4683 = vmax.f32 %v4682, %v4624
    %v4684 = vmax.f32 %v4683, %v4625
    %v4685 = vmax.f32 %v4684, %v4626
    %v4686 = vmax.f32 %v4627, %v4628
    %v4687 = vmax.f32 %v4686, %v4629
    %v4688 = vmax.f32 %v4687, %v4630
    %v4689 = vmax.f32 %v4688, %v4631
    %v4690 = vmax.f32 %v4689, %v4632
    %v4691 = vmax.f32 %v4690, %v4633
    %v4692 = vmax.f32 %v4691, %v4634
    %v4693 = vmax.f32 %v4635, %v4636
    %v4694 = vmax.f32 %v4693, %v4637
    %v4695 = vmax.f32 %v4694, %v4638
    %v4696 = vmax.f32 %v4695, %v4639
    %v4697 = vmax.f32 %v4696, %v4640
    %v4698 = vmax.f32 %v4697, %v4641
    %v4699 = vmax.f32 %v4698, %v4642
    %v4700 = vmax.f32 %v4643, %v4644
    %v4701 = vmax.f32 %v4700, %v4645
    %v4702 = vmax.f32 %v4701, %v4646
    %v4703 = vmax.f32 %v4702, %v4647
    %v4704 = vmax.f32 %v4703, %v4648
    %v4705 = vmax.f32 %v4704, %v4649
    %v4706 = vmax.f32 %v4705, %v4650
    %v4707 = vsub.f32 %v4587, %v4657
    %v4708 = vsub.f32 %v4588, %v4657
    %v4709 = vsub.f32 %v4589, %v4657
    %v4710 = vsub.f32 %v4590, %v4657
    %v4711 = vsub.f32 %v4591, %v4657
    %v4712 = vsub.f32 %v4592, %v4657
    %v4713 = vsub.f32 %v4593, %v4657
    %v4714 = vsub.f32 %v4594, %v4657
    %v4715 = vsub.f32 %v4595, %v4664
    %v4716 = vsub.f32 %v4596, %v4664
    %v4717 = vsub.f32 %v4597, %v4664
    %v4718 = vsub.f32 %v4598, %v4664
    %v4719 = vsub.f32 %v4599, %v4664
    %v4720 = vsub.f32 %v4600, %v4664
    %v4721 = vsub.f32 %v4601, %v4664
    %v4722 = vsub.f32 %v4602, %v4664
    %v4723 = vsub.f32 %v4603, %v4671
    %v4724 = vsub.f32 %v4604, %v4671
    %v4725 = vsub.f32 %v4605, %v4671
    %v4726 = vsub.f32 %v4606, %v4671
    %v4727 = vsub.f32 %v4607, %v4671
    %v4728 = vsub.f32 %v4608, %v4671
    %v4729 = vsub.f32 %v4609, %v4671
    %v4730 = vsub.f32 %v4610, %v4671
    %v4731 = vsub.f32 %v4611, %v4678
    %v4732 = vsub.f32 %v4612, %v4678
    %v4733 = vsub.f32 %v4613, %v4678
    %v4734 = vsub.f32 %v4614, %v4678
    %v4735 = vsub.f32 %v4615, %v4678
    %v4736 = vsub.f32 %v4616, %v4678
    %v4737 = vsub.f32 %v4617, %v4678
    %v4738 = vsub.f32 %v4618, %v4678
    %v4739 = vsub.f32 %v4619, %v4685
    %v4740 = vsub.f32 %v4620, %v4685
    %v4741 = vsub.f32 %v4621, %v4685
    %v4742 = vsub.f32 %v4622, %v4685
    %v4743 = vsub.f32 %v4623, %v4685
    %v4744 = vsub.f32 %v4624, %v4685
    %v4745 = vsub.f32 %v4625, %v4685
    %v4746 = vsub.f32 %v4626, %v4685
    %v4747 = vsub.f32 %v4627, %v4692
    %v4748 = vsub.f32 %v4628, %v4692
    %v4749 = vsub.f32 %v4629, %v4692
    %v4750 = vsub.f32 %v4630, %v4692
    %v4751 = vsub.f32 %v4631, %v4692
    %v4752 = vsub.f32 %v4632, %v4692
    %v4753 = vsub.f32 %v4633, %v4692
    %v4754 = vsub.f32 %v4634, %v4692
    %v4755 = vsub.f32 %v4635, %v4699
    %v4756 = vsub.f32 %v4636, %v4699
    %v4757 = vsub.f32 %v4637, %v4699
    %v4758 = vsub.f32 %v4638, %v4699
    %v4759 = vsub.f32 %v4639, %v4699
    %v4760 = vsub.f32 %v4640, %v4699
    %v4761 = vsub.f32 %v4641, %v4699
    %v4762 = vsub.f32 %v4642, %v4699
    %v4763 = vsub.f32 %v4643, %v4706
    %v4764 = vsub.f32 %v4644, %v4706
    %v4765 = vsub.f32 %v4645, %v4706
    %v4766 = vsub.f32 %v4646, %v4706
    %v4767 = vsub.f32 %v4647, %v4706
    %v4768 = vsub.f32 %v4648, %v4706
    %v4769 = vsub.f32 %v4649, %v4706
    %v4770 = vsub.f32 %v4650, %v4706
    %v4771 = vmul.f32 %v4707, 1.442695
    %v4772 = vpow.pop %v4771
    %v4773 = vmul.f32 %v4708, 1.442695
    %v4774 = vpow.pop %v4773
    %v4775 = vmul.f32 %v4709, 1.442695
    %v4776 = vpow.pop %v4775
    %v4777 = vmul.f32 %v4710, 1.442695
    %v4778 = vpow.pop %v4777
    %v4779 = vmul.f32 %v4711, 1.442695
    %v4780 = vpow.pop %v4779
    %v4781 = vmul.f32 %v4712, 1.442695
    %v4782 = vpow.pop %v4781
    %v4783 = vmul.f32 %v4713, 1.442695
    %v4784 = vpow.pop %v4783
    %v4785 = vmul.f32 %v4714, 1.442695
    %v4786 = vpow.pop %v4785
    %v4787 = vmul.f32 %v4715, 1.442695
    %v4788 = vpow.pop %v4787
    %v4789 = vmul.f32 %v4716, 1.442695
    %v4790 = vpow.pop %v4789
    %v4791 = vmul.f32 %v4717, 1.442695
    %v4792 = vpow.pop %v4791
    %v4793 = vmul.f32 %v4718, 1.442695
    %v4794 = vpow.pop %v4793
    %v4795 = vmul.f32 %v4719, 1.442695
    %v4796 = vpow.pop %v4795
    %v4797 = vmul.f32 %v4720, 1.442695
    %v4798 = vpow.pop %v4797
    %v4799 = vmul.f32 %v4721, 1.442695
    %v4800 = vpow.pop %v4799
    %v4801 = vmul.f32 %v4722, 1.442695
    %v4802 = vpow.pop %v4801
    %v4803 = vmul.f32 %v4723, 1.442695
    %v4804 = vpow.pop %v4803
    %v4805 = vmul.f32 %v4724, 1.442695
    %v4806 = vpow.pop %v4805
    %v4807 = vmul.f32 %v4725, 1.442695
    %v4808 = vpow.pop %v4807
    %v4809 = vmul.f32 %v4726, 1.442695
    %v4810 = vpow.pop %v4809
    %v4811 = vmul.f32 %v4727, 1.442695
    %v4812 = vpow.pop %v4811
    %v4813 = vmul.f32 %v4728, 1.442695
    %v4814 = vpow.pop %v4813
    %v4815 = vmul.f32 %v4729, 1.442695
    %v4816 = vpow.pop %v4815
    %v4817 = vmul.f32 %v4730, 1.442695
    %v4818 = vpow.pop %v4817
    %v4819 = vmul.f32 %v4731, 1.442695
    %v4820 = vpow.pop %v4819
    %v4821 = vmul.f32 %v4732, 1.442695
    %v4822 = vpow.pop %v4821
    %v4823 = vmul.f32 %v4733, 1.442695
    %v4824 = vpow.pop %v4823
    %v4825 = vmul.f32 %v4734, 1.442695
    %v4826 = vpow.pop %v4825
    %v4827 = vmul.f32 %v4735, 1.442695
    %v4828 = vpow.pop %v4827
    %v4829 = vmul.f32 %v4736, 1.442695
    %v4830 = vpow.pop %v4829
    %v4831 = vmul.f32 %v4737, 1.442695
    %v4832 = vpow.pop %v4831
    %v4833 = vmul.f32 %v4738, 1.442695
    %v4834 = vpow.pop %v4833
    %v4835 = vmul.f32 %v4739, 1.442695
    %v4836 = vpow.pop %v4835
    %v4837 = vmul.f32 %v4740, 1.442695
    %v4838 = vpow.pop %v4837
    %v4839 = vmul.f32 %v4741, 1.442695
    %v4840 = vpow.pop %v4839
    %v4841 = vmul.f32 %v4742, 1.442695
    %v4842 = vpow.pop %v4841
    %v4843 = vmul.f32 %v4743, 1.442695
    %v4844 = vpow.pop %v4843
    %v4845 = vmul.f32 %v4744, 1.442695
    %v4846 = vpow.pop %v4845
    %v4847 = vmul.f32 %v4745, 1.442695
    %v4848 = vpow.pop %v4847
    %v4849 = vmul.f32 %v4746, 1.442695
    %v4850 = vpow.pop %v4849
    %v4851 = vmul.f32 %v4747, 1.442695
    %v4852 = vpow.pop %v4851
    %v4853 = vmul.f32 %v4748, 1.442695
    %v4854 = vpow.pop %v4853
    %v4855 = vmul.f32 %v4749, 1.442695
    %v4856 = vpow.pop %v4855
    %v4857 = vmul.f32 %v4750, 1.442695
    %v4858 = vpow.pop %v4857
    %v4859 = vmul.f32 %v4751, 1.442695
    %v4860 = vpow.pop %v4859
    %v4861 = vmul.f32 %v4752, 1.442695
    %v4862 = vpow.pop %v4861
    %v4863 = vmul.f32 %v4753, 1.442695
    %v4864 = vpow.pop %v4863
    %v4865 = vmul.f32 %v4754, 1.442695
    %v4866 = vpow.pop %v4865
    %v4867 = vmul.f32 %v4755, 1.442695
    %v4868 = vpow.pop %v4867
    %v4869 = vmul.f32 %v4756, 1.442695
    %v4870 = vpow.pop %v4869
    %v4871 = vmul.f32 %v4757, 1.442695
    %v4872 = vpow.pop %v4871
    %v4873 = vmul.f32 %v4758, 1.442695
    %v4874 = vpow.pop %v4873
    %v4875 = vmul.f32 %v4759, 1.442695
    %v4876 = vpow.pop %v4875
    %v4877 = vmul.f32 %v4760, 1.442695
    %v4878 = vpow.pop %v4877
    %v4879 = vmul.f32 %v4761, 1.442695
    %v4880 = vpow.pop %v4879
    %v4881 = vmul.f32 %v4762, 1.442695
    %v4882 = vpow.pop %v4881
    %v4883 = vmul.f32 %v4763, 1.442695
    %v4884 = vpow.pop %v4883
    %v4885 = vmul.f32 %v4764, 1.442695
    %v4886 = vpow.pop %v4885
    %v4887 = vmul.f32 %v4765, 1.442695
    %v4888 = vpow.pop %v4887
    %v4889 = vmul.f32 %v4766, 1.442695
    %v4890 = vpow.pop %v4889
    %v4891 = vmul.f32 %v4767, 1.442695
    %v4892 = vpow.pop %v4891
    %v4893 = vmul.f32 %v4768, 1.442695
    %v4894 = vpow.pop %v4893
    %v4895 = vmul.f32 %v4769, 1.442695
    %v4896 = vpow.pop %v4895
    %v4897 = vmul.f32 %v4770, 1.442695
    %v4898 = vpow.pop %v4897
    %v4963 = vrot.slane %v4774, 7
    %v4964 = vsel %vm2013, %v4963, %v4772
    %v4965 = vrot.slane %v4776, 6
    %v4966 = vsel %vm2016, %v4965, %v4964
    %v4967 = vrot.slane %v4778, 5
    %v4968 = vsel %vm2019, %v4967, %v4966
    %v4969 = vrot.slane %v4780, 4
    %v4970 = vsel %vm2022, %v4969, %v4968
    %v4971 = vrot.slane %v4782, 3
    %v4972 = vsel %vm2025, %v4971, %v4970
    %v4973 = vrot.slane %v4784, 2
    %v4974 = vsel %vm2028, %v4973, %v4972
    %v4975 = vrot.slane %v4786, 1
    %v4976 = vsel %vm2031, %v4975, %v4974
    %v4977 = vrot.slane %v4790, 7
    %v4978 = vsel %vm2013, %v4977, %v4788
    %v4979 = vrot.slane %v4792, 6
    %v4980 = vsel %vm2016, %v4979, %v4978
    %v4981 = vrot.slane %v4794, 5
    %v4982 = vsel %vm2019, %v4981, %v4980
    %v4983 = vrot.slane %v4796, 4
    %v4984 = vsel %vm2022, %v4983, %v4982
    %v4985 = vrot.slane %v4798, 3
    %v4986 = vsel %vm2025, %v4985, %v4984
    %v4987 = vrot.slane %v4800, 2
    %v4988 = vsel %vm2028, %v4987, %v4986
    %v4989 = vrot.slane %v4802, 1
    %v4990 = vsel %vm2031, %v4989, %v4988
    %v4991 = vrot.slane %v4806, 7
    %v4992 = vsel %vm2013, %v4991, %v4804
    %v4993 = vrot.slane %v4808, 6
    %v4994 = vsel %vm2016, %v4993, %v4992
    %v4995 = vrot.slane %v4810, 5
    %v4996 = vsel %vm2019, %v4995, %v4994
    %v4997 = vrot.slane %v4812, 4
    %v4998 = vsel %vm2022, %v4997, %v4996
    %v4999 = vrot.slane %v4814, 3
    %v5000 = vsel %vm2025, %v4999, %v4998
    %v5001 = vrot.slane %v4816, 2
    %v5002 = vsel %vm2028, %v5001, %v5000
    %v5003 = vrot.slane %v4818, 1
    %v5004 = vsel %vm2031, %v5003, %v5002
    %v5005 = vrot.slane %v4822, 7
    %v5006 = vsel %vm2013, %v5005, %v4820
    %v5007 = vrot.slane %v4824, 6
    %v5008 = vsel %vm2016, %v5007, %v5006
    %v5009 = vrot.slane %v4826, 5
    %v5010 = vsel %vm2019, %v5009, %v5008
    %v5011 = vrot.slane %v4828, 4
    %v5012 = vsel %vm2022, %v5011, %v5010
    %v5013 = vrot.slane %v4830, 3
    %v5014 = vsel %vm2025, %v5013, %v5012
    %v5015 = vrot.slane %v4832, 2
    %v5016 = vsel %vm2028, %v5015, %v5014
    %v5017 = vrot.slane %v4834, 1
    %v5018 = vsel %vm2031, %v5017, %v5016
    %v5019 = vrot.slane %v4838, 7
    %v5020 = vsel %vm2013, %v5019, %v4836
    %v5021 = vrot.slane %v4840, 6
    %v5022 = vsel %vm2016, %v5021, %v5020
    %v5023 = vrot.slane %v4842, 5
    %v5024 = vsel %vm2019, %v5023, %v5022
    %v5025 = vrot.slane %v4844, 4
    %v5026 = vsel %vm2022, %v5025, %v5024
    %v5027 = vrot.slane %v4846, 3
    %v5028 = vsel %vm2025, %v5027, %v5026
    %v5029 = vrot.slane %v4848, 2
    %v5030 = vsel %vm2028, %v5029, %v5028
    %v5031 = vrot.slane %v4850, 1
    %v5032 = vsel %vm2031, %v5031, %v5030
    %v5033 = vrot.slane %v4854, 7
    %v5034 = vsel %vm2013, %v5033, %v4852
    %v5035 = vrot.slane %v4856, 6
    %v5036 = vsel %vm2016, %v5035, %v5034
    %v5037 = vrot.slane %v4858, 5
    %v5038 = vsel %vm2019, %v5037, %v5036
    %v5039 = vrot.slane %v4860, 4
    %v5040 = vsel %vm2022, %v5039, %v5038
    %v5041 = vrot.slane %v4862, 3
    %v5042 = vsel %vm2025, %v5041, %v5040
    %v5043 = vrot.slane %v4864, 2
    %v5044 = vsel %vm2028, %v5043, %v5042
    %v5045 = vrot.slane %v4866, 1
    %v5046 = vsel %vm2031, %v5045, %v5044
    %v5047 = vrot.slane %v4870, 7
    %v5048 = vsel %vm2013, %v5047, %v4868
    %v5049 = vrot.slane %v4872, 6
    %v5050 = vsel %vm2016, %v5049, %v5048
    %v5051 = vrot.slane %v4874, 5
    %v5052 = vsel %vm2019, %v5051, %v5050
    %v5053 = vrot.slane %v4876, 4
    %v5054 = vsel %vm2022, %v5053, %v5052
    %v5055 = vrot.slane %v4878, 3
    %v5056 = vsel %vm2025, %v5055, %v5054
    %v5057 = vrot.slane %v4880, 2
    %v5058 = vsel %vm2028, %v5057, %v5056
    %v5059 = vrot.slane %v4882, 1
    %v5060 = vsel %vm2031, %v5059, %v5058
    %v5061 = vrot.slane %v4886, 7
    %v5062 = vsel %vm2013, %v5061, %v4884
    %v5063 = vrot.slane %v4888, 6
    %v5064 = vsel %vm2016, %v5063, %v5062
    %v5065 = vrot.slane %v4890, 5
    %v5066 = vsel %vm2019, %v5065, %v5064
    %v5067 = vrot.slane %v4892, 4
    %v5068 = vsel %vm2022, %v5067, %v5066
    %v5069 = vrot.slane %v4894, 3
    %v5070 = vsel %vm2025, %v5069, %v5068
    %v5071 = vrot.slane %v4896, 2
    %v5072 = vsel %vm2028, %v5071, %v5070
    %v5073 = vrot.slane %v4898, 1
    %v5074 = vsel %vm2031, %v5073, %v5072
    %v5083 = vrot.slane %v4976, 4
    %v5084 = vadd.f32 %v4976, %v5083
    %v5085 = vrot.slane %v5084, 2
    %v5086 = vadd.f32 %v5084, %v5085
    %v5087 = vrot.slane %v5086, 1
    %v5088 = vadd.f32 %v5086, %v5087
    %v5089 = vrot.slane %v4990, 4
    %v5090 = vadd.f32 %v4990, %v5089
    %v5091 = vrot.slane %v5090, 2
    %v5092 = vadd.f32 %v5090, %v5091
    %v5093 = vrot.slane %v5092, 1
    %v5094 = vadd.f32 %v5092, %v5093
    %v5095 = vrot.slane %v5004, 4
    %v5096 = vadd.f32 %v5004, %v5095
    %v5097 = vrot.slane %v5096, 2
    %v5098 = vadd.f32 %v5096, %v5097
    %v5099 = vrot.slane %v5098, 1
    %v5100 = vadd.f32 %v5098, %v5099
    %v5101 = vrot.slane %v5018, 4
    %v5102 = vadd.f32 %v5018, %v5101
    %v5103 = vrot.slane %v5102, 2
    %v5104 = vadd.f32 %v5102, %v5103
    %v5105 = vrot.slane %v5104, 1
    %v5106 = vadd.f32 %v5104, %v5105
    %v5107 = vrot.slane %v5032, 4
    %v5108 = vadd.f32 %v5032, %v5107
    %v5109 = vrot.slane %v5108, 2
    %v5110 = vadd.f32 %v5108, %v5109
    %v5111 = vrot.slane %v5110, 1
    %v5112 = vadd.f32 %v5110, %v5111
    %v5113 = vrot.slane %v5046, 4
    %v5114 = vadd.f32 %v5046, %v5113
    %v5115 = vrot.slane %v5114, 2
    %v5116 = vadd.f32 %v5114, %v5115
    %v5117 = vrot.slane %v5116, 1
    %v5118 = vadd.f32 %v5116, %v5117
    %v5119 = vrot.slane %v5060, 4
    %v5120 = vadd.f32 %v5060, %v5119
    %v5121 = vrot.slane %v5120, 2
    %v5122 = vadd.f32 %v5120, %v5121
    %v5123 = vrot.slane %v5122, 1
    %v5124 = vadd.f32 %v5122, %v5123
    %v5125 = vrot.slane %v5074, 4
    %v5126 = vadd.f32 %v5074, %v5125
    %v5127 = vrot.slane %v5126, 2
    %v5128 = vadd.f32 %v5126, %v5127
    %v5129 = vrot.slane %v5128, 1
    %v5130 = vadd.f32 %v5128, %v5129
    %v5131 = vrcp.pop %v5088
    %v5132 = vrcp.pop %v5094
    %v5133 = vrcp.pop %v5100
    %v5134 = vrcp.pop %v5106
    %v5135 = vrcp.pop %v5112
    %v5136 = vrcp.pop %v5118
    %v5137 = vrcp.pop %v5124
    %v5138 = vrcp.pop %v5130
    %v5139 = vlaneseq
    %v5140 = vshrl.u32 %v5139, 7
    %v5141 = vsub.s32 0, %v5140
    %v5142 = vrot.slane %v5131, %v5141
    %v5143 = vlaneseq
    %v5144 = vshrl.u32 %v5143, 7
    %v5145 = vsub.s32 0, %v5144
    %v5146 = vrot.slane %v5132, %v5145
    %v5147 = vlaneseq
    %v5148 = vshrl.u32 %v5147, 7
    %v5149 = vsub.s32 0, %v5148
    %v5150 = vrot.slane %v5133, %v5149
    %v5151 = vlaneseq
    %v5152 = vshrl.u32 %v5151, 7
    %v5153 = vsub.s32 0, %v5152
    %v5154 = vrot.slane %v5134, %v5153
    %v5155 = vlaneseq
    %v5156 = vshrl.u32 %v5155, 7
    %v5157 = vsub.s32 0, %v5156
    %v5158 = vrot.slane %v5135, %v5157
    %v5159 = vlaneseq
    %v5160 = vshrl.u32 %v5159, 7
    %v5161 = vsub.s32 0, %v5160
    %v5162 = vrot.slane %v5136, %v5161
    %v5163 = vlaneseq
    %v5164 = vshrl.u32 %v5163, 7
    %v5165 = vsub.s32 0, %v5164
    %v5166 = vrot.slane %v5137, %v5165
    %v5167 = vlaneseq
    %v5168 = vshrl.u32 %v5167, 7
    %v5169 = vsub.s32 0, %v5168
    %v5170 = vrot.slane %v5138, %v5169
    %v5171 = vmul.f32 %v4772, %v5142
    %v5172 = vmul.f32 %v4774, %v5142
    %v5173 = vmul.f32 %v4776, %v5142
    %v5174 = vmul.f32 %v4778, %v5142
    %v5175 = vmul.f32 %v4780, %v5142
    %v5176 = vmul.f32 %v4782, %v5142
    %v5177 = vmul.f32 %v4784, %v5142
    %v5178 = vmul.f32 %v4786, %v5142
    %v5179 = vmul.f32 %v4788, %v5146
    %v5180 = vmul.f32 %v4790, %v5146
    %v5181 = vmul.f32 %v4792, %v5146
    %v5182 = vmul.f32 %v4794, %v5146
    %v5183 = vmul.f32 %v4796, %v5146
    %v5184 = vmul.f32 %v4798, %v5146
    %v5185 = vmul.f32 %v4800, %v5146
    %v5186 = vmul.f32 %v4802, %v5146
    %v5187 = vmul.f32 %v4804, %v5150
    %v5188 = vmul.f32 %v4806, %v5150
    %v5189 = vmul.f32 %v4808, %v5150
    %v5190 = vmul.f32 %v4810, %v5150
    %v5191 = vmul.f32 %v4812, %v5150
    %v5192 = vmul.f32 %v4814, %v5150
    %v5193 = vmul.f32 %v4816, %v5150
    %v5194 = vmul.f32 %v4818, %v5150
    %v5195 = vmul.f32 %v4820, %v5154
    %v5196 = vmul.f32 %v4822, %v5154
    %v5197 = vmul.f32 %v4824, %v5154
    %v5198 = vmul.f32 %v4826, %v5154
    %v5199 = vmul.f32 %v4828, %v5154
    %v5200 = vmul.f32 %v4830, %v5154
    %v5201 = vmul.f32 %v4832, %v5154
    %v5202 = vmul.f32 %v4834, %v5154
    %v5203 = vmul.f32 %v4836, %v5158
    %v5204 = vmul.f32 %v4838, %v5158
    %v5205 = vmul.f32 %v4840, %v5158
    %v5206 = vmul.f32 %v4842, %v5158
    %v5207 = vmul.f32 %v4844, %v5158
    %v5208 = vmul.f32 %v4846, %v5158
    %v5209 = vmul.f32 %v4848, %v5158
    %v5210 = vmul.f32 %v4850, %v5158
    %v5211 = vmul.f32 %v4852, %v5162
    %v5212 = vmul.f32 %v4854, %v5162
    %v5213 = vmul.f32 %v4856, %v5162
    %v5214 = vmul.f32 %v4858, %v5162
    %v5215 = vmul.f32 %v4860, %v5162
    %v5216 = vmul.f32 %v4862, %v5162
    %v5217 = vmul.f32 %v4864, %v5162
    %v5218 = vmul.f32 %v4866, %v5162
    %v5219 = vmul.f32 %v4868, %v5166
    %v5220 = vmul.f32 %v4870, %v5166
    %v5221 = vmul.f32 %v4872, %v5166
    %v5222 = vmul.f32 %v4874, %v5166
    %v5223 = vmul.f32 %v4876, %v5166
    %v5224 = vmul.f32 %v4878, %v5166
    %v5225 = vmul.f32 %v4880, %v5166
    %v5226 = vmul.f32 %v4882, %v5166
    %v5227 = vmul.f32 %v4884, %v5170
    %v5228 = vmul.f32 %v4886, %v5170
    %v5229 = vmul.f32 %v4888, %v5170
    %v5230 = vmul.f32 %v4890, %v5170
    %v5231 = vmul.f32 %v4892, %v5170
    %v5232 = vmul.f32 %v4894, %v5170
    %v5233 = vmul.f32 %v4896, %v5170
    %v5234 = vmul.f32 %v4898, %v5170
    %v5235 = vlaneseq
    %v5236 = vshrl.u32 %v5235, 7
    %v5237 = vsub.s32 0, %v5236
    %v5238 = vrot.slane %v5171, %v5237
    %v5239 = vlaneseq
    %v5240 = vshrl.u32 %v5239, 7
    %v5241 = vsub.s32 0, %v5240
    %v5242 = vrot.slane %v5172, %v5241
    %v5243 = vlaneseq
    %v5244 = vshrl.u32 %v5243, 7
    %v5245 = vsub.s32 0, %v5244
    %v5246 = vrot.slane %v5173, %v5245
    %v5247 = vlaneseq
    %v5248 = vshrl.u32 %v5247, 7
    %v5249 = vsub.s32 0, %v5248
    %v5250 = vrot.slane %v5174, %v5249
    %v5251 = vlaneseq
    %v5252 = vshrl.u32 %v5251, 7
    %v5253 = vsub.s32 0, %v5252
    %v5254 = vrot.slane %v5175, %v5253
    %v5255 = vlaneseq
    %v5256 = vshrl.u32 %v5255, 7
    %v5257 = vsub.s32 0, %v5256
    %v5258 = vrot.slane %v5176, %v5257
    %v5259 = vlaneseq
    %v5260 = vshrl.u32 %v5259, 7
    %v5261 = vsub.s32 0, %v5260
    %v5262 = vrot.slane %v5177, %v5261
    %v5263 = vlaneseq
    %v5264 = vshrl.u32 %v5263, 7
    %v5265 = vsub.s32 0, %v5264
    %v5266 = vrot.slane %v5178, %v5265
    %v5267 = vlaneseq
    %v5268 = vshrl.u32 %v5267, 7
    %v5269 = vsub.s32 0, %v5268
    %v5270 = vrot.slane %v5179, %v5269
    %v5271 = vlaneseq
    %v5272 = vshrl.u32 %v5271, 7
    %v5273 = vsub.s32 0, %v5272
    %v5274 = vrot.slane %v5180, %v5273
    %v5275 = vlaneseq
    %v5276 = vshrl.u32 %v5275, 7
    %v5277 = vsub.s32 0, %v5276
    %v5278 = vrot.slane %v5181, %v5277
    %v5279 = vlaneseq
    %v5280 = vshrl.u32 %v5279, 7
    %v5281 = vsub.s32 0, %v5280
    %v5282 = vrot.slane %v5182, %v5281
    %v5283 = vlaneseq
    %v5284 = vshrl.u32 %v5283, 7
    %v5285 = vsub.s32 0, %v5284
    %v5286 = vrot.slane %v5183, %v5285
    %v5287 = vlaneseq
    %v5288 = vshrl.u32 %v5287, 7
    %v5289 = vsub.s32 0, %v5288
    %v5290 = vrot.slane %v5184, %v5289
    %v5291 = vlaneseq
    %v5292 = vshrl.u32 %v5291, 7
    %v5293 = vsub.s32 0, %v5292
    %v5294 = vrot.slane %v5185, %v5293
    %v5295 = vlaneseq
    %v5296 = vshrl.u32 %v5295, 7
    %v5297 = vsub.s32 0, %v5296
    %v5298 = vrot.slane %v5186, %v5297
    %v5299 = vlaneseq
    %v5300 = vshrl.u32 %v5299, 7
    %v5301 = vsub.s32 0, %v5300
    %v5302 = vrot.slane %v5187, %v5301
    %v5303 = vlaneseq
    %v5304 = vshrl.u32 %v5303, 7
    %v5305 = vsub.s32 0, %v5304
    %v5306 = vrot.slane %v5188, %v5305
    %v5307 = vlaneseq
    %v5308 = vshrl.u32 %v5307, 7
    %v5309 = vsub.s32 0, %v5308
    %v5310 = vrot.slane %v5189, %v5309
    %v5311 = vlaneseq
    %v5312 = vshrl.u32 %v5311, 7
    %v5313 = vsub.s32 0, %v5312
    %v5314 = vrot.slane %v5190, %v5313
    %v5315 = vlaneseq
    %v5316 = vshrl.u32 %v5315, 7
    %v5317 = vsub.s32 0, %v5316
    %v5318 = vrot.slane %v5191, %v5317
    %v5319 = vlaneseq
    %v5320 = vshrl.u32 %v5319, 7
    %v5321 = vsub.s32 0, %v5320
    %v5322 = vrot.slane %v5192, %v5321
    %v5323 = vlaneseq
    %v5324 = vshrl.u32 %v5323, 7
    %v5325 = vsub.s32 0, %v5324
    %v5326 = vrot.slane %v5193, %v5325
    %v5327 = vlaneseq
    %v5328 = vshrl.u32 %v5327, 7
    %v5329 = vsub.s32 0, %v5328
    %v5330 = vrot.slane %v5194, %v5329
    %v5331 = vlaneseq
    %v5332 = vshrl.u32 %v5331, 7
    %v5333 = vsub.s32 0, %v5332
    %v5334 = vrot.slane %v5195, %v5333
    %v5335 = vlaneseq
    %v5336 = vshrl.u32 %v5335, 7
    %v5337 = vsub.s32 0, %v5336
    %v5338 = vrot.slane %v5196, %v5337
    %v5339 = vlaneseq
    %v5340 = vshrl.u32 %v5339, 7
    %v5341 = vsub.s32 0, %v5340
    %v5342 = vrot.slane %v5197, %v5341
    %v5343 = vlaneseq
    %v5344 = vshrl.u32 %v5343, 7
    %v5345 = vsub.s32 0, %v5344
    %v5346 = vrot.slane %v5198, %v5345
    %v5347 = vlaneseq
    %v5348 = vshrl.u32 %v5347, 7
    %v5349 = vsub.s32 0, %v5348
    %v5350 = vrot.slane %v5199, %v5349
    %v5351 = vlaneseq
    %v5352 = vshrl.u32 %v5351, 7
    %v5353 = vsub.s32 0, %v5352
    %v5354 = vrot.slane %v5200, %v5353
    %v5355 = vlaneseq
    %v5356 = vshrl.u32 %v5355, 7
    %v5357 = vsub.s32 0, %v5356
    %v5358 = vrot.slane %v5201, %v5357
    %v5359 = vlaneseq
    %v5360 = vshrl.u32 %v5359, 7
    %v5361 = vsub.s32 0, %v5360
    %v5362 = vrot.slane %v5202, %v5361
    %v5363 = vlaneseq
    %v5364 = vshrl.u32 %v5363, 7
    %v5365 = vsub.s32 0, %v5364
    %v5366 = vrot.slane %v5203, %v5365
    %v5367 = vlaneseq
    %v5368 = vshrl.u32 %v5367, 7
    %v5369 = vsub.s32 0, %v5368
    %v5370 = vrot.slane %v5204, %v5369
    %v5371 = vlaneseq
    %v5372 = vshrl.u32 %v5371, 7
    %v5373 = vsub.s32 0, %v5372
    %v5374 = vrot.slane %v5205, %v5373
    %v5375 = vlaneseq
    %v5376 = vshrl.u32 %v5375, 7
    %v5377 = vsub.s32 0, %v5376
    %v5378 = vrot.slane %v5206, %v5377
    %v5379 = vlaneseq
    %v5380 = vshrl.u32 %v5379, 7
    %v5381 = vsub.s32 0, %v5380
    %v5382 = vrot.slane %v5207, %v5381
    %v5383 = vlaneseq
    %v5384 = vshrl.u32 %v5383, 7
    %v5385 = vsub.s32 0, %v5384
    %v5386 = vrot.slane %v5208, %v5385
    %v5387 = vlaneseq
    %v5388 = vshrl.u32 %v5387, 7
    %v5389 = vsub.s32 0, %v5388
    %v5390 = vrot.slane %v5209, %v5389
    %v5391 = vlaneseq
    %v5392 = vshrl.u32 %v5391, 7
    %v5393 = vsub.s32 0, %v5392
    %v5394 = vrot.slane %v5210, %v5393
    %v5395 = vlaneseq
    %v5396 = vshrl.u32 %v5395, 7
    %v5397 = vsub.s32 0, %v5396
    %v5398 = vrot.slane %v5211, %v5397
    %v5399 = vlaneseq
    %v5400 = vshrl.u32 %v5399, 7
    %v5401 = vsub.s32 0, %v5400
    %v5402 = vrot.slane %v5212, %v5401
    %v5403 = vlaneseq
    %v5404 = vshrl.u32 %v5403, 7
    %v5405 = vsub.s32 0, %v5404
    %v5406 = vrot.slane %v5213, %v5405
    %v5407 = vlaneseq
    %v5408 = vshrl.u32 %v5407, 7
    %v5409 = vsub.s32 0, %v5408
    %v5410 = vrot.slane %v5214, %v5409
    %v5411 = vlaneseq
    %v5412 = vshrl.u32 %v5411, 7
    %v5413 = vsub.s32 0, %v5412
    %v5414 = vrot.slane %v5215, %v5413
    %v5415 = vlaneseq
    %v5416 = vshrl.u32 %v5415, 7
    %v5417 = vsub.s32 0, %v5416
    %v5418 = vrot.slane %v5216, %v5417
    %v5419 = vlaneseq
    %v5420 = vshrl.u32 %v5419, 7
    %v5421 = vsub.s32 0, %v5420
    %v5422 = vrot.slane %v5217, %v5421
    %v5423 = vlaneseq
    %v5424 = vshrl.u32 %v5423, 7
    %v5425 = vsub.s32 0, %v5424
    %v5426 = vrot.slane %v5218, %v5425
    %v5427 = vlaneseq
    %v5428 = vshrl.u32 %v5427, 7
    %v5429 = vsub.s32 0, %v5428
    %v5430 = vrot.slane %v5219, %v5429
    %v5431 = vlaneseq
    %v5432 = vshrl.u32 %v5431, 7
    %v5433 = vsub.s32 0, %v5432
    %v5434 = vrot.slane %v5220, %v5433
    %v5435 = vlaneseq
    %v5436 = vshrl.u32 %v5435, 7
    %v5437 = vsub.s32 0, %v5436
    %v5438 = vrot.slane %v5221, %v5437
    %v5439 = vlaneseq
    %v5440 = vshrl.u32 %v5439, 7
    %v5441 = vsub.s32 0, %v5440
    %v5442 = vrot.slane %v5222, %v5441
    %v5443 = vlaneseq
    %v5444 = vshrl.u32 %v5443, 7
    %v5445 = vsub.s32 0, %v5444
    %v5446 = vrot.slane %v5223, %v5445
    %v5447 = vlaneseq
    %v5448 = vshrl.u32 %v5447, 7
    %v5449 = vsub.s32 0, %v5448
    %v5450 = vrot.slane %v5224, %v5449
    %v5451 = vlaneseq
    %v5452 = vshrl.u32 %v5451, 7
    %v5453 = vsub.s32 0, %v5452
    %v5454 = vrot.slane %v5225, %v5453
    %v5455 = vlaneseq
    %v5456 = vshrl.u32 %v5455, 7
    %v5457 = vsub.s32 0, %v5456
    %v5458 = vrot.slane %v5226, %v5457
    %v5459 = vlaneseq
    %v5460 = vshrl.u32 %v5459, 7
    %v5461 = vsub.s32 0, %v5460
    %v5462 = vrot.slane %v5227, %v5461
    %v5463 = vlaneseq
    %v5464 = vshrl.u32 %v5463, 7
    %v5465 = vsub.s32 0, %v5464
    %v5466 = vrot.slane %v5228, %v5465
    %v5467 = vlaneseq
    %v5468 = vshrl.u32 %v5467, 7
    %v5469 = vsub.s32 0, %v5468
    %v5470 = vrot.slane %v5229, %v5469
    %v5471 = vlaneseq
    %v5472 = vshrl.u32 %v5471, 7
    %v5473 = vsub.s32 0, %v5472
    %v5474 = vrot.slane %v5230, %v5473
    %v5475 = vlaneseq
    %v5476 = vshrl.u32 %v5475, 7
    %v5477 = vsub.s32 0, %v5476
    %v5478 = vrot.slane %v5231, %v5477
    %v5479 = vlaneseq
    %v5480 = vshrl.u32 %v5479, 7
    %v5481 = vsub.s32 0, %v5480
    %v5482 = vrot.slane %v5232, %v5481
    %v5483 = vlaneseq
    %v5484 = vshrl.u32 %v5483, 7
    %v5485 = vsub.s32 0, %v5484
    %v5486 = vrot.slane %v5233, %v5485
    %v5487 = vlaneseq
    %v5488 = vshrl.u32 %v5487, 7
    %v5489 = vsub.s32 0, %v5488
    %v5490 = vrot.slane %v5234, %v5489
    %v5491 = vmul.f32 %v5238, %v305
    %v5492 = vmul.f32 %v5242, %v430
    %v5493 = vmul.f32 %v5246, %v555
    %v5494 = vmul.f32 %v5250, %v680
    %v5495 = vmul.f32 %v5254, %v805
    %v5496 = vmul.f32 %v5258, %v930
    %v5497 = vmul.f32 %v5262, %v1055
    %v5498 = vmul.f32 %v5266, %v1180
    %v5499 = vmul.f32 %v5270, %v305
    %v5500 = vmul.f32 %v5274, %v430
    %v5501 = vmul.f32 %v5278, %v555
    %v5502 = vmul.f32 %v5282, %v680
    %v5503 = vmul.f32 %v5286, %v805
    %v5504 = vmul.f32 %v5290, %v930
    %v5505 = vmul.f32 %v5294, %v1055
    %v5506 = vmul.f32 %v5298, %v1180
    %v5507 = vmul.f32 %v5302, %v305
    %v5508 = vmul.f32 %v5306, %v430
    %v5509 = vmul.f32 %v5310, %v555
    %v5510 = vmul.f32 %v5314, %v680
    %v5511 = vmul.f32 %v5318, %v805
    %v5512 = vmul.f32 %v5322, %v930
    %v5513 = vmul.f32 %v5326, %v1055
    %v5514 = vmul.f32 %v5330, %v1180
    %v5515 = vmul.f32 %v5334, %v305
    %v5516 = vmul.f32 %v5338, %v430
    %v5517 = vmul.f32 %v5342, %v555
    %v5518 = vmul.f32 %v5346, %v680
    %v5519 = vmul.f32 %v5350, %v805
    %v5520 = vmul.f32 %v5354, %v930
    %v5521 = vmul.f32 %v5358, %v1055
    %v5522 = vmul.f32 %v5362, %v1180
    %v5523 = vmul.f32 %v5366, %v305
    %v5524 = vmul.f32 %v5370, %v430
    %v5525 = vmul.f32 %v5374, %v555
    %v5526 = vmul.f32 %v5378, %v680
    %v5527 = vmul.f32 %v5382, %v805
    %v5528 = vmul.f32 %v5386, %v930
    %v5529 = vmul.f32 %v5390, %v1055
    %v5530 = vmul.f32 %v5394, %v1180
    %v5531 = vmul.f32 %v5398, %v305
    %v5532 = vmul.f32 %v5402, %v430
    %v5533 = vmul.f32 %v5406, %v555
    %v5534 = vmul.f32 %v5410, %v680
    %v5535 = vmul.f32 %v5414, %v805
    %v5536 = vmul.f32 %v5418, %v930
    %v5537 = vmul.f32 %v5422, %v1055
    %v5538 = vmul.f32 %v5426, %v1180
    %v5539 = vmul.f32 %v5430, %v305
    %v5540 = vmul.f32 %v5434, %v430
    %v5541 = vmul.f32 %v5438, %v555
    %v5542 = vmul.f32 %v5442, %v680
    %v5543 = vmul.f32 %v5446, %v805
    %v5544 = vmul.f32 %v5450, %v930
    %v5545 = vmul.f32 %v5454, %v1055
    %v5546 = vmul.f32 %v5458, %v1180
    %v5547 = vmul.f32 %v5462, %v305
    %v5548 = vmul.f32 %v5466, %v430
    %v5549 = vmul.f32 %v5470, %v555
    %v5550 = vmul.f32 %v5474, %v680
    %v5551 = vmul.f32 %v5478, %v805
    %v5552 = vmul.f32 %v5482, %v930
    %v5553 = vmul.f32 %v5486, %v1055
    %v5554 = vmul.f32 %v5490, %v1180
    %v5555 = vadd.f32 %v5491, %v5492
    %v5556 = vadd.f32 %v5555, %v5493
    %v5557 = vadd.f32 %v5556, %v5494
    %v5558 = vadd.f32 %v5557, %v5495
    %v5559 = vadd.f32 %v5558, %v5496
    %v5560 = vadd.f32 %v5559, %v5497
    %v5561 = vadd.f32 %v5560, %v5498
    %v5562 = vadd.f32 %v5499, %v5500
    %v5563 = vadd.f32 %v5562, %v5501
    %v5564 = vadd.f32 %v5563, %v5502
    %v5565 = vadd.f32 %v5564, %v5503
    %v5566 = vadd.f32 %v5565, %v5504
    %v5567 = vadd.f32 %v5566, %v5505
    %v5568 = vadd.f32 %v5567, %v5506
    %v5569 = vadd.f32 %v5507, %v5508
    %v5570 = vadd.f32 %v5569, %v5509
    %v5571 = vadd.f32 %v5570, %v5510
    %v5572 = vadd.f32 %v5571, %v5511
    %v5573 = vadd.f32 %v5572, %v5512
    %v5574 = vadd.f32 %v5573, %v5513
    %v5575 = vadd.f32 %v5574, %v5514
    %v5576 = vadd.f32 %v5515, %v5516
    %v5577 = vadd.f32 %v5576, %v5517
    %v5578 = vadd.f32 %v5577, %v5518
    %v5579 = vadd.f32 %v5578, %v5519
    %v5580 = vadd.f32 %v5579, %v5520
    %v5581 = vadd.f32 %v5580, %v5521
    %v5582 = vadd.f32 %v5581, %v5522
    %v5583 = vadd.f32 %v5523, %v5524
    %v5584 = vadd.f32 %v5583, %v5525
    %v5585 = vadd.f32 %v5584, %v5526
    %v5586 = vadd.f32 %v5585, %v5527
    %v5587 = vadd.f32 %v5586, %v5528
    %v5588 = vadd.f32 %v5587, %v5529
    %v5589 = vadd.f32 %v5588, %v5530
    %v5590 = vadd.f32 %v5531, %v5532
    %v5591 = vadd.f32 %v5590, %v5533
    %v5592 = vadd.f32 %v5591, %v5534
    %v5593 = vadd.f32 %v5592, %v5535
    %v5594 = vadd.f32 %v5593, %v5536
    %v5595 = vadd.f32 %v5594, %v5537
    %v5596 = vadd.f32 %v5595, %v5538
    %v5597 = vadd.f32 %v5539, %v5540
    %v5598 = vadd.f32 %v5597, %v5541
    %v5599 = vadd.f32 %v5598, %v5542
    %v5600 = vadd.f32 %v5599, %v5543
    %v5601 = vadd.f32 %v5600, %v5544
    %v5602 = vadd.f32 %v5601, %v5545
    %v5603 = vadd.f32 %v5602, %v5546
    %v5604 = vadd.f32 %v5547, %v5548
    %v5605 = vadd.f32 %v5604, %v5549
    %v5606 = vadd.f32 %v5605, %v5550
    %v5607 = vadd.f32 %v5606, %v5551
    %v5608 = vadd.f32 %v5607, %v5552
    %v5609 = vadd.f32 %v5608, %v5553
    %v5610 = vadd.f32 %v5609, %v5554
    %v5611 = vmul.f32 %v270, %v290
    %v5612 = vmul.f32 %v270, %v415
    %v5613 = vmul.f32 %v270, %v540
    %v5614 = vmul.f32 %v270, %v665
    %v5615 = vmul.f32 %v270, %v790
    %v5616 = vmul.f32 %v270, %v915
    %v5617 = vmul.f32 %v270, %v1040
    %v5618 = vmul.f32 %v270, %v1165
    %v5619 = vmul.f32 %v395, %v290
    %v5620 = vmul.f32 %v395, %v415
    %v5621 = vmul.f32 %v395, %v540
    %v5622 = vmul.f32 %v395, %v665
    %v5623 = vmul.f32 %v395, %v790
    %v5624 = vmul.f32 %v395, %v915
    %v5625 = vmul.f32 %v395, %v1040
    %v5626 = vmul.f32 %v395, %v1165
    %v5627 = vmul.f32 %v520, %v290
    %v5628 = vmul.f32 %v520, %v415
    %v5629 = vmul.f32 %v520, %v540
    %v5630 = vmul.f32 %v520, %v665
    %v5631 = vmul.f32 %v520, %v790
    %v5632 = vmul.f32 %v520, %v915
    %v5633 = vmul.f32 %v520, %v1040
    %v5634 = vmul.f32 %v520, %v1165
    %v5635 = vmul.f32 %v645, %v290
    %v5636 = vmul.f32 %v645, %v415
    %v5637 = vmul.f32 %v645, %v540
    %v5638 = vmul.f32 %v645, %v665
    %v5639 = vmul.f32 %v645, %v790
    %v5640 = vmul.f32 %v645, %v915
    %v5641 = vmul.f32 %v645, %v1040
    %v5642 = vmul.f32 %v645, %v1165
    %v5643 = vmul.f32 %v770, %v290
    %v5644 = vmul.f32 %v770, %v415
    %v5645 = vmul.f32 %v770, %v540
    %v5646 = vmul.f32 %v770, %v665
    %v5647 = vmul.f32 %v770, %v790
    %v5648 = vmul.f32 %v770, %v915
    %v5649 = vmul.f32 %v770, %v1040
    %v5650 = vmul.f32 %v770, %v1165
    %v5651 = vmul.f32 %v895, %v290
    %v5652 = vmul.f32 %v895, %v415
    %v5653 = vmul.f32 %v895, %v540
    %v5654 = vmul.f32 %v895, %v665
    %v5655 = vmul.f32 %v895, %v790
    %v5656 = vmul.f32 %v895, %v915
    %v5657 = vmul.f32 %v895, %v1040
    %v5658 = vmul.f32 %v895, %v1165
    %v5659 = vmul.f32 %v1020, %v290
    %v5660 = vmul.f32 %v1020, %v415
    %v5661 = vmul.f32 %v1020, %v540
    %v5662 = vmul.f32 %v1020, %v665
    %v5663 = vmul.f32 %v1020, %v790
    %v5664 = vmul.f32 %v1020, %v915
    %v5665 = vmul.f32 %v1020, %v1040
    %v5666 = vmul.f32 %v1020, %v1165
    %v5667 = vmul.f32 %v1145, %v290
    %v5668 = vmul.f32 %v1145, %v415
    %v5669 = vmul.f32 %v1145, %v540
    %v5670 = vmul.f32 %v1145, %v665
    %v5671 = vmul.f32 %v1145, %v790
    %v5672 = vmul.f32 %v1145, %v915
    %v5673 = vmul.f32 %v1145, %v1040
    %v5674 = vmul.f32 %v1145, %v1165
    %v5675 = vrot.slane %v5611, 4
    %v5676 = vadd.f32 %v5611, %v5675
    %v5677 = vrot.slane %v5676, 2
    %v5678 = vadd.f32 %v5676, %v5677
    %v5679 = vrot.slane %v5678, 1
    %v5680 = vadd.f32 %v5678, %v5679
    %v5681 = vrot.slane %v5612, 4
    %v5682 = vadd.f32 %v5612, %v5681
    %v5683 = vrot.slane %v5682, 2
    %v5684 = vadd.f32 %v5682, %v5683
    %v5685 = vrot.slane %v5684, 1
    %v5686 = vadd.f32 %v5684, %v5685
    %v5687 = vrot.slane %v5613, 4
    %v5688 = vadd.f32 %v5613, %v5687
    %v5689 = vrot.slane %v5688, 2
    %v5690 = vadd.f32 %v5688, %v5689
    %v5691 = vrot.slane %v5690, 1
    %v5692 = vadd.f32 %v5690, %v5691
    %v5693 = vrot.slane %v5614, 4
    %v5694 = vadd.f32 %v5614, %v5693
    %v5695 = vrot.slane %v5694, 2
    %v5696 = vadd.f32 %v5694, %v5695
    %v5697 = vrot.slane %v5696, 1
    %v5698 = vadd.f32 %v5696, %v5697
    %v5699 = vrot.slane %v5615, 4
    %v5700 = vadd.f32 %v5615, %v5699
    %v5701 = vrot.slane %v5700, 2
    %v5702 = vadd.f32 %v5700, %v5701
    %v5703 = vrot.slane %v5702, 1
    %v5704 = vadd.f32 %v5702, %v5703
    %v5705 = vrot.slane %v5616, 4
    %v5706 = vadd.f32 %v5616, %v5705
    %v5707 = vrot.slane %v5706, 2
    %v5708 = vadd.f32 %v5706, %v5707
    %v5709 = vrot.slane %v5708, 1
    %v5710 = vadd.f32 %v5708, %v5709
    %v5711 = vrot.slane %v5617, 4
    %v5712 = vadd.f32 %v5617, %v5711
    %v5713 = vrot.slane %v5712, 2
    %v5714 = vadd.f32 %v5712, %v5713
    %v5715 = vrot.slane %v5714, 1
    %v5716 = vadd.f32 %v5714, %v5715
    %v5717 = vrot.slane %v5618, 4
    %v5718 = vadd.f32 %v5618, %v5717
    %v5719 = vrot.slane %v5718, 2
    %v5720 = vadd.f32 %v5718, %v5719
    %v5721 = vrot.slane %v5720, 1
    %v5722 = vadd.f32 %v5720, %v5721
    %v5723 = vrot.slane %v5619, 4
    %v5724 = vadd.f32 %v5619, %v5723
    %v5725 = vrot.slane %v5724, 2
    %v5726 = vadd.f32 %v5724, %v5725
    %v5727 = vrot.slane %v5726, 1
    %v5728 = vadd.f32 %v5726, %v5727
    %v5729 = vrot.slane %v5620, 4
    %v5730 = vadd.f32 %v5620, %v5729
    %v5731 = vrot.slane %v5730, 2
    %v5732 = vadd.f32 %v5730, %v5731
    %v5733 = vrot.slane %v5732, 1
    %v5734 = vadd.f32 %v5732, %v5733
    %v5735 = vrot.slane %v5621, 4
    %v5736 = vadd.f32 %v5621, %v5735
    %v5737 = vrot.slane %v5736, 2
    %v5738 = vadd.f32 %v5736, %v5737
    %v5739 = vrot.slane %v5738, 1
    %v5740 = vadd.f32 %v5738, %v5739
    %v5741 = vrot.slane %v5622, 4
    %v5742 = vadd.f32 %v5622, %v5741
    %v5743 = vrot.slane %v5742, 2
    %v5744 = vadd.f32 %v5742, %v5743
    %v5745 = vrot.slane %v5744, 1
    %v5746 = vadd.f32 %v5744, %v5745
    %v5747 = vrot.slane %v5623, 4
    %v5748 = vadd.f32 %v5623, %v5747
    %v5749 = vrot.slane %v5748, 2
    %v5750 = vadd.f32 %v5748, %v5749
    %v5751 = vrot.slane %v5750, 1
    %v5752 = vadd.f32 %v5750, %v5751
    %v5753 = vrot.slane %v5624, 4
    %v5754 = vadd.f32 %v5624, %v5753
    %v5755 = vrot.slane %v5754, 2
    %v5756 = vadd.f32 %v5754, %v5755
    %v5757 = vrot.slane %v5756, 1
    %v5758 = vadd.f32 %v5756, %v5757
    %v5759 = vrot.slane %v5625, 4
    %v5760 = vadd.f32 %v5625, %v5759
    %v5761 = vrot.slane %v5760, 2
    %v5762 = vadd.f32 %v5760, %v5761
    %v5763 = vrot.slane %v5762, 1
    %v5764 = vadd.f32 %v5762, %v5763
    %v5765 = vrot.slane %v5626, 4
    %v5766 = vadd.f32 %v5626, %v5765
    %v5767 = vrot.slane %v5766, 2
    %v5768 = vadd.f32 %v5766, %v5767
    %v5769 = vrot.slane %v5768, 1
    %v5770 = vadd.f32 %v5768, %v5769
    %v5771 = vrot.slane %v5627, 4
    %v5772 = vadd.f32 %v5627, %v5771
    %v5773 = vrot.slane %v5772, 2
    %v5774 = vadd.f32 %v5772, %v5773
    %v5775 = vrot.slane %v5774, 1
    %v5776 = vadd.f32 %v5774, %v5775
    %v5777 = vrot.slane %v5628, 4
    %v5778 = vadd.f32 %v5628, %v5777
    %v5779 = vrot.slane %v5778, 2
    %v5780 = vadd.f32 %v5778, %v5779
    %v5781 = vrot.slane %v5780, 1
    %v5782 = vadd.f32 %v5780, %v5781
    %v5783 = vrot.slane %v5629, 4
    %v5784 = vadd.f32 %v5629, %v5783
    %v5785 = vrot.slane %v5784, 2
    %v5786 = vadd.f32 %v5784, %v5785
    %v5787 = vrot.slane %v5786, 1
    %v5788 = vadd.f32 %v5786, %v5787
    %v5789 = vrot.slane %v5630, 4
    %v5790 = vadd.f32 %v5630, %v5789
    %v5791 = vrot.slane %v5790, 2
    %v5792 = vadd.f32 %v5790, %v5791
    %v5793 = vrot.slane %v5792, 1
    %v5794 = vadd.f32 %v5792, %v5793
    %v5795 = vrot.slane %v5631, 4
    %v5796 = vadd.f32 %v5631, %v5795
    %v5797 = vrot.slane %v5796, 2
    %v5798 = vadd.f32 %v5796, %v5797
    %v5799 = vrot.slane %v5798, 1
    %v5800 = vadd.f32 %v5798, %v5799
    %v5801 = vrot.slane %v5632, 4
    %v5802 = vadd.f32 %v5632, %v5801
    %v5803 = vrot.slane %v5802, 2
    %v5804 = vadd.f32 %v5802, %v5803
    %v5805 = vrot.slane %v5804, 1
    %v5806 = vadd.f32 %v5804, %v5805
    %v5807 = vrot.slane %v5633, 4
    %v5808 = vadd.f32 %v5633, %v5807
    %v5809 = vrot.slane %v5808, 2
    %v5810 = vadd.f32 %v5808, %v5809
    %v5811 = vrot.slane %v5810, 1
    %v5812 = vadd.f32 %v5810, %v5811
    %v5813 = vrot.slane %v5634, 4
    %v5814 = vadd.f32 %v5634, %v5813
    %v5815 = vrot.slane %v5814, 2
    %v5816 = vadd.f32 %v5814, %v5815
    %v5817 = vrot.slane %v5816, 1
    %v5818 = vadd.f32 %v5816, %v5817
    %v5819 = vrot.slane %v5635, 4
    %v5820 = vadd.f32 %v5635, %v5819
    %v5821 = vrot.slane %v5820, 2
    %v5822 = vadd.f32 %v5820, %v5821
    %v5823 = vrot.slane %v5822, 1
    %v5824 = vadd.f32 %v5822, %v5823
    %v5825 = vrot.slane %v5636, 4
    %v5826 = vadd.f32 %v5636, %v5825
    %v5827 = vrot.slane %v5826, 2
    %v5828 = vadd.f32 %v5826, %v5827
    %v5829 = vrot.slane %v5828, 1
    %v5830 = vadd.f32 %v5828, %v5829
    %v5831 = vrot.slane %v5637, 4
    %v5832 = vadd.f32 %v5637, %v5831
    %v5833 = vrot.slane %v5832, 2
    %v5834 = vadd.f32 %v5832, %v5833
    %v5835 = vrot.slane %v5834, 1
    %v5836 = vadd.f32 %v5834, %v5835
    %v5837 = vrot.slane %v5638, 4
    %v5838 = vadd.f32 %v5638, %v5837
    %v5839 = vrot.slane %v5838, 2
    %v5840 = vadd.f32 %v5838, %v5839
    %v5841 = vrot.slane %v5840, 1
    %v5842 = vadd.f32 %v5840, %v5841
    %v5843 = vrot.slane %v5639, 4
    %v5844 = vadd.f32 %v5639, %v5843
    %v5845 = vrot.slane %v5844, 2
    %v5846 = vadd.f32 %v5844, %v5845
    %v5847 = vrot.slane %v5846, 1
    %v5848 = vadd.f32 %v5846, %v5847
    %v5849 = vrot.slane %v5640, 4
    %v5850 = vadd.f32 %v5640, %v5849
    %v5851 = vrot.slane %v5850, 2
    %v5852 = vadd.f32 %v5850, %v5851
    %v5853 = vrot.slane %v5852, 1
    %v5854 = vadd.f32 %v5852, %v5853
    %v5855 = vrot.slane %v5641, 4
    %v5856 = vadd.f32 %v5641, %v5855
    %v5857 = vrot.slane %v5856, 2
    %v5858 = vadd.f32 %v5856, %v5857
    %v5859 = vrot.slane %v5858, 1
    %v5860 = vadd.f32 %v5858, %v5859
    %v5861 = vrot.slane %v5642, 4
    %v5862 = vadd.f32 %v5642, %v5861
    %v5863 = vrot.slane %v5862, 2
    %v5864 = vadd.f32 %v5862, %v5863
    %v5865 = vrot.slane %v5864, 1
    %v5866 = vadd.f32 %v5864, %v5865
    %v5867 = vrot.slane %v5643, 4
    %v5868 = vadd.f32 %v5643, %v5867
    %v5869 = vrot.slane %v5868, 2
    %v5870 = vadd.f32 %v5868, %v5869
    %v5871 = vrot.slane %v5870, 1
    %v5872 = vadd.f32 %v5870, %v5871
    %v5873 = vrot.slane %v5644, 4
    %v5874 = vadd.f32 %v5644, %v5873
    %v5875 = vrot.slane %v5874, 2
    %v5876 = vadd.f32 %v5874, %v5875
    %v5877 = vrot.slane %v5876, 1
    %v5878 = vadd.f32 %v5876, %v5877
    %v5879 = vrot.slane %v5645, 4
    %v5880 = vadd.f32 %v5645, %v5879
    %v5881 = vrot.slane %v5880, 2
    %v5882 = vadd.f32 %v5880, %v5881
    %v5883 = vrot.slane %v5882, 1
    %v5884 = vadd.f32 %v5882, %v5883
    %v5885 = vrot.slane %v5646, 4
    %v5886 = vadd.f32 %v5646, %v5885
    %v5887 = vrot.slane %v5886, 2
    %v5888 = vadd.f32 %v5886, %v5887
    %v5889 = vrot.slane %v5888, 1
    %v5890 = vadd.f32 %v5888, %v5889
    %v5891 = vrot.slane %v5647, 4
    %v5892 = vadd.f32 %v5647, %v5891
    %v5893 = vrot.slane %v5892, 2
    %v5894 = vadd.f32 %v5892, %v5893
    %v5895 = vrot.slane %v5894, 1
    %v5896 = vadd.f32 %v5894, %v5895
    %v5897 = vrot.slane %v5648, 4
    %v5898 = vadd.f32 %v5648, %v5897
    %v5899 = vrot.slane %v5898, 2
    %v5900 = vadd.f32 %v5898, %v5899
    %v5901 = vrot.slane %v5900, 1
    %v5902 = vadd.f32 %v5900, %v5901
    %v5903 = vrot.slane %v5649, 4
    %v5904 = vadd.f32 %v5649, %v5903
    %v5905 = vrot.slane %v5904, 2
    %v5906 = vadd.f32 %v5904, %v5905
    %v5907 = vrot.slane %v5906, 1
    %v5908 = vadd.f32 %v5906, %v5907
    %v5909 = vrot.slane %v5650, 4
    %v5910 = vadd.f32 %v5650, %v5909
    %v5911 = vrot.slane %v5910, 2
    %v5912 = vadd.f32 %v5910, %v5911
    %v5913 = vrot.slane %v5912, 1
    %v5914 = vadd.f32 %v5912, %v5913
    %v5915 = vrot.slane %v5651, 4
    %v5916 = vadd.f32 %v5651, %v5915
    %v5917 = vrot.slane %v5916, 2
    %v5918 = vadd.f32 %v5916, %v5917
    %v5919 = vrot.slane %v5918, 1
    %v5920 = vadd.f32 %v5918, %v5919
    %v5921 = vrot.slane %v5652, 4
    %v5922 = vadd.f32 %v5652, %v5921
    %v5923 = vrot.slane %v5922, 2
    %v5924 = vadd.f32 %v5922, %v5923
    %v5925 = vrot.slane %v5924, 1
    %v5926 = vadd.f32 %v5924, %v5925
    %v5927 = vrot.slane %v5653, 4
    %v5928 = vadd.f32 %v5653, %v5927
    %v5929 = vrot.slane %v5928, 2
    %v5930 = vadd.f32 %v5928, %v5929
    %v5931 = vrot.slane %v5930, 1
    %v5932 = vadd.f32 %v5930, %v5931
    %v5933 = vrot.slane %v5654, 4
    %v5934 = vadd.f32 %v5654, %v5933
    %v5935 = vrot.slane %v5934, 2
    %v5936 = vadd.f32 %v5934, %v5935
    %v5937 = vrot.slane %v5936, 1
    %v5938 = vadd.f32 %v5936, %v5937
    %v5939 = vrot.slane %v5655, 4
    %v5940 = vadd.f32 %v5655, %v5939
    %v5941 = vrot.slane %v5940, 2
    %v5942 = vadd.f32 %v5940, %v5941
    %v5943 = vrot.slane %v5942, 1
    %v5944 = vadd.f32 %v5942, %v5943
    %v5945 = vrot.slane %v5656, 4
    %v5946 = vadd.f32 %v5656, %v5945
    %v5947 = vrot.slane %v5946, 2
    %v5948 = vadd.f32 %v5946, %v5947
    %v5949 = vrot.slane %v5948, 1
    %v5950 = vadd.f32 %v5948, %v5949
    %v5951 = vrot.slane %v5657, 4
    %v5952 = vadd.f32 %v5657, %v5951
    %v5953 = vrot.slane %v5952, 2
    %v5954 = vadd.f32 %v5952, %v5953
    %v5955 = vrot.slane %v5954, 1
    %v5956 = vadd.f32 %v5954, %v5955
    %v5957 = vrot.slane %v5658, 4
    %v5958 = vadd.f32 %v5658, %v5957
    %v5959 = vrot.slane %v5958, 2
    %v5960 = vadd.f32 %v5958, %v5959
    %v5961 = vrot.slane %v5960, 1
    %v5962 = vadd.f32 %v5960, %v5961
    %v5963 = vrot.slane %v5659, 4
    %v5964 = vadd.f32 %v5659, %v5963
    %v5965 = vrot.slane %v5964, 2
    %v5966 = vadd.f32 %v5964, %v5965
    %v5967 = vrot.slane %v5966, 1
    %v5968 = vadd.f32 %v5966, %v5967
    %v5969 = vrot.slane %v5660, 4
    %v5970 = vadd.f32 %v5660, %v5969
    %v5971 = vrot.slane %v5970, 2
    %v5972 = vadd.f32 %v5970, %v5971
    %v5973 = vrot.slane %v5972, 1
    %v5974 = vadd.f32 %v5972, %v5973
    %v5975 = vrot.slane %v5661, 4
    %v5976 = vadd.f32 %v5661, %v5975
    %v5977 = vrot.slane %v5976, 2
    %v5978 = vadd.f32 %v5976, %v5977
    %v5979 = vrot.slane %v5978, 1
    %v5980 = vadd.f32 %v5978, %v5979
    %v5981 = vrot.slane %v5662, 4
    %v5982 = vadd.f32 %v5662, %v5981
    %v5983 = vrot.slane %v5982, 2
    %v5984 = vadd.f32 %v5982, %v5983
    %v5985 = vrot.slane %v5984, 1
    %v5986 = vadd.f32 %v5984, %v5985
    %v5987 = vrot.slane %v5663, 4
    %v5988 = vadd.f32 %v5663, %v5987
    %v5989 = vrot.slane %v5988, 2
    %v5990 = vadd.f32 %v5988, %v5989
    %v5991 = vrot.slane %v5990, 1
    %v5992 = vadd.f32 %v5990, %v5991
    %v5993 = vrot.slane %v5664, 4
    %v5994 = vadd.f32 %v5664, %v5993
    %v5995 = vrot.slane %v5994, 2
    %v5996 = vadd.f32 %v5994, %v5995
    %v5997 = vrot.slane %v5996, 1
    %v5998 = vadd.f32 %v5996, %v5997
    %v5999 = vrot.slane %v5665, 4
    %v6000 = vadd.f32 %v5665, %v5999
    %v6001 = vrot.slane %v6000, 2
    %v6002 = vadd.f32 %v6000, %v6001
    %v6003 = vrot.slane %v6002, 1
    %v6004 = vadd.f32 %v6002, %v6003
    %v6005 = vrot.slane %v5666, 4
    %v6006 = vadd.f32 %v5666, %v6005
    %v6007 = vrot.slane %v6006, 2
    %v6008 = vadd.f32 %v6006, %v6007
    %v6009 = vrot.slane %v6008, 1
    %v6010 = vadd.f32 %v6008, %v6009
    %v6011 = vrot.slane %v5667, 4
    %v6012 = vadd.f32 %v5667, %v6011
    %v6013 = vrot.slane %v6012, 2
    %v6014 = vadd.f32 %v6012, %v6013
    %v6015 = vrot.slane %v6014, 1
    %v6016 = vadd.f32 %v6014, %v6015
    %v6017 = vrot.slane %v5668, 4
    %v6018 = vadd.f32 %v5668, %v6017
    %v6019 = vrot.slane %v6018, 2
    %v6020 = vadd.f32 %v6018, %v6019
    %v6021 = vrot.slane %v6020, 1
    %v6022 = vadd.f32 %v6020, %v6021
    %v6023 = vrot.slane %v5669, 4
    %v6024 = vadd.f32 %v5669, %v6023
    %v6025 = vrot.slane %v6024, 2
    %v6026 = vadd.f32 %v6024, %v6025
    %v6027 = vrot.slane %v6026, 1
    %v6028 = vadd.f32 %v6026, %v6027
    %v6029 = vrot.slane %v5670, 4
    %v6030 = vadd.f32 %v5670, %v6029
    %v6031 = vrot.slane %v6030, 2
    %v6032 = vadd.f32 %v6030, %v6031
    %v6033 = vrot.slane %v6032, 1
    %v6034 = vadd.f32 %v6032, %v6033
    %v6035 = vrot.slane %v5671, 4
    %v6036 = vadd.f32 %v5671, %v6035
    %v6037 = vrot.slane %v6036, 2
    %v6038 = vadd.f32 %v6036, %v6037
    %v6039 = vrot.slane %v6038, 1
    %v6040 = vadd.f32 %v6038, %v6039
    %v6041 = vrot.slane %v5672, 4
    %v6042 = vadd.f32 %v5672, %v6041
    %v6043 = vrot.slane %v6042, 2
    %v6044 = vadd.f32 %v6042, %v6043
    %v6045 = vrot.slane %v6044, 1
    %v6046 = vadd.f32 %v6044, %v6045
    %v6047 = vrot.slane %v5673, 4
    %v6048 = vadd.f32 %v5673, %v6047
    %v6049 = vrot.slane %v6048, 2
    %v6050 = vadd.f32 %v6048, %v6049
    %v6051 = vrot.slane %v6050, 1
    %v6052 = vadd.f32 %v6050, %v6051
    %v6053 = vrot.slane %v5674, 4
    %v6054 = vadd.f32 %v5674, %v6053
    %v6055 = vrot.slane %v6054, 2
    %v6056 = vadd.f32 %v6054, %v6055
    %v6057 = vrot.slane %v6056, 1
    %v6058 = vadd.f32 %v6056, %v6057
    %v6059 = vmul.f32 %v5680, 0.35355338
    %v6060 = vmul.f32 %v5686, 0.35355338
    %v6061 = vmul.f32 %v5692, 0.35355338
    %v6062 = vmul.f32 %v5698, 0.35355338
    %v6063 = vmul.f32 %v5704, 0.35355338
    %v6064 = vmul.f32 %v5710, 0.35355338
    %v6065 = vmul.f32 %v5716, 0.35355338
    %v6066 = vmul.f32 %v5722, 0.35355338
    %v6067 = vmul.f32 %v5728, 0.35355338
    %v6068 = vmul.f32 %v5734, 0.35355338
    %v6069 = vmul.f32 %v5740, 0.35355338
    %v6070 = vmul.f32 %v5746, 0.35355338
    %v6071 = vmul.f32 %v5752, 0.35355338
    %v6072 = vmul.f32 %v5758, 0.35355338
    %v6073 = vmul.f32 %v5764, 0.35355338
    %v6074 = vmul.f32 %v5770, 0.35355338
    %v6075 = vmul.f32 %v5776, 0.35355338
    %v6076 = vmul.f32 %v5782, 0.35355338
    %v6077 = vmul.f32 %v5788, 0.35355338
    %v6078 = vmul.f32 %v5794, 0.35355338
    %v6079 = vmul.f32 %v5800, 0.35355338
    %v6080 = vmul.f32 %v5806, 0.35355338
    %v6081 = vmul.f32 %v5812, 0.35355338
    %v6082 = vmul.f32 %v5818, 0.35355338
    %v6083 = vmul.f32 %v5824, 0.35355338
    %v6084 = vmul.f32 %v5830, 0.35355338
    %v6085 = vmul.f32 %v5836, 0.35355338
    %v6086 = vmul.f32 %v5842, 0.35355338
    %v6087 = vmul.f32 %v5848, 0.35355338
    %v6088 = vmul.f32 %v5854, 0.35355338
    %v6089 = vmul.f32 %v5860, 0.35355338
    %v6090 = vmul.f32 %v5866, 0.35355338
    %v6091 = vmul.f32 %v5872, 0.35355338
    %v6092 = vmul.f32 %v5878, 0.35355338
    %v6093 = vmul.f32 %v5884, 0.35355338
    %v6094 = vmul.f32 %v5890, 0.35355338
    %v6095 = vmul.f32 %v5896, 0.35355338
    %v6096 = vmul.f32 %v5902, 0.35355338
    %v6097 = vmul.f32 %v5908, 0.35355338
    %v6098 = vmul.f32 %v5914, 0.35355338
    %v6099 = vmul.f32 %v5920, 0.35355338
    %v6100 = vmul.f32 %v5926, 0.35355338
    %v6101 = vmul.f32 %v5932, 0.35355338
    %v6102 = vmul.f32 %v5938, 0.35355338
    %v6103 = vmul.f32 %v5944, 0.35355338
    %v6104 = vmul.f32 %v5950, 0.35355338
    %v6105 = vmul.f32 %v5956, 0.35355338
    %v6106 = vmul.f32 %v5962, 0.35355338
    %v6107 = vmul.f32 %v5968, 0.35355338
    %v6108 = vmul.f32 %v5974, 0.35355338
    %v6109 = vmul.f32 %v5980, 0.35355338
    %v6110 = vmul.f32 %v5986, 0.35355338
    %v6111 = vmul.f32 %v5992, 0.35355338
    %v6112 = vmul.f32 %v5998, 0.35355338
    %v6113 = vmul.f32 %v6004, 0.35355338
    %v6114 = vmul.f32 %v6010, 0.35355338
    %v6115 = vmul.f32 %v6016, 0.35355338
    %v6116 = vmul.f32 %v6022, 0.35355338
    %v6117 = vmul.f32 %v6028, 0.35355338
    %v6118 = vmul.f32 %v6034, 0.35355338
    %v6119 = vmul.f32 %v6040, 0.35355338
    %v6120 = vmul.f32 %v6046, 0.35355338
    %v6121 = vmul.f32 %v6052, 0.35355338
    %v6122 = vmul.f32 %v6058, 0.35355338
    %v6123 = vmax.f32 %v6059, %v6060
    %v6124 = vmax.f32 %v6123, %v6061
    %v6125 = vmax.f32 %v6124, %v6062
    %v6126 = vmax.f32 %v6125, %v6063
    %v6127 = vmax.f32 %v6126, %v6064
    %v6128 = vmax.f32 %v6127, %v6065
    %v6129 = vmax.f32 %v6128, %v6066
    %v6130 = vmax.f32 %v6067, %v6068
    %v6131 = vmax.f32 %v6130, %v6069
    %v6132 = vmax.f32 %v6131, %v6070
    %v6133 = vmax.f32 %v6132, %v6071
    %v6134 = vmax.f32 %v6133, %v6072
    %v6135 = vmax.f32 %v6134, %v6073
    %v6136 = vmax.f32 %v6135, %v6074
    %v6137 = vmax.f32 %v6075, %v6076
    %v6138 = vmax.f32 %v6137, %v6077
    %v6139 = vmax.f32 %v6138, %v6078
    %v6140 = vmax.f32 %v6139, %v6079
    %v6141 = vmax.f32 %v6140, %v6080
    %v6142 = vmax.f32 %v6141, %v6081
    %v6143 = vmax.f32 %v6142, %v6082
    %v6144 = vmax.f32 %v6083, %v6084
    %v6145 = vmax.f32 %v6144, %v6085
    %v6146 = vmax.f32 %v6145, %v6086
    %v6147 = vmax.f32 %v6146, %v6087
    %v6148 = vmax.f32 %v6147, %v6088
    %v6149 = vmax.f32 %v6148, %v6089
    %v6150 = vmax.f32 %v6149, %v6090
    %v6151 = vmax.f32 %v6091, %v6092
    %v6152 = vmax.f32 %v6151, %v6093
    %v6153 = vmax.f32 %v6152, %v6094
    %v6154 = vmax.f32 %v6153, %v6095
    %v6155 = vmax.f32 %v6154, %v6096
    %v6156 = vmax.f32 %v6155, %v6097
    %v6157 = vmax.f32 %v6156, %v6098
    %v6158 = vmax.f32 %v6099, %v6100
    %v6159 = vmax.f32 %v6158, %v6101
    %v6160 = vmax.f32 %v6159, %v6102
    %v6161 = vmax.f32 %v6160, %v6103
    %v6162 = vmax.f32 %v6161, %v6104
    %v6163 = vmax.f32 %v6162, %v6105
    %v6164 = vmax.f32 %v6163, %v6106
    %v6165 = vmax.f32 %v6107, %v6108
    %v6166 = vmax.f32 %v6165, %v6109
    %v6167 = vmax.f32 %v6166, %v6110
    %v6168 = vmax.f32 %v6167, %v6111
    %v6169 = vmax.f32 %v6168, %v6112
    %v6170 = vmax.f32 %v6169, %v6113
    %v6171 = vmax.f32 %v6170, %v6114
    %v6172 = vmax.f32 %v6115, %v6116
    %v6173 = vmax.f32 %v6172, %v6117
    %v6174 = vmax.f32 %v6173, %v6118
    %v6175 = vmax.f32 %v6174, %v6119
    %v6176 = vmax.f32 %v6175, %v6120
    %v6177 = vmax.f32 %v6176, %v6121
    %v6178 = vmax.f32 %v6177, %v6122
    %v6179 = vsub.f32 %v6059, %v6129
    %v6180 = vsub.f32 %v6060, %v6129
    %v6181 = vsub.f32 %v6061, %v6129
    %v6182 = vsub.f32 %v6062, %v6129
    %v6183 = vsub.f32 %v6063, %v6129
    %v6184 = vsub.f32 %v6064, %v6129
    %v6185 = vsub.f32 %v6065, %v6129
    %v6186 = vsub.f32 %v6066, %v6129
    %v6187 = vsub.f32 %v6067, %v6136
    %v6188 = vsub.f32 %v6068, %v6136
    %v6189 = vsub.f32 %v6069, %v6136
    %v6190 = vsub.f32 %v6070, %v6136
    %v6191 = vsub.f32 %v6071, %v6136
    %v6192 = vsub.f32 %v6072, %v6136
    %v6193 = vsub.f32 %v6073, %v6136
    %v6194 = vsub.f32 %v6074, %v6136
    %v6195 = vsub.f32 %v6075, %v6143
    %v6196 = vsub.f32 %v6076, %v6143
    %v6197 = vsub.f32 %v6077, %v6143
    %v6198 = vsub.f32 %v6078, %v6143
    %v6199 = vsub.f32 %v6079, %v6143
    %v6200 = vsub.f32 %v6080, %v6143
    %v6201 = vsub.f32 %v6081, %v6143
    %v6202 = vsub.f32 %v6082, %v6143
    %v6203 = vsub.f32 %v6083, %v6150
    %v6204 = vsub.f32 %v6084, %v6150
    %v6205 = vsub.f32 %v6085, %v6150
    %v6206 = vsub.f32 %v6086, %v6150
    %v6207 = vsub.f32 %v6087, %v6150
    %v6208 = vsub.f32 %v6088, %v6150
    %v6209 = vsub.f32 %v6089, %v6150
    %v6210 = vsub.f32 %v6090, %v6150
    %v6211 = vsub.f32 %v6091, %v6157
    %v6212 = vsub.f32 %v6092, %v6157
    %v6213 = vsub.f32 %v6093, %v6157
    %v6214 = vsub.f32 %v6094, %v6157
    %v6215 = vsub.f32 %v6095, %v6157
    %v6216 = vsub.f32 %v6096, %v6157
    %v6217 = vsub.f32 %v6097, %v6157
    %v6218 = vsub.f32 %v6098, %v6157
    %v6219 = vsub.f32 %v6099, %v6164
    %v6220 = vsub.f32 %v6100, %v6164
    %v6221 = vsub.f32 %v6101, %v6164
    %v6222 = vsub.f32 %v6102, %v6164
    %v6223 = vsub.f32 %v6103, %v6164
    %v6224 = vsub.f32 %v6104, %v6164
    %v6225 = vsub.f32 %v6105, %v6164
    %v6226 = vsub.f32 %v6106, %v6164
    %v6227 = vsub.f32 %v6107, %v6171
    %v6228 = vsub.f32 %v6108, %v6171
    %v6229 = vsub.f32 %v6109, %v6171
    %v6230 = vsub.f32 %v6110, %v6171
    %v6231 = vsub.f32 %v6111, %v6171
    %v6232 = vsub.f32 %v6112, %v6171
    %v6233 = vsub.f32 %v6113, %v6171
    %v6234 = vsub.f32 %v6114, %v6171
    %v6235 = vsub.f32 %v6115, %v6178
    %v6236 = vsub.f32 %v6116, %v6178
    %v6237 = vsub.f32 %v6117, %v6178
    %v6238 = vsub.f32 %v6118, %v6178
    %v6239 = vsub.f32 %v6119, %v6178
    %v6240 = vsub.f32 %v6120, %v6178
    %v6241 = vsub.f32 %v6121, %v6178
    %v6242 = vsub.f32 %v6122, %v6178
    %v6243 = vmul.f32 %v6179, 1.442695
    %v6244 = vpow.pop %v6243
    %v6245 = vmul.f32 %v6180, 1.442695
    %v6246 = vpow.pop %v6245
    %v6247 = vmul.f32 %v6181, 1.442695
    %v6248 = vpow.pop %v6247
    %v6249 = vmul.f32 %v6182, 1.442695
    %v6250 = vpow.pop %v6249
    %v6251 = vmul.f32 %v6183, 1.442695
    %v6252 = vpow.pop %v6251
    %v6253 = vmul.f32 %v6184, 1.442695
    %v6254 = vpow.pop %v6253
    %v6255 = vmul.f32 %v6185, 1.442695
    %v6256 = vpow.pop %v6255
    %v6257 = vmul.f32 %v6186, 1.442695
    %v6258 = vpow.pop %v6257
    %v6259 = vmul.f32 %v6187, 1.442695
    %v6260 = vpow.pop %v6259
    %v6261 = vmul.f32 %v6188, 1.442695
    %v6262 = vpow.pop %v6261
    %v6263 = vmul.f32 %v6189, 1.442695
    %v6264 = vpow.pop %v6263
    %v6265 = vmul.f32 %v6190, 1.442695
    %v6266 = vpow.pop %v6265
    %v6267 = vmul.f32 %v6191, 1.442695
    %v6268 = vpow.pop %v6267
    %v6269 = vmul.f32 %v6192, 1.442695
    %v6270 = vpow.pop %v6269
    %v6271 = vmul.f32 %v6193, 1.442695
    %v6272 = vpow.pop %v6271
    %v6273 = vmul.f32 %v6194, 1.442695
    %v6274 = vpow.pop %v6273
    %v6275 = vmul.f32 %v6195, 1.442695
    %v6276 = vpow.pop %v6275
    %v6277 = vmul.f32 %v6196, 1.442695
    %v6278 = vpow.pop %v6277
    %v6279 = vmul.f32 %v6197, 1.442695
    %v6280 = vpow.pop %v6279
    %v6281 = vmul.f32 %v6198, 1.442695
    %v6282 = vpow.pop %v6281
    %v6283 = vmul.f32 %v6199, 1.442695
    %v6284 = vpow.pop %v6283
    %v6285 = vmul.f32 %v6200, 1.442695
    %v6286 = vpow.pop %v6285
    %v6287 = vmul.f32 %v6201, 1.442695
    %v6288 = vpow.pop %v6287
    %v6289 = vmul.f32 %v6202, 1.442695
    %v6290 = vpow.pop %v6289
    %v6291 = vmul.f32 %v6203, 1.442695
    %v6292 = vpow.pop %v6291
    %v6293 = vmul.f32 %v6204, 1.442695
    %v6294 = vpow.pop %v6293
    %v6295 = vmul.f32 %v6205, 1.442695
    %v6296 = vpow.pop %v6295
    %v6297 = vmul.f32 %v6206, 1.442695
    %v6298 = vpow.pop %v6297
    %v6299 = vmul.f32 %v6207, 1.442695
    %v6300 = vpow.pop %v6299
    %v6301 = vmul.f32 %v6208, 1.442695
    %v6302 = vpow.pop %v6301
    %v6303 = vmul.f32 %v6209, 1.442695
    %v6304 = vpow.pop %v6303
    %v6305 = vmul.f32 %v6210, 1.442695
    %v6306 = vpow.pop %v6305
    %v6307 = vmul.f32 %v6211, 1.442695
    %v6308 = vpow.pop %v6307
    %v6309 = vmul.f32 %v6212, 1.442695
    %v6310 = vpow.pop %v6309
    %v6311 = vmul.f32 %v6213, 1.442695
    %v6312 = vpow.pop %v6311
    %v6313 = vmul.f32 %v6214, 1.442695
    %v6314 = vpow.pop %v6313
    %v6315 = vmul.f32 %v6215, 1.442695
    %v6316 = vpow.pop %v6315
    %v6317 = vmul.f32 %v6216, 1.442695
    %v6318 = vpow.pop %v6317
    %v6319 = vmul.f32 %v6217, 1.442695
    %v6320 = vpow.pop %v6319
    %v6321 = vmul.f32 %v6218, 1.442695
    %v6322 = vpow.pop %v6321
    %v6323 = vmul.f32 %v6219, 1.442695
    %v6324 = vpow.pop %v6323
    %v6325 = vmul.f32 %v6220, 1.442695
    %v6326 = vpow.pop %v6325
    %v6327 = vmul.f32 %v6221, 1.442695
    %v6328 = vpow.pop %v6327
    %v6329 = vmul.f32 %v6222, 1.442695
    %v6330 = vpow.pop %v6329
    %v6331 = vmul.f32 %v6223, 1.442695
    %v6332 = vpow.pop %v6331
    %v6333 = vmul.f32 %v6224, 1.442695
    %v6334 = vpow.pop %v6333
    %v6335 = vmul.f32 %v6225, 1.442695
    %v6336 = vpow.pop %v6335
    %v6337 = vmul.f32 %v6226, 1.442695
    %v6338 = vpow.pop %v6337
    %v6339 = vmul.f32 %v6227, 1.442695
    %v6340 = vpow.pop %v6339
    %v6341 = vmul.f32 %v6228, 1.442695
    %v6342 = vpow.pop %v6341
    %v6343 = vmul.f32 %v6229, 1.442695
    %v6344 = vpow.pop %v6343
    %v6345 = vmul.f32 %v6230, 1.442695
    %v6346 = vpow.pop %v6345
    %v6347 = vmul.f32 %v6231, 1.442695
    %v6348 = vpow.pop %v6347
    %v6349 = vmul.f32 %v6232, 1.442695
    %v6350 = vpow.pop %v6349
    %v6351 = vmul.f32 %v6233, 1.442695
    %v6352 = vpow.pop %v6351
    %v6353 = vmul.f32 %v6234, 1.442695
    %v6354 = vpow.pop %v6353
    %v6355 = vmul.f32 %v6235, 1.442695
    %v6356 = vpow.pop %v6355
    %v6357 = vmul.f32 %v6236, 1.442695
    %v6358 = vpow.pop %v6357
    %v6359 = vmul.f32 %v6237, 1.442695
    %v6360 = vpow.pop %v6359
    %v6361 = vmul.f32 %v6238, 1.442695
    %v6362 = vpow.pop %v6361
    %v6363 = vmul.f32 %v6239, 1.442695
    %v6364 = vpow.pop %v6363
    %v6365 = vmul.f32 %v6240, 1.442695
    %v6366 = vpow.pop %v6365
    %v6367 = vmul.f32 %v6241, 1.442695
    %v6368 = vpow.pop %v6367
    %v6369 = vmul.f32 %v6242, 1.442695
    %v6370 = vpow.pop %v6369
    %v6435 = vrot.slane %v6246, 7
    %v6436 = vsel %vm2013, %v6435, %v6244
    %v6437 = vrot.slane %v6248, 6
    %v6438 = vsel %vm2016, %v6437, %v6436
    %v6439 = vrot.slane %v6250, 5
    %v6440 = vsel %vm2019, %v6439, %v6438
    %v6441 = vrot.slane %v6252, 4
    %v6442 = vsel %vm2022, %v6441, %v6440
    %v6443 = vrot.slane %v6254, 3
    %v6444 = vsel %vm2025, %v6443, %v6442
    %v6445 = vrot.slane %v6256, 2
    %v6446 = vsel %vm2028, %v6445, %v6444
    %v6447 = vrot.slane %v6258, 1
    %v6448 = vsel %vm2031, %v6447, %v6446
    %v6449 = vrot.slane %v6262, 7
    %v6450 = vsel %vm2013, %v6449, %v6260
    %v6451 = vrot.slane %v6264, 6
    %v6452 = vsel %vm2016, %v6451, %v6450
    %v6453 = vrot.slane %v6266, 5
    %v6454 = vsel %vm2019, %v6453, %v6452
    %v6455 = vrot.slane %v6268, 4
    %v6456 = vsel %vm2022, %v6455, %v6454
    %v6457 = vrot.slane %v6270, 3
    %v6458 = vsel %vm2025, %v6457, %v6456
    %v6459 = vrot.slane %v6272, 2
    %v6460 = vsel %vm2028, %v6459, %v6458
    %v6461 = vrot.slane %v6274, 1
    %v6462 = vsel %vm2031, %v6461, %v6460
    %v6463 = vrot.slane %v6278, 7
    %v6464 = vsel %vm2013, %v6463, %v6276
    %v6465 = vrot.slane %v6280, 6
    %v6466 = vsel %vm2016, %v6465, %v6464
    %v6467 = vrot.slane %v6282, 5
    %v6468 = vsel %vm2019, %v6467, %v6466
    %v6469 = vrot.slane %v6284, 4
    %v6470 = vsel %vm2022, %v6469, %v6468
    %v6471 = vrot.slane %v6286, 3
    %v6472 = vsel %vm2025, %v6471, %v6470
    %v6473 = vrot.slane %v6288, 2
    %v6474 = vsel %vm2028, %v6473, %v6472
    %v6475 = vrot.slane %v6290, 1
    %v6476 = vsel %vm2031, %v6475, %v6474
    %v6477 = vrot.slane %v6294, 7
    %v6478 = vsel %vm2013, %v6477, %v6292
    %v6479 = vrot.slane %v6296, 6
    %v6480 = vsel %vm2016, %v6479, %v6478
    %v6481 = vrot.slane %v6298, 5
    %v6482 = vsel %vm2019, %v6481, %v6480
    %v6483 = vrot.slane %v6300, 4
    %v6484 = vsel %vm2022, %v6483, %v6482
    %v6485 = vrot.slane %v6302, 3
    %v6486 = vsel %vm2025, %v6485, %v6484
    %v6487 = vrot.slane %v6304, 2
    %v6488 = vsel %vm2028, %v6487, %v6486
    %v6489 = vrot.slane %v6306, 1
    %v6490 = vsel %vm2031, %v6489, %v6488
    %v6491 = vrot.slane %v6310, 7
    %v6492 = vsel %vm2013, %v6491, %v6308
    %v6493 = vrot.slane %v6312, 6
    %v6494 = vsel %vm2016, %v6493, %v6492
    %v6495 = vrot.slane %v6314, 5
    %v6496 = vsel %vm2019, %v6495, %v6494
    %v6497 = vrot.slane %v6316, 4
    %v6498 = vsel %vm2022, %v6497, %v6496
    %v6499 = vrot.slane %v6318, 3
    %v6500 = vsel %vm2025, %v6499, %v6498
    %v6501 = vrot.slane %v6320, 2
    %v6502 = vsel %vm2028, %v6501, %v6500
    %v6503 = vrot.slane %v6322, 1
    %v6504 = vsel %vm2031, %v6503, %v6502
    %v6505 = vrot.slane %v6326, 7
    %v6506 = vsel %vm2013, %v6505, %v6324
    %v6507 = vrot.slane %v6328, 6
    %v6508 = vsel %vm2016, %v6507, %v6506
    %v6509 = vrot.slane %v6330, 5
    %v6510 = vsel %vm2019, %v6509, %v6508
    %v6511 = vrot.slane %v6332, 4
    %v6512 = vsel %vm2022, %v6511, %v6510
    %v6513 = vrot.slane %v6334, 3
    %v6514 = vsel %vm2025, %v6513, %v6512
    %v6515 = vrot.slane %v6336, 2
    %v6516 = vsel %vm2028, %v6515, %v6514
    %v6517 = vrot.slane %v6338, 1
    %v6518 = vsel %vm2031, %v6517, %v6516
    %v6519 = vrot.slane %v6342, 7
    %v6520 = vsel %vm2013, %v6519, %v6340
    %v6521 = vrot.slane %v6344, 6
    %v6522 = vsel %vm2016, %v6521, %v6520
    %v6523 = vrot.slane %v6346, 5
    %v6524 = vsel %vm2019, %v6523, %v6522
    %v6525 = vrot.slane %v6348, 4
    %v6526 = vsel %vm2022, %v6525, %v6524
    %v6527 = vrot.slane %v6350, 3
    %v6528 = vsel %vm2025, %v6527, %v6526
    %v6529 = vrot.slane %v6352, 2
    %v6530 = vsel %vm2028, %v6529, %v6528
    %v6531 = vrot.slane %v6354, 1
    %v6532 = vsel %vm2031, %v6531, %v6530
    %v6533 = vrot.slane %v6358, 7
    %v6534 = vsel %vm2013, %v6533, %v6356
    %v6535 = vrot.slane %v6360, 6
    %v6536 = vsel %vm2016, %v6535, %v6534
    %v6537 = vrot.slane %v6362, 5
    %v6538 = vsel %vm2019, %v6537, %v6536
    %v6539 = vrot.slane %v6364, 4
    %v6540 = vsel %vm2022, %v6539, %v6538
    %v6541 = vrot.slane %v6366, 3
    %v6542 = vsel %vm2025, %v6541, %v6540
    %v6543 = vrot.slane %v6368, 2
    %v6544 = vsel %vm2028, %v6543, %v6542
    %v6545 = vrot.slane %v6370, 1
    %v6546 = vsel %vm2031, %v6545, %v6544
    %v6555 = vrot.slane %v6448, 4
    %v6556 = vadd.f32 %v6448, %v6555
    %v6557 = vrot.slane %v6556, 2
    %v6558 = vadd.f32 %v6556, %v6557
    %v6559 = vrot.slane %v6558, 1
    %v6560 = vadd.f32 %v6558, %v6559
    %v6561 = vrot.slane %v6462, 4
    %v6562 = vadd.f32 %v6462, %v6561
    %v6563 = vrot.slane %v6562, 2
    %v6564 = vadd.f32 %v6562, %v6563
    %v6565 = vrot.slane %v6564, 1
    %v6566 = vadd.f32 %v6564, %v6565
    %v6567 = vrot.slane %v6476, 4
    %v6568 = vadd.f32 %v6476, %v6567
    %v6569 = vrot.slane %v6568, 2
    %v6570 = vadd.f32 %v6568, %v6569
    %v6571 = vrot.slane %v6570, 1
    %v6572 = vadd.f32 %v6570, %v6571
    %v6573 = vrot.slane %v6490, 4
    %v6574 = vadd.f32 %v6490, %v6573
    %v6575 = vrot.slane %v6574, 2
    %v6576 = vadd.f32 %v6574, %v6575
    %v6577 = vrot.slane %v6576, 1
    %v6578 = vadd.f32 %v6576, %v6577
    %v6579 = vrot.slane %v6504, 4
    %v6580 = vadd.f32 %v6504, %v6579
    %v6581 = vrot.slane %v6580, 2
    %v6582 = vadd.f32 %v6580, %v6581
    %v6583 = vrot.slane %v6582, 1
    %v6584 = vadd.f32 %v6582, %v6583
    %v6585 = vrot.slane %v6518, 4
    %v6586 = vadd.f32 %v6518, %v6585
    %v6587 = vrot.slane %v6586, 2
    %v6588 = vadd.f32 %v6586, %v6587
    %v6589 = vrot.slane %v6588, 1
    %v6590 = vadd.f32 %v6588, %v6589
    %v6591 = vrot.slane %v6532, 4
    %v6592 = vadd.f32 %v6532, %v6591
    %v6593 = vrot.slane %v6592, 2
    %v6594 = vadd.f32 %v6592, %v6593
    %v6595 = vrot.slane %v6594, 1
    %v6596 = vadd.f32 %v6594, %v6595
    %v6597 = vrot.slane %v6546, 4
    %v6598 = vadd.f32 %v6546, %v6597
    %v6599 = vrot.slane %v6598, 2
    %v6600 = vadd.f32 %v6598, %v6599
    %v6601 = vrot.slane %v6600, 1
    %v6602 = vadd.f32 %v6600, %v6601
    %v6603 = vrcp.pop %v6560
    %v6604 = vrcp.pop %v6566
    %v6605 = vrcp.pop %v6572
    %v6606 = vrcp.pop %v6578
    %v6607 = vrcp.pop %v6584
    %v6608 = vrcp.pop %v6590
    %v6609 = vrcp.pop %v6596
    %v6610 = vrcp.pop %v6602
    %v6611 = vlaneseq
    %v6612 = vshrl.u32 %v6611, 7
    %v6613 = vsub.s32 0, %v6612
    %v6614 = vrot.slane %v6603, %v6613
    %v6615 = vlaneseq
    %v6616 = vshrl.u32 %v6615, 7
    %v6617 = vsub.s32 0, %v6616
    %v6618 = vrot.slane %v6604, %v6617
    %v6619 = vlaneseq
    %v6620 = vshrl.u32 %v6619, 7
    %v6621 = vsub.s32 0, %v6620
    %v6622 = vrot.slane %v6605, %v6621
    %v6623 = vlaneseq
    %v6624 = vshrl.u32 %v6623, 7
    %v6625 = vsub.s32 0, %v6624
    %v6626 = vrot.slane %v6606, %v6625
    %v6627 = vlaneseq
    %v6628 = vshrl.u32 %v6627, 7
    %v6629 = vsub.s32 0, %v6628
    %v6630 = vrot.slane %v6607, %v6629
    %v6631 = vlaneseq
    %v6632 = vshrl.u32 %v6631, 7
    %v6633 = vsub.s32 0, %v6632
    %v6634 = vrot.slane %v6608, %v6633
    %v6635 = vlaneseq
    %v6636 = vshrl.u32 %v6635, 7
    %v6637 = vsub.s32 0, %v6636
    %v6638 = vrot.slane %v6609, %v6637
    %v6639 = vlaneseq
    %v6640 = vshrl.u32 %v6639, 7
    %v6641 = vsub.s32 0, %v6640
    %v6642 = vrot.slane %v6610, %v6641
    %v6643 = vmul.f32 %v6244, %v6614
    %v6644 = vmul.f32 %v6246, %v6614
    %v6645 = vmul.f32 %v6248, %v6614
    %v6646 = vmul.f32 %v6250, %v6614
    %v6647 = vmul.f32 %v6252, %v6614
    %v6648 = vmul.f32 %v6254, %v6614
    %v6649 = vmul.f32 %v6256, %v6614
    %v6650 = vmul.f32 %v6258, %v6614
    %v6651 = vmul.f32 %v6260, %v6618
    %v6652 = vmul.f32 %v6262, %v6618
    %v6653 = vmul.f32 %v6264, %v6618
    %v6654 = vmul.f32 %v6266, %v6618
    %v6655 = vmul.f32 %v6268, %v6618
    %v6656 = vmul.f32 %v6270, %v6618
    %v6657 = vmul.f32 %v6272, %v6618
    %v6658 = vmul.f32 %v6274, %v6618
    %v6659 = vmul.f32 %v6276, %v6622
    %v6660 = vmul.f32 %v6278, %v6622
    %v6661 = vmul.f32 %v6280, %v6622
    %v6662 = vmul.f32 %v6282, %v6622
    %v6663 = vmul.f32 %v6284, %v6622
    %v6664 = vmul.f32 %v6286, %v6622
    %v6665 = vmul.f32 %v6288, %v6622
    %v6666 = vmul.f32 %v6290, %v6622
    %v6667 = vmul.f32 %v6292, %v6626
    %v6668 = vmul.f32 %v6294, %v6626
    %v6669 = vmul.f32 %v6296, %v6626
    %v6670 = vmul.f32 %v6298, %v6626
    %v6671 = vmul.f32 %v6300, %v6626
    %v6672 = vmul.f32 %v6302, %v6626
    %v6673 = vmul.f32 %v6304, %v6626
    %v6674 = vmul.f32 %v6306, %v6626
    %v6675 = vmul.f32 %v6308, %v6630
    %v6676 = vmul.f32 %v6310, %v6630
    %v6677 = vmul.f32 %v6312, %v6630
    %v6678 = vmul.f32 %v6314, %v6630
    %v6679 = vmul.f32 %v6316, %v6630
    %v6680 = vmul.f32 %v6318, %v6630
    %v6681 = vmul.f32 %v6320, %v6630
    %v6682 = vmul.f32 %v6322, %v6630
    %v6683 = vmul.f32 %v6324, %v6634
    %v6684 = vmul.f32 %v6326, %v6634
    %v6685 = vmul.f32 %v6328, %v6634
    %v6686 = vmul.f32 %v6330, %v6634
    %v6687 = vmul.f32 %v6332, %v6634
    %v6688 = vmul.f32 %v6334, %v6634
    %v6689 = vmul.f32 %v6336, %v6634
    %v6690 = vmul.f32 %v6338, %v6634
    %v6691 = vmul.f32 %v6340, %v6638
    %v6692 = vmul.f32 %v6342, %v6638
    %v6693 = vmul.f32 %v6344, %v6638
    %v6694 = vmul.f32 %v6346, %v6638
    %v6695 = vmul.f32 %v6348, %v6638
    %v6696 = vmul.f32 %v6350, %v6638
    %v6697 = vmul.f32 %v6352, %v6638
    %v6698 = vmul.f32 %v6354, %v6638
    %v6699 = vmul.f32 %v6356, %v6642
    %v6700 = vmul.f32 %v6358, %v6642
    %v6701 = vmul.f32 %v6360, %v6642
    %v6702 = vmul.f32 %v6362, %v6642
    %v6703 = vmul.f32 %v6364, %v6642
    %v6704 = vmul.f32 %v6366, %v6642
    %v6705 = vmul.f32 %v6368, %v6642
    %v6706 = vmul.f32 %v6370, %v6642
    %v6707 = vlaneseq
    %v6708 = vshrl.u32 %v6707, 7
    %v6709 = vsub.s32 0, %v6708
    %v6710 = vrot.slane %v6643, %v6709
    %v6711 = vlaneseq
    %v6712 = vshrl.u32 %v6711, 7
    %v6713 = vsub.s32 0, %v6712
    %v6714 = vrot.slane %v6644, %v6713
    %v6715 = vlaneseq
    %v6716 = vshrl.u32 %v6715, 7
    %v6717 = vsub.s32 0, %v6716
    %v6718 = vrot.slane %v6645, %v6717
    %v6719 = vlaneseq
    %v6720 = vshrl.u32 %v6719, 7
    %v6721 = vsub.s32 0, %v6720
    %v6722 = vrot.slane %v6646, %v6721
    %v6723 = vlaneseq
    %v6724 = vshrl.u32 %v6723, 7
    %v6725 = vsub.s32 0, %v6724
    %v6726 = vrot.slane %v6647, %v6725
    %v6727 = vlaneseq
    %v6728 = vshrl.u32 %v6727, 7
    %v6729 = vsub.s32 0, %v6728
    %v6730 = vrot.slane %v6648, %v6729
    %v6731 = vlaneseq
    %v6732 = vshrl.u32 %v6731, 7
    %v6733 = vsub.s32 0, %v6732
    %v6734 = vrot.slane %v6649, %v6733
    %v6735 = vlaneseq
    %v6736 = vshrl.u32 %v6735, 7
    %v6737 = vsub.s32 0, %v6736
    %v6738 = vrot.slane %v6650, %v6737
    %v6739 = vlaneseq
    %v6740 = vshrl.u32 %v6739, 7
    %v6741 = vsub.s32 0, %v6740
    %v6742 = vrot.slane %v6651, %v6741
    %v6743 = vlaneseq
    %v6744 = vshrl.u32 %v6743, 7
    %v6745 = vsub.s32 0, %v6744
    %v6746 = vrot.slane %v6652, %v6745
    %v6747 = vlaneseq
    %v6748 = vshrl.u32 %v6747, 7
    %v6749 = vsub.s32 0, %v6748
    %v6750 = vrot.slane %v6653, %v6749
    %v6751 = vlaneseq
    %v6752 = vshrl.u32 %v6751, 7
    %v6753 = vsub.s32 0, %v6752
    %v6754 = vrot.slane %v6654, %v6753
    %v6755 = vlaneseq
    %v6756 = vshrl.u32 %v6755, 7
    %v6757 = vsub.s32 0, %v6756
    %v6758 = vrot.slane %v6655, %v6757
    %v6759 = vlaneseq
    %v6760 = vshrl.u32 %v6759, 7
    %v6761 = vsub.s32 0, %v6760
    %v6762 = vrot.slane %v6656, %v6761
    %v6763 = vlaneseq
    %v6764 = vshrl.u32 %v6763, 7
    %v6765 = vsub.s32 0, %v6764
    %v6766 = vrot.slane %v6657, %v6765
    %v6767 = vlaneseq
    %v6768 = vshrl.u32 %v6767, 7
    %v6769 = vsub.s32 0, %v6768
    %v6770 = vrot.slane %v6658, %v6769
    %v6771 = vlaneseq
    %v6772 = vshrl.u32 %v6771, 7
    %v6773 = vsub.s32 0, %v6772
    %v6774 = vrot.slane %v6659, %v6773
    %v6775 = vlaneseq
    %v6776 = vshrl.u32 %v6775, 7
    %v6777 = vsub.s32 0, %v6776
    %v6778 = vrot.slane %v6660, %v6777
    %v6779 = vlaneseq
    %v6780 = vshrl.u32 %v6779, 7
    %v6781 = vsub.s32 0, %v6780
    %v6782 = vrot.slane %v6661, %v6781
    %v6783 = vlaneseq
    %v6784 = vshrl.u32 %v6783, 7
    %v6785 = vsub.s32 0, %v6784
    %v6786 = vrot.slane %v6662, %v6785
    %v6787 = vlaneseq
    %v6788 = vshrl.u32 %v6787, 7
    %v6789 = vsub.s32 0, %v6788
    %v6790 = vrot.slane %v6663, %v6789
    %v6791 = vlaneseq
    %v6792 = vshrl.u32 %v6791, 7
    %v6793 = vsub.s32 0, %v6792
    %v6794 = vrot.slane %v6664, %v6793
    %v6795 = vlaneseq
    %v6796 = vshrl.u32 %v6795, 7
    %v6797 = vsub.s32 0, %v6796
    %v6798 = vrot.slane %v6665, %v6797
    %v6799 = vlaneseq
    %v6800 = vshrl.u32 %v6799, 7
    %v6801 = vsub.s32 0, %v6800
    %v6802 = vrot.slane %v6666, %v6801
    %v6803 = vlaneseq
    %v6804 = vshrl.u32 %v6803, 7
    %v6805 = vsub.s32 0, %v6804
    %v6806 = vrot.slane %v6667, %v6805
    %v6807 = vlaneseq
    %v6808 = vshrl.u32 %v6807, 7
    %v6809 = vsub.s32 0, %v6808
    %v6810 = vrot.slane %v6668, %v6809
    %v6811 = vlaneseq
    %v6812 = vshrl.u32 %v6811, 7
    %v6813 = vsub.s32 0, %v6812
    %v6814 = vrot.slane %v6669, %v6813
    %v6815 = vlaneseq
    %v6816 = vshrl.u32 %v6815, 7
    %v6817 = vsub.s32 0, %v6816
    %v6818 = vrot.slane %v6670, %v6817
    %v6819 = vlaneseq
    %v6820 = vshrl.u32 %v6819, 7
    %v6821 = vsub.s32 0, %v6820
    %v6822 = vrot.slane %v6671, %v6821
    %v6823 = vlaneseq
    %v6824 = vshrl.u32 %v6823, 7
    %v6825 = vsub.s32 0, %v6824
    %v6826 = vrot.slane %v6672, %v6825
    %v6827 = vlaneseq
    %v6828 = vshrl.u32 %v6827, 7
    %v6829 = vsub.s32 0, %v6828
    %v6830 = vrot.slane %v6673, %v6829
    %v6831 = vlaneseq
    %v6832 = vshrl.u32 %v6831, 7
    %v6833 = vsub.s32 0, %v6832
    %v6834 = vrot.slane %v6674, %v6833
    %v6835 = vlaneseq
    %v6836 = vshrl.u32 %v6835, 7
    %v6837 = vsub.s32 0, %v6836
    %v6838 = vrot.slane %v6675, %v6837
    %v6839 = vlaneseq
    %v6840 = vshrl.u32 %v6839, 7
    %v6841 = vsub.s32 0, %v6840
    %v6842 = vrot.slane %v6676, %v6841
    %v6843 = vlaneseq
    %v6844 = vshrl.u32 %v6843, 7
    %v6845 = vsub.s32 0, %v6844
    %v6846 = vrot.slane %v6677, %v6845
    %v6847 = vlaneseq
    %v6848 = vshrl.u32 %v6847, 7
    %v6849 = vsub.s32 0, %v6848
    %v6850 = vrot.slane %v6678, %v6849
    %v6851 = vlaneseq
    %v6852 = vshrl.u32 %v6851, 7
    %v6853 = vsub.s32 0, %v6852
    %v6854 = vrot.slane %v6679, %v6853
    %v6855 = vlaneseq
    %v6856 = vshrl.u32 %v6855, 7
    %v6857 = vsub.s32 0, %v6856
    %v6858 = vrot.slane %v6680, %v6857
    %v6859 = vlaneseq
    %v6860 = vshrl.u32 %v6859, 7
    %v6861 = vsub.s32 0, %v6860
    %v6862 = vrot.slane %v6681, %v6861
    %v6863 = vlaneseq
    %v6864 = vshrl.u32 %v6863, 7
    %v6865 = vsub.s32 0, %v6864
    %v6866 = vrot.slane %v6682, %v6865
    %v6867 = vlaneseq
    %v6868 = vshrl.u32 %v6867, 7
    %v6869 = vsub.s32 0, %v6868
    %v6870 = vrot.slane %v6683, %v6869
    %v6871 = vlaneseq
    %v6872 = vshrl.u32 %v6871, 7
    %v6873 = vsub.s32 0, %v6872
    %v6874 = vrot.slane %v6684, %v6873
    %v6875 = vlaneseq
    %v6876 = vshrl.u32 %v6875, 7
    %v6877 = vsub.s32 0, %v6876
    %v6878 = vrot.slane %v6685, %v6877
    %v6879 = vlaneseq
    %v6880 = vshrl.u32 %v6879, 7
    %v6881 = vsub.s32 0, %v6880
    %v6882 = vrot.slane %v6686, %v6881
    %v6883 = vlaneseq
    %v6884 = vshrl.u32 %v6883, 7
    %v6885 = vsub.s32 0, %v6884
    %v6886 = vrot.slane %v6687, %v6885
    %v6887 = vlaneseq
    %v6888 = vshrl.u32 %v6887, 7
    %v6889 = vsub.s32 0, %v6888
    %v6890 = vrot.slane %v6688, %v6889
    %v6891 = vlaneseq
    %v6892 = vshrl.u32 %v6891, 7
    %v6893 = vsub.s32 0, %v6892
    %v6894 = vrot.slane %v6689, %v6893
    %v6895 = vlaneseq
    %v6896 = vshrl.u32 %v6895, 7
    %v6897 = vsub.s32 0, %v6896
    %v6898 = vrot.slane %v6690, %v6897
    %v6899 = vlaneseq
    %v6900 = vshrl.u32 %v6899, 7
    %v6901 = vsub.s32 0, %v6900
    %v6902 = vrot.slane %v6691, %v6901
    %v6903 = vlaneseq
    %v6904 = vshrl.u32 %v6903, 7
    %v6905 = vsub.s32 0, %v6904
    %v6906 = vrot.slane %v6692, %v6905
    %v6907 = vlaneseq
    %v6908 = vshrl.u32 %v6907, 7
    %v6909 = vsub.s32 0, %v6908
    %v6910 = vrot.slane %v6693, %v6909
    %v6911 = vlaneseq
    %v6912 = vshrl.u32 %v6911, 7
    %v6913 = vsub.s32 0, %v6912
    %v6914 = vrot.slane %v6694, %v6913
    %v6915 = vlaneseq
    %v6916 = vshrl.u32 %v6915, 7
    %v6917 = vsub.s32 0, %v6916
    %v6918 = vrot.slane %v6695, %v6917
    %v6919 = vlaneseq
    %v6920 = vshrl.u32 %v6919, 7
    %v6921 = vsub.s32 0, %v6920
    %v6922 = vrot.slane %v6696, %v6921
    %v6923 = vlaneseq
    %v6924 = vshrl.u32 %v6923, 7
    %v6925 = vsub.s32 0, %v6924
    %v6926 = vrot.slane %v6697, %v6925
    %v6927 = vlaneseq
    %v6928 = vshrl.u32 %v6927, 7
    %v6929 = vsub.s32 0, %v6928
    %v6930 = vrot.slane %v6698, %v6929
    %v6931 = vlaneseq
    %v6932 = vshrl.u32 %v6931, 7
    %v6933 = vsub.s32 0, %v6932
    %v6934 = vrot.slane %v6699, %v6933
    %v6935 = vlaneseq
    %v6936 = vshrl.u32 %v6935, 7
    %v6937 = vsub.s32 0, %v6936
    %v6938 = vrot.slane %v6700, %v6937
    %v6939 = vlaneseq
    %v6940 = vshrl.u32 %v6939, 7
    %v6941 = vsub.s32 0, %v6940
    %v6942 = vrot.slane %v6701, %v6941
    %v6943 = vlaneseq
    %v6944 = vshrl.u32 %v6943, 7
    %v6945 = vsub.s32 0, %v6944
    %v6946 = vrot.slane %v6702, %v6945
    %v6947 = vlaneseq
    %v6948 = vshrl.u32 %v6947, 7
    %v6949 = vsub.s32 0, %v6948
    %v6950 = vrot.slane %v6703, %v6949
    %v6951 = vlaneseq
    %v6952 = vshrl.u32 %v6951, 7
    %v6953 = vsub.s32 0, %v6952
    %v6954 = vrot.slane %v6704, %v6953
    %v6955 = vlaneseq
    %v6956 = vshrl.u32 %v6955, 7
    %v6957 = vsub.s32 0, %v6956
    %v6958 = vrot.slane %v6705, %v6957
    %v6959 = vlaneseq
    %v6960 = vshrl.u32 %v6959, 7
    %v6961 = vsub.s32 0, %v6960
    %v6962 = vrot.slane %v6706, %v6961
    %v6963 = vmul.f32 %v6710, %v310
    %v6964 = vmul.f32 %v6714, %v435
    %v6965 = vmul.f32 %v6718, %v560
    %v6966 = vmul.f32 %v6722, %v685
    %v6967 = vmul.f32 %v6726, %v810
    %v6968 = vmul.f32 %v6730, %v935
    %v6969 = vmul.f32 %v6734, %v1060
    %v6970 = vmul.f32 %v6738, %v1185
    %v6971 = vmul.f32 %v6742, %v310
    %v6972 = vmul.f32 %v6746, %v435
    %v6973 = vmul.f32 %v6750, %v560
    %v6974 = vmul.f32 %v6754, %v685
    %v6975 = vmul.f32 %v6758, %v810
    %v6976 = vmul.f32 %v6762, %v935
    %v6977 = vmul.f32 %v6766, %v1060
    %v6978 = vmul.f32 %v6770, %v1185
    %v6979 = vmul.f32 %v6774, %v310
    %v6980 = vmul.f32 %v6778, %v435
    %v6981 = vmul.f32 %v6782, %v560
    %v6982 = vmul.f32 %v6786, %v685
    %v6983 = vmul.f32 %v6790, %v810
    %v6984 = vmul.f32 %v6794, %v935
    %v6985 = vmul.f32 %v6798, %v1060
    %v6986 = vmul.f32 %v6802, %v1185
    %v6987 = vmul.f32 %v6806, %v310
    %v6988 = vmul.f32 %v6810, %v435
    %v6989 = vmul.f32 %v6814, %v560
    %v6990 = vmul.f32 %v6818, %v685
    %v6991 = vmul.f32 %v6822, %v810
    %v6992 = vmul.f32 %v6826, %v935
    %v6993 = vmul.f32 %v6830, %v1060
    %v6994 = vmul.f32 %v6834, %v1185
    %v6995 = vmul.f32 %v6838, %v310
    %v6996 = vmul.f32 %v6842, %v435
    %v6997 = vmul.f32 %v6846, %v560
    %v6998 = vmul.f32 %v6850, %v685
    %v6999 = vmul.f32 %v6854, %v810
    %v7000 = vmul.f32 %v6858, %v935
    %v7001 = vmul.f32 %v6862, %v1060
    %v7002 = vmul.f32 %v6866, %v1185
    %v7003 = vmul.f32 %v6870, %v310
    %v7004 = vmul.f32 %v6874, %v435
    %v7005 = vmul.f32 %v6878, %v560
    %v7006 = vmul.f32 %v6882, %v685
    %v7007 = vmul.f32 %v6886, %v810
    %v7008 = vmul.f32 %v6890, %v935
    %v7009 = vmul.f32 %v6894, %v1060
    %v7010 = vmul.f32 %v6898, %v1185
    %v7011 = vmul.f32 %v6902, %v310
    %v7012 = vmul.f32 %v6906, %v435
    %v7013 = vmul.f32 %v6910, %v560
    %v7014 = vmul.f32 %v6914, %v685
    %v7015 = vmul.f32 %v6918, %v810
    %v7016 = vmul.f32 %v6922, %v935
    %v7017 = vmul.f32 %v6926, %v1060
    %v7018 = vmul.f32 %v6930, %v1185
    %v7019 = vmul.f32 %v6934, %v310
    %v7020 = vmul.f32 %v6938, %v435
    %v7021 = vmul.f32 %v6942, %v560
    %v7022 = vmul.f32 %v6946, %v685
    %v7023 = vmul.f32 %v6950, %v810
    %v7024 = vmul.f32 %v6954, %v935
    %v7025 = vmul.f32 %v6958, %v1060
    %v7026 = vmul.f32 %v6962, %v1185
    %v7027 = vadd.f32 %v6963, %v6964
    %v7028 = vadd.f32 %v7027, %v6965
    %v7029 = vadd.f32 %v7028, %v6966
    %v7030 = vadd.f32 %v7029, %v6967
    %v7031 = vadd.f32 %v7030, %v6968
    %v7032 = vadd.f32 %v7031, %v6969
    %v7033 = vadd.f32 %v7032, %v6970
    %v7034 = vadd.f32 %v6971, %v6972
    %v7035 = vadd.f32 %v7034, %v6973
    %v7036 = vadd.f32 %v7035, %v6974
    %v7037 = vadd.f32 %v7036, %v6975
    %v7038 = vadd.f32 %v7037, %v6976
    %v7039 = vadd.f32 %v7038, %v6977
    %v7040 = vadd.f32 %v7039, %v6978
    %v7041 = vadd.f32 %v6979, %v6980
    %v7042 = vadd.f32 %v7041, %v6981
    %v7043 = vadd.f32 %v7042, %v6982
    %v7044 = vadd.f32 %v7043, %v6983
    %v7045 = vadd.f32 %v7044, %v6984
    %v7046 = vadd.f32 %v7045, %v6985
    %v7047 = vadd.f32 %v7046, %v6986
    %v7048 = vadd.f32 %v6987, %v6988
    %v7049 = vadd.f32 %v7048, %v6989
    %v7050 = vadd.f32 %v7049, %v6990
    %v7051 = vadd.f32 %v7050, %v6991
    %v7052 = vadd.f32 %v7051, %v6992
    %v7053 = vadd.f32 %v7052, %v6993
    %v7054 = vadd.f32 %v7053, %v6994
    %v7055 = vadd.f32 %v6995, %v6996
    %v7056 = vadd.f32 %v7055, %v6997
    %v7057 = vadd.f32 %v7056, %v6998
    %v7058 = vadd.f32 %v7057, %v6999
    %v7059 = vadd.f32 %v7058, %v7000
    %v7060 = vadd.f32 %v7059, %v7001
    %v7061 = vadd.f32 %v7060, %v7002
    %v7062 = vadd.f32 %v7003, %v7004
    %v7063 = vadd.f32 %v7062, %v7005
    %v7064 = vadd.f32 %v7063, %v7006
    %v7065 = vadd.f32 %v7064, %v7007
    %v7066 = vadd.f32 %v7065, %v7008
    %v7067 = vadd.f32 %v7066, %v7009
    %v7068 = vadd.f32 %v7067, %v7010
    %v7069 = vadd.f32 %v7011, %v7012
    %v7070 = vadd.f32 %v7069, %v7013
    %v7071 = vadd.f32 %v7070, %v7014
    %v7072 = vadd.f32 %v7071, %v7015
    %v7073 = vadd.f32 %v7072, %v7016
    %v7074 = vadd.f32 %v7073, %v7017
    %v7075 = vadd.f32 %v7074, %v7018
    %v7076 = vadd.f32 %v7019, %v7020
    %v7077 = vadd.f32 %v7076, %v7021
    %v7078 = vadd.f32 %v7077, %v7022
    %v7079 = vadd.f32 %v7078, %v7023
    %v7080 = vadd.f32 %v7079, %v7024
    %v7081 = vadd.f32 %v7080, %v7025
    %v7082 = vadd.f32 %v7081, %v7026
    %7084 = vset.pattern.permute.xlu0 0
    %7085 = vperm.xlu0 %7084, %v87
    %v7086 = vpop.permute.xlu0 %7085
    %7089 = vset.pattern.permute.xlu0 0
    %7090 = vperm.xlu0 %7089, %v88
    %v7091 = vpop.permute.xlu0 %7090
    %7094 = vset.pattern.permute.xlu0 0
    %7095 = vperm.xlu0 %7094, %v89
    %v7096 = vpop.permute.xlu0 %7095
    %7099 = vset.pattern.permute.xlu0 0
    %7100 = vperm.xlu0 %7099, %v90
    %v7101 = vpop.permute.xlu0 %7100
    %v7104 = vsel %vm151, %v71, 0
    %v7107 = vsel %vm151, %v72, 0
    %v7110 = vsel %vm151, %v73, 0
    %v7113 = vsel %vm151, %v74, 0
    %7115 = vmatprep.subr.mxu0 0.0
    %7116 = vmatpush1.msra.mxu0 %v2617
    %7117 = vmatprep.subr.mxu0 0.0
    %7118 = vmatpush1.msra.mxu0 %v4089
    %7119 = vmatprep.subr.mxu0 0.0
    %7120 = vmatpush1.msra.mxu0 %v5561
    %7121 = vmatprep.subr.mxu0 0.0
    %7122 = vmatpush1.msra.mxu0 %v7033
    %7123 = vmatprep.subr.mxu0 0.0
    %7124 = vmatpush1.msra.mxu0 0.0
    %7125 = vmatprep.subr.mxu0 0.0
    %7126 = vmatpush1.msra.mxu0 0.0
    %7127 = vmatprep.subr.mxu0 0.0
    %7128 = vmatpush1.msra.mxu0 0.0
    %7129 = vmatprep.subr.mxu0 0.0
    %7130 = vmatpush1.msra.mxu0 0.0
    %7131 = vmatprep.subr.mxu0 0.0
    %7132 = vmatpush1.msra.mxu0 0.0
    %7133 = vmatprep.subr.mxu0 0.0
    %7134 = vmatpush1.msra.mxu0 0.0
    %7135 = vmatprep.subr.mxu0 0.0
    %7136 = vmatpush1.msra.mxu0 0.0
    %7137 = vmatprep.subr.mxu0 0.0
    %7138 = vmatpush1.msra.mxu0 0.0
    %7139 = vmatprep.subr.mxu0 0.0
    %7140 = vmatpush1.msra.mxu0 0.0
    %7141 = vmatprep.subr.mxu0 0.0
    %7142 = vmatpush1.msra.mxu0 0.0
    %7143 = vmatprep.subr.mxu0 0.0
    %7144 = vmatpush1.msra.mxu0 0.0
    %7145 = vmatprep.subr.mxu0 0.0
    %7146 = vmatpush1.msra.mxu0 0.0
    %7147 = vmatprep.subr.mxu0 0.0
    %7148 = vmatpush1.msra.mxu0 0.0
    %7149 = vmatprep.subr.mxu0 0.0
    %7150 = vmatpush1.msra.mxu0 0.0
    %7151 = vmatprep.subr.mxu0 0.0
    %7152 = vmatpush1.msra.mxu0 0.0
    %7153 = vmatprep.subr.mxu0 0.0
    %7154 = vmatpush1.msra.mxu0 0.0
    %7155 = vmatprep.subr.mxu0 0.0
    %7156 = vmatpush1.msra.mxu0 0.0
    %7157 = vmatprep.subr.mxu0 0.0
    %7158 = vmatpush1.msra.mxu0 0.0
    %7159 = vmatprep.subr.mxu0 0.0
    %7160 = vmatpush1.msra.mxu0 0.0
    %7161 = vmatprep.subr.mxu0 0.0
    %7162 = vmatpush1.msra.mxu0 0.0
    %7163 = vmatprep.subr.mxu0 0.0
    %7164 = vmatpush1.msra.mxu0 0.0
    %7165 = vmatprep.subr.mxu0 0.0
    %7166 = vmatpush1.msra.mxu0 0.0
    %7167 = vmatprep.subr.mxu0 0.0
    %7168 = vmatpush1.msra.mxu0 0.0
    %7169 = vmatprep.subr.mxu0 0.0
    %7170 = vmatpush1.msra.mxu0 0.0
    %7171 = vmatprep.subr.mxu0 0.0
    %7172 = vmatpush1.msra.mxu0 0.0
    %7173 = vmatprep.subr.mxu0 0.0
    %7174 = vmatpush1.msra.mxu0 0.0
    %7175 = vmatprep.subr.mxu0 0.0
    %7176 = vmatpush1.msra.mxu0 0.0
    %7177 = vmatprep.subr.mxu0 0.0
    %7178 = vmatpush1.msra.mxu0 0.0
    %7179 = vmatprep.mubr.f32.mxu0 0.0
    %7180 = vmatmul.mubr.f32.gmra.mrb[0].mxu0 %v7104
    %v7181 = vpop.f32.mrb[0].mxu0
    %v7182 = vadd.f32 %v7086, %v7181
    %v7183 = vpop.f32.mrb[0].mxu0
    %7184 = vmatprep.mubr.f32.mxu0 0.0
    %7185 = vmatmul.mubr.f32.gmra.mrb[0].mxu0 %v7107
    %v7186 = vpop.f32.mrb[0].mxu0
    %v7187 = vadd.f32 %v7091, %v7186
    %v7188 = vpop.f32.mrb[0].mxu0
    %7189 = vmatprep.mubr.f32.mxu0 0.0
    %7190 = vmatmul.mubr.f32.gmra.mrb[0].mxu0 %v7110
    %v7191 = vpop.f32.mrb[0].mxu0
    %v7192 = vadd.f32 %v7096, %v7191
    %v7193 = vpop.f32.mrb[0].mxu0
    %7194 = vmatprep.mubr.f32.mxu0 0.0
    %7195 = vmatmul.mubr.f32.gmra.mrb[0].mxu0 %v7113
    %v7196 = vpop.f32.mrb[0].mxu0
    %v7197 = vadd.f32 %v7101, %v7196
    %v7198 = vpop.f32.mrb[0].mxu0
    %7199 = vdwg.mxu0
    %7200 = vmatprep.subr.mxu0 0.0
    %7201 = vmatpush1.msra.mxu0 %v2624
    %7202 = vmatprep.subr.mxu0 0.0
    %7203 = vmatpush1.msra.mxu0 %v4096
    %7204 = vmatprep.subr.mxu0 0.0
    %7205 = vmatpush1.msra.mxu0 %v5568
    %7206 = vmatprep.subr.mxu0 0.0
    %7207 = vmatpush1.msra.mxu0 %v7040
    %7208 = vmatprep.subr.mxu0 0.0
    %7209 = vmatpush1.msra.mxu0 0.0
    %7210 = vmatprep.subr.mxu0 0.0
    %7211 = vmatpush1.msra.mxu0 0.0
    %7212 = vmatprep.subr.mxu0 0.0
    %7213 = vmatpush1.msra.mxu0 0.0
    %7214 = vmatprep.subr.mxu0 0.0
    %7215 = vmatpush1.msra.mxu0 0.0
    %7216 = vmatprep.subr.mxu0 0.0
    %7217 = vmatpush1.msra.mxu0 0.0
    %7218 = vmatprep.subr.mxu0 0.0
    %7219 = vmatpush1.msra.mxu0 0.0
    %7220 = vmatprep.subr.mxu0 0.0
    %7221 = vmatpush1.msra.mxu0 0.0
    %7222 = vmatprep.subr.mxu0 0.0
    %7223 = vmatpush1.msra.mxu0 0.0
    %7224 = vmatprep.subr.mxu0 0.0
    %7225 = vmatpush1.msra.mxu0 0.0
    %7226 = vmatprep.subr.mxu0 0.0
    %7227 = vmatpush1.msra.mxu0 0.0
    %7228 = vmatprep.subr.mxu0 0.0
    %7229 = vmatpush1.msra.mxu0 0.0
    %7230 = vmatprep.subr.mxu0 0.0
    %7231 = vmatpush1.msra.mxu0 0.0
    %7232 = vmatprep.subr.mxu0 0.0
    %7233 = vmatpush1.msra.mxu0 0.0
    %7234 = vmatprep.subr.mxu0 0.0
    %7235 = vmatpush1.msra.mxu0 0.0
    %7236 = vmatprep.subr.mxu0 0.0
    %7237 = vmatpush1.msra.mxu0 0.0
    %7238 = vmatprep.subr.mxu0 0.0
    %7239 = vmatpush1.msra.mxu0 0.0
    %7240 = vmatprep.subr.mxu0 0.0
    %7241 = vmatpush1.msra.mxu0 0.0
    %7242 = vmatprep.subr.mxu0 0.0
    %7243 = vmatpush1.msra.mxu0 0.0
    %7244 = vmatprep.subr.mxu0 0.0
    %7245 = vmatpush1.msra.mxu0 0.0
    %7246 = vmatprep.subr.mxu0 0.0
    %7247 = vmatpush1.msra.mxu0 0.0
    %7248 = vmatprep.subr.mxu0 0.0
    %7249 = vmatpush1.msra.mxu0 0.0
    %7250 = vmatprep.subr.mxu0 0.0
    %7251 = vmatpush1.msra.mxu0 0.0
    %7252 = vmatprep.subr.mxu0 0.0
    %7253 = vmatpush1.msra.mxu0 0.0
    %7254 = vmatprep.subr.mxu0 0.0
    %7255 = vmatpush1.msra.mxu0 0.0
    %7256 = vmatprep.subr.mxu0 0.0
    %7257 = vmatpush1.msra.mxu0 0.0
    %7258 = vmatprep.subr.mxu0 0.0
    %7259 = vmatpush1.msra.mxu0 0.0
    %7260 = vmatprep.subr.mxu0 0.0
    %7261 = vmatpush1.msra.mxu0 0.0
    %7262 = vmatprep.subr.mxu0 0.0
    %7263 = vmatpush1.msra.mxu0 0.0
    %7264 = vmatprep.mubr.f32.mxu0 0.0
    %7265 = vmatmul.mubr.f32.gmra.mrb[0].mxu0 %v7104
    %v7266 = vpop.f32.mrb[0].mxu0
    %v7267 = vadd.f32 %v7086, %v7266
    %v7268 = vpop.f32.mrb[0].mxu0
    %7269 = vmatprep.mubr.f32.mxu0 0.0
    %7270 = vmatmul.mubr.f32.gmra.mrb[0].mxu0 %v7107
    %v7271 = vpop.f32.mrb[0].mxu0
    %v7272 = vadd.f32 %v7091, %v7271
    %v7273 = vpop.f32.mrb[0].mxu0
    %7274 = vmatprep.mubr.f32.mxu0 0.0
    %7275 = vmatmul.mubr.f32.gmra.mrb[0].mxu0 %v7110
    %v7276 = vpop.f32.mrb[0].mxu0
    %v7277 = vadd.f32 %v7096, %v7276
    %v7278 = vpop.f32.mrb[0].mxu0
    %7279 = vmatprep.mubr.f32.mxu0 0.0
    %7280 = vmatmul.mubr.f32.gmra.mrb[0].mxu0 %v7113
    %v7281 = vpop.f32.mrb[0].mxu0
    %v7282 = vadd.f32 %v7101, %v7281
    %v7283 = vpop.f32.mrb[0].mxu0
    %7284 = vdwg.mxu0
    %7285 = vmatprep.subr.mxu0 0.0
    %7286 = vmatpush1.msra.mxu0 %v2631
    %7287 = vmatprep.subr.mxu0 0.0
    %7288 = vmatpush1.msra.mxu0 %v4103
    %7289 = vmatprep.subr.mxu0 0.0
    %7290 = vmatpush1.msra.mxu0 %v5575
    %7291 = vmatprep.subr.mxu0 0.0
    %7292 = vmatpush1.msra.mxu0 %v7047
    %7293 = vmatprep.subr.mxu0 0.0
    %7294 = vmatpush1.msra.mxu0 0.0
    %7295 = vmatprep.subr.mxu0 0.0
    %7296 = vmatpush1.msra.mxu0 0.0
    %7297 = vmatprep.subr.mxu0 0.0
    %7298 = vmatpush1.msra.mxu0 0.0
    %7299 = vmatprep.subr.mxu0 0.0
    %7300 = vmatpush1.msra.mxu0 0.0
    %7301 = vmatprep.subr.mxu0 0.0
    %7302 = vmatpush1.msra.mxu0 0.0
    %7303 = vmatprep.subr.mxu0 0.0
    %7304 = vmatpush1.msra.mxu0 0.0
    %7305 = vmatprep.subr.mxu0 0.0
    %7306 = vmatpush1.msra.mxu0 0.0
    %7307 = vmatprep.subr.mxu0 0.0
    %7308 = vmatpush1.msra.mxu0 0.0
    %7309 = vmatprep.subr.mxu0 0.0
    %7310 = vmatpush1.msra.mxu0 0.0
    %7311 = vmatprep.subr.mxu0 0.0
    %7312 = vmatpush1.msra.mxu0 0.0
    %7313 = vmatprep.subr.mxu0 0.0
    %7314 = vmatpush1.msra.mxu0 0.0
    %7315 = vmatprep.subr.mxu0 0.0
    %7316 = vmatpush1.msra.mxu0 0.0
    %7317 = vmatprep.subr.mxu0 0.0
    %7318 = vmatpush1.msra.mxu0 0.0
    %7319 = vmatprep.subr.mxu0 0.0
    %7320 = vmatpush1.msra.mxu0 0.0
    %7321 = vmatprep.subr.mxu0 0.0
    %7322 = vmatpush1.msra.mxu0 0.0
    %7323 = vmatprep.subr.mxu0 0.0
    %7324 = vmatpush1.msra.mxu0 0.0
    %7325 = vmatprep.subr.mxu0 0.0
    %7326 = vmatpush1.msra.mxu0 0.0
    %7327 = vmatprep.subr.mxu0 0.0
    %7328 = vmatpush1.msra.mxu0 0.0
    %7329 = vmatprep.subr.mxu0 0.0
    %7330 = vmatpush1.msra.mxu0 0.0
    %7331 = vmatprep.subr.mxu0 0.0
    %7332 = vmatpush1.msra.mxu0 0.0
    %7333 = vmatprep.subr.mxu0 0.0
    %7334 = vmatpush1.msra.mxu0 0.0
    %7335 = vmatprep.subr.mxu0 0.0
    %7336 = vmatpush1.msra.mxu0 0.0
    %7337 = vmatprep.subr.mxu0 0.0
    %7338 = vmatpush1.msra.mxu0 0.0
    %7339 = vmatprep.subr.mxu0 0.0
    %7340 = vmatpush1.msra.mxu0 0.0
    %7341 = vmatprep.subr.mxu0 0.0
    %7342 = vmatpush1.msra.mxu0 0.0
    %7343 = vmatprep.subr.mxu0 0.0
    %7344 = vmatpush1.msra.mxu0 0.0
    %7345 = vmatprep.subr.mxu0 0.0
    %7346 = vmatpush1.msra.mxu0 0.0
    %7347 = vmatprep.subr.mxu0 0.0
    %7348 = vmatpush1.msra.mxu0 0.0
    %7349 = vmatprep.mubr.f32.mxu0 0.0
    %7350 = vmatmul.mubr.f32.gmra.mrb[0].mxu0 %v7104
    %v7351 = vpop.f32.mrb[0].mxu0
    %v7352 = vadd.f32 %v7086, %v7351
    %v7353 = vpop.f32.mrb[0].mxu0
    %7354 = vmatprep.mubr.f32.mxu0 0.0
    %7355 = vmatmul.mubr.f32.gmra.mrb[0].mxu0 %v7107
    %v7356 = vpop.f32.mrb[0].mxu0
    %v7357 = vadd.f32 %v7091, %v7356
    %v7358 = vpop.f32.mrb[0].mxu0
    %7359 = vmatprep.mubr.f32.mxu0 0.0
    %7360 = vmatmul.mubr.f32.gmra.mrb[0].mxu0 %v7110
    %v7361 = vpop.f32.mrb[0].mxu0
    %v7362 = vadd.f32 %v7096, %v7361
    %v7363 = vpop.f32.mrb[0].mxu0
    %7364 = vmatprep.mubr.f32.mxu0 0.0
    %7365 = vmatmul.mubr.f32.gmra.mrb[0].mxu0 %v7113
    %v7366 = vpop.f32.mrb[0].mxu0
    %v7367 = vadd.f32 %v7101, %v7366
    %v7368 = vpop.f32.mrb[0].mxu0
    %7369 = vdwg.mxu0
    %7370 = vmatprep.subr.mxu0 0.0
    %7371 = vmatpush1.msra.mxu0 %v2638
    %7372 = vmatprep.subr.mxu0 0.0
    %7373 = vmatpush1.msra.mxu0 %v4110
    %7374 = vmatprep.subr.mxu0 0.0
    %7375 = vmatpush1.msra.mxu0 %v5582
    %7376 = vmatprep.subr.mxu0 0.0
    %7377 = vmatpush1.msra.mxu0 %v7054
    %7378 = vmatprep.subr.mxu0 0.0
    %7379 = vmatpush1.msra.mxu0 0.0
    %7380 = vmatprep.subr.mxu0 0.0
    %7381 = vmatpush1.msra.mxu0 0.0
    %7382 = vmatprep.subr.mxu0 0.0
    %7383 = vmatpush1.msra.mxu0 0.0
    %7384 = vmatprep.subr.mxu0 0.0
    %7385 = vmatpush1.msra.mxu0 0.0
    %7386 = vmatprep.subr.mxu0 0.0
    %7387 = vmatpush1.msra.mxu0 0.0
    %7388 = vmatprep.subr.mxu0 0.0
    %7389 = vmatpush1.msra.mxu0 0.0
    %7390 = vmatprep.subr.mxu0 0.0
    %7391 = vmatpush1.msra.mxu0 0.0
    %7392 = vmatprep.subr.mxu0 0.0
    %7393 = vmatpush1.msra.mxu0 0.0
    %7394 = vmatprep.subr.mxu0 0.0
    %7395 = vmatpush1.msra.mxu0 0.0
    %7396 = vmatprep.subr.mxu0 0.0
    %7397 = vmatpush1.msra.mxu0 0.0
    %7398 = vmatprep.subr.mxu0 0.0
    %7399 = vmatpush1.msra.mxu0 0.0
    %7400 = vmatprep.subr.mxu0 0.0
    %7401 = vmatpush1.msra.mxu0 0.0
    %7402 = vmatprep.subr.mxu0 0.0
    %7403 = vmatpush1.msra.mxu0 0.0
    %7404 = vmatprep.subr.mxu0 0.0
    %7405 = vmatpush1.msra.mxu0 0.0
    %7406 = vmatprep.subr.mxu0 0.0
    %7407 = vmatpush1.msra.mxu0 0.0
    %7408 = vmatprep.subr.mxu0 0.0
    %7409 = vmatpush1.msra.mxu0 0.0
    %7410 = vmatprep.subr.mxu0 0.0
    %7411 = vmatpush1.msra.mxu0 0.0
    %7412 = vmatprep.subr.mxu0 0.0
    %7413 = vmatpush1.msra.mxu0 0.0
    %7414 = vmatprep.subr.mxu0 0.0
    %7415 = vmatpush1.msra.mxu0 0.0
    %7416 = vmatprep.subr.mxu0 0.0
    %7417 = vmatpush1.msra.mxu0 0.0
    %7418 = vmatprep.subr.mxu0 0.0
    %7419 = vmatpush1.msra.mxu0 0.0
    %7420 = vmatprep.subr.mxu0 0.0
    %7421 = vmatpush1.msra.mxu0 0.0
    %7422 = vmatprep.subr.mxu0 0.0
    %7423 = vmatpush1.msra.mxu0 0.0
    %7424 = vmatprep.subr.mxu0 0.0
    %7425 = vmatpush1.msra.mxu0 0.0
    %7426 = vmatprep.subr.mxu0 0.0
    %7427 = vmatpush1.msra.mxu0 0.0
    %7428 = vmatprep.subr.mxu0 0.0
    %7429 = vmatpush1.msra.mxu0 0.0
    %7430 = vmatprep.subr.mxu0 0.0
    %7431 = vmatpush1.msra.mxu0 0.0
    %7432 = vmatprep.subr.mxu0 0.0
    %7433 = vmatpush1.msra.mxu0 0.0
    %7434 = vmatprep.mubr.f32.mxu0 0.0
    %7435 = vmatmul.mubr.f32.gmra.mrb[0].mxu0 %v7104
    %v7436 = vpop.f32.mrb[0].mxu0
    %v7437 = vadd.f32 %v7086, %v7436
    %v7438 = vpop.f32.mrb[0].mxu0
    %7439 = vmatprep.mubr.f32.mxu0 0.0
    %7440 = vmatmul.mubr.f32.gmra.mrb[0].mxu0 %v7107
    %v7441 = vpop.f32.mrb[0].mxu0
    %v7442 = vadd.f32 %v7091, %v7441
    %v7443 = vpop.f32.mrb[0].mxu0
    %7444 = vmatprep.mubr.f32.mxu0 0.0
    %7445 = vmatmul.mubr.f32.gmra.mrb[0].mxu0 %v7110
    %v7446 = vpop.f32.mrb[0].mxu0
    %v7447 = vadd.f32 %v7096, %v7446
    %v7448 = vpop.f32.mrb[0].mxu0
    %7449 = vmatprep.mubr.f32.mxu0 0.0
    %7450 = vmatmul.mubr.f32.gmra.mrb[0].mxu0 %v7113
    %v7451 = vpop.f32.mrb[0].mxu0
    %v7452 = vadd.f32 %v7101, %v7451
    %v7453 = vpop.f32.mrb[0].mxu0
    %7454 = vdwg.mxu0
    %7455 = vmatprep.subr.mxu0 0.0
    %7456 = vmatpush1.msra.mxu0 %v2645
    %7457 = vmatprep.subr.mxu0 0.0
    %7458 = vmatpush1.msra.mxu0 %v4117
    %7459 = vmatprep.subr.mxu0 0.0
    %7460 = vmatpush1.msra.mxu0 %v5589
    %7461 = vmatprep.subr.mxu0 0.0
    %7462 = vmatpush1.msra.mxu0 %v7061
    %7463 = vmatprep.subr.mxu0 0.0
    %7464 = vmatpush1.msra.mxu0 0.0
    %7465 = vmatprep.subr.mxu0 0.0
    %7466 = vmatpush1.msra.mxu0 0.0
    %7467 = vmatprep.subr.mxu0 0.0
    %7468 = vmatpush1.msra.mxu0 0.0
    %7469 = vmatprep.subr.mxu0 0.0
    %7470 = vmatpush1.msra.mxu0 0.0
    %7471 = vmatprep.subr.mxu0 0.0
    %7472 = vmatpush1.msra.mxu0 0.0
    %7473 = vmatprep.subr.mxu0 0.0
    %7474 = vmatpush1.msra.mxu0 0.0
    %7475 = vmatprep.subr.mxu0 0.0
    %7476 = vmatpush1.msra.mxu0 0.0
    %7477 = vmatprep.subr.mxu0 0.0
    %7478 = vmatpush1.msra.mxu0 0.0
    %7479 = vmatprep.subr.mxu0 0.0
    %7480 = vmatpush1.msra.mxu0 0.0
    %7481 = vmatprep.subr.mxu0 0.0
    %7482 = vmatpush1.msra.mxu0 0.0
    %7483 = vmatprep.subr.mxu0 0.0
    %7484 = vmatpush1.msra.mxu0 0.0
    %7485 = vmatprep.subr.mxu0 0.0
    %7486 = vmatpush1.msra.mxu0 0.0
    %7487 = vmatprep.subr.mxu0 0.0
    %7488 = vmatpush1.msra.mxu0 0.0
    %7489 = vmatprep.subr.mxu0 0.0
    %7490 = vmatpush1.msra.mxu0 0.0
    %7491 = vmatprep.subr.mxu0 0.0
    %7492 = vmatpush1.msra.mxu0 0.0
    %7493 = vmatprep.subr.mxu0 0.0
    %7494 = vmatpush1.msra.mxu0 0.0
    %7495 = vmatprep.subr.mxu0 0.0
    %7496 = vmatpush1.msra.mxu0 0.0
    %7497 = vmatprep.subr.mxu0 0.0
    %7498 = vmatpush1.msra.mxu0 0.0
    %7499 = vmatprep.subr.mxu0 0.0
    %7500 = vmatpush1.msra.mxu0 0.0
    %7501 = vmatprep.subr.mxu0 0.0
    %7502 = vmatpush1.msra.mxu0 0.0
    %7503 = vmatprep.subr.mxu0 0.0
    %7504 = vmatpush1.msra.mxu0 0.0
    %7505 = vmatprep.subr.mxu0 0.0
    %7506 = vmatpush1.msra.mxu0 0.0
    %7507 = vmatprep.subr.mxu0 0.0
    %7508 = vmatpush1.msra.mxu0 0.0
    %7509 = vmatprep.subr.mxu0 0.0
    %7510 = vmatpush1.msra.mxu0 0.0
    %7511 = vmatprep.subr.mxu0 0.0
    %7512 = vmatpush1.msra.mxu0 0.0
    %7513 = vmatprep.subr.mxu0 0.0
    %7514 = vmatpush1.msra.mxu0 0.0
    %7515 = vmatprep.subr.mxu0 0.0
    %7516 = vmatpush1.msra.mxu0 0.0
    %7517 = vmatprep.subr.mxu0 0.0
    %7518 = vmatpush1.msra.mxu0 0.0
    %7519 = vmatprep.mubr.f32.mxu0 0.0
    %7520 = vmatmul.mubr.f32.gmra.mrb[0].mxu0 %v7104
    %v7521 = vpop.f32.mrb[0].mxu0
    %v7522 = vadd.f32 %v7086, %v7521
    %v7523 = vpop.f32.mrb[0].mxu0
    %7524 = vmatprep.mubr.f32.mxu0 0.0
    %7525 = vmatmul.mubr.f32.gmra.mrb[0].mxu0 %v7107
    %v7526 = vpop.f32.mrb[0].mxu0
    %v7527 = vadd.f32 %v7091, %v7526
    %v7528 = vpop.f32.mrb[0].mxu0
    %7529 = vmatprep.mubr.f32.mxu0 0.0
    %7530 = vmatmul.mubr.f32.gmra.mrb[0].mxu0 %v7110
    %v7531 = vpop.f32.mrb[0].mxu0
    %v7532 = vadd.f32 %v7096, %v7531
    %v7533 = vpop.f32.mrb[0].mxu0
    %7534 = vmatprep.mubr.f32.mxu0 0.0
    %7535 = vmatmul.mubr.f32.gmra.mrb[0].mxu0 %v7113
    %v7536 = vpop.f32.mrb[0].mxu0
    %v7537 = vadd.f32 %v7101, %v7536
    %v7538 = vpop.f32.mrb[0].mxu0
    %7539 = vdwg.mxu0
    %7540 = vmatprep.subr.mxu0 0.0
    %7541 = vmatpush1.msra.mxu0 %v2652
    %7542 = vmatprep.subr.mxu0 0.0
    %7543 = vmatpush1.msra.mxu0 %v4124
    %7544 = vmatprep.subr.mxu0 0.0
    %7545 = vmatpush1.msra.mxu0 %v5596
    %7546 = vmatprep.subr.mxu0 0.0
    %7547 = vmatpush1.msra.mxu0 %v7068
    %7548 = vmatprep.subr.mxu0 0.0
    %7549 = vmatpush1.msra.mxu0 0.0
    %7550 = vmatprep.subr.mxu0 0.0
    %7551 = vmatpush1.msra.mxu0 0.0
    %7552 = vmatprep.subr.mxu0 0.0
    %7553 = vmatpush1.msra.mxu0 0.0
    %7554 = vmatprep.subr.mxu0 0.0
    %7555 = vmatpush1.msra.mxu0 0.0
    %7556 = vmatprep.subr.mxu0 0.0
    %7557 = vmatpush1.msra.mxu0 0.0
    %7558 = vmatprep.subr.mxu0 0.0
    %7559 = vmatpush1.msra.mxu0 0.0
    %7560 = vmatprep.subr.mxu0 0.0
    %7561 = vmatpush1.msra.mxu0 0.0
    %7562 = vmatprep.subr.mxu0 0.0
    %7563 = vmatpush1.msra.mxu0 0.0
    %7564 = vmatprep.subr.mxu0 0.0
    %7565 = vmatpush1.msra.mxu0 0.0
    %7566 = vmatprep.subr.mxu0 0.0
    %7567 = vmatpush1.msra.mxu0 0.0
    %7568 = vmatprep.subr.mxu0 0.0
    %7569 = vmatpush1.msra.mxu0 0.0
    %7570 = vmatprep.subr.mxu0 0.0
    %7571 = vmatpush1.msra.mxu0 0.0
    %7572 = vmatprep.subr.mxu0 0.0
    %7573 = vmatpush1.msra.mxu0 0.0
    %7574 = vmatprep.subr.mxu0 0.0
    %7575 = vmatpush1.msra.mxu0 0.0
    %7576 = vmatprep.subr.mxu0 0.0
    %7577 = vmatpush1.msra.mxu0 0.0
    %7578 = vmatprep.subr.mxu0 0.0
    %7579 = vmatpush1.msra.mxu0 0.0
    %7580 = vmatprep.subr.mxu0 0.0
    %7581 = vmatpush1.msra.mxu0 0.0
    %7582 = vmatprep.subr.mxu0 0.0
    %7583 = vmatpush1.msra.mxu0 0.0
    %7584 = vmatprep.subr.mxu0 0.0
    %7585 = vmatpush1.msra.mxu0 0.0
    %7586 = vmatprep.subr.mxu0 0.0
    %7587 = vmatpush1.msra.mxu0 0.0
    %7588 = vmatprep.subr.mxu0 0.0
    %7589 = vmatpush1.msra.mxu0 0.0
    %7590 = vmatprep.subr.mxu0 0.0
    %7591 = vmatpush1.msra.mxu0 0.0
    %7592 = vmatprep.subr.mxu0 0.0
    %7593 = vmatpush1.msra.mxu0 0.0
    %7594 = vmatprep.subr.mxu0 0.0
    %7595 = vmatpush1.msra.mxu0 0.0
    %7596 = vmatprep.subr.mxu0 0.0
    %7597 = vmatpush1.msra.mxu0 0.0
    %7598 = vmatprep.subr.mxu0 0.0
    %7599 = vmatpush1.msra.mxu0 0.0
    %7600 = vmatprep.subr.mxu0 0.0
    %7601 = vmatpush1.msra.mxu0 0.0
    %7602 = vmatprep.subr.mxu0 0.0
    %7603 = vmatpush1.msra.mxu0 0.0
    %7604 = vmatprep.mubr.f32.mxu0 0.0
    %7605 = vmatmul.mubr.f32.gmra.mrb[0].mxu0 %v7104
    %v7606 = vpop.f32.mrb[0].mxu0
    %v7607 = vadd.f32 %v7086, %v7606
    %v7608 = vpop.f32.mrb[0].mxu0
    %7609 = vmatprep.mubr.f32.mxu0 0.0
    %7610 = vmatmul.mubr.f32.gmra.mrb[0].mxu0 %v7107
    %v7611 = vpop.f32.mrb[0].mxu0
    %v7612 = vadd.f32 %v7091, %v7611
    %v7613 = vpop.f32.mrb[0].mxu0
    %7614 = vmatprep.mubr.f32.mxu0 0.0
    %7615 = vmatmul.mubr.f32.gmra.mrb[0].mxu0 %v7110
    %v7616 = vpop.f32.mrb[0].mxu0
    %v7617 = vadd.f32 %v7096, %v7616
    %v7618 = vpop.f32.mrb[0].mxu0
    %7619 = vmatprep.mubr.f32.mxu0 0.0
    %7620 = vmatmul.mubr.f32.gmra.mrb[0].mxu0 %v7113
    %v7621 = vpop.f32.mrb[0].mxu0
    %v7622 = vadd.f32 %v7101, %v7621
    %v7623 = vpop.f32.mrb[0].mxu0
    %7624 = vdwg.mxu0
    %7625 = vmatprep.subr.mxu0 0.0
    %7626 = vmatpush1.msra.mxu0 %v2659
    %7627 = vmatprep.subr.mxu0 0.0
    %7628 = vmatpush1.msra.mxu0 %v4131
    %7629 = vmatprep.subr.mxu0 0.0
    %7630 = vmatpush1.msra.mxu0 %v5603
    %7631 = vmatprep.subr.mxu0 0.0
    %7632 = vmatpush1.msra.mxu0 %v7075
    %7633 = vmatprep.subr.mxu0 0.0
    %7634 = vmatpush1.msra.mxu0 0.0
    %7635 = vmatprep.subr.mxu0 0.0
    %7636 = vmatpush1.msra.mxu0 0.0
    %7637 = vmatprep.subr.mxu0 0.0
    %7638 = vmatpush1.msra.mxu0 0.0
    %7639 = vmatprep.subr.mxu0 0.0
    %7640 = vmatpush1.msra.mxu0 0.0
    %7641 = vmatprep.subr.mxu0 0.0
    %7642 = vmatpush1.msra.mxu0 0.0
    %7643 = vmatprep.subr.mxu0 0.0
    %7644 = vmatpush1.msra.mxu0 0.0
    %7645 = vmatprep.subr.mxu0 0.0
    %7646 = vmatpush1.msra.mxu0 0.0
    %7647 = vmatprep.subr.mxu0 0.0
    %7648 = vmatpush1.msra.mxu0 0.0
    %7649 = vmatprep.subr.mxu0 0.0
    %7650 = vmatpush1.msra.mxu0 0.0
    %7651 = vmatprep.subr.mxu0 0.0
    %7652 = vmatpush1.msra.mxu0 0.0
    %7653 = vmatprep.subr.mxu0 0.0
    %7654 = vmatpush1.msra.mxu0 0.0
    %7655 = vmatprep.subr.mxu0 0.0
    %7656 = vmatpush1.msra.mxu0 0.0
    %7657 = vmatprep.subr.mxu0 0.0
    %7658 = vmatpush1.msra.mxu0 0.0
    %7659 = vmatprep.subr.mxu0 0.0
    %7660 = vmatpush1.msra.mxu0 0.0
    %7661 = vmatprep.subr.mxu0 0.0
    %7662 = vmatpush1.msra.mxu0 0.0
    %7663 = vmatprep.subr.mxu0 0.0
    %7664 = vmatpush1.msra.mxu0 0.0
    %7665 = vmatprep.subr.mxu0 0.0
    %7666 = vmatpush1.msra.mxu0 0.0
    %7667 = vmatprep.subr.mxu0 0.0
    %7668 = vmatpush1.msra.mxu0 0.0
    %7669 = vmatprep.subr.mxu0 0.0
    %7670 = vmatpush1.msra.mxu0 0.0
    %7671 = vmatprep.subr.mxu0 0.0
    %7672 = vmatpush1.msra.mxu0 0.0
    %7673 = vmatprep.subr.mxu0 0.0
    %7674 = vmatpush1.msra.mxu0 0.0
    %7675 = vmatprep.subr.mxu0 0.0
    %7676 = vmatpush1.msra.mxu0 0.0
    %7677 = vmatprep.subr.mxu0 0.0
    %7678 = vmatpush1.msra.mxu0 0.0
    %7679 = vmatprep.subr.mxu0 0.0
    %7680 = vmatpush1.msra.mxu0 0.0
    %7681 = vmatprep.subr.mxu0 0.0
    %7682 = vmatpush1.msra.mxu0 0.0
    %7683 = vmatprep.subr.mxu0 0.0
    %7684 = vmatpush1.msra.mxu0 0.0
    %7685 = vmatprep.subr.mxu0 0.0
    %7686 = vmatpush1.msra.mxu0 0.0
    %7687 = vmatprep.subr.mxu0 0.0
    %7688 = vmatpush1.msra.mxu0 0.0
    %7689 = vmatprep.mubr.f32.mxu0 0.0
    %7690 = vmatmul.mubr.f32.gmra.mrb[0].mxu0 %v7104
    %v7691 = vpop.f32.mrb[0].mxu0
    %v7692 = vadd.f32 %v7086, %v7691
    %v7693 = vpop.f32.mrb[0].mxu0
    %7694 = vmatprep.mubr.f32.mxu0 0.0
    %7695 = vmatmul.mubr.f32.gmra.mrb[0].mxu0 %v7107
    %v7696 = vpop.f32.mrb[0].mxu0
    %v7697 = vadd.f32 %v7091, %v7696
    %v7698 = vpop.f32.mrb[0].mxu0
    %7699 = vmatprep.mubr.f32.mxu0 0.0
    %7700 = vmatmul.mubr.f32.gmra.mrb[0].mxu0 %v7110
    %v7701 = vpop.f32.mrb[0].mxu0
    %v7702 = vadd.f32 %v7096, %v7701
    %v7703 = vpop.f32.mrb[0].mxu0
    %7704 = vmatprep.mubr.f32.mxu0 0.0
    %7705 = vmatmul.mubr.f32.gmra.mrb[0].mxu0 %v7113
    %v7706 = vpop.f32.mrb[0].mxu0
    %v7707 = vadd.f32 %v7101, %v7706
    %v7708 = vpop.f32.mrb[0].mxu0
    %7709 = vdwg.mxu0
    %7710 = vmatprep.subr.mxu0 0.0
    %7711 = vmatpush1.msra.mxu0 %v2666
    %7712 = vmatprep.subr.mxu0 0.0
    %7713 = vmatpush1.msra.mxu0 %v4138
    %7714 = vmatprep.subr.mxu0 0.0
    %7715 = vmatpush1.msra.mxu0 %v5610
    %7716 = vmatprep.subr.mxu0 0.0
    %7717 = vmatpush1.msra.mxu0 %v7082
    %7718 = vmatprep.subr.mxu0 0.0
    %7719 = vmatpush1.msra.mxu0 0.0
    %7720 = vmatprep.subr.mxu0 0.0
    %7721 = vmatpush1.msra.mxu0 0.0
    %7722 = vmatprep.subr.mxu0 0.0
    %7723 = vmatpush1.msra.mxu0 0.0
    %7724 = vmatprep.subr.mxu0 0.0
    %7725 = vmatpush1.msra.mxu0 0.0
    %7726 = vmatprep.subr.mxu0 0.0
    %7727 = vmatpush1.msra.mxu0 0.0
    %7728 = vmatprep.subr.mxu0 0.0
    %7729 = vmatpush1.msra.mxu0 0.0
    %7730 = vmatprep.subr.mxu0 0.0
    %7731 = vmatpush1.msra.mxu0 0.0
    %7732 = vmatprep.subr.mxu0 0.0
    %7733 = vmatpush1.msra.mxu0 0.0
    %7734 = vmatprep.subr.mxu0 0.0
    %7735 = vmatpush1.msra.mxu0 0.0
    %7736 = vmatprep.subr.mxu0 0.0
    %7737 = vmatpush1.msra.mxu0 0.0
    %7738 = vmatprep.subr.mxu0 0.0
    %7739 = vmatpush1.msra.mxu0 0.0
    %7740 = vmatprep.subr.mxu0 0.0
    %7741 = vmatpush1.msra.mxu0 0.0
    %7742 = vmatprep.subr.mxu0 0.0
    %7743 = vmatpush1.msra.mxu0 0.0
    %7744 = vmatprep.subr.mxu0 0.0
    %7745 = vmatpush1.msra.mxu0 0.0
    %7746 = vmatprep.subr.mxu0 0.0
    %7747 = vmatpush1.msra.mxu0 0.0
    %7748 = vmatprep.subr.mxu0 0.0
    %7749 = vmatpush1.msra.mxu0 0.0
    %7750 = vmatprep.subr.mxu0 0.0
    %7751 = vmatpush1.msra.mxu0 0.0
    %7752 = vmatprep.subr.mxu0 0.0
    %7753 = vmatpush1.msra.mxu0 0.0
    %7754 = vmatprep.subr.mxu0 0.0
    %7755 = vmatpush1.msra.mxu0 0.0
    %7756 = vmatprep.subr.mxu0 0.0
    %7757 = vmatpush1.msra.mxu0 0.0
    %7758 = vmatprep.subr.mxu0 0.0
    %7759 = vmatpush1.msra.mxu0 0.0
    %7760 = vmatprep.subr.mxu0 0.0
    %7761 = vmatpush1.msra.mxu0 0.0
    %7762 = vmatprep.subr.mxu0 0.0
    %7763 = vmatpush1.msra.mxu0 0.0
    %7764 = vmatprep.subr.mxu0 0.0
    %7765 = vmatpush1.msra.mxu0 0.0
    %7766 = vmatprep.subr.mxu0 0.0
    %7767 = vmatpush1.msra.mxu0 0.0
    %7768 = vmatprep.subr.mxu0 0.0
    %7769 = vmatpush1.msra.mxu0 0.0
    %7770 = vmatprep.subr.mxu0 0.0
    %7771 = vmatpush1.msra.mxu0 0.0
    %7772 = vmatprep.subr.mxu0 0.0
    %7773 = vmatpush1.msra.mxu0 0.0
    %7774 = vmatprep.mubr.f32.mxu0 0.0
    %7775 = vmatmul.mubr.f32.gmra.mrb[0].mxu0 %v7104
    %v7776 = vpop.f32.mrb[0].mxu0
    %v7777 = vadd.f32 %v7086, %v7776
    %v7778 = vpop.f32.mrb[0].mxu0
    %7779 = vmatprep.mubr.f32.mxu0 0.0
    %7780 = vmatmul.mubr.f32.gmra.mrb[0].mxu0 %v7107
    %v7781 = vpop.f32.mrb[0].mxu0
    %v7782 = vadd.f32 %v7091, %v7781
    %v7783 = vpop.f32.mrb[0].mxu0
    %7784 = vmatprep.mubr.f32.mxu0 0.0
    %7785 = vmatmul.mubr.f32.gmra.mrb[0].mxu0 %v7110
    %v7786 = vpop.f32.mrb[0].mxu0
    %v7787 = vadd.f32 %v7096, %v7786
    %v7788 = vpop.f32.mrb[0].mxu0
    %7789 = vmatprep.mubr.f32.mxu0 0.0
    %7790 = vmatmul.mubr.f32.gmra.mrb[0].mxu0 %v7113
    %v7791 = vpop.f32.mrb[0].mxu0
    %v7792 = vadd.f32 %v7101, %v7791
    %v7793 = vpop.f32.mrb[0].mxu0
    %7794 = vdwg.mxu0
    %v7795 = vadd.f32 %v27, %v7182
    %v7796 = vadd.f32 %v28, %v7187
    %v7797 = vadd.f32 %v29, %v7192
    %v7798 = vadd.f32 %v30, %v7197
    %v7799 = vadd.f32 %v31, %v7267
    %v7800 = vadd.f32 %v32, %v7272
    %v7801 = vadd.f32 %v33, %v7277
    %v7802 = vadd.f32 %v34, %v7282
    %v7803 = vadd.f32 %v35, %v7352
    %v7804 = vadd.f32 %v36, %v7357
    %v7805 = vadd.f32 %v37, %v7362
    %v7806 = vadd.f32 %v38, %v7367
    %v7807 = vadd.f32 %v39, %v7437
    %v7808 = vadd.f32 %v40, %v7442
    %v7809 = vadd.f32 %v41, %v7447
    %v7810 = vadd.f32 %v42, %v7452
    %v7811 = vadd.f32 %v43, %v7522
    %v7812 = vadd.f32 %v44, %v7527
    %v7813 = vadd.f32 %v45, %v7532
    %v7814 = vadd.f32 %v46, %v7537
    %v7815 = vadd.f32 %v47, %v7607
    %v7816 = vadd.f32 %v48, %v7612
    %v7817 = vadd.f32 %v49, %v7617
    %v7818 = vadd.f32 %v50, %v7622
    %v7819 = vadd.f32 %v51, %v7692
    %v7820 = vadd.f32 %v52, %v7697
    %v7821 = vadd.f32 %v53, %v7702
    %v7822 = vadd.f32 %v54, %v7707
    %v7823 = vadd.f32 %v55, %v7777
    %v7824 = vadd.f32 %v56, %v7782
    %v7825 = vadd.f32 %v57, %v7787
    %v7826 = vadd.f32 %v58, %v7792
    %v7827 = vadd.f32 %v7795, %v7796
    %v7828 = vadd.f32 %v7827, %v7797
    %v7829 = vadd.f32 %v7828, %v7798
    %v7830 = vrot.slane %v7829, 4
    %v7831 = vadd.f32 %v7829, %v7830
    %v7832 = vrot.slane %v7831, 2
    %v7833 = vadd.f32 %v7831, %v7832
    %v7834 = vrot.slane %v7833, 1
    %v7835 = vadd.f32 %v7833, %v7834
    %v7836 = vadd.f32 %v7799, %v7800
    %v7837 = vadd.f32 %v7836, %v7801
    %v7838 = vadd.f32 %v7837, %v7802
    %v7839 = vrot.slane %v7838, 4
    %v7840 = vadd.f32 %v7838, %v7839
    %v7841 = vrot.slane %v7840, 2
    %v7842 = vadd.f32 %v7840, %v7841
    %v7843 = vrot.slane %v7842, 1
    %v7844 = vadd.f32 %v7842, %v7843
    %v7845 = vadd.f32 %v7803, %v7804
    %v7846 = vadd.f32 %v7845, %v7805
    %v7847 = vadd.f32 %v7846, %v7806
    %v7848 = vrot.slane %v7847, 4
    %v7849 = vadd.f32 %v7847, %v7848
    %v7850 = vrot.slane %v7849, 2
    %v7851 = vadd.f32 %v7849, %v7850
    %v7852 = vrot.slane %v7851, 1
    %v7853 = vadd.f32 %v7851, %v7852
    %v7854 = vadd.f32 %v7807, %v7808
    %v7855 = vadd.f32 %v7854, %v7809
    %v7856 = vadd.f32 %v7855, %v7810
    %v7857 = vrot.slane %v7856, 4
    %v7858 = vadd.f32 %v7856, %v7857
    %v7859 = vrot.slane %v7858, 2
    %v7860 = vadd.f32 %v7858, %v7859
    %v7861 = vrot.slane %v7860, 1
    %v7862 = vadd.f32 %v7860, %v7861
    %v7863 = vadd.f32 %v7811, %v7812
    %v7864 = vadd.f32 %v7863, %v7813
    %v7865 = vadd.f32 %v7864, %v7814
    %v7866 = vrot.slane %v7865, 4
    %v7867 = vadd.f32 %v7865, %v7866
    %v7868 = vrot.slane %v7867, 2
    %v7869 = vadd.f32 %v7867, %v7868
    %v7870 = vrot.slane %v7869, 1
    %v7871 = vadd.f32 %v7869, %v7870
    %v7872 = vadd.f32 %v7815, %v7816
    %v7873 = vadd.f32 %v7872, %v7817
    %v7874 = vadd.f32 %v7873, %v7818
    %v7875 = vrot.slane %v7874, 4
    %v7876 = vadd.f32 %v7874, %v7875
    %v7877 = vrot.slane %v7876, 2
    %v7878 = vadd.f32 %v7876, %v7877
    %v7879 = vrot.slane %v7878, 1
    %v7880 = vadd.f32 %v7878, %v7879
    %v7881 = vadd.f32 %v7819, %v7820
    %v7882 = vadd.f32 %v7881, %v7821
    %v7883 = vadd.f32 %v7882, %v7822
    %v7884 = vrot.slane %v7883, 4
    %v7885 = vadd.f32 %v7883, %v7884
    %v7886 = vrot.slane %v7885, 2
    %v7887 = vadd.f32 %v7885, %v7886
    %v7888 = vrot.slane %v7887, 1
    %v7889 = vadd.f32 %v7887, %v7888
    %v7890 = vadd.f32 %v7823, %v7824
    %v7891 = vadd.f32 %v7890, %v7825
    %v7892 = vadd.f32 %v7891, %v7826
    %v7893 = vrot.slane %v7892, 4
    %v7894 = vadd.f32 %v7892, %v7893
    %v7895 = vrot.slane %v7894, 2
    %v7896 = vadd.f32 %v7894, %v7895
    %v7897 = vrot.slane %v7896, 1
    %v7898 = vadd.f32 %v7896, %v7897
    %v7899 = vrcp.pop 32.0
    %v7900 = vmul.f32 %v7835, %v7899
    %v7901 = vmul.f32 %v7844, %v7899
    %v7902 = vmul.f32 %v7853, %v7899
    %v7903 = vmul.f32 %v7862, %v7899
    %v7904 = vmul.f32 %v7871, %v7899
    %v7905 = vmul.f32 %v7880, %v7899
    %v7906 = vmul.f32 %v7889, %v7899
    %v7907 = vmul.f32 %v7898, %v7899
    %v7908 = vsub.f32 %v7795, %v7900
    %v7909 = vsub.f32 %v7796, %v7900
    %v7910 = vsub.f32 %v7797, %v7900
    %v7911 = vsub.f32 %v7798, %v7900
    %v7912 = vsub.f32 %v7799, %v7901
    %v7913 = vsub.f32 %v7800, %v7901
    %v7914 = vsub.f32 %v7801, %v7901
    %v7915 = vsub.f32 %v7802, %v7901
    %v7916 = vsub.f32 %v7803, %v7902
    %v7917 = vsub.f32 %v7804, %v7902
    %v7918 = vsub.f32 %v7805, %v7902
    %v7919 = vsub.f32 %v7806, %v7902
    %v7920 = vsub.f32 %v7807, %v7903
    %v7921 = vsub.f32 %v7808, %v7903
    %v7922 = vsub.f32 %v7809, %v7903
    %v7923 = vsub.f32 %v7810, %v7903
    %v7924 = vsub.f32 %v7811, %v7904
    %v7925 = vsub.f32 %v7812, %v7904
    %v7926 = vsub.f32 %v7813, %v7904
    %v7927 = vsub.f32 %v7814, %v7904
    %v7928 = vsub.f32 %v7815, %v7905
    %v7929 = vsub.f32 %v7816, %v7905
    %v7930 = vsub.f32 %v7817, %v7905
    %v7931 = vsub.f32 %v7818, %v7905
    %v7932 = vsub.f32 %v7819, %v7906
    %v7933 = vsub.f32 %v7820, %v7906
    %v7934 = vsub.f32 %v7821, %v7906
    %v7935 = vsub.f32 %v7822, %v7906
    %v7936 = vsub.f32 %v7823, %v7907
    %v7937 = vsub.f32 %v7824, %v7907
    %v7938 = vsub.f32 %v7825, %v7907
    %v7939 = vsub.f32 %v7826, %v7907
    %v7940 = vmul.f32 %v7908, %v7908
    %v7941 = vmul.f32 %v7909, %v7909
    %v7942 = vmul.f32 %v7910, %v7910
    %v7943 = vmul.f32 %v7911, %v7911
    %v7944 = vmul.f32 %v7912, %v7912
    %v7945 = vmul.f32 %v7913, %v7913
    %v7946 = vmul.f32 %v7914, %v7914
    %v7947 = vmul.f32 %v7915, %v7915
    %v7948 = vmul.f32 %v7916, %v7916
    %v7949 = vmul.f32 %v7917, %v7917
    %v7950 = vmul.f32 %v7918, %v7918
    %v7951 = vmul.f32 %v7919, %v7919
    %v7952 = vmul.f32 %v7920, %v7920
    %v7953 = vmul.f32 %v7921, %v7921
    %v7954 = vmul.f32 %v7922, %v7922
    %v7955 = vmul.f32 %v7923, %v7923
    %v7956 = vmul.f32 %v7924, %v7924
    %v7957 = vmul.f32 %v7925, %v7925
    %v7958 = vmul.f32 %v7926, %v7926
    %v7959 = vmul.f32 %v7927, %v7927
    %v7960 = vmul.f32 %v7928, %v7928
    %v7961 = vmul.f32 %v7929, %v7929
    %v7962 = vmul.f32 %v7930, %v7930
    %v7963 = vmul.f32 %v7931, %v7931
    %v7964 = vmul.f32 %v7932, %v7932
    %v7965 = vmul.f32 %v7933, %v7933
    %v7966 = vmul.f32 %v7934, %v7934
    %v7967 = vmul.f32 %v7935, %v7935
    %v7968 = vmul.f32 %v7936, %v7936
    %v7969 = vmul.f32 %v7937, %v7937
    %v7970 = vmul.f32 %v7938, %v7938
    %v7971 = vmul.f32 %v7939, %v7939
    %v7972 = vadd.f32 %v7940, %v7941
    %v7973 = vadd.f32 %v7972, %v7942
    %v7974 = vadd.f32 %v7973, %v7943
    %v7975 = vrot.slane %v7974, 4
    %v7976 = vadd.f32 %v7974, %v7975
    %v7977 = vrot.slane %v7976, 2
    %v7978 = vadd.f32 %v7976, %v7977
    %v7979 = vrot.slane %v7978, 1
    %v7980 = vadd.f32 %v7978, %v7979
    %v7981 = vadd.f32 %v7944, %v7945
    %v7982 = vadd.f32 %v7981, %v7946
    %v7983 = vadd.f32 %v7982, %v7947
    %v7984 = vrot.slane %v7983, 4
    %v7985 = vadd.f32 %v7983, %v7984
    %v7986 = vrot.slane %v7985, 2
    %v7987 = vadd.f32 %v7985, %v7986
    %v7988 = vrot.slane %v7987, 1
    %v7989 = vadd.f32 %v7987, %v7988
    %v7990 = vadd.f32 %v7948, %v7949
    %v7991 = vadd.f32 %v7990, %v7950
    %v7992 = vadd.f32 %v7991, %v7951
    %v7993 = vrot.slane %v7992, 4
    %v7994 = vadd.f32 %v7992, %v7993
    %v7995 = vrot.slane %v7994, 2
    %v7996 = vadd.f32 %v7994, %v7995
    %v7997 = vrot.slane %v7996, 1
    %v7998 = vadd.f32 %v7996, %v7997
    %v7999 = vadd.f32 %v7952, %v7953
    %v8000 = vadd.f32 %v7999, %v7954
    %v8001 = vadd.f32 %v8000, %v7955
    %v8002 = vrot.slane %v8001, 4
    %v8003 = vadd.f32 %v8001, %v8002
    %v8004 = vrot.slane %v8003, 2
    %v8005 = vadd.f32 %v8003, %v8004
    %v8006 = vrot.slane %v8005, 1
    %v8007 = vadd.f32 %v8005, %v8006
    %v8008 = vadd.f32 %v7956, %v7957
    %v8009 = vadd.f32 %v8008, %v7958
    %v8010 = vadd.f32 %v8009, %v7959
    %v8011 = vrot.slane %v8010, 4
    %v8012 = vadd.f32 %v8010, %v8011
    %v8013 = vrot.slane %v8012, 2
    %v8014 = vadd.f32 %v8012, %v8013
    %v8015 = vrot.slane %v8014, 1
    %v8016 = vadd.f32 %v8014, %v8015
    %v8017 = vadd.f32 %v7960, %v7961
    %v8018 = vadd.f32 %v8017, %v7962
    %v8019 = vadd.f32 %v8018, %v7963
    %v8020 = vrot.slane %v8019, 4
    %v8021 = vadd.f32 %v8019, %v8020
    %v8022 = vrot.slane %v8021, 2
    %v8023 = vadd.f32 %v8021, %v8022
    %v8024 = vrot.slane %v8023, 1
    %v8025 = vadd.f32 %v8023, %v8024
    %v8026 = vadd.f32 %v7964, %v7965
    %v8027 = vadd.f32 %v8026, %v7966
    %v8028 = vadd.f32 %v8027, %v7967
    %v8029 = vrot.slane %v8028, 4
    %v8030 = vadd.f32 %v8028, %v8029
    %v8031 = vrot.slane %v8030, 2
    %v8032 = vadd.f32 %v8030, %v8031
    %v8033 = vrot.slane %v8032, 1
    %v8034 = vadd.f32 %v8032, %v8033
    %v8035 = vadd.f32 %v7968, %v7969
    %v8036 = vadd.f32 %v8035, %v7970
    %v8037 = vadd.f32 %v8036, %v7971
    %v8038 = vrot.slane %v8037, 4
    %v8039 = vadd.f32 %v8037, %v8038
    %v8040 = vrot.slane %v8039, 2
    %v8041 = vadd.f32 %v8039, %v8040
    %v8042 = vrot.slane %v8041, 1
    %v8043 = vadd.f32 %v8041, %v8042
    %v8044 = vmul.f32 %v7980, %v7899
    %v8045 = vmul.f32 %v7989, %v7899
    %v8046 = vmul.f32 %v7998, %v7899
    %v8047 = vmul.f32 %v8007, %v7899
    %v8048 = vmul.f32 %v8016, %v7899
    %v8049 = vmul.f32 %v8025, %v7899
    %v8050 = vmul.f32 %v8034, %v7899
    %v8051 = vmul.f32 %v8043, %v7899
    %v8052 = vadd.f32 %v8044, 1e-05
    %v8053 = vadd.f32 %v8045, 1e-05
    %v8054 = vadd.f32 %v8046, 1e-05
    %v8055 = vadd.f32 %v8047, 1e-05
    %v8056 = vadd.f32 %v8048, 1e-05
    %v8057 = vadd.f32 %v8049, 1e-05
    %v8058 = vadd.f32 %v8050, 1e-05
    %v8059 = vadd.f32 %v8051, 1e-05
    %v8060 = vrsqrt.pop %v8052
    %v8061 = vrsqrt.pop %v8053
    %v8062 = vrsqrt.pop %v8054
    %v8063 = vrsqrt.pop %v8055
    %v8064 = vrsqrt.pop %v8056
    %v8065 = vrsqrt.pop %v8057
    %v8066 = vrsqrt.pop %v8058
    %v8067 = vrsqrt.pop %v8059
    %v8068 = vmul.f32 %v7908, %v8060
    %v8069 = vmul.f32 %v7909, %v8060
    %v8070 = vmul.f32 %v7910, %v8060
    %v8071 = vmul.f32 %v7911, %v8060
    %v8072 = vmul.f32 %v7912, %v8061
    %v8073 = vmul.f32 %v7913, %v8061
    %v8074 = vmul.f32 %v7914, %v8061
    %v8075 = vmul.f32 %v7915, %v8061
    %v8076 = vmul.f32 %v7916, %v8062
    %v8077 = vmul.f32 %v7917, %v8062
    %v8078 = vmul.f32 %v7918, %v8062
    %v8079 = vmul.f32 %v7919, %v8062
    %v8080 = vmul.f32 %v7920, %v8063
    %v8081 = vmul.f32 %v7921, %v8063
    %v8082 = vmul.f32 %v7922, %v8063
    %v8083 = vmul.f32 %v7923, %v8063
    %v8084 = vmul.f32 %v7924, %v8064
    %v8085 = vmul.f32 %v7925, %v8064
    %v8086 = vmul.f32 %v7926, %v8064
    %v8087 = vmul.f32 %v7927, %v8064
    %v8088 = vmul.f32 %v7928, %v8065
    %v8089 = vmul.f32 %v7929, %v8065
    %v8090 = vmul.f32 %v7930, %v8065
    %v8091 = vmul.f32 %v7931, %v8065
    %v8092 = vmul.f32 %v7932, %v8066
    %v8093 = vmul.f32 %v7933, %v8066
    %v8094 = vmul.f32 %v7934, %v8066
    %v8095 = vmul.f32 %v7935, %v8066
    %v8096 = vmul.f32 %v7936, %v8067
    %v8097 = vmul.f32 %v7937, %v8067
    %v8098 = vmul.f32 %v7938, %v8067
    %v8099 = vmul.f32 %v7939, %v8067
    %v8100 = vld [vmem:[%s5] sm:$0xff]
    %v8101 = vld [vmem:[%s5 + $0x8] sm:$0xff]
    %v8102 = vld [vmem:[%s5 + $0x10] sm:$0xff]
    %v8103 = vld [vmem:[%s5 + $0x18] sm:$0xff]
    %8105 = vset.pattern.permute.xlu0 0
    %8106 = vperm.xlu0 %8105, %v8100
    %v8107 = vpop.permute.xlu0 %8106
    %8110 = vset.pattern.permute.xlu0 0
    %8111 = vperm.xlu0 %8110, %v8101
    %v8112 = vpop.permute.xlu0 %8111
    %8115 = vset.pattern.permute.xlu0 0
    %8116 = vperm.xlu0 %8115, %v8102
    %v8117 = vpop.permute.xlu0 %8116
    %8120 = vset.pattern.permute.xlu0 0
    %8121 = vperm.xlu0 %8120, %v8103
    %v8122 = vpop.permute.xlu0 %8121
    %v8124 = vmul.f32 %v8068, %v8107
    %v8125 = vmul.f32 %v8069, %v8112
    %v8126 = vmul.f32 %v8070, %v8117
    %v8127 = vmul.f32 %v8071, %v8122
    %v8128 = vmul.f32 %v8072, %v8107
    %v8129 = vmul.f32 %v8073, %v8112
    %v8130 = vmul.f32 %v8074, %v8117
    %v8131 = vmul.f32 %v8075, %v8122
    %v8132 = vmul.f32 %v8076, %v8107
    %v8133 = vmul.f32 %v8077, %v8112
    %v8134 = vmul.f32 %v8078, %v8117
    %v8135 = vmul.f32 %v8079, %v8122
    %v8136 = vmul.f32 %v8080, %v8107
    %v8137 = vmul.f32 %v8081, %v8112
    %v8138 = vmul.f32 %v8082, %v8117
    %v8139 = vmul.f32 %v8083, %v8122
    %v8140 = vmul.f32 %v8084, %v8107
    %v8141 = vmul.f32 %v8085, %v8112
    %v8142 = vmul.f32 %v8086, %v8117
    %v8143 = vmul.f32 %v8087, %v8122
    %v8144 = vmul.f32 %v8088, %v8107
    %v8145 = vmul.f32 %v8089, %v8112
    %v8146 = vmul.f32 %v8090, %v8117
    %v8147 = vmul.f32 %v8091, %v8122
    %v8148 = vmul.f32 %v8092, %v8107
    %v8149 = vmul.f32 %v8093, %v8112
    %v8150 = vmul.f32 %v8094, %v8117
    %v8151 = vmul.f32 %v8095, %v8122
    %v8152 = vmul.f32 %v8096, %v8107
    %v8153 = vmul.f32 %v8097, %v8112
    %v8154 = vmul.f32 %v8098, %v8117
    %v8155 = vmul.f32 %v8099, %v8122
    %v8156 = vld [vmem:[%s6] sm:$0xff]
    %v8157 = vld [vmem:[%s6 + $0x8] sm:$0xff]
    %v8158 = vld [vmem:[%s6 + $0x10] sm:$0xff]
    %v8159 = vld [vmem:[%s6 + $0x18] sm:$0xff]
    %8161 = vset.pattern.permute.xlu0 0
    %8162 = vperm.xlu0 %8161, %v8156
    %v8163 = vpop.permute.xlu0 %8162
    %8166 = vset.pattern.permute.xlu0 0
    %8167 = vperm.xlu0 %8166, %v8157
    %v8168 = vpop.permute.xlu0 %8167
    %8171 = vset.pattern.permute.xlu0 0
    %8172 = vperm.xlu0 %8171, %v8158
    %v8173 = vpop.permute.xlu0 %8172
    %8176 = vset.pattern.permute.xlu0 0
    %8177 = vperm.xlu0 %8176, %v8159
    %v8178 = vpop.permute.xlu0 %8177
    %v8180 = vadd.f32 %v8124, %v8163
    %v8181 = vadd.f32 %v8125, %v8168
    %v8182 = vadd.f32 %v8126, %v8173
    %v8183 = vadd.f32 %v8127, %v8178
    %v8184 = vadd.f32 %v8128, %v8163
    %v8185 = vadd.f32 %v8129, %v8168
    %v8186 = vadd.f32 %v8130, %v8173
    %v8187 = vadd.f32 %v8131, %v8178
    %v8188 = vadd.f32 %v8132, %v8163
    %v8189 = vadd.f32 %v8133, %v8168
    %v8190 = vadd.f32 %v8134, %v8173
    %v8191 = vadd.f32 %v8135, %v8178
    %v8192 = vadd.f32 %v8136, %v8163
    %v8193 = vadd.f32 %v8137, %v8168
    %v8194 = vadd.f32 %v8138, %v8173
    %v8195 = vadd.f32 %v8139, %v8178
    %v8196 = vadd.f32 %v8140, %v8163
    %v8197 = vadd.f32 %v8141, %v8168
    %v8198 = vadd.f32 %v8142, %v8173
    %v8199 = vadd.f32 %v8143, %v8178
    %v8200 = vadd.f32 %v8144, %v8163
    %v8201 = vadd.f32 %v8145, %v8168
    %v8202 = vadd.f32 %v8146, %v8173
    %v8203 = vadd.f32 %v8147, %v8178
    %v8204 = vadd.f32 %v8148, %v8163
    %v8205 = vadd.f32 %v8149, %v8168
    %v8206 = vadd.f32 %v8150, %v8173
    %v8207 = vadd.f32 %v8151, %v8178
    %v8208 = vadd.f32 %v8152, %v8163
    %v8209 = vadd.f32 %v8153, %v8168
    %v8210 = vadd.f32 %v8154, %v8173
    %v8211 = vadd.f32 %v8155, %v8178
    %8212 = vst [vmem:[#allocation2] sm:$0xff] %v8180
    %8213 = vst [vmem:[#allocation2 + $0x8] sm:$0xff] %v8181
    %8214 = vst [vmem:[#allocation2 + $0x10] sm:$0xff] %v8182
    %8215 = vst [vmem:[#allocation2 + $0x18] sm:$0xff] %v8183
    %8216 = vst [vmem:[#allocation2 + $0x20] sm:$0xff] %v8184
    %8217 = vst [vmem:[#allocation2 + $0x28] sm:$0xff] %v8185
    %8218 = vst [vmem:[#allocation2 + $0x30] sm:$0xff] %v8186
    %8219 = vst [vmem:[#allocation2 + $0x38] sm:$0xff] %v8187
    %8220 = vst [vmem:[#allocation2 + $0x40] sm:$0xff] %v8188
    %8221 = vst [vmem:[#allocation2 + $0x48] sm:$0xff] %v8189
    %8222 = vst [vmem:[#allocation2 + $0x50] sm:$0xff] %v8190
    %8223 = vst [vmem:[#allocation2 + $0x58] sm:$0xff] %v8191
    %8224 = vst [vmem:[#allocation2 + $0x60] sm:$0xff] %v8192
    %8225 = vst [vmem:[#allocation2 + $0x68] sm:$0xff] %v8193
    %8226 = vst [vmem:[#allocation2 + $0x70] sm:$0xff] %v8194
    %8227 = vst [vmem:[#allocation2 + $0x78] sm:$0xff] %v8195
    %8228 = vst [vmem:[#allocation2 + $0x80] sm:$0xff] %v8196
    %8229 = vst [vmem:[#allocation2 + $0x88] sm:$0xff] %v8197
    %8230 = vst [vmem:[#allocation2 + $0x90] sm:$0xff] %v8198
    %8231 = vst [vmem:[#allocation2 + $0x98] sm:$0xff] %v8199
    %8232 = vst [vmem:[#allocation2 + $0xa0] sm:$0xff] %v8200
    %8233 = vst [vmem:[#allocation2 + $0xa8] sm:$0xff] %v8201
    %8234 = vst [vmem:[#allocation2 + $0xb0] sm:$0xff] %v8202
    %8235 = vst [vmem:[#allocation2 + $0xb8] sm:$0xff] %v8203
    %8236 = vst [vmem:[#allocation2 + $0xc0] sm:$0xff] %v8204
    %8237 = vst [vmem:[#allocation2 + $0xc8] sm:$0xff] %v8205
    %8238 = vst [vmem:[#allocation2 + $0xd0] sm:$0xff] %v8206
    %8239 = vst [vmem:[#allocation2 + $0xd8] sm:$0xff] %v8207
    %8240 = vst [vmem:[#allocation2 + $0xe0] sm:$0xff] %v8208
    %8241 = vst [vmem:[#allocation2 + $0xe8] sm:$0xff] %v8209
    %8242 = vst [vmem:[#allocation2 + $0xf0] sm:$0xff] %v8210
    %8243 = vst [vmem:[#allocation2 + $0xf8] sm:$0xff] %v8211
    // Predicated region
    $region30: #{tpu_custom_call.1} parent=1 // pred_check
      _
    $region31: #{tpu_custom_call.1} parent=1 // pred_check_branch
      %8245 = sbr.rel (0) target = $region33
    $region32: #{tpu_custom_call.1} parent=1 // pred_region
      %s8247 = ssub.s32 4096, 4096
      %8248 = vsyncadd [#allocation3], %s8247
      %s8249 = sshll.u32 [#allocation2], 4
      %s8250 = int_to_ptr.vmem [resolvable:$true] %s8249
      %8255 = dma.vmem_to_hbm [thread:$0]  %s8250, 4096, %s7, [#allocation3], 128, 128, 8
    $region33: #{tpu_custom_call.1} parent=1 // pred_fallthru
      _
    // Predicated region
    $region34: #{tpu_custom_call.1} parent=1 // pred_check
      _
    $region35: #{tpu_custom_call.1} parent=1 // pred_check_branch
      %8257 = sbr.rel (0) target = $region37
    $region36: #{tpu_custom_call.1} parent=1 // pred_region
      %8258 = dma.done [#allocation3], 4096
    $region37: #{tpu_custom_call.1} parent=1 // pred_fallthru
      _
    %8259 = vsyncpa [#allocation3], 1

</llo_original>
